<compile_context>
chip_gen: v7x
topology: tpu7x:2x2x1
jax: 0.10.0
libtpu: 0.0.40
codegen_flags: <defaults>
</compile_context>

<pallas_src>
import functools

import numpy as np
import jax
import jax.numpy as jnp
from jax.experimental import pallas as pl
from jax.experimental.pallas import tpu as pltpu

NDF = 64
EPS = 1e-5            # nn.BatchNorm2d default eps
LRELU_SLOPE = 0.2
C1P = 128             # layer-1 output channels padded 64 -> 128 (lane-dense)
IN_SPATIAL = 32       # DCGAN discriminator expects 32x32 single-channel input


# ------------------------------ Pallas kernel -------------------------------

def _bn_lrelu(a, gamma, beta):
    """Training-mode BatchNorm2d (biased batch stats over all rows) followed by
    LeakyReLU(0.2).  Sum and sum-of-squares come out of ONE reduction pass
    (lane-concatenated), everything in f32."""
    m, c = a.shape
    stats = jnp.sum(jnp.concatenate([a, a * a], axis=-1),
                    axis=0, keepdims=True) * (1.0 / m)            # [1, 2c]
    mu, ex2 = stats[:, :c], stats[:, c:]
    var = jnp.maximum(ex2 - mu * mu, 0.0)
    scale = gamma * jax.lax.rsqrt(var + EPS)
    shift = beta - mu * scale
    y = a * scale + shift
    return jnp.where(y >= 0.0, y, LRELU_SLOPE * y)


def _disc_kernel(x1_ref, w1_ref, g1_ref, b1_ref,
                 t2_ref, w2_ref, g2_ref, b2_ref,
                 t3_ref, w3_ref, g3_ref, b3_ref,
                 w4_ref, o_ref, *, n):
    """Whole discriminator forward.  Row spaces: layer1 n*16*16, layer2 n*8*8,
    layer3 n*4*4 (valid positions only, no pad rows / masks)."""
    f32 = jnp.float32
    bf16 = jnp.bfloat16

    # ---- layer 1: Conv(1->64, 4, s2, p1) as a single K=16 im2col matmul ----
    a1 = jnp.dot(x1_ref[...], w1_ref[...], preferred_element_type=f32)  # [n*256, 128]
    y1 = _bn_lrelu(a1, g1_ref[...], b1_ref[...]).astype(bf16)

    # ---- layer 2: im2col via 16 constant selection matmuls (one per kernel
    # tap; zero rows encode the zero padding), then one K=2048 conv matmul.
    x2 = jnp.concatenate(
        [jnp.dot(t2_ref[k], y1, preferred_element_type=f32).astype(bf16)
         for k in range(16)], axis=-1)                                   # [n*64, 2048]
    a2 = jnp.dot(x2, w2_ref[...], preferred_element_type=f32)           # [n*64, 128]
    y2 = _bn_lrelu(a2, g2_ref[...], b2_ref[...]).astype(bf16)

    # ---- layer 3: same scheme ----
    x3 = jnp.concatenate(
        [jnp.dot(t3_ref[k], y2, preferred_element_type=f32).astype(bf16)
         for k in range(16)], axis=-1)                                   # [n*16, 2048]
    a3 = jnp.dot(x3, w3_ref[...], preferred_element_type=f32)           # [n*16, 256]
    y3 = _bn_lrelu(a3, g3_ref[...], b3_ref[...])                         # f32

    # ---- head: Conv(256->1, 4, s1, p0) + Sigmoid, as per-sample aligned
    # 16-row block sums against the per-position head weights (no selector
    # matmul).  Row starts s*16 are multiples of 8.
    w4 = w4_ref[...]                                                     # [16, 256] f32
    parts = []
    for s in range(n):
        z = y3[s * 16:(s + 1) * 16, :] * w4
        part = jnp.sum(jnp.sum(z, axis=1, keepdims=True), axis=0, keepdims=True)
        parts.append(part)                                               # [1, 1]
    logits = jnp.concatenate(parts, axis=1)                              # [1, n]
    o_ref[...] = 1.0 / (1.0 + jnp.exp(-logits))                          # sigmoid


def _full_spec(shape):
    zeros = (0,) * len(shape)
    return pl.BlockSpec(shape, lambda i: zeros)


def _fused_forward_call(x1, p, n):
    inputs = [x1, p["w1"], p["g1"], p["b1"],
              p["t2"], p["w2"], p["g2"], p["b2"],
              p["t3"], p["w3"], p["g3"], p["b3"],
              p["w4"]]
    out_shape = jax.ShapeDtypeStruct((1, n), jnp.float32)
    return pl.pallas_call(
        functools.partial(_disc_kernel, n=n),
        out_shape=out_shape,
        grid=(1,),
        in_specs=[_full_spec(a.shape) for a in inputs],
        out_specs=_full_spec(out_shape.shape),
        compiler_params=pltpu.CompilerParams(
            dimension_semantics=("arbitrary",),
            vmem_limit_bytes=32 * 1024 * 1024),
    )(*inputs)


# --------------------------- one-time prepacking ----------------------------

def _im2col_selectors(n, s_in, s_out):
    """0/1 matrices [16, n*s_out^2, n*s_in^2]; matrix k = a*4+b maps output row
    (sample, i, j) to input row (sample, 2i+a-1, 2j+b-1); out-of-range (zero
    padding) positions become all-zero rows.  Block-diagonal over samples."""
    i = np.arange(s_out)
    u = np.arange(s_in)
    eye_n = np.eye(n, dtype=np.float32)
    mats = []
    for a in range(4):
        ra = (u[None, :] == (2 * i[:, None] + a - 1)).astype(np.float32)  # [s_out, s_in]
        for b in range(4):
            rb = (u[None, :] == (2 * i[:, None] + b - 1)).astype(np.float32)
            sel = np.einsum("iu,jv->ijuv", ra, rb).reshape(s_out * s_out, s_in * s_in)
            mats.append(np.kron(eye_n, sel))
    return jnp.asarray(np.stack(mats), dtype=jnp.bfloat16)


def _conv_weight_cat(w_oihw, ic_pad=None):
    """PyTorch [OC, IC, 4, 4] -> [16*ICp, OC] bf16, row = (a*4+b)*ICp + c."""
    ic = w_oihw.shape[1]
    w = jnp.transpose(w_oihw, (2, 3, 1, 0))                    # [4, 4, IC, OC]
    if ic_pad is not None and ic_pad > ic:
        w = jnp.pad(w, ((0, 0), (0, 0), (0, ic_pad - ic), (0, 0)))
        ic = ic_pad
    return w.reshape(16 * ic, w.shape[-1]).astype(jnp.bfloat16)


def prepack(params, n):
    """Build all constant kernel inputs once (outside the jitted forward).
    NOTE: the selection matrices are block-diagonal over the batch, so a new
    batch size requires re-prepacking (trivial, one-time)."""
    c1, c2, c3 = NDF, NDF * 2, NDF * 4
    w1 = jnp.transpose(params["w1"], (2, 3, 1, 0)).reshape(16, c1)
    w1 = jnp.pad(w1, ((0, 0), (0, C1P - c1))).astype(jnp.bfloat16)       # [16, 128]
    return {
        "w1": w1,
        "g1": jnp.pad(params["g1"], (0, C1P - c1)).reshape(1, C1P).astype(jnp.float32),
        "b1": jnp.pad(params["b1"], (0, C1P - c1)).reshape(1, C1P).astype(jnp.float32),
        "t2": _im2col_selectors(n, 16, 8),                               # [16, n*64, n*256]
        "w2": _conv_weight_cat(params["w2"], ic_pad=C1P),                # [2048, 128]
        "g2": params["g2"].reshape(1, c2).astype(jnp.float32),
        "b2": params["b2"].reshape(1, c2).astype(jnp.float32),
        "t3": _im2col_selectors(n, 8, 4),                                # [16, n*16, n*64]
        "w3": _conv_weight_cat(params["w3"]),                            # [2048, 256]
        "g3": params["g3"].reshape(1, c3).astype(jnp.float32),
        "b3": params["b3"].reshape(1, c3).astype(jnp.float32),
        "w4": jnp.transpose(params["w4"][0], (1, 2, 0)).reshape(16, c3).astype(jnp.float32),
    }


# ------------------------------ forward pass --------------------------------

def discriminator_forward(packed, x_nchw):
    n, c, h, w = x_nchw.shape
    assert (c, h, w) == (1, IN_SPATIAL, IN_SPATIAL), (c, h, w)
    x = jnp.transpose(x_nchw, (0, 2, 3, 1)).astype(jnp.float32)          # NHWC
    xpad = jnp.pad(x, ((0, 0), (1, 1), (1, 1), (0, 0)))                  # [n, 34, 34, 1]
    # Layer-1 im2col (Cin=1): rows (n, i, j), 16 channels in (a, b) order.
    slabs = [xpad[:, a:a + 31:2, b:b + 31:2, :]
             for a in range(4) for b in range(4)]                        # each [n,16,16,1]
    x1 = jnp.concatenate(slabs, axis=-1).reshape(n * 16 * 16, 16).astype(jnp.bfloat16)
    out = _fused_forward_call(x1, packed, n)                             # [1, n]
    return out.reshape(n, 1, 1, 1)                                       # NCHW [n,1,1,1]


def init_params(key):
    ks = jax.random.split(key, 4)
    # TODO(synk): PyTorch training-mode BN also updates running_mean/var buffers
    # as a side effect; that state update does not affect the forward output
    # and is not modeled here.
    return {
        "w1": 0.02 * jax.random.normal(ks[0], (NDF, 1, 4, 4), jnp.float32),
        "w2": 0.02 * jax.random.normal(ks[1], (NDF * 2, NDF, 4, 4), jnp.float32),
        "w3": 0.02 * jax.random.normal(ks[2], (NDF * 4, NDF * 2, 4, 4), jnp.float32),
        "w4": 0.02 * jax.random.normal(ks[3], (1, NDF * 4, 4, 4), jnp.float32),
        "g1": jnp.ones((NDF,), jnp.float32), "b1": jnp.zeros((NDF,), jnp.float32),
        "g2": jnp.ones((NDF * 2,), jnp.float32), "b2": jnp.zeros((NDF * 2,), jnp.float32),
        "g3": jnp.ones((NDF * 4,), jnp.float32), "b3": jnp.zeros((NDF * 4,), jnp.float32),
    }


if __name__ == "__main__":
    key = jax.random.PRNGKey(0)
    pkey, xkey = jax.random.split(key)
    params = init_params(pkey)
    # DCGAN discriminator: 32x32 single-channel -> 16 -> 8 -> 4 -> 1x1 output.
    x = jax.random.normal(xkey, (2, 1, 32, 32), jnp.float32)

    packed = prepack(params, n=x.shape[0])      # one-time constant prepacking
    fwd = jax.jit(discriminator_forward)
    y = fwd(packed, x)
    jax.block_until_ready(y)

    assert y.shape == (2, 1, 1, 1), y.shape
    assert bool(jnp.all(jnp.isfinite(y)))
    assert bool(jnp.all((y >= 0.0) & (y <= 1.0)))
    print("KERNEL_OK")
</pallas_src>

<mosaic_0001>
module attributes {stable_mosaic.version = 11 : i64} {
  func.func @_disc_kernel(%arg0: i32, %arg1: memref<512x16xbf16, #tpu.memory_space<vmem>>, %arg2: memref<16x128xbf16, #tpu.memory_space<vmem>>, %arg3: memref<1x128xf32, #tpu.memory_space<vmem>>, %arg4: memref<1x128xf32, #tpu.memory_space<vmem>>, %arg5: memref<16x128x512xbf16, #tpu.memory_space<vmem>>, %arg6: memref<2048x128xbf16, #tpu.memory_space<vmem>>, %arg7: memref<1x128xf32, #tpu.memory_space<vmem>>, %arg8: memref<1x128xf32, #tpu.memory_space<vmem>>, %arg9: memref<16x32x128xbf16, #tpu.memory_space<vmem>>, %arg10: memref<2048x256xbf16, #tpu.memory_space<vmem>>, %arg11: memref<1x256xf32, #tpu.memory_space<vmem>>, %arg12: memref<1x256xf32, #tpu.memory_space<vmem>>, %arg13: memref<16x256xf32, #tpu.memory_space<vmem>>, %arg14: memref<1x2xf32, #tpu.memory_space<vmem>>) attributes {dimension_semantics = [#tpu.dimension_semantics<arbitrary>], iteration_bounds = array<i64: 1>, scalar_prefetch = 0 : i64, scratch_operands = 0 : i64, tpu.core_type = #tpu.core_type<tc>, window_params = [{pipeline_mode = #tpu.pipeline_mode<synchronous>, transform_indices = @transform_0, window_bounds = array<i64: 512, 16>}, {pipeline_mode = #tpu.pipeline_mode<synchronous>, transform_indices = @transform_1, window_bounds = array<i64: 16, 128>}, {pipeline_mode = #tpu.pipeline_mode<synchronous>, transform_indices = @transform_2, window_bounds = array<i64: 1, 128>}, {pipeline_mode = #tpu.pipeline_mode<synchronous>, transform_indices = @transform_3, window_bounds = array<i64: 1, 128>}, {pipeline_mode = #tpu.pipeline_mode<synchronous>, transform_indices = @transform_4, window_bounds = array<i64: 16, 128, 512>}, {pipeline_mode = #tpu.pipeline_mode<synchronous>, transform_indices = @transform_5, window_bounds = array<i64: 2048, 128>}, {pipeline_mode = #tpu.pipeline_mode<synchronous>, transform_indices = @transform_6, window_bounds = array<i64: 1, 128>}, {pipeline_mode = #tpu.pipeline_mode<synchronous>, transform_indices = @transform_7, window_bounds = array<i64: 1, 128>}, {pipeline_mode = #tpu.pipeline_mode<synchronous>, transform_indices = @transform_8, window_bounds = array<i64: 16, 32, 128>}, {pipeline_mode = #tpu.pipeline_mode<synchronous>, transform_indices = @transform_9, window_bounds = array<i64: 2048, 256>}, {pipeline_mode = #tpu.pipeline_mode<synchronous>, transform_indices = @transform_10, window_bounds = array<i64: 1, 256>}, {pipeline_mode = #tpu.pipeline_mode<synchronous>, transform_indices = @transform_11, window_bounds = array<i64: 1, 256>}, {pipeline_mode = #tpu.pipeline_mode<synchronous>, transform_indices = @transform_12, window_bounds = array<i64: 16, 256>}, {pipeline_mode = #tpu.pipeline_mode<synchronous>, transform_indices = @transform_13, window_bounds = array<i64: 1, 2>}]} {
    %c0 = arith.constant 0 : index
    %c0_0 = arith.constant 0 : index
    %0 = vector.load %arg1[%c0, %c0_0] : memref<512x16xbf16, #tpu.memory_space<vmem>>, vector<512x16xbf16>
    %c0_1 = arith.constant 0 : index
    %c0_2 = arith.constant 0 : index
    %1 = vector.load %arg2[%c0_1, %c0_2] : memref<16x128xbf16, #tpu.memory_space<vmem>>, vector<16x128xbf16>
    %cst = arith.constant dense<0.000000e+00> : vector<512x128xf32>
    %2 = tpu.matmul %0, %1, %cst {dimension_numbers = #tpu.dot_dimension_numbers<[1], [0], [0], [1], [0, 0, 1, 1], [], []>} : vector<512x16xbf16>, vector<16x128xbf16>, vector<512x128xf32> -> vector<512x128xf32>
    %c0_3 = arith.constant 0 : index
    %c0_4 = arith.constant 0 : index
    %3 = vector.load %arg3[%c0_3, %c0_4] : memref<1x128xf32, #tpu.memory_space<vmem>>, vector<1x128xf32>
    %c0_5 = arith.constant 0 : index
    %c0_6 = arith.constant 0 : index
    %4 = vector.load %arg4[%c0_5, %c0_6] : memref<1x128xf32, #tpu.memory_space<vmem>>, vector<1x128xf32>
    %5 = arith.mulf %2, %2 : vector<512x128xf32>
    %6 = tpu.concatenate %2, %5 in 1 : vector<512x128xf32>, vector<512x128xf32> -> vector<512x256xf32>
    %cst_7 = arith.constant dense<0.000000e+00> : vector<256xf32>
    %7 = vector.multi_reduction <add>, %6, %cst_7 [0] : vector<512x256xf32> to vector<256xf32>
    %8 = vector.shape_cast %7 : vector<256xf32> to vector<1x256xf32>
    %cst_8 = arith.constant 0.001953125 : f32
    %9 = vector.broadcast %cst_8 : f32 to vector<1x256xf32>
    %10 = arith.mulf %8, %9 : vector<1x256xf32>
    %11 = vector.extract_strided_slice %10 {offsets = [0, 0], sizes = [1, 128], strides = [1, 1]} : vector<1x256xf32> to vector<1x128xf32>
    %12 = vector.extract_strided_slice %10 {offsets = [0, 128], sizes = [1, 128], strides = [1, 1]} : vector<1x256xf32> to vector<1x128xf32>
    %13 = arith.mulf %11, %11 : vector<1x128xf32>
    %14 = arith.subf %12, %13 : vector<1x128xf32>
    %cst_9 = arith.constant 0.000000e+00 : f32
    %15 = vector.broadcast %cst_9 : f32 to vector<1x128xf32>
    %16 = arith.maximumf %14, %15 : vector<1x128xf32>
    %cst_10 = arith.constant 9.99999974E-6 : f32
    %17 = vector.broadcast %cst_10 : f32 to vector<1x128xf32>
    %18 = arith.addf %16, %17 : vector<1x128xf32>
    %19 = math.rsqrt %18 : vector<1x128xf32>
    %20 = arith.mulf %3, %19 : vector<1x128xf32>
    %21 = arith.mulf %11, %20 : vector<1x128xf32>
    %22 = arith.subf %4, %21 : vector<1x128xf32>
    %23 = vector.broadcast %20 : vector<1x128xf32> to vector<512x128xf32>
    %24 = arith.mulf %2, %23 : vector<512x128xf32>
    %25 = vector.broadcast %22 : vector<1x128xf32> to vector<512x128xf32>
    %26 = arith.addf %24, %25 : vector<512x128xf32>
    %cst_11 = arith.constant 0.000000e+00 : f32
    %27 = vector.broadcast %cst_11 : f32 to vector<512x128xf32>
    %28 = arith.cmpf oge, %26, %27 : vector<512x128xf32>
    %cst_12 = arith.constant 2.000000e-01 : f32
    %29 = vector.broadcast %cst_12 : f32 to vector<512x128xf32>
    %30 = arith.mulf %29, %26 : vector<512x128xf32>
    %31 = arith.select %28, %26, %30 : vector<512x128xi1>, vector<512x128xf32>
    %32 = arith.truncf %31 : vector<512x128xf32> to vector<512x128xbf16>
    %c0_13 = arith.constant 0 : index
    %c0_14 = arith.constant 0 : index
    %c0_15 = arith.constant 0 : index
    %33 = vector.load %arg5[%c0_13, %c0_14, %c0_15] : memref<16x128x512xbf16, #tpu.memory_space<vmem>>, vector<1x128x512xbf16>
    %34 = vector.shape_cast %33 : vector<1x128x512xbf16> to vector<128x512xbf16>
    %cst_16 = arith.constant dense<0.000000e+00> : vector<128x128xf32>
    %35 = tpu.matmul %34, %32, %cst_16 {dimension_numbers = #tpu.dot_dimension_numbers<[1], [0], [0], [1], [0, 0, 1, 1], [], []>} : vector<128x512xbf16>, vector<512x128xbf16>, vector<128x128xf32> -> vector<128x128xf32>
    %36 = arith.truncf %35 : vector<128x128xf32> to vector<128x128xbf16>
    %c1 = arith.constant 1 : index
    %c0_17 = arith.constant 0 : index
    %c0_18 = arith.constant 0 : index
    %37 = vector.load %arg5[%c1, %c0_17, %c0_18] : memref<16x128x512xbf16, #tpu.memory_space<vmem>>, vector<1x128x512xbf16>
    %38 = vector.shape_cast %37 : vector<1x128x512xbf16> to vector<128x512xbf16>
    %cst_19 = arith.constant dense<0.000000e+00> : vector<128x128xf32>
    %39 = tpu.matmul %38, %32, %cst_19 {dimension_numbers = #tpu.dot_dimension_numbers<[1], [0], [0], [1], [0, 0, 1, 1], [], []>} : vector<128x512xbf16>, vector<512x128xbf16>, vector<128x128xf32> -> vector<128x128xf32>
    %40 = arith.truncf %39 : vector<128x128xf32> to vector<128x128xbf16>
    %c2 = arith.constant 2 : index
    %c0_20 = arith.constant 0 : index
    %c0_21 = arith.constant 0 : index
    %41 = vector.load %arg5[%c2, %c0_20, %c0_21] : memref<16x128x512xbf16, #tpu.memory_space<vmem>>, vector<1x128x512xbf16>
    %42 = vector.shape_cast %41 : vector<1x128x512xbf16> to vector<128x512xbf16>
    %cst_22 = arith.constant dense<0.000000e+00> : vector<128x128xf32>
    %43 = tpu.matmul %42, %32, %cst_22 {dimension_numbers = #tpu.dot_dimension_numbers<[1], [0], [0], [1], [0, 0, 1, 1], [], []>} : vector<128x512xbf16>, vector<512x128xbf16>, vector<128x128xf32> -> vector<128x128xf32>
    %44 = arith.truncf %43 : vector<128x128xf32> to vector<128x128xbf16>
    %c3 = arith.constant 3 : index
    %c0_23 = arith.constant 0 : index
    %c0_24 = arith.constant 0 : index
    %45 = vector.load %arg5[%c3, %c0_23, %c0_24] : memref<16x128x512xbf16, #tpu.memory_space<vmem>>, vector<1x128x512xbf16>
    %46 = vector.shape_cast %45 : vector<1x128x512xbf16> to vector<128x512xbf16>
    %cst_25 = arith.constant dense<0.000000e+00> : vector<128x128xf32>
    %47 = tpu.matmul %46, %32, %cst_25 {dimension_numbers = #tpu.dot_dimension_numbers<[1], [0], [0], [1], [0, 0, 1, 1], [], []>} : vector<128x512xbf16>, vector<512x128xbf16>, vector<128x128xf32> -> vector<128x128xf32>
    %48 = arith.truncf %47 : vector<128x128xf32> to vector<128x128xbf16>
    %c4 = arith.constant 4 : index
    %c0_26 = arith.constant 0 : index
    %c0_27 = arith.constant 0 : index
    %49 = vector.load %arg5[%c4, %c0_26, %c0_27] : memref<16x128x512xbf16, #tpu.memory_space<vmem>>, vector<1x128x512xbf16>
    %50 = vector.shape_cast %49 : vector<1x128x512xbf16> to vector<128x512xbf16>
    %cst_28 = arith.constant dense<0.000000e+00> : vector<128x128xf32>
    %51 = tpu.matmul %50, %32, %cst_28 {dimension_numbers = #tpu.dot_dimension_numbers<[1], [0], [0], [1], [0, 0, 1, 1], [], []>} : vector<128x512xbf16>, vector<512x128xbf16>, vector<128x128xf32> -> vector<128x128xf32>
    %52 = arith.truncf %51 : vector<128x128xf32> to vector<128x128xbf16>
    %c5 = arith.constant 5 : index
    %c0_29 = arith.constant 0 : index
    %c0_30 = arith.constant 0 : index
    %53 = vector.load %arg5[%c5, %c0_29, %c0_30] : memref<16x128x512xbf16, #tpu.memory_space<vmem>>, vector<1x128x512xbf16>
    %54 = vector.shape_cast %53 : vector<1x128x512xbf16> to vector<128x512xbf16>
    %cst_31 = arith.constant dense<0.000000e+00> : vector<128x128xf32>
    %55 = tpu.matmul %54, %32, %cst_31 {dimension_numbers = #tpu.dot_dimension_numbers<[1], [0], [0], [1], [0, 0, 1, 1], [], []>} : vector<128x512xbf16>, vector<512x128xbf16>, vector<128x128xf32> -> vector<128x128xf32>
    %56 = arith.truncf %55 : vector<128x128xf32> to vector<128x128xbf16>
    %c6 = arith.constant 6 : index
    %c0_32 = arith.constant 0 : index
    %c0_33 = arith.constant 0 : index
    %57 = vector.load %arg5[%c6, %c0_32, %c0_33] : memref<16x128x512xbf16, #tpu.memory_space<vmem>>, vector<1x128x512xbf16>
    %58 = vector.shape_cast %57 : vector<1x128x512xbf16> to vector<128x512xbf16>
    %cst_34 = arith.constant dense<0.000000e+00> : vector<128x128xf32>
    %59 = tpu.matmul %58, %32, %cst_34 {dimension_numbers = #tpu.dot_dimension_numbers<[1], [0], [0], [1], [0, 0, 1, 1], [], []>} : vector<128x512xbf16>, vector<512x128xbf16>, vector<128x128xf32> -> vector<128x128xf32>
    %60 = arith.truncf %59 : vector<128x128xf32> to vector<128x128xbf16>
    %c7 = arith.constant 7 : index
    %c0_35 = arith.constant 0 : index
    %c0_36 = arith.constant 0 : index
    %61 = vector.load %arg5[%c7, %c0_35, %c0_36] : memref<16x128x512xbf16, #tpu.memory_space<vmem>>, vector<1x128x512xbf16>
    %62 = vector.shape_cast %61 : vector<1x128x512xbf16> to vector<128x512xbf16>
    %cst_37 = arith.constant dense<0.000000e+00> : vector<128x128xf32>
    %63 = tpu.matmul %62, %32, %cst_37 {dimension_numbers = #tpu.dot_dimension_numbers<[1], [0], [0], [1], [0, 0, 1, 1], [], []>} : vector<128x512xbf16>, vector<512x128xbf16>, vector<128x128xf32> -> vector<128x128xf32>
    %64 = arith.truncf %63 : vector<128x128xf32> to vector<128x128xbf16>
    %c8 = arith.constant 8 : index
    %c0_38 = arith.constant 0 : index
    %c0_39 = arith.constant 0 : index
    %65 = vector.load %arg5[%c8, %c0_38, %c0_39] : memref<16x128x512xbf16, #tpu.memory_space<vmem>>, vector<1x128x512xbf16>
    %66 = vector.shape_cast %65 : vector<1x128x512xbf16> to vector<128x512xbf16>
    %cst_40 = arith.constant dense<0.000000e+00> : vector<128x128xf32>
    %67 = tpu.matmul %66, %32, %cst_40 {dimension_numbers = #tpu.dot_dimension_numbers<[1], [0], [0], [1], [0, 0, 1, 1], [], []>} : vector<128x512xbf16>, vector<512x128xbf16>, vector<128x128xf32> -> vector<128x128xf32>
    %68 = arith.truncf %67 : vector<128x128xf32> to vector<128x128xbf16>
    %c9 = arith.constant 9 : index
    %c0_41 = arith.constant 0 : index
    %c0_42 = arith.constant 0 : index
    %69 = vector.load %arg5[%c9, %c0_41, %c0_42] : memref<16x128x512xbf16, #tpu.memory_space<vmem>>, vector<1x128x512xbf16>
    %70 = vector.shape_cast %69 : vector<1x128x512xbf16> to vector<128x512xbf16>
    %cst_43 = arith.constant dense<0.000000e+00> : vector<128x128xf32>
    %71 = tpu.matmul %70, %32, %cst_43 {dimension_numbers = #tpu.dot_dimension_numbers<[1], [0], [0], [1], [0, 0, 1, 1], [], []>} : vector<128x512xbf16>, vector<512x128xbf16>, vector<128x128xf32> -> vector<128x128xf32>
    %72 = arith.truncf %71 : vector<128x128xf32> to vector<128x128xbf16>
    %c10 = arith.constant 10 : index
    %c0_44 = arith.constant 0 : index
    %c0_45 = arith.constant 0 : index
    %73 = vector.load %arg5[%c10, %c0_44, %c0_45] : memref<16x128x512xbf16, #tpu.memory_space<vmem>>, vector<1x128x512xbf16>
    %74 = vector.shape_cast %73 : vector<1x128x512xbf16> to vector<128x512xbf16>
    %cst_46 = arith.constant dense<0.000000e+00> : vector<128x128xf32>
    %75 = tpu.matmul %74, %32, %cst_46 {dimension_numbers = #tpu.dot_dimension_numbers<[1], [0], [0], [1], [0, 0, 1, 1], [], []>} : vector<128x512xbf16>, vector<512x128xbf16>, vector<128x128xf32> -> vector<128x128xf32>
    %76 = arith.truncf %75 : vector<128x128xf32> to vector<128x128xbf16>
    %c11 = arith.constant 11 : index
    %c0_47 = arith.constant 0 : index
    %c0_48 = arith.constant 0 : index
    %77 = vector.load %arg5[%c11, %c0_47, %c0_48] : memref<16x128x512xbf16, #tpu.memory_space<vmem>>, vector<1x128x512xbf16>
    %78 = vector.shape_cast %77 : vector<1x128x512xbf16> to vector<128x512xbf16>
    %cst_49 = arith.constant dense<0.000000e+00> : vector<128x128xf32>
    %79 = tpu.matmul %78, %32, %cst_49 {dimension_numbers = #tpu.dot_dimension_numbers<[1], [0], [0], [1], [0, 0, 1, 1], [], []>} : vector<128x512xbf16>, vector<512x128xbf16>, vector<128x128xf32> -> vector<128x128xf32>
    %80 = arith.truncf %79 : vector<128x128xf32> to vector<128x128xbf16>
    %c12 = arith.constant 12 : index
    %c0_50 = arith.constant 0 : index
    %c0_51 = arith.constant 0 : index
    %81 = vector.load %arg5[%c12, %c0_50, %c0_51] : memref<16x128x512xbf16, #tpu.memory_space<vmem>>, vector<1x128x512xbf16>
    %82 = vector.shape_cast %81 : vector<1x128x512xbf16> to vector<128x512xbf16>
    %cst_52 = arith.constant dense<0.000000e+00> : vector<128x128xf32>
    %83 = tpu.matmul %82, %32, %cst_52 {dimension_numbers = #tpu.dot_dimension_numbers<[1], [0], [0], [1], [0, 0, 1, 1], [], []>} : vector<128x512xbf16>, vector<512x128xbf16>, vector<128x128xf32> -> vector<128x128xf32>
    %84 = arith.truncf %83 : vector<128x128xf32> to vector<128x128xbf16>
    %c13 = arith.constant 13 : index
    %c0_53 = arith.constant 0 : index
    %c0_54 = arith.constant 0 : index
    %85 = vector.load %arg5[%c13, %c0_53, %c0_54] : memref<16x128x512xbf16, #tpu.memory_space<vmem>>, vector<1x128x512xbf16>
    %86 = vector.shape_cast %85 : vector<1x128x512xbf16> to vector<128x512xbf16>
    %cst_55 = arith.constant dense<0.000000e+00> : vector<128x128xf32>
    %87 = tpu.matmul %86, %32, %cst_55 {dimension_numbers = #tpu.dot_dimension_numbers<[1], [0], [0], [1], [0, 0, 1, 1], [], []>} : vector<128x512xbf16>, vector<512x128xbf16>, vector<128x128xf32> -> vector<128x128xf32>
    %88 = arith.truncf %87 : vector<128x128xf32> to vector<128x128xbf16>
    %c14 = arith.constant 14 : index
    %c0_56 = arith.constant 0 : index
    %c0_57 = arith.constant 0 : index
    %89 = vector.load %arg5[%c14, %c0_56, %c0_57] : memref<16x128x512xbf16, #tpu.memory_space<vmem>>, vector<1x128x512xbf16>
    %90 = vector.shape_cast %89 : vector<1x128x512xbf16> to vector<128x512xbf16>
    %cst_58 = arith.constant dense<0.000000e+00> : vector<128x128xf32>
    %91 = tpu.matmul %90, %32, %cst_58 {dimension_numbers = #tpu.dot_dimension_numbers<[1], [0], [0], [1], [0, 0, 1, 1], [], []>} : vector<128x512xbf16>, vector<512x128xbf16>, vector<128x128xf32> -> vector<128x128xf32>
    %92 = arith.truncf %91 : vector<128x128xf32> to vector<128x128xbf16>
    %c15 = arith.constant 15 : index
    %c0_59 = arith.constant 0 : index
    %c0_60 = arith.constant 0 : index
    %93 = vector.load %arg5[%c15, %c0_59, %c0_60] : memref<16x128x512xbf16, #tpu.memory_space<vmem>>, vector<1x128x512xbf16>
    %94 = vector.shape_cast %93 : vector<1x128x512xbf16> to vector<128x512xbf16>
    %cst_61 = arith.constant dense<0.000000e+00> : vector<128x128xf32>
    %95 = tpu.matmul %94, %32, %cst_61 {dimension_numbers = #tpu.dot_dimension_numbers<[1], [0], [0], [1], [0, 0, 1, 1], [], []>} : vector<128x512xbf16>, vector<512x128xbf16>, vector<128x128xf32> -> vector<128x128xf32>
    %96 = arith.truncf %95 : vector<128x128xf32> to vector<128x128xbf16>
    %97 = tpu.concatenate %36, %40, %44, %48, %52, %56, %60, %64, %68, %72, %76, %80, %84, %88, %92, %96 in 1 : vector<128x128xbf16>, vector<128x128xbf16>, vector<128x128xbf16>, vector<128x128xbf16>, vector<128x128xbf16>, vector<128x128xbf16>, vector<128x128xbf16>, vector<128x128xbf16>, vector<128x128xbf16>, vector<128x128xbf16>, vector<128x128xbf16>, vector<128x128xbf16>, vector<128x128xbf16>, vector<128x128xbf16>, vector<128x128xbf16>, vector<128x128xbf16> -> vector<128x2048xbf16>
    %c0_62 = arith.constant 0 : index
    %c0_63 = arith.constant 0 : index
    %98 = vector.load %arg6[%c0_62, %c0_63] : memref<2048x128xbf16, #tpu.memory_space<vmem>>, vector<2048x128xbf16>
    %cst_64 = arith.constant dense<0.000000e+00> : vector<128x128xf32>
    %99 = tpu.matmul %97, %98, %cst_64 {dimension_numbers = #tpu.dot_dimension_numbers<[1], [0], [0], [1], [0, 0, 1, 1], [], []>} : vector<128x2048xbf16>, vector<2048x128xbf16>, vector<128x128xf32> -> vector<128x128xf32>
    %c0_65 = arith.constant 0 : index
    %c0_66 = arith.constant 0 : index
    %100 = vector.load %arg7[%c0_65, %c0_66] : memref<1x128xf32, #tpu.memory_space<vmem>>, vector<1x128xf32>
    %c0_67 = arith.constant 0 : index
    %c0_68 = arith.constant 0 : index
    %101 = vector.load %arg8[%c0_67, %c0_68] : memref<1x128xf32, #tpu.memory_space<vmem>>, vector<1x128xf32>
    %102 = arith.mulf %99, %99 : vector<128x128xf32>
    %103 = tpu.concatenate %99, %102 in 1 : vector<128x128xf32>, vector<128x128xf32> -> vector<128x256xf32>
    %cst_69 = arith.constant dense<0.000000e+00> : vector<256xf32>
    %104 = vector.multi_reduction <add>, %103, %cst_69 [0] : vector<128x256xf32> to vector<256xf32>
    %105 = vector.shape_cast %104 : vector<256xf32> to vector<1x256xf32>
    %cst_70 = arith.constant 7.812500e-03 : f32
    %106 = vector.broadcast %cst_70 : f32 to vector<1x256xf32>
    %107 = arith.mulf %105, %106 : vector<1x256xf32>
    %108 = vector.extract_strided_slice %107 {offsets = [0, 0], sizes = [1, 128], strides = [1, 1]} : vector<1x256xf32> to vector<1x128xf32>
    %109 = vector.extract_strided_slice %107 {offsets = [0, 128], sizes = [1, 128], strides = [1, 1]} : vector<1x256xf32> to vector<1x128xf32>
    %110 = arith.mulf %108, %108 : vector<1x128xf32>
    %111 = arith.subf %109, %110 : vector<1x128xf32>
    %cst_71 = arith.constant 0.000000e+00 : f32
    %112 = vector.broadcast %cst_71 : f32 to vector<1x128xf32>
    %113 = arith.maximumf %111, %112 : vector<1x128xf32>
    %cst_72 = arith.constant 9.99999974E-6 : f32
    %114 = vector.broadcast %cst_72 : f32 to vector<1x128xf32>
    %115 = arith.addf %113, %114 : vector<1x128xf32>
    %116 = math.rsqrt %115 : vector<1x128xf32>
    %117 = arith.mulf %100, %116 : vector<1x128xf32>
    %118 = arith.mulf %108, %117 : vector<1x128xf32>
    %119 = arith.subf %101, %118 : vector<1x128xf32>
    %120 = vector.broadcast %117 : vector<1x128xf32> to vector<128x128xf32>
    %121 = arith.mulf %99, %120 : vector<128x128xf32>
    %122 = vector.broadcast %119 : vector<1x128xf32> to vector<128x128xf32>
    %123 = arith.addf %121, %122 : vector<128x128xf32>
    %cst_73 = arith.constant 0.000000e+00 : f32
    %124 = vector.broadcast %cst_73 : f32 to vector<128x128xf32>
    %125 = arith.cmpf oge, %123, %124 : vector<128x128xf32>
    %cst_74 = arith.constant 2.000000e-01 : f32
    %126 = vector.broadcast %cst_74 : f32 to vector<128x128xf32>
    %127 = arith.mulf %126, %123 : vector<128x128xf32>
    %128 = arith.select %125, %123, %127 : vector<128x128xi1>, vector<128x128xf32>
    %129 = arith.truncf %128 : vector<128x128xf32> to vector<128x128xbf16>
    %c0_75 = arith.constant 0 : index
    %c0_76 = arith.constant 0 : index
    %c0_77 = arith.constant 0 : index
    %130 = vector.load %arg9[%c0_75, %c0_76, %c0_77] : memref<16x32x128xbf16, #tpu.memory_space<vmem>>, vector<1x32x128xbf16>
    %131 = vector.shape_cast %130 : vector<1x32x128xbf16> to vector<32x128xbf16>
    %cst_78 = arith.constant dense<0.000000e+00> : vector<32x128xf32>
    %132 = tpu.matmul %131, %129, %cst_78 {dimension_numbers = #tpu.dot_dimension_numbers<[1], [0], [0], [1], [0, 0, 1, 1], [], []>} : vector<32x128xbf16>, vector<128x128xbf16>, vector<32x128xf32> -> vector<32x128xf32>
    %133 = arith.truncf %132 : vector<32x128xf32> to vector<32x128xbf16>
    %c1_79 = arith.constant 1 : index
    %c0_80 = arith.constant 0 : index
    %c0_81 = arith.constant 0 : index
    %134 = vector.load %arg9[%c1_79, %c0_80, %c0_81] : memref<16x32x128xbf16, #tpu.memory_space<vmem>>, vector<1x32x128xbf16>
    %135 = vector.shape_cast %134 : vector<1x32x128xbf16> to vector<32x128xbf16>
    %cst_82 = arith.constant dense<0.000000e+00> : vector<32x128xf32>
    %136 = tpu.matmul %135, %129, %cst_82 {dimension_numbers = #tpu.dot_dimension_numbers<[1], [0], [0], [1], [0, 0, 1, 1], [], []>} : vector<32x128xbf16>, vector<128x128xbf16>, vector<32x128xf32> -> vector<32x128xf32>
    %137 = arith.truncf %136 : vector<32x128xf32> to vector<32x128xbf16>
    %c2_83 = arith.constant 2 : index
    %c0_84 = arith.constant 0 : index
    %c0_85 = arith.constant 0 : index
    %138 = vector.load %arg9[%c2_83, %c0_84, %c0_85] : memref<16x32x128xbf16, #tpu.memory_space<vmem>>, vector<1x32x128xbf16>
    %139 = vector.shape_cast %138 : vector<1x32x128xbf16> to vector<32x128xbf16>
    %cst_86 = arith.constant dense<0.000000e+00> : vector<32x128xf32>
    %140 = tpu.matmul %139, %129, %cst_86 {dimension_numbers = #tpu.dot_dimension_numbers<[1], [0], [0], [1], [0, 0, 1, 1], [], []>} : vector<32x128xbf16>, vector<128x128xbf16>, vector<32x128xf32> -> vector<32x128xf32>
    %141 = arith.truncf %140 : vector<32x128xf32> to vector<32x128xbf16>
    %c3_87 = arith.constant 3 : index
    %c0_88 = arith.constant 0 : index
    %c0_89 = arith.constant 0 : index
    %142 = vector.load %arg9[%c3_87, %c0_88, %c0_89] : memref<16x32x128xbf16, #tpu.memory_space<vmem>>, vector<1x32x128xbf16>
    %143 = vector.shape_cast %142 : vector<1x32x128xbf16> to vector<32x128xbf16>
    %cst_90 = arith.constant dense<0.000000e+00> : vector<32x128xf32>
    %144 = tpu.matmul %143, %129, %cst_90 {dimension_numbers = #tpu.dot_dimension_numbers<[1], [0], [0], [1], [0, 0, 1, 1], [], []>} : vector<32x128xbf16>, vector<128x128xbf16>, vector<32x128xf32> -> vector<32x128xf32>
    %145 = arith.truncf %144 : vector<32x128xf32> to vector<32x128xbf16>
    %c4_91 = arith.constant 4 : index
    %c0_92 = arith.constant 0 : index
    %c0_93 = arith.constant 0 : index
    %146 = vector.load %arg9[%c4_91, %c0_92, %c0_93] : memref<16x32x128xbf16, #tpu.memory_space<vmem>>, vector<1x32x128xbf16>
    %147 = vector.shape_cast %146 : vector<1x32x128xbf16> to vector<32x128xbf16>
    %cst_94 = arith.constant dense<0.000000e+00> : vector<32x128xf32>
    %148 = tpu.matmul %147, %129, %cst_94 {dimension_numbers = #tpu.dot_dimension_numbers<[1], [0], [0], [1], [0, 0, 1, 1], [], []>} : vector<32x128xbf16>, vector<128x128xbf16>, vector<32x128xf32> -> vector<32x128xf32>
    %149 = arith.truncf %148 : vector<32x128xf32> to vector<32x128xbf16>
    %c5_95 = arith.constant 5 : index
    %c0_96 = arith.constant 0 : index
    %c0_97 = arith.constant 0 : index
    %150 = vector.load %arg9[%c5_95, %c0_96, %c0_97] : memref<16x32x128xbf16, #tpu.memory_space<vmem>>, vector<1x32x128xbf16>
    %151 = vector.shape_cast %150 : vector<1x32x128xbf16> to vector<32x128xbf16>
    %cst_98 = arith.constant dense<0.000000e+00> : vector<32x128xf32>
    %152 = tpu.matmul %151, %129, %cst_98 {dimension_numbers = #tpu.dot_dimension_numbers<[1], [0], [0], [1], [0, 0, 1, 1], [], []>} : vector<32x128xbf16>, vector<128x128xbf16>, vector<32x128xf32> -> vector<32x128xf32>
    %153 = arith.truncf %152 : vector<32x128xf32> to vector<32x128xbf16>
    %c6_99 = arith.constant 6 : index
    %c0_100 = arith.constant 0 : index
    %c0_101 = arith.constant 0 : index
    %154 = vector.load %arg9[%c6_99, %c0_100, %c0_101] : memref<16x32x128xbf16, #tpu.memory_space<vmem>>, vector<1x32x128xbf16>
    %155 = vector.shape_cast %154 : vector<1x32x128xbf16> to vector<32x128xbf16>
    %cst_102 = arith.constant dense<0.000000e+00> : vector<32x128xf32>
    %156 = tpu.matmul %155, %129, %cst_102 {dimension_numbers = #tpu.dot_dimension_numbers<[1], [0], [0], [1], [0, 0, 1, 1], [], []>} : vector<32x128xbf16>, vector<128x128xbf16>, vector<32x128xf32> -> vector<32x128xf32>
    %157 = arith.truncf %156 : vector<32x128xf32> to vector<32x128xbf16>
    %c7_103 = arith.constant 7 : index
    %c0_104 = arith.constant 0 : index
    %c0_105 = arith.constant 0 : index
    %158 = vector.load %arg9[%c7_103, %c0_104, %c0_105] : memref<16x32x128xbf16, #tpu.memory_space<vmem>>, vector<1x32x128xbf16>
    %159 = vector.shape_cast %158 : vector<1x32x128xbf16> to vector<32x128xbf16>
    %cst_106 = arith.constant dense<0.000000e+00> : vector<32x128xf32>
    %160 = tpu.matmul %159, %129, %cst_106 {dimension_numbers = #tpu.dot_dimension_numbers<[1], [0], [0], [1], [0, 0, 1, 1], [], []>} : vector<32x128xbf16>, vector<128x128xbf16>, vector<32x128xf32> -> vector<32x128xf32>
    %161 = arith.truncf %160 : vector<32x128xf32> to vector<32x128xbf16>
    %c8_107 = arith.constant 8 : index
    %c0_108 = arith.constant 0 : index
    %c0_109 = arith.constant 0 : index
    %162 = vector.load %arg9[%c8_107, %c0_108, %c0_109] : memref<16x32x128xbf16, #tpu.memory_space<vmem>>, vector<1x32x128xbf16>
    %163 = vector.shape_cast %162 : vector<1x32x128xbf16> to vector<32x128xbf16>
    %cst_110 = arith.constant dense<0.000000e+00> : vector<32x128xf32>
    %164 = tpu.matmul %163, %129, %cst_110 {dimension_numbers = #tpu.dot_dimension_numbers<[1], [0], [0], [1], [0, 0, 1, 1], [], []>} : vector<32x128xbf16>, vector<128x128xbf16>, vector<32x128xf32> -> vector<32x128xf32>
    %165 = arith.truncf %164 : vector<32x128xf32> to vector<32x128xbf16>
    %c9_111 = arith.constant 9 : index
    %c0_112 = arith.constant 0 : index
    %c0_113 = arith.constant 0 : index
    %166 = vector.load %arg9[%c9_111, %c0_112, %c0_113] : memref<16x32x128xbf16, #tpu.memory_space<vmem>>, vector<1x32x128xbf16>
    %167 = vector.shape_cast %166 : vector<1x32x128xbf16> to vector<32x128xbf16>
    %cst_114 = arith.constant dense<0.000000e+00> : vector<32x128xf32>
    %168 = tpu.matmul %167, %129, %cst_114 {dimension_numbers = #tpu.dot_dimension_numbers<[1], [0], [0], [1], [0, 0, 1, 1], [], []>} : vector<32x128xbf16>, vector<128x128xbf16>, vector<32x128xf32> -> vector<32x128xf32>
    %169 = arith.truncf %168 : vector<32x128xf32> to vector<32x128xbf16>
    %c10_115 = arith.constant 10 : index
    %c0_116 = arith.constant 0 : index
    %c0_117 = arith.constant 0 : index
    %170 = vector.load %arg9[%c10_115, %c0_116, %c0_117] : memref<16x32x128xbf16, #tpu.memory_space<vmem>>, vector<1x32x128xbf16>
    %171 = vector.shape_cast %170 : vector<1x32x128xbf16> to vector<32x128xbf16>
    %cst_118 = arith.constant dense<0.000000e+00> : vector<32x128xf32>
    %172 = tpu.matmul %171, %129, %cst_118 {dimension_numbers = #tpu.dot_dimension_numbers<[1], [0], [0], [1], [0, 0, 1, 1], [], []>} : vector<32x128xbf16>, vector<128x128xbf16>, vector<32x128xf32> -> vector<32x128xf32>
    %173 = arith.truncf %172 : vector<32x128xf32> to vector<32x128xbf16>
    %c11_119 = arith.constant 11 : index
    %c0_120 = arith.constant 0 : index
    %c0_121 = arith.constant 0 : index
    %174 = vector.load %arg9[%c11_119, %c0_120, %c0_121] : memref<16x32x128xbf16, #tpu.memory_space<vmem>>, vector<1x32x128xbf16>
    %175 = vector.shape_cast %174 : vector<1x32x128xbf16> to vector<32x128xbf16>
    %cst_122 = arith.constant dense<0.000000e+00> : vector<32x128xf32>
    %176 = tpu.matmul %175, %129, %cst_122 {dimension_numbers = #tpu.dot_dimension_numbers<[1], [0], [0], [1], [0, 0, 1, 1], [], []>} : vector<32x128xbf16>, vector<128x128xbf16>, vector<32x128xf32> -> vector<32x128xf32>
    %177 = arith.truncf %176 : vector<32x128xf32> to vector<32x128xbf16>
    %c12_123 = arith.constant 12 : index
    %c0_124 = arith.constant 0 : index
    %c0_125 = arith.constant 0 : index
    %178 = vector.load %arg9[%c12_123, %c0_124, %c0_125] : memref<16x32x128xbf16, #tpu.memory_space<vmem>>, vector<1x32x128xbf16>
    %179 = vector.shape_cast %178 : vector<1x32x128xbf16> to vector<32x128xbf16>
    %cst_126 = arith.constant dense<0.000000e+00> : vector<32x128xf32>
    %180 = tpu.matmul %179, %129, %cst_126 {dimension_numbers = #tpu.dot_dimension_numbers<[1], [0], [0], [1], [0, 0, 1, 1], [], []>} : vector<32x128xbf16>, vector<128x128xbf16>, vector<32x128xf32> -> vector<32x128xf32>
    %181 = arith.truncf %180 : vector<32x128xf32> to vector<32x128xbf16>
    %c13_127 = arith.constant 13 : index
    %c0_128 = arith.constant 0 : index
    %c0_129 = arith.constant 0 : index
    %182 = vector.load %arg9[%c13_127, %c0_128, %c0_129] : memref<16x32x128xbf16, #tpu.memory_space<vmem>>, vector<1x32x128xbf16>
    %183 = vector.shape_cast %182 : vector<1x32x128xbf16> to vector<32x128xbf16>
    %cst_130 = arith.constant dense<0.000000e+00> : vector<32x128xf32>
    %184 = tpu.matmul %183, %129, %cst_130 {dimension_numbers = #tpu.dot_dimension_numbers<[1], [0], [0], [1], [0, 0, 1, 1], [], []>} : vector<32x128xbf16>, vector<128x128xbf16>, vector<32x128xf32> -> vector<32x128xf32>
    %185 = arith.truncf %184 : vector<32x128xf32> to vector<32x128xbf16>
    %c14_131 = arith.constant 14 : index
    %c0_132 = arith.constant 0 : index
    %c0_133 = arith.constant 0 : index
    %186 = vector.load %arg9[%c14_131, %c0_132, %c0_133] : memref<16x32x128xbf16, #tpu.memory_space<vmem>>, vector<1x32x128xbf16>
    %187 = vector.shape_cast %186 : vector<1x32x128xbf16> to vector<32x128xbf16>
    %cst_134 = arith.constant dense<0.000000e+00> : vector<32x128xf32>
    %188 = tpu.matmul %187, %129, %cst_134 {dimension_numbers = #tpu.dot_dimension_numbers<[1], [0], [0], [1], [0, 0, 1, 1], [], []>} : vector<32x128xbf16>, vector<128x128xbf16>, vector<32x128xf32> -> vector<32x128xf32>
    %189 = arith.truncf %188 : vector<32x128xf32> to vector<32x128xbf16>
    %c15_135 = arith.constant 15 : index
    %c0_136 = arith.constant 0 : index
    %c0_137 = arith.constant 0 : index
    %190 = vector.load %arg9[%c15_135, %c0_136, %c0_137] : memref<16x32x128xbf16, #tpu.memory_space<vmem>>, vector<1x32x128xbf16>
    %191 = vector.shape_cast %190 : vector<1x32x128xbf16> to vector<32x128xbf16>
    %cst_138 = arith.constant dense<0.000000e+00> : vector<32x128xf32>
    %192 = tpu.matmul %191, %129, %cst_138 {dimension_numbers = #tpu.dot_dimension_numbers<[1], [0], [0], [1], [0, 0, 1, 1], [], []>} : vector<32x128xbf16>, vector<128x128xbf16>, vector<32x128xf32> -> vector<32x128xf32>
    %193 = arith.truncf %192 : vector<32x128xf32> to vector<32x128xbf16>
    %194 = tpu.concatenate %133, %137, %141, %145, %149, %153, %157, %161, %165, %169, %173, %177, %181, %185, %189, %193 in 1 : vector<32x128xbf16>, vector<32x128xbf16>, vector<32x128xbf16>, vector<32x128xbf16>, vector<32x128xbf16>, vector<32x128xbf16>, vector<32x128xbf16>, vector<32x128xbf16>, vector<32x128xbf16>, vector<32x128xbf16>, vector<32x128xbf16>, vector<32x128xbf16>, vector<32x128xbf16>, vector<32x128xbf16>, vector<32x128xbf16>, vector<32x128xbf16> -> vector<32x2048xbf16>
    %c0_139 = arith.constant 0 : index
    %c0_140 = arith.constant 0 : index
    %195 = vector.load %arg10[%c0_139, %c0_140] : memref<2048x256xbf16, #tpu.memory_space<vmem>>, vector<2048x256xbf16>
    %cst_141 = arith.constant dense<0.000000e+00> : vector<32x256xf32>
    %196 = tpu.matmul %194, %195, %cst_141 {dimension_numbers = #tpu.dot_dimension_numbers<[1], [0], [0], [1], [0, 0, 1, 1], [], []>} : vector<32x2048xbf16>, vector<2048x256xbf16>, vector<32x256xf32> -> vector<32x256xf32>
    %c0_142 = arith.constant 0 : index
    %c0_143 = arith.constant 0 : index
    %197 = vector.load %arg11[%c0_142, %c0_143] : memref<1x256xf32, #tpu.memory_space<vmem>>, vector<1x256xf32>
    %c0_144 = arith.constant 0 : index
    %c0_145 = arith.constant 0 : index
    %198 = vector.load %arg12[%c0_144, %c0_145] : memref<1x256xf32, #tpu.memory_space<vmem>>, vector<1x256xf32>
    %199 = arith.mulf %196, %196 : vector<32x256xf32>
    %200 = tpu.concatenate %196, %199 in 1 : vector<32x256xf32>, vector<32x256xf32> -> vector<32x512xf32>
    %cst_146 = arith.constant dense<0.000000e+00> : vector<512xf32>
    %201 = vector.multi_reduction <add>, %200, %cst_146 [0] : vector<32x512xf32> to vector<512xf32>
    %202 = vector.shape_cast %201 : vector<512xf32> to vector<1x512xf32>
    %cst_147 = arith.constant 3.125000e-02 : f32
    %203 = vector.broadcast %cst_147 : f32 to vector<1x512xf32>
    %204 = arith.mulf %202, %203 : vector<1x512xf32>
    %205 = vector.extract_strided_slice %204 {offsets = [0, 0], sizes = [1, 256], strides = [1, 1]} : vector<1x512xf32> to vector<1x256xf32>
    %206 = vector.extract_strided_slice %204 {offsets = [0, 256], sizes = [1, 256], strides = [1, 1]} : vector<1x512xf32> to vector<1x256xf32>
    %207 = arith.mulf %205, %205 : vector<1x256xf32>
    %208 = arith.subf %206, %207 : vector<1x256xf32>
    %cst_148 = arith.constant 0.000000e+00 : f32
    %209 = vector.broadcast %cst_148 : f32 to vector<1x256xf32>
    %210 = arith.maximumf %208, %209 : vector<1x256xf32>
    %cst_149 = arith.constant 9.99999974E-6 : f32
    %211 = vector.broadcast %cst_149 : f32 to vector<1x256xf32>
    %212 = arith.addf %210, %211 : vector<1x256xf32>
    %213 = math.rsqrt %212 : vector<1x256xf32>
    %214 = arith.mulf %197, %213 : vector<1x256xf32>
    %215 = arith.mulf %205, %214 : vector<1x256xf32>
    %216 = arith.subf %198, %215 : vector<1x256xf32>
    %217 = vector.broadcast %214 : vector<1x256xf32> to vector<32x256xf32>
    %218 = arith.mulf %196, %217 : vector<32x256xf32>
    %219 = vector.broadcast %216 : vector<1x256xf32> to vector<32x256xf32>
    %220 = arith.addf %218, %219 : vector<32x256xf32>
    %cst_150 = arith.constant 0.000000e+00 : f32
    %221 = vector.broadcast %cst_150 : f32 to vector<32x256xf32>
    %222 = arith.cmpf oge, %220, %221 : vector<32x256xf32>
    %cst_151 = arith.constant 2.000000e-01 : f32
    %223 = vector.broadcast %cst_151 : f32 to vector<32x256xf32>
    %224 = arith.mulf %223, %220 : vector<32x256xf32>
    %225 = arith.select %222, %220, %224 : vector<32x256xi1>, vector<32x256xf32>
    %c0_152 = arith.constant 0 : index
    %c0_153 = arith.constant 0 : index
    %226 = vector.load %arg13[%c0_152, %c0_153] : memref<16x256xf32, #tpu.memory_space<vmem>>, vector<16x256xf32>
    %227 = vector.extract_strided_slice %225 {offsets = [0, 0], sizes = [16, 256], strides = [1, 1]} : vector<32x256xf32> to vector<16x256xf32>
    %228 = arith.mulf %227, %226 : vector<16x256xf32>
    %cst_154 = arith.constant dense<0.000000e+00> : vector<16xf32>
    %229 = vector.multi_reduction <add>, %228, %cst_154 [1] : vector<16x256xf32> to vector<16xf32>
    %230 = vector.shape_cast %229 : vector<16xf32> to vector<16x1xf32>
    %cst_155 = arith.constant dense<0.000000e+00> : vector<1xf32>
    %231 = vector.multi_reduction <add>, %230, %cst_155 [0] : vector<16x1xf32> to vector<1xf32>
    %232 = vector.shape_cast %231 : vector<1xf32> to vector<1x1xf32>
    %233 = vector.extract_strided_slice %225 {offsets = [16, 0], sizes = [16, 256], strides = [1, 1]} : vector<32x256xf32> to vector<16x256xf32>
    %234 = arith.mulf %233, %226 : vector<16x256xf32>
    %cst_156 = arith.constant dense<0.000000e+00> : vector<16xf32>
    %235 = vector.multi_reduction <add>, %234, %cst_156 [1] : vector<16x256xf32> to vector<16xf32>
    %236 = vector.shape_cast %235 : vector<16xf32> to vector<16x1xf32>
    %cst_157 = arith.constant dense<0.000000e+00> : vector<1xf32>
    %237 = vector.multi_reduction <add>, %236, %cst_157 [0] : vector<16x1xf32> to vector<1xf32>
    %238 = vector.shape_cast %237 : vector<1xf32> to vector<1x1xf32>
    %239 = tpu.concatenate %232, %238 in 1 : vector<1x1xf32>, vector<1x1xf32> -> vector<1x2xf32>
    %cst_158 = arith.constant 0.000000e+00 : f32
    %240 = vector.broadcast %cst_158 : f32 to vector<1x2xf32>
    %241 = arith.subf %240, %239 : vector<1x2xf32>
    %242 = math.exp %241 : vector<1x2xf32>
    %cst_159 = arith.constant 1.000000e+00 : f32
    %243 = vector.broadcast %cst_159 : f32 to vector<1x2xf32>
    %244 = arith.addf %243, %242 : vector<1x2xf32>
    %cst_160 = arith.constant 1.000000e+00 : f32
    %245 = vector.broadcast %cst_160 : f32 to vector<1x2xf32>
    %246 = arith.divf %245, %244 : vector<1x2xf32>
    %c0_161 = arith.constant 0 : index
    %c0_162 = arith.constant 0 : index
    %247 = vector.load %arg14[%c0_161, %c0_162] : memref<1x2xf32, #tpu.memory_space<vmem>>, vector<1x2xf32>
    tpu.vector_store %arg14[%c0_161, %c0_162], %246 {strides = array<i32>} : memref<1x2xf32, #tpu.memory_space<vmem>>, vector<1x2xf32>,
    return
  }
  func.func @transform_0(%arg0: i32) -> (i32, i32) {
    %c0_i32 = arith.constant 0 : i32
    %c0_i32_0 = arith.constant 0 : i32
    %c0_i32_1 = arith.constant 0 : i32
    return %c0_i32, %c0_i32_0 : i32, i32
  }
  func.func @transform_1(%arg0: i32) -> (i32, i32) {
    %c0_i32 = arith.constant 0 : i32
    %c0_i32_0 = arith.constant 0 : i32
    %c0_i32_1 = arith.constant 0 : i32
    return %c0_i32, %c0_i32_0 : i32, i32
  }
  func.func @transform_2(%arg0: i32) -> (i32, i32) {
    %c0_i32 = arith.constant 0 : i32
    %c0_i32_0 = arith.constant 0 : i32
    %c0_i32_1 = arith.constant 0 : i32
    return %c0_i32, %c0_i32_0 : i32, i32
  }
  func.func @transform_3(%arg0: i32) -> (i32, i32) {
    %c0_i32 = arith.constant 0 : i32
    %c0_i32_0 = arith.constant 0 : i32
    %c0_i32_1 = arith.constant 0 : i32
    return %c0_i32, %c0_i32_0 : i32, i32
  }
  func.func @transform_4(%arg0: i32) -> (i32, i32, i32) {
    %c0_i32 = arith.constant 0 : i32
    %c0_i32_0 = arith.constant 0 : i32
    %c0_i32_1 = arith.constant 0 : i32
    %c0_i32_2 = arith.constant 0 : i32
    return %c0_i32, %c0_i32_0, %c0_i32_1 : i32, i32, i32
  }
  func.func @transform_5(%arg0: i32) -> (i32, i32) {
    %c0_i32 = arith.constant 0 : i32
    %c0_i32_0 = arith.constant 0 : i32
    %c0_i32_1 = arith.constant 0 : i32
    return %c0_i32, %c0_i32_0 : i32, i32
  }
  func.func @transform_6(%arg0: i32) -> (i32, i32) {
    %c0_i32 = arith.constant 0 : i32
    %c0_i32_0 = arith.constant 0 : i32
    %c0_i32_1 = arith.constant 0 : i32
    return %c0_i32, %c0_i32_0 : i32, i32
  }
  func.func @transform_7(%arg0: i32) -> (i32, i32) {
    %c0_i32 = arith.constant 0 : i32
    %c0_i32_0 = arith.constant 0 : i32
    %c0_i32_1 = arith.constant 0 : i32
    return %c0_i32, %c0_i32_0 : i32, i32
  }
  func.func @transform_8(%arg0: i32) -> (i32, i32, i32) {
    %c0_i32 = arith.constant 0 : i32
    %c0_i32_0 = arith.constant 0 : i32
    %c0_i32_1 = arith.constant 0 : i32
    %c0_i32_2 = arith.constant 0 : i32
    return %c0_i32, %c0_i32_0, %c0_i32_1 : i32, i32, i32
  }
  func.func @transform_9(%arg0: i32) -> (i32, i32) {
    %c0_i32 = arith.constant 0 : i32
    %c0_i32_0 = arith.constant 0 : i32
    %c0_i32_1 = arith.constant 0 : i32
    return %c0_i32, %c0_i32_0 : i32, i32
  }
  func.func @transform_10(%arg0: i32) -> (i32, i32) {
    %c0_i32 = arith.constant 0 : i32
    %c0_i32_0 = arith.constant 0 : i32
    %c0_i32_1 = arith.constant 0 : i32
    return %c0_i32, %c0_i32_0 : i32, i32
  }
  func.func @transform_11(%arg0: i32) -> (i32, i32) {
    %c0_i32 = arith.constant 0 : i32
    %c0_i32_0 = arith.constant 0 : i32
    %c0_i32_1 = arith.constant 0 : i32
    return %c0_i32, %c0_i32_0 : i32, i32
  }
  func.func @transform_12(%arg0: i32) -> (i32, i32) {
    %c0_i32 = arith.constant 0 : i32
    %c0_i32_0 = arith.constant 0 : i32
    %c0_i32_1 = arith.constant 0 : i32
    return %c0_i32, %c0_i32_0 : i32, i32
  }
  func.func @transform_13(%arg0: i32) -> (i32, i32) {
    %c0_i32 = arith.constant 0 : i32
    %c0_i32_0 = arith.constant 0 : i32
    %c0_i32_1 = arith.constant 0 : i32
    return %c0_i32, %c0_i32_0 : i32, i32
  }
}

</mosaic_0001>

<llo_original>
// kernel: discriminator_forward.1
$region0: #{discriminator_forward.1}
  #allocation0 [shape = 'u32[]', space=smem, size = 0x4, offset = 0x4, fixed_abs, tag = 'smem constant byte address 0x4 - core index']
  #allocation1 [shape = 'u32[144,128]{1,0:T(1,128)}', space=vmem, size = 0x12000, scoped, tag = 'internal scratch']
  %s0 = inlined_call_operand.vmem [shape: bf16[512,16], index: 0, kind: input, shape index: {}]
  %s1 = inlined_call_operand.hbm [shape: bf16[16,128], index: 1, kind: input, shape index: {}]
  %s2 = inlined_call_operand.hbm [shape: f32[1,128], index: 2, kind: input, shape index: {}]
  %s3 = inlined_call_operand.hbm [shape: f32[1,128], index: 3, kind: input, shape index: {}]
  %s4 = inlined_call_operand.hbm [shape: bf16[16,128,512], index: 4, kind: input, shape index: {}]
  %s5 = inlined_call_operand.hbm [shape: bf16[2048,128], index: 5, kind: input, shape index: {}]
  %s6 = inlined_call_operand.hbm [shape: f32[1,128], index: 6, kind: input, shape index: {}]
  %s7 = inlined_call_operand.hbm [shape: f32[1,128], index: 7, kind: input, shape index: {}]
  %s8 = inlined_call_operand.hbm [shape: bf16[16,32,128], index: 8, kind: input, shape index: {}]
  %s9 = inlined_call_operand.hbm [shape: bf16[2048,256], index: 9, kind: input, shape index: {}]
  %s10 = inlined_call_operand.hbm [shape: f32[1,256], index: 10, kind: input, shape index: {}]
  %s11 = inlined_call_operand.hbm [shape: f32[1,256], index: 11, kind: input, shape index: {}]
  %s12 = inlined_call_operand.hbm [shape: f32[16,256], index: 12, kind: input, shape index: {}]
  %s13 = inlined_call_operand.hbm [shape: f32[1,2], index: 13, kind: output, shape index: {}]
  %s14 = sld [smem:[#allocation0]]
  $region110: #{discriminator_forward.1} parent=0
    _
  %s16 = ssub.s32 1, %s14
  %s17 = scalar_select 0, %s16, %s14
  $region1: #{discriminator_forward.1} parent=0
    #allocation2 [shape = 'u8[4096]{0}', space=vmem, size = 0x1000, scoped, tag = 'input window, operand 1, single buffered']
    #allocation3 [shape = 's32[1]{0}', space=sflag, size = 0x4, scoped, tag = 'scoped memory for discriminator_forward.1']
    #allocation4 [shape = 's32[1]{0}', space=sflag, size = 0x4, scoped, tag = 'scoped memory for discriminator_forward.1']
    #allocation5 [shape = 'u8[512]{0}', space=vmem, size = 0x400, scoped, tag = 'input window, operand 2, single buffered']
    #allocation6 [shape = 's32[1]{0}', space=sflag, size = 0x4, scoped, tag = 'scoped memory for discriminator_forward.1']
    #allocation7 [shape = 'u8[512]{0}', space=vmem, size = 0x400, scoped, tag = 'input window, operand 3, single buffered']
    #allocation8 [shape = 'u8[2097152]{0}', space=vmem, size = 0x200000, scoped, tag = 'input window, operand 4, single buffered']
    #allocation9 [shape = 's32[1]{0}', space=sflag, size = 0x4, scoped, tag = 'scoped memory for discriminator_forward.1']
    #allocation10 [shape = 'u8[524288]{0}', space=vmem, size = 0x80000, scoped, tag = 'input window, operand 5, single buffered']
    #allocation11 [shape = 'u8[512]{0}', space=vmem, size = 0x400, scoped, tag = 'input window, operand 6, single buffered']
    #allocation12 [shape = 's32[1]{0}', space=sflag, size = 0x4, scoped, tag = 'scoped memory for discriminator_forward.1']
    #allocation13 [shape = 'u8[512]{0}', space=vmem, size = 0x400, scoped, tag = 'input window, operand 7, single buffered']
    #allocation14 [shape = 'u8[131072]{0}', space=vmem, size = 0x20000, scoped, tag = 'input window, operand 8, single buffered']
    #allocation15 [shape = 's32[1]{0}', space=sflag, size = 0x4, scoped, tag = 'scoped memory for discriminator_forward.1']
    #allocation16 [shape = 'u8[1048576]{0}', space=vmem, size = 0x100000, scoped, tag = 'input window, operand 9, single buffered']
    #allocation17 [shape = 'u8[1024]{0}', space=vmem, size = 0x400, scoped, tag = 'input window, operand 10, single buffered']
    #allocation18 [shape = 's32[1]{0}', space=sflag, size = 0x4, scoped, tag = 'scoped memory for discriminator_forward.1']
    #allocation19 [shape = 'u8[1024]{0}', space=vmem, size = 0x400, scoped, tag = 'input window, operand 11, single buffered']
    #allocation20 [shape = 'u8[16384]{0}', space=vmem, size = 0x4000, scoped, tag = 'input window, operand 12, single buffered']
    #allocation21 [shape = 's32[1]{0}', space=sflag, size = 0x4, scoped, tag = 'scoped memory for discriminator_forward.1']
    #allocation22 [shape = 'u8[512]{0}', space=vmem, size = 0x400, scoped, tag = 'output window, operand 0, single buffered']
    %18 = vsyncpa [#allocation3], 0
    %19 = vsyncpa [#allocation6], 0
    %20 = vsyncpa [#allocation9], 0
    %21 = vsyncpa [#allocation12], 0
    %22 = vsyncpa [#allocation15], 0
    %23 = vsyncpa [#allocation18], 0
    %24 = vsyncpa [#allocation21], 0
    %25 = vsyncpa [#allocation4], 0
    // Predicated region
    $region2: #{discriminator_forward.1} parent=1 // pred_check
      _
    $region3: #{discriminator_forward.1} parent=1 // pred_check_branch
      %27 = sbr.rel (0) target = $region5
    $region4: #{discriminator_forward.1} parent=1 // pred_region
      _
    $region5: #{discriminator_forward.1} parent=1 // pred_fallthru
      _
    // Predicated region
    $region6: #{discriminator_forward.1} parent=1 // pred_check
      _
    $region7: #{discriminator_forward.1} parent=1 // pred_check_branch
      %29 = sbr.rel (0) target = $region9
    $region8: #{discriminator_forward.1} parent=1 // pred_region
      %s31 = ssub.s32 128, 128
      %32 = vsyncadd [#allocation3], %s31
      %s33 = sshll.u32 [#allocation2], 4
      %s34 = int_to_ptr.vmem [resolvable:$true] %s33
      %39 = dma.hbm_to_vmem [thread:$0]  %s1, 128, %s34, [#allocation3], 64, 64, 4
    $region9: #{discriminator_forward.1} parent=1 // pred_fallthru
      _
    // Predicated region
    $region10: #{discriminator_forward.1} parent=1 // pred_check
      _
    $region11: #{discriminator_forward.1} parent=1 // pred_check_branch
      %41 = sbr.rel (0) target = $region13
    $region12: #{discriminator_forward.1} parent=1 // pred_region
      %s43 = ssub.s32 16, 16
      %44 = vsyncadd [#allocation6], %s43
      %s46 = sshll.u32 [#allocation5], 4
      %s47 = int_to_ptr.vmem [resolvable:$true] %s46
      %49 = dma.hbm_to_vmem [thread:$0]  %s2, 16, %s47, [#allocation6]
    $region13: #{discriminator_forward.1} parent=1 // pred_fallthru
      _
    // Predicated region
    $region14: #{discriminator_forward.1} parent=1 // pred_check
      _
    $region15: #{discriminator_forward.1} parent=1 // pred_check_branch
      %51 = sbr.rel (0) target = $region17
    $region16: #{discriminator_forward.1} parent=1 // pred_region
      %s53 = ssub.s32 16, 16
      %54 = vsyncadd [#allocation6], %s53
      %s56 = sshll.u32 [#allocation7], 4
      %s57 = int_to_ptr.vmem [resolvable:$true] %s56
      %59 = dma.hbm_to_vmem [thread:$0]  %s3, 16, %s57, [#allocation6]
    $region17: #{discriminator_forward.1} parent=1 // pred_fallthru
      _
    // Predicated region
    $region18: #{discriminator_forward.1} parent=1 // pred_check
      _
    $region19: #{discriminator_forward.1} parent=1 // pred_check_branch
      %61 = sbr.rel (0) target = $region21
    $region20: #{discriminator_forward.1} parent=1 // pred_region
      %s63 = ssub.s32 65536, 65536
      %64 = vsyncadd [#allocation9], %s63
      %s65 = sshll.u32 [#allocation8], 4
      %s66 = int_to_ptr.vmem [resolvable:$true] %s65
      %71 = dma.hbm_to_vmem [thread:$0]  %s4, 65536, %s66, [#allocation9], 256, 256, 16
    $region21: #{discriminator_forward.1} parent=1 // pred_fallthru
      _
    // Predicated region
    $region22: #{discriminator_forward.1} parent=1 // pred_check
      _
    $region23: #{discriminator_forward.1} parent=1 // pred_check_branch
      %73 = sbr.rel (0) target = $region25
    $region24: #{discriminator_forward.1} parent=1 // pred_region
      %s75 = ssub.s32 16384, 16384
      %76 = vsyncadd [#allocation9], %s75
      %s77 = sshll.u32 [#allocation10], 4
      %s78 = int_to_ptr.vmem [resolvable:$true] %s77
      %83 = dma.hbm_to_vmem [thread:$0]  %s5, 16384, %s78, [#allocation9], 64, 64, 4
    $region25: #{discriminator_forward.1} parent=1 // pred_fallthru
      _
    // Predicated region
    $region26: #{discriminator_forward.1} parent=1 // pred_check
      _
    $region27: #{discriminator_forward.1} parent=1 // pred_check_branch
      %85 = sbr.rel (0) target = $region29
    $region28: #{discriminator_forward.1} parent=1 // pred_region
      %s87 = ssub.s32 16, 16
      %88 = vsyncadd [#allocation12], %s87
      %s90 = sshll.u32 [#allocation11], 4
      %s91 = int_to_ptr.vmem [resolvable:$true] %s90
      %93 = dma.hbm_to_vmem [thread:$0]  %s6, 16, %s91, [#allocation12]
    $region29: #{discriminator_forward.1} parent=1 // pred_fallthru
      _
    // Predicated region
    $region30: #{discriminator_forward.1} parent=1 // pred_check
      _
    $region31: #{discriminator_forward.1} parent=1 // pred_check_branch
      %95 = sbr.rel (0) target = $region33
    $region32: #{discriminator_forward.1} parent=1 // pred_region
      %s97 = ssub.s32 16, 16
      %98 = vsyncadd [#allocation12], %s97
      %s100 = sshll.u32 [#allocation13], 4
      %s101 = int_to_ptr.vmem [resolvable:$true] %s100
      %103 = dma.hbm_to_vmem [thread:$0]  %s7, 16, %s101, [#allocation12]
    $region33: #{discriminator_forward.1} parent=1 // pred_fallthru
      _
    // Predicated region
    $region34: #{discriminator_forward.1} parent=1 // pred_check
      _
    $region35: #{discriminator_forward.1} parent=1 // pred_check_branch
      %105 = sbr.rel (0) target = $region37
    $region36: #{discriminator_forward.1} parent=1 // pred_region
      %s107 = ssub.s32 4096, 4096
      %108 = vsyncadd [#allocation15], %s107
      %s109 = sshll.u32 [#allocation14], 4
      %s110 = int_to_ptr.vmem [resolvable:$true] %s109
      %115 = dma.hbm_to_vmem [thread:$0]  %s8, 4096, %s110, [#allocation15], 64, 64, 4
    $region37: #{discriminator_forward.1} parent=1 // pred_fallthru
      _
    // Predicated region
    $region38: #{discriminator_forward.1} parent=1 // pred_check
      _
    $region39: #{discriminator_forward.1} parent=1 // pred_check_branch
      %117 = sbr.rel (0) target = $region41
    $region40: #{discriminator_forward.1} parent=1 // pred_region
      %s119 = ssub.s32 32768, 32768
      %120 = vsyncadd [#allocation15], %s119
      %s121 = sshll.u32 [#allocation16], 4
      %s122 = int_to_ptr.vmem [resolvable:$true] %s121
      %127 = dma.hbm_to_vmem [thread:$0]  %s9, 32768, %s122, [#allocation15], 128, 128, 8
    $region41: #{discriminator_forward.1} parent=1 // pred_fallthru
      _
    // Predicated region
    $region42: #{discriminator_forward.1} parent=1 // pred_check
      _
    $region43: #{discriminator_forward.1} parent=1 // pred_check_branch
      %129 = sbr.rel (0) target = $region45
    $region44: #{discriminator_forward.1} parent=1 // pred_region
      %s131 = ssub.s32 32, 32
      %132 = vsyncadd [#allocation18], %s131
      %s134 = sshll.u32 [#allocation17], 4
      %s135 = int_to_ptr.vmem [resolvable:$true] %s134
      %137 = dma.hbm_to_vmem [thread:$0]  %s10, 32, %s135, [#allocation18]
    $region45: #{discriminator_forward.1} parent=1 // pred_fallthru
      _
    // Predicated region
    $region46: #{discriminator_forward.1} parent=1 // pred_check
      _
    $region47: #{discriminator_forward.1} parent=1 // pred_check_branch
      %139 = sbr.rel (0) target = $region49
    $region48: #{discriminator_forward.1} parent=1 // pred_region
      %s141 = ssub.s32 32, 32
      %142 = vsyncadd [#allocation18], %s141
      %s144 = sshll.u32 [#allocation19], 4
      %s145 = int_to_ptr.vmem [resolvable:$true] %s144
      %147 = dma.hbm_to_vmem [thread:$0]  %s11, 32, %s145, [#allocation18]
    $region49: #{discriminator_forward.1} parent=1 // pred_fallthru
      _
    // Predicated region
    $region50: #{discriminator_forward.1} parent=1 // pred_check
      _
    $region51: #{discriminator_forward.1} parent=1 // pred_check_branch
      %149 = sbr.rel (0) target = $region53
    $region52: #{discriminator_forward.1} parent=1 // pred_region
      %s151 = ssub.s32 512, 512
      %152 = vsyncadd [#allocation21], %s151
      %s153 = sshll.u32 [#allocation20], 4
      %s154 = int_to_ptr.vmem [resolvable:$true] %s153
      %159 = dma.hbm_to_vmem [thread:$0]  %s12, 512, %s154, [#allocation21], 256, 256, 16
    $region53: #{discriminator_forward.1} parent=1 // pred_fallthru
      _
    // Predicated region
    $region54: #{discriminator_forward.1} parent=1 // pred_check
      _
    $region55: #{discriminator_forward.1} parent=1 // pred_check_branch
      %161 = sbr.rel (0) target = $region57
    $region56: #{discriminator_forward.1} parent=1 // pred_region
      %162 = dma.done [#allocation3], 128
    $region57: #{discriminator_forward.1} parent=1 // pred_fallthru
      _
    // Predicated region
    $region58: #{discriminator_forward.1} parent=1 // pred_check
      _
    $region59: #{discriminator_forward.1} parent=1 // pred_check_branch
      %164 = sbr.rel (0) target = $region61
    $region60: #{discriminator_forward.1} parent=1 // pred_region
      %165 = dma.done [#allocation6], 16
    $region61: #{discriminator_forward.1} parent=1 // pred_fallthru
      _
    // Predicated region
    $region62: #{discriminator_forward.1} parent=1 // pred_check
      _
    $region63: #{discriminator_forward.1} parent=1 // pred_check_branch
      %167 = sbr.rel (0) target = $region65
    $region64: #{discriminator_forward.1} parent=1 // pred_region
      %168 = dma.done [#allocation6], 16
    $region65: #{discriminator_forward.1} parent=1 // pred_fallthru
      _
    // Predicated region
    $region66: #{discriminator_forward.1} parent=1 // pred_check
      _
    $region67: #{discriminator_forward.1} parent=1 // pred_check_branch
      %170 = sbr.rel (0) target = $region69
    $region68: #{discriminator_forward.1} parent=1 // pred_region
      %171 = dma.done [#allocation9], 65536
    $region69: #{discriminator_forward.1} parent=1 // pred_fallthru
      _
    // Predicated region
    $region70: #{discriminator_forward.1} parent=1 // pred_check
      _
    $region71: #{discriminator_forward.1} parent=1 // pred_check_branch
      %173 = sbr.rel (0) target = $region73
    $region72: #{discriminator_forward.1} parent=1 // pred_region
      %174 = dma.done [#allocation9], 16384
    $region73: #{discriminator_forward.1} parent=1 // pred_fallthru
      _
    // Predicated region
    $region74: #{discriminator_forward.1} parent=1 // pred_check
      _
    $region75: #{discriminator_forward.1} parent=1 // pred_check_branch
      %176 = sbr.rel (0) target = $region77
    $region76: #{discriminator_forward.1} parent=1 // pred_region
      %177 = dma.done [#allocation12], 16
    $region77: #{discriminator_forward.1} parent=1 // pred_fallthru
      _
    // Predicated region
    $region78: #{discriminator_forward.1} parent=1 // pred_check
      _
    $region79: #{discriminator_forward.1} parent=1 // pred_check_branch
      %179 = sbr.rel (0) target = $region81
    $region80: #{discriminator_forward.1} parent=1 // pred_region
      %180 = dma.done [#allocation12], 16
    $region81: #{discriminator_forward.1} parent=1 // pred_fallthru
      _
    // Predicated region
    $region82: #{discriminator_forward.1} parent=1 // pred_check
      _
    $region83: #{discriminator_forward.1} parent=1 // pred_check_branch
      %182 = sbr.rel (0) target = $region85
    $region84: #{discriminator_forward.1} parent=1 // pred_region
      %183 = dma.done [#allocation15], 4096
    $region85: #{discriminator_forward.1} parent=1 // pred_fallthru
      _
    // Predicated region
    $region86: #{discriminator_forward.1} parent=1 // pred_check
      _
    $region87: #{discriminator_forward.1} parent=1 // pred_check_branch
      %185 = sbr.rel (0) target = $region89
    $region88: #{discriminator_forward.1} parent=1 // pred_region
      %186 = dma.done [#allocation15], 32768
    $region89: #{discriminator_forward.1} parent=1 // pred_fallthru
      _
    // Predicated region
    $region90: #{discriminator_forward.1} parent=1 // pred_check
      _
    $region91: #{discriminator_forward.1} parent=1 // pred_check_branch
      %188 = sbr.rel (0) target = $region93
    $region92: #{discriminator_forward.1} parent=1 // pred_region
      %189 = dma.done [#allocation18], 32
    $region93: #{discriminator_forward.1} parent=1 // pred_fallthru
      _
    // Predicated region
    $region94: #{discriminator_forward.1} parent=1 // pred_check
      _
    $region95: #{discriminator_forward.1} parent=1 // pred_check_branch
      %191 = sbr.rel (0) target = $region97
    $region96: #{discriminator_forward.1} parent=1 // pred_region
      %192 = dma.done [#allocation18], 32
    $region97: #{discriminator_forward.1} parent=1 // pred_fallthru
      _
    // Predicated region
    $region98: #{discriminator_forward.1} parent=1 // pred_check
      _
    $region99: #{discriminator_forward.1} parent=1 // pred_check_branch
      %194 = sbr.rel (0) target = $region101
    $region100: #{discriminator_forward.1} parent=1 // pred_region
      %195 = dma.done [#allocation21], 512
    $region101: #{discriminator_forward.1} parent=1 // pred_fallthru
      _
    %v197 = vld [vmem:[%s0] sm:$0xf]
    %v198 = vld [vmem:[%s0 + $0x4] sm:$0xf]
    %v199 = vld [vmem:[%s0 + $0x8] sm:$0xf]
    %v200 = vld [vmem:[%s0 + $0xc] sm:$0xf]
    %v201 = vld [vmem:[%s0 + $0x10] sm:$0xf]
    %v202 = vld [vmem:[%s0 + $0x14] sm:$0xf]
    %v203 = vld [vmem:[%s0 + $0x18] sm:$0xf]
    %v204 = vld [vmem:[%s0 + $0x1c] sm:$0xf]
    %v205 = vld [vmem:[%s0 + $0x20] sm:$0xf]
    %v206 = vld [vmem:[%s0 + $0x24] sm:$0xf]
    %v207 = vld [vmem:[%s0 + $0x28] sm:$0xf]
    %v208 = vld [vmem:[%s0 + $0x2c] sm:$0xf]
    %v209 = vld [vmem:[%s0 + $0x30] sm:$0xf]
    %v210 = vld [vmem:[%s0 + $0x34] sm:$0xf]
    %v211 = vld [vmem:[%s0 + $0x38] sm:$0xf]
    %v212 = vld [vmem:[%s0 + $0x3c] sm:$0xf]
    %v213 = vld [vmem:[%s0 + $0x40] sm:$0xf]
    %v214 = vld [vmem:[%s0 + $0x44] sm:$0xf]
    %v215 = vld [vmem:[%s0 + $0x48] sm:$0xf]
    %v216 = vld [vmem:[%s0 + $0x4c] sm:$0xf]
    %v217 = vld [vmem:[%s0 + $0x50] sm:$0xf]
    %v218 = vld [vmem:[%s0 + $0x54] sm:$0xf]
    %v219 = vld [vmem:[%s0 + $0x58] sm:$0xf]
    %v220 = vld [vmem:[%s0 + $0x5c] sm:$0xf]
    %v221 = vld [vmem:[%s0 + $0x60] sm:$0xf]
    %v222 = vld [vmem:[%s0 + $0x64] sm:$0xf]
    %v223 = vld [vmem:[%s0 + $0x68] sm:$0xf]
    %v224 = vld [vmem:[%s0 + $0x6c] sm:$0xf]
    %v225 = vld [vmem:[%s0 + $0x70] sm:$0xf]
    %v226 = vld [vmem:[%s0 + $0x74] sm:$0xf]
    %v227 = vld [vmem:[%s0 + $0x78] sm:$0xf]
    %v228 = vld [vmem:[%s0 + $0x7c] sm:$0xf]
    %v229 = vld [vmem:[%s0 + $0x80] sm:$0xf]
    %v230 = vld [vmem:[%s0 + $0x84] sm:$0xf]
    %v231 = vld [vmem:[%s0 + $0x88] sm:$0xf]
    %v232 = vld [vmem:[%s0 + $0x8c] sm:$0xf]
    %v233 = vld [vmem:[%s0 + $0x90] sm:$0xf]
    %v234 = vld [vmem:[%s0 + $0x94] sm:$0xf]
    %v235 = vld [vmem:[%s0 + $0x98] sm:$0xf]
    %v236 = vld [vmem:[%s0 + $0x9c] sm:$0xf]
    %v237 = vld [vmem:[%s0 + $0xa0] sm:$0xf]
    %v238 = vld [vmem:[%s0 + $0xa4] sm:$0xf]
    %v239 = vld [vmem:[%s0 + $0xa8] sm:$0xf]
    %v240 = vld [vmem:[%s0 + $0xac] sm:$0xf]
    %v241 = vld [vmem:[%s0 + $0xb0] sm:$0xf]
    %v242 = vld [vmem:[%s0 + $0xb4] sm:$0xf]
    %v243 = vld [vmem:[%s0 + $0xb8] sm:$0xf]
    %v244 = vld [vmem:[%s0 + $0xbc] sm:$0xf]
    %v245 = vld [vmem:[%s0 + $0xc0] sm:$0xf]
    %v246 = vld [vmem:[%s0 + $0xc4] sm:$0xf]
    %v247 = vld [vmem:[%s0 + $0xc8] sm:$0xf]
    %v248 = vld [vmem:[%s0 + $0xcc] sm:$0xf]
    %v249 = vld [vmem:[%s0 + $0xd0] sm:$0xf]
    %v250 = vld [vmem:[%s0 + $0xd4] sm:$0xf]
    %v251 = vld [vmem:[%s0 + $0xd8] sm:$0xf]
    %v252 = vld [vmem:[%s0 + $0xdc] sm:$0xf]
    %v253 = vld [vmem:[%s0 + $0xe0] sm:$0xf]
    %v254 = vld [vmem:[%s0 + $0xe4] sm:$0xf]
    %v255 = vld [vmem:[%s0 + $0xe8] sm:$0xf]
    %v256 = vld [vmem:[%s0 + $0xec] sm:$0xf]
    %v257 = vld [vmem:[%s0 + $0xf0] sm:$0xf]
    %v258 = vld [vmem:[%s0 + $0xf4] sm:$0xf]
    %v259 = vld [vmem:[%s0 + $0xf8] sm:$0xf]
    %v260 = vld [vmem:[%s0 + $0xfc] sm:$0xf]
    %v261 = vld [vmem:[#allocation2] sm:$0xf]
    %v262 = vld [vmem:[#allocation2 + $0x4] sm:$0xf]
    %v327 = vunpack.c.l.b16 %v197
    %v328 = vunpack.c.l.b16 %v198
    %v329 = vunpack.c.l.b16 %v199
    %v330 = vunpack.c.l.b16 %v200
    %v331 = vunpack.c.l.b16 %v201
    %v332 = vunpack.c.l.b16 %v202
    %v333 = vunpack.c.l.b16 %v203
    %v334 = vunpack.c.l.b16 %v204
    %v335 = vunpack.c.l.b16 %v205
    %v336 = vunpack.c.l.b16 %v206
    %v337 = vunpack.c.l.b16 %v207
    %v338 = vunpack.c.l.b16 %v208
    %v339 = vunpack.c.l.b16 %v209
    %v340 = vunpack.c.l.b16 %v210
    %v341 = vunpack.c.l.b16 %v211
    %v342 = vunpack.c.l.b16 %v212
    %v343 = vunpack.c.l.b16 %v213
    %v344 = vunpack.c.l.b16 %v214
    %v345 = vunpack.c.l.b16 %v215
    %v346 = vunpack.c.l.b16 %v216
    %v347 = vunpack.c.l.b16 %v217
    %v348 = vunpack.c.l.b16 %v218
    %v349 = vunpack.c.l.b16 %v219
    %v350 = vunpack.c.l.b16 %v220
    %v351 = vunpack.c.l.b16 %v221
    %v352 = vunpack.c.l.b16 %v222
    %v353 = vunpack.c.l.b16 %v223
    %v354 = vunpack.c.l.b16 %v224
    %v355 = vunpack.c.l.b16 %v225
    %v356 = vunpack.c.l.b16 %v226
    %v357 = vunpack.c.l.b16 %v227
    %v358 = vunpack.c.l.b16 %v228
    %v359 = vunpack.c.l.b16 %v229
    %v360 = vunpack.c.l.b16 %v230
    %v361 = vunpack.c.l.b16 %v231
    %v362 = vunpack.c.l.b16 %v232
    %v363 = vunpack.c.l.b16 %v233
    %v364 = vunpack.c.l.b16 %v234
    %v365 = vunpack.c.l.b16 %v235
    %v366 = vunpack.c.l.b16 %v236
    %v367 = vunpack.c.l.b16 %v237
    %v368 = vunpack.c.l.b16 %v238
    %v369 = vunpack.c.l.b16 %v239
    %v370 = vunpack.c.l.b16 %v240
    %v371 = vunpack.c.l.b16 %v241
    %v372 = vunpack.c.l.b16 %v242
    %v373 = vunpack.c.l.b16 %v243
    %v374 = vunpack.c.l.b16 %v244
    %v375 = vunpack.c.l.b16 %v245
    %v376 = vunpack.c.l.b16 %v246
    %v377 = vunpack.c.l.b16 %v247
    %v378 = vunpack.c.l.b16 %v248
    %v379 = vunpack.c.l.b16 %v249
    %v380 = vunpack.c.l.b16 %v250
    %v381 = vunpack.c.l.b16 %v251
    %v382 = vunpack.c.l.b16 %v252
    %v383 = vunpack.c.l.b16 %v253
    %v384 = vunpack.c.l.b16 %v254
    %v385 = vunpack.c.l.b16 %v255
    %v386 = vunpack.c.l.b16 %v256
    %v387 = vunpack.c.l.b16 %v257
    %v388 = vunpack.c.l.b16 %v258
    %v389 = vunpack.c.l.b16 %v259
    %v390 = vunpack.c.l.b16 %v260
    %v391 = vpack.c.b16 %v328, %v327
    %v392 = vpack.c.b16 %v330, %v329
    %v393 = vpack.c.b16 %v332, %v331
    %v394 = vpack.c.b16 %v334, %v333
    %v395 = vpack.c.b16 %v336, %v335
    %v396 = vpack.c.b16 %v338, %v337
    %v397 = vpack.c.b16 %v340, %v339
    %v398 = vpack.c.b16 %v342, %v341
    %v399 = vpack.c.b16 %v344, %v343
    %v400 = vpack.c.b16 %v346, %v345
    %v401 = vpack.c.b16 %v348, %v347
    %v402 = vpack.c.b16 %v350, %v349
    %v403 = vpack.c.b16 %v352, %v351
    %v404 = vpack.c.b16 %v354, %v353
    %v405 = vpack.c.b16 %v356, %v355
    %v406 = vpack.c.b16 %v358, %v357
    %v407 = vpack.c.b16 %v360, %v359
    %v408 = vpack.c.b16 %v362, %v361
    %v409 = vpack.c.b16 %v364, %v363
    %v410 = vpack.c.b16 %v366, %v365
    %v411 = vpack.c.b16 %v368, %v367
    %v412 = vpack.c.b16 %v370, %v369
    %v413 = vpack.c.b16 %v372, %v371
    %v414 = vpack.c.b16 %v374, %v373
    %v415 = vpack.c.b16 %v376, %v375
    %v416 = vpack.c.b16 %v378, %v377
    %v417 = vpack.c.b16 %v380, %v379
    %v418 = vpack.c.b16 %v382, %v381
    %v419 = vpack.c.b16 %v384, %v383
    %v420 = vpack.c.b16 %v386, %v385
    %v421 = vpack.c.b16 %v388, %v387
    %v422 = vpack.c.b16 %v390, %v389
    %v425 = vunpack.c.l.b16 %v261
    %v426 = vunpack.c.l.b16 %v262
    %v427 = vpack.c.b16 %v426, %v425
    %vm429 = vcmask 130048
    %v431 = vsel %vm429, %v391, 0
    %v434 = vsel %vm429, %v392, 0
    %v437 = vsel %vm429, %v393, 0
    %v440 = vsel %vm429, %v394, 0
    %v443 = vsel %vm429, %v395, 0
    %v446 = vsel %vm429, %v396, 0
    %v449 = vsel %vm429, %v397, 0
    %v452 = vsel %vm429, %v398, 0
    %v455 = vsel %vm429, %v399, 0
    %v458 = vsel %vm429, %v400, 0
    %v461 = vsel %vm429, %v401, 0
    %v464 = vsel %vm429, %v402, 0
    %v467 = vsel %vm429, %v403, 0
    %v470 = vsel %vm429, %v404, 0
    %v473 = vsel %vm429, %v405, 0
    %v476 = vsel %vm429, %v406, 0
    %v479 = vsel %vm429, %v407, 0
    %v482 = vsel %vm429, %v408, 0
    %v485 = vsel %vm429, %v409, 0
    %v488 = vsel %vm429, %v410, 0
    %v491 = vsel %vm429, %v411, 0
    %v494 = vsel %vm429, %v412, 0
    %v497 = vsel %vm429, %v413, 0
    %v500 = vsel %vm429, %v414, 0
    %v503 = vsel %vm429, %v415, 0
    %v506 = vsel %vm429, %v416, 0
    %v509 = vsel %vm429, %v417, 0
    %v512 = vsel %vm429, %v418, 0
    %v515 = vsel %vm429, %v419, 0
    %v518 = vsel %vm429, %v420, 0
    %v521 = vsel %vm429, %v421, 0
    %v524 = vsel %vm429, %v422, 0
    %526 = vmatprep.subr.bf16.mxu0 0
    %527 = vmatpush1.bf16.msra.mxu0 %v427
    %528 = vmatprep.subr.bf16.mxu0 0
    %529 = vmatpush1.bf16.msra.mxu0 0
    %530 = vmatprep.subr.bf16.mxu0 0
    %531 = vmatpush1.bf16.msra.mxu0 0
    %532 = vmatprep.subr.bf16.mxu0 0
    %533 = vmatpush1.bf16.msra.mxu0 0
    %534 = vmatprep.subr.bf16.mxu0 0
    %535 = vmatpush1.bf16.msra.mxu0 0
    %536 = vmatprep.subr.bf16.mxu0 0
    %537 = vmatpush1.bf16.msra.mxu0 0
    %538 = vmatprep.subr.bf16.mxu0 0
    %539 = vmatpush1.bf16.msra.mxu0 0
    %540 = vmatprep.subr.bf16.mxu0 0
    %541 = vmatpush1.bf16.msra.mxu0 0
    %542 = vmatprep.subr.bf16.mxu0 0
    %543 = vmatpush1.bf16.msra.mxu0 0
    %544 = vmatprep.subr.bf16.mxu0 0
    %545 = vmatpush1.bf16.msra.mxu0 0
    %546 = vmatprep.subr.bf16.mxu0 0
    %547 = vmatpush1.bf16.msra.mxu0 0
    %548 = vmatprep.subr.bf16.mxu0 0
    %549 = vmatpush1.bf16.msra.mxu0 0
    %550 = vmatprep.subr.bf16.mxu0 0
    %551 = vmatpush1.bf16.msra.mxu0 0
    %552 = vmatprep.subr.bf16.mxu0 0
    %553 = vmatpush1.bf16.msra.mxu0 0
    %554 = vmatprep.subr.bf16.mxu0 0
    %555 = vmatpush1.bf16.msra.mxu0 0
    %556 = vmatprep.subr.bf16.mxu0 0
    %557 = vmatpush1.bf16.msra.mxu0 0
    %558 = vmatprep.mubr.bf16.mxu0 0
    %559 = vmatmul.mubr.bf16.gmra.mrb[0].mxu0 %v431
    %v560 = vpop.f32.mrb[0].mxu0
    %v561 = vadd.f32 0.0, %v560
    %v562 = vpop.f32.mrb[0].mxu0
    %v563 = vpop.f32.mrb[0].mxu0
    %v564 = vadd.f32 0.0, %v563
    %v565 = vpop.f32.mrb[0].mxu0
    %566 = vmatprep.mubr.bf16.mxu0 0
    %567 = vmatmul.mubr.bf16.gmra.mrb[0].mxu0 %v434
    %v568 = vpop.f32.mrb[0].mxu0
    %v569 = vadd.f32 0.0, %v568
    %v570 = vpop.f32.mrb[0].mxu0
    %v571 = vpop.f32.mrb[0].mxu0
    %v572 = vadd.f32 0.0, %v571
    %v573 = vpop.f32.mrb[0].mxu0
    %574 = vmatprep.mubr.bf16.mxu0 0
    %575 = vmatmul.mubr.bf16.gmra.mrb[0].mxu0 %v437
    %v576 = vpop.f32.mrb[0].mxu0
    %v577 = vadd.f32 0.0, %v576
    %v578 = vpop.f32.mrb[0].mxu0
    %v579 = vpop.f32.mrb[0].mxu0
    %v580 = vadd.f32 0.0, %v579
    %v581 = vpop.f32.mrb[0].mxu0
    %582 = vmatprep.mubr.bf16.mxu0 0
    %583 = vmatmul.mubr.bf16.gmra.mrb[0].mxu0 %v440
    %v584 = vpop.f32.mrb[0].mxu0
    %v585 = vadd.f32 0.0, %v584
    %v586 = vpop.f32.mrb[0].mxu0
    %v587 = vpop.f32.mrb[0].mxu0
    %v588 = vadd.f32 0.0, %v587
    %v589 = vpop.f32.mrb[0].mxu0
    %590 = vmatprep.mubr.bf16.mxu0 0
    %591 = vmatmul.mubr.bf16.gmra.mrb[0].mxu0 %v443
    %v592 = vpop.f32.mrb[0].mxu0
    %v593 = vadd.f32 0.0, %v592
    %v594 = vpop.f32.mrb[0].mxu0
    %v595 = vpop.f32.mrb[0].mxu0
    %v596 = vadd.f32 0.0, %v595
    %v597 = vpop.f32.mrb[0].mxu0
    %598 = vmatprep.mubr.bf16.mxu0 0
    %599 = vmatmul.mubr.bf16.gmra.mrb[0].mxu0 %v446
    %v600 = vpop.f32.mrb[0].mxu0
    %v601 = vadd.f32 0.0, %v600
    %v602 = vpop.f32.mrb[0].mxu0
    %v603 = vpop.f32.mrb[0].mxu0
    %v604 = vadd.f32 0.0, %v603
    %v605 = vpop.f32.mrb[0].mxu0
    %606 = vmatprep.mubr.bf16.mxu0 0
    %607 = vmatmul.mubr.bf16.gmra.mrb[0].mxu0 %v449
    %v608 = vpop.f32.mrb[0].mxu0
    %v609 = vadd.f32 0.0, %v608
    %v610 = vpop.f32.mrb[0].mxu0
    %v611 = vpop.f32.mrb[0].mxu0
    %v612 = vadd.f32 0.0, %v611
    %v613 = vpop.f32.mrb[0].mxu0
    %614 = vmatprep.mubr.bf16.mxu0 0
    %615 = vmatmul.mubr.bf16.gmra.mrb[0].mxu0 %v452
    %v616 = vpop.f32.mrb[0].mxu0
    %v617 = vadd.f32 0.0, %v616
    %v618 = vpop.f32.mrb[0].mxu0
    %v619 = vpop.f32.mrb[0].mxu0
    %v620 = vadd.f32 0.0, %v619
    %v621 = vpop.f32.mrb[0].mxu0
    %622 = vmatprep.mubr.bf16.mxu0 0
    %623 = vmatmul.mubr.bf16.gmra.mrb[0].mxu0 %v455
    %v624 = vpop.f32.mrb[0].mxu0
    %v625 = vadd.f32 0.0, %v624
    %v626 = vpop.f32.mrb[0].mxu0
    %v627 = vpop.f32.mrb[0].mxu0
    %v628 = vadd.f32 0.0, %v627
    %v629 = vpop.f32.mrb[0].mxu0
    %630 = vmatprep.mubr.bf16.mxu0 0
    %631 = vmatmul.mubr.bf16.gmra.mrb[0].mxu0 %v458
    %v632 = vpop.f32.mrb[0].mxu0
    %v633 = vadd.f32 0.0, %v632
    %v634 = vpop.f32.mrb[0].mxu0
    %v635 = vpop.f32.mrb[0].mxu0
    %v636 = vadd.f32 0.0, %v635
    %v637 = vpop.f32.mrb[0].mxu0
    %638 = vmatprep.mubr.bf16.mxu0 0
    %639 = vmatmul.mubr.bf16.gmra.mrb[0].mxu0 %v461
    %v640 = vpop.f32.mrb[0].mxu0
    %v641 = vadd.f32 0.0, %v640
    %v642 = vpop.f32.mrb[0].mxu0
    %v643 = vpop.f32.mrb[0].mxu0
    %v644 = vadd.f32 0.0, %v643
    %v645 = vpop.f32.mrb[0].mxu0
    %646 = vmatprep.mubr.bf16.mxu0 0
    %647 = vmatmul.mubr.bf16.gmra.mrb[0].mxu0 %v464
    %v648 = vpop.f32.mrb[0].mxu0
    %v649 = vadd.f32 0.0, %v648
    %v650 = vpop.f32.mrb[0].mxu0
    %v651 = vpop.f32.mrb[0].mxu0
    %v652 = vadd.f32 0.0, %v651
    %v653 = vpop.f32.mrb[0].mxu0
    %654 = vmatprep.mubr.bf16.mxu0 0
    %655 = vmatmul.mubr.bf16.gmra.mrb[0].mxu0 %v467
    %v656 = vpop.f32.mrb[0].mxu0
    %v657 = vadd.f32 0.0, %v656
    %v658 = vpop.f32.mrb[0].mxu0
    %v659 = vpop.f32.mrb[0].mxu0
    %v660 = vadd.f32 0.0, %v659
    %v661 = vpop.f32.mrb[0].mxu0
    %662 = vmatprep.mubr.bf16.mxu0 0
    %663 = vmatmul.mubr.bf16.gmra.mrb[0].mxu0 %v470
    %v664 = vpop.f32.mrb[0].mxu0
    %v665 = vadd.f32 0.0, %v664
    %v666 = vpop.f32.mrb[0].mxu0
    %v667 = vpop.f32.mrb[0].mxu0
    %v668 = vadd.f32 0.0, %v667
    %v669 = vpop.f32.mrb[0].mxu0
    %670 = vmatprep.mubr.bf16.mxu0 0
    %671 = vmatmul.mubr.bf16.gmra.mrb[0].mxu0 %v473
    %v672 = vpop.f32.mrb[0].mxu0
    %v673 = vadd.f32 0.0, %v672
    %v674 = vpop.f32.mrb[0].mxu0
    %v675 = vpop.f32.mrb[0].mxu0
    %v676 = vadd.f32 0.0, %v675
    %v677 = vpop.f32.mrb[0].mxu0
    %678 = vmatprep.mubr.bf16.mxu0 0
    %679 = vmatmul.mubr.bf16.gmra.mrb[0].mxu0 %v476
    %v680 = vpop.f32.mrb[0].mxu0
    %v681 = vadd.f32 0.0, %v680
    %v682 = vpop.f32.mrb[0].mxu0
    %v683 = vpop.f32.mrb[0].mxu0
    %v684 = vadd.f32 0.0, %v683
    %v685 = vpop.f32.mrb[0].mxu0
    %686 = vmatprep.mubr.bf16.mxu0 0
    %687 = vmatmul.mubr.bf16.gmra.mrb[0].mxu0 %v479
    %v688 = vpop.f32.mrb[0].mxu0
    %v689 = vadd.f32 0.0, %v688
    %v690 = vpop.f32.mrb[0].mxu0
    %v691 = vpop.f32.mrb[0].mxu0
    %v692 = vadd.f32 0.0, %v691
    %v693 = vpop.f32.mrb[0].mxu0
    %694 = vmatprep.mubr.bf16.mxu0 0
    %695 = vmatmul.mubr.bf16.gmra.mrb[0].mxu0 %v482
    %v696 = vpop.f32.mrb[0].mxu0
    %v697 = vadd.f32 0.0, %v696
    %v698 = vpop.f32.mrb[0].mxu0
    %v699 = vpop.f32.mrb[0].mxu0
    %v700 = vadd.f32 0.0, %v699
    %v701 = vpop.f32.mrb[0].mxu0
    %702 = vmatprep.mubr.bf16.mxu0 0
    %703 = vmatmul.mubr.bf16.gmra.mrb[0].mxu0 %v485
    %v704 = vpop.f32.mrb[0].mxu0
    %v705 = vadd.f32 0.0, %v704
    %v706 = vpop.f32.mrb[0].mxu0
    %v707 = vpop.f32.mrb[0].mxu0
    %v708 = vadd.f32 0.0, %v707
    %v709 = vpop.f32.mrb[0].mxu0
    %710 = vmatprep.mubr.bf16.mxu0 0
    %711 = vmatmul.mubr.bf16.gmra.mrb[0].mxu0 %v488
    %v712 = vpop.f32.mrb[0].mxu0
    %v713 = vadd.f32 0.0, %v712
    %v714 = vpop.f32.mrb[0].mxu0
    %v715 = vpop.f32.mrb[0].mxu0
    %v716 = vadd.f32 0.0, %v715
    %v717 = vpop.f32.mrb[0].mxu0
    %718 = vmatprep.mubr.bf16.mxu0 0
    %719 = vmatmul.mubr.bf16.gmra.mrb[0].mxu0 %v491
    %v720 = vpop.f32.mrb[0].mxu0
    %v721 = vadd.f32 0.0, %v720
    %v722 = vpop.f32.mrb[0].mxu0
    %v723 = vpop.f32.mrb[0].mxu0
    %v724 = vadd.f32 0.0, %v723
    %v725 = vpop.f32.mrb[0].mxu0
    %726 = vmatprep.mubr.bf16.mxu0 0
    %727 = vmatmul.mubr.bf16.gmra.mrb[0].mxu0 %v494
    %v728 = vpop.f32.mrb[0].mxu0
    %v729 = vadd.f32 0.0, %v728
    %v730 = vpop.f32.mrb[0].mxu0
    %v731 = vpop.f32.mrb[0].mxu0
    %v732 = vadd.f32 0.0, %v731
    %v733 = vpop.f32.mrb[0].mxu0
    %734 = vmatprep.mubr.bf16.mxu0 0
    %735 = vmatmul.mubr.bf16.gmra.mrb[0].mxu0 %v497
    %v736 = vpop.f32.mrb[0].mxu0
    %v737 = vadd.f32 0.0, %v736
    %v738 = vpop.f32.mrb[0].mxu0
    %v739 = vpop.f32.mrb[0].mxu0
    %v740 = vadd.f32 0.0, %v739
    %v741 = vpop.f32.mrb[0].mxu0
    %742 = vmatprep.mubr.bf16.mxu0 0
    %743 = vmatmul.mubr.bf16.gmra.mrb[0].mxu0 %v500
    %v744 = vpop.f32.mrb[0].mxu0
    %v745 = vadd.f32 0.0, %v744
    %v746 = vpop.f32.mrb[0].mxu0
    %v747 = vpop.f32.mrb[0].mxu0
    %v748 = vadd.f32 0.0, %v747
    %v749 = vpop.f32.mrb[0].mxu0
    %750 = vmatprep.mubr.bf16.mxu0 0
    %751 = vmatmul.mubr.bf16.gmra.mrb[0].mxu0 %v503
    %v752 = vpop.f32.mrb[0].mxu0
    %v753 = vadd.f32 0.0, %v752
    %v754 = vpop.f32.mrb[0].mxu0
    %v755 = vpop.f32.mrb[0].mxu0
    %v756 = vadd.f32 0.0, %v755
    %v757 = vpop.f32.mrb[0].mxu0
    %758 = vmatprep.mubr.bf16.mxu0 0
    %759 = vmatmul.mubr.bf16.gmra.mrb[0].mxu0 %v506
    %v760 = vpop.f32.mrb[0].mxu0
    %v761 = vadd.f32 0.0, %v760
    %v762 = vpop.f32.mrb[0].mxu0
    %v763 = vpop.f32.mrb[0].mxu0
    %v764 = vadd.f32 0.0, %v763
    %v765 = vpop.f32.mrb[0].mxu0
    %766 = vmatprep.mubr.bf16.mxu0 0
    %767 = vmatmul.mubr.bf16.gmra.mrb[0].mxu0 %v509
    %v768 = vpop.f32.mrb[0].mxu0
    %v769 = vadd.f32 0.0, %v768
    %v770 = vpop.f32.mrb[0].mxu0
    %v771 = vpop.f32.mrb[0].mxu0
    %v772 = vadd.f32 0.0, %v771
    %v773 = vpop.f32.mrb[0].mxu0
    %774 = vmatprep.mubr.bf16.mxu0 0
    %775 = vmatmul.mubr.bf16.gmra.mrb[0].mxu0 %v512
    %v776 = vpop.f32.mrb[0].mxu0
    %v777 = vadd.f32 0.0, %v776
    %v778 = vpop.f32.mrb[0].mxu0
    %v779 = vpop.f32.mrb[0].mxu0
    %v780 = vadd.f32 0.0, %v779
    %v781 = vpop.f32.mrb[0].mxu0
    %782 = vmatprep.mubr.bf16.mxu0 0
    %783 = vmatmul.mubr.bf16.gmra.mrb[0].mxu0 %v515
    %v784 = vpop.f32.mrb[0].mxu0
    %v785 = vadd.f32 0.0, %v784
    %v786 = vpop.f32.mrb[0].mxu0
    %v787 = vpop.f32.mrb[0].mxu0
    %v788 = vadd.f32 0.0, %v787
    %v789 = vpop.f32.mrb[0].mxu0
    %790 = vmatprep.mubr.bf16.mxu0 0
    %791 = vmatmul.mubr.bf16.gmra.mrb[0].mxu0 %v518
    %v792 = vpop.f32.mrb[0].mxu0
    %v793 = vadd.f32 0.0, %v792
    %v794 = vpop.f32.mrb[0].mxu0
    %v795 = vpop.f32.mrb[0].mxu0
    %v796 = vadd.f32 0.0, %v795
    %v797 = vpop.f32.mrb[0].mxu0
    %798 = vmatprep.mubr.bf16.mxu0 0
    %799 = vmatmul.mubr.bf16.gmra.mrb[0].mxu0 %v521
    %v800 = vpop.f32.mrb[0].mxu0
    %v801 = vadd.f32 0.0, %v800
    %v802 = vpop.f32.mrb[0].mxu0
    %v803 = vpop.f32.mrb[0].mxu0
    %v804 = vadd.f32 0.0, %v803
    %v805 = vpop.f32.mrb[0].mxu0
    %806 = vmatprep.mubr.bf16.mxu0 0
    %807 = vmatmul.mubr.bf16.gmra.mrb[0].mxu0 %v524
    %v808 = vpop.f32.mrb[0].mxu0
    %v809 = vadd.f32 0.0, %v808
    %v810 = vpop.f32.mrb[0].mxu0
    %v811 = vpop.f32.mrb[0].mxu0
    %v812 = vadd.f32 0.0, %v811
    %v813 = vpop.f32.mrb[0].mxu0
    %814 = vdwg.mxu0
    %v815 = vld [vmem:[#allocation5] sm:$0x1]
    %v816 = vld [vmem:[#allocation7] sm:$0x1]
    %v817 = vmul.f32 %v561, %v561
    %v818 = vmul.f32 %v564, %v564
    %v819 = vmul.f32 %v569, %v569
    %v820 = vmul.f32 %v572, %v572
    %v821 = vmul.f32 %v577, %v577
    %v822 = vmul.f32 %v580, %v580
    %v823 = vmul.f32 %v585, %v585
    %v824 = vmul.f32 %v588, %v588
    %v825 = vmul.f32 %v593, %v593
    %v826 = vmul.f32 %v596, %v596
    %v827 = vmul.f32 %v601, %v601
    %v828 = vmul.f32 %v604, %v604
    %v829 = vmul.f32 %v609, %v609
    %v830 = vmul.f32 %v612, %v612
    %v831 = vmul.f32 %v617, %v617
    %v832 = vmul.f32 %v620, %v620
    %v833 = vmul.f32 %v625, %v625
    %v834 = vmul.f32 %v628, %v628
    %v835 = vmul.f32 %v633, %v633
    %v836 = vmul.f32 %v636, %v636
    %v837 = vmul.f32 %v641, %v641
    %v838 = vmul.f32 %v644, %v644
    %v839 = vmul.f32 %v649, %v649
    %v840 = vmul.f32 %v652, %v652
    %v841 = vmul.f32 %v657, %v657
    %v842 = vmul.f32 %v660, %v660
    %v843 = vmul.f32 %v665, %v665
    %v844 = vmul.f32 %v668, %v668
    %v845 = vmul.f32 %v673, %v673
    %v846 = vmul.f32 %v676, %v676
    %v847 = vmul.f32 %v681, %v681
    %v848 = vmul.f32 %v684, %v684
    %v849 = vmul.f32 %v689, %v689
    %v850 = vmul.f32 %v692, %v692
    %v851 = vmul.f32 %v697, %v697
    %v852 = vmul.f32 %v700, %v700
    %v853 = vmul.f32 %v705, %v705
    %v854 = vmul.f32 %v708, %v708
    %v855 = vmul.f32 %v713, %v713
    %v856 = vmul.f32 %v716, %v716
    %v857 = vmul.f32 %v721, %v721
    %v858 = vmul.f32 %v724, %v724
    %v859 = vmul.f32 %v729, %v729
    %v860 = vmul.f32 %v732, %v732
    %v861 = vmul.f32 %v737, %v737
    %v862 = vmul.f32 %v740, %v740
    %v863 = vmul.f32 %v745, %v745
    %v864 = vmul.f32 %v748, %v748
    %v865 = vmul.f32 %v753, %v753
    %v866 = vmul.f32 %v756, %v756
    %v867 = vmul.f32 %v761, %v761
    %v868 = vmul.f32 %v764, %v764
    %v869 = vmul.f32 %v769, %v769
    %v870 = vmul.f32 %v772, %v772
    %v871 = vmul.f32 %v777, %v777
    %v872 = vmul.f32 %v780, %v780
    %v873 = vmul.f32 %v785, %v785
    %v874 = vmul.f32 %v788, %v788
    %v875 = vmul.f32 %v793, %v793
    %v876 = vmul.f32 %v796, %v796
    %v877 = vmul.f32 %v801, %v801
    %v878 = vmul.f32 %v804, %v804
    %v879 = vmul.f32 %v809, %v809
    %v880 = vmul.f32 %v812, %v812
    %v881 = vadd.f32 %v561, %v564
    %v882 = vadd.f32 %v881, %v569
    %v883 = vadd.f32 %v882, %v572
    %v884 = vadd.f32 %v883, %v577
    %v885 = vadd.f32 %v884, %v580
    %v886 = vadd.f32 %v885, %v585
    %v887 = vadd.f32 %v886, %v588
    %v888 = vadd.f32 %v887, %v593
    %v889 = vadd.f32 %v888, %v596
    %v890 = vadd.f32 %v889, %v601
    %v891 = vadd.f32 %v890, %v604
    %v892 = vadd.f32 %v891, %v609
    %v893 = vadd.f32 %v892, %v612
    %v894 = vadd.f32 %v893, %v617
    %v895 = vadd.f32 %v894, %v620
    %v896 = vadd.f32 %v895, %v625
    %v897 = vadd.f32 %v896, %v628
    %v898 = vadd.f32 %v897, %v633
    %v899 = vadd.f32 %v898, %v636
    %v900 = vadd.f32 %v899, %v641
    %v901 = vadd.f32 %v900, %v644
    %v902 = vadd.f32 %v901, %v649
    %v903 = vadd.f32 %v902, %v652
    %v904 = vadd.f32 %v903, %v657
    %v905 = vadd.f32 %v904, %v660
    %v906 = vadd.f32 %v905, %v665
    %v907 = vadd.f32 %v906, %v668
    %v908 = vadd.f32 %v907, %v673
    %v909 = vadd.f32 %v908, %v676
    %v910 = vadd.f32 %v909, %v681
    %v911 = vadd.f32 %v910, %v684
    %v912 = vadd.f32 %v911, %v689
    %v913 = vadd.f32 %v912, %v692
    %v914 = vadd.f32 %v913, %v697
    %v915 = vadd.f32 %v914, %v700
    %v916 = vadd.f32 %v915, %v705
    %v917 = vadd.f32 %v916, %v708
    %v918 = vadd.f32 %v917, %v713
    %v919 = vadd.f32 %v918, %v716
    %v920 = vadd.f32 %v919, %v721
    %v921 = vadd.f32 %v920, %v724
    %v922 = vadd.f32 %v921, %v729
    %v923 = vadd.f32 %v922, %v732
    %v924 = vadd.f32 %v923, %v737
    %v925 = vadd.f32 %v924, %v740
    %v926 = vadd.f32 %v925, %v745
    %v927 = vadd.f32 %v926, %v748
    %v928 = vadd.f32 %v927, %v753
    %v929 = vadd.f32 %v928, %v756
    %v930 = vadd.f32 %v929, %v761
    %v931 = vadd.f32 %v930, %v764
    %v932 = vadd.f32 %v931, %v769
    %v933 = vadd.f32 %v932, %v772
    %v934 = vadd.f32 %v933, %v777
    %v935 = vadd.f32 %v934, %v780
    %v936 = vadd.f32 %v935, %v785
    %v937 = vadd.f32 %v936, %v788
    %v938 = vadd.f32 %v937, %v793
    %v939 = vadd.f32 %v938, %v796
    %v940 = vadd.f32 %v939, %v801
    %v941 = vadd.f32 %v940, %v804
    %v942 = vadd.f32 %v941, %v809
    %v943 = vadd.f32 %v942, %v812
    %v944 = vrot.slane %v943, 4
    %v945 = vadd.f32 %v943, %v944
    %v946 = vrot.slane %v945, 2
    %v947 = vadd.f32 %v945, %v946
    %v948 = vrot.slane %v947, 1
    %v949 = vadd.f32 %v947, %v948
    %v950 = vadd.f32 %v817, %v818
    %v951 = vadd.f32 %v950, %v819
    %v952 = vadd.f32 %v951, %v820
    %v953 = vadd.f32 %v952, %v821
    %v954 = vadd.f32 %v953, %v822
    %v955 = vadd.f32 %v954, %v823
    %v956 = vadd.f32 %v955, %v824
    %v957 = vadd.f32 %v956, %v825
    %v958 = vadd.f32 %v957, %v826
    %v959 = vadd.f32 %v958, %v827
    %v960 = vadd.f32 %v959, %v828
    %v961 = vadd.f32 %v960, %v829
    %v962 = vadd.f32 %v961, %v830
    %v963 = vadd.f32 %v962, %v831
    %v964 = vadd.f32 %v963, %v832
    %v965 = vadd.f32 %v964, %v833
    %v966 = vadd.f32 %v965, %v834
    %v967 = vadd.f32 %v966, %v835
    %v968 = vadd.f32 %v967, %v836
    %v969 = vadd.f32 %v968, %v837
    %v970 = vadd.f32 %v969, %v838
    %v971 = vadd.f32 %v970, %v839
    %v972 = vadd.f32 %v971, %v840
    %v973 = vadd.f32 %v972, %v841
    %v974 = vadd.f32 %v973, %v842
    %v975 = vadd.f32 %v974, %v843
    %v976 = vadd.f32 %v975, %v844
    %v977 = vadd.f32 %v976, %v845
    %v978 = vadd.f32 %v977, %v846
    %v979 = vadd.f32 %v978, %v847
    %v980 = vadd.f32 %v979, %v848
    %v981 = vadd.f32 %v980, %v849
    %v982 = vadd.f32 %v981, %v850
    %v983 = vadd.f32 %v982, %v851
    %v984 = vadd.f32 %v983, %v852
    %v985 = vadd.f32 %v984, %v853
    %v986 = vadd.f32 %v985, %v854
    %v987 = vadd.f32 %v986, %v855
    %v988 = vadd.f32 %v987, %v856
    %v989 = vadd.f32 %v988, %v857
    %v990 = vadd.f32 %v989, %v858
    %v991 = vadd.f32 %v990, %v859
    %v992 = vadd.f32 %v991, %v860
    %v993 = vadd.f32 %v992, %v861
    %v994 = vadd.f32 %v993, %v862
    %v995 = vadd.f32 %v994, %v863
    %v996 = vadd.f32 %v995, %v864
    %v997 = vadd.f32 %v996, %v865
    %v998 = vadd.f32 %v997, %v866
    %v999 = vadd.f32 %v998, %v867
    %v1000 = vadd.f32 %v999, %v868
    %v1001 = vadd.f32 %v1000, %v869
    %v1002 = vadd.f32 %v1001, %v870
    %v1003 = vadd.f32 %v1002, %v871
    %v1004 = vadd.f32 %v1003, %v872
    %v1005 = vadd.f32 %v1004, %v873
    %v1006 = vadd.f32 %v1005, %v874
    %v1007 = vadd.f32 %v1006, %v875
    %v1008 = vadd.f32 %v1007, %v876
    %v1009 = vadd.f32 %v1008, %v877
    %v1010 = vadd.f32 %v1009, %v878
    %v1011 = vadd.f32 %v1010, %v879
    %v1012 = vadd.f32 %v1011, %v880
    %v1013 = vrot.slane %v1012, 4
    %v1014 = vadd.f32 %v1012, %v1013
    %v1015 = vrot.slane %v1014, 2
    %v1016 = vadd.f32 %v1014, %v1015
    %v1017 = vrot.slane %v1016, 1
    %v1018 = vadd.f32 %v1016, %v1017
    %v1019 = vmul.f32 %v949, 0.001953125
    %v1020 = vmul.f32 %v1018, 0.001953125
    %v1021 = vmul.f32 %v1019, %v1019
    %v1022 = vsub.f32 %v1020, %v1021
    %v1023 = vmax.f32 %v1022, 0.0
    %v1024 = vadd.f32 %v1023, 1e-05
    %v1025 = vrsqrt.pop %v1024
    %v1026 = vmul.f32 %v815, %v1025
    %v1027 = vmul.f32 %v1019, %v1026
    %v1028 = vsub.f32 %v816, %v1027
    %v1030 = vlaneseq
    %v1031 = vshrl.u32 %v1030, 7
    %v1032 = vsub.s32 0, %v1031
    %v1033 = vrot.slane %v1026, %v1032
    %v1035 = vmul.f32 %v561, %v1033
    %v1036 = vmul.f32 %v564, %v1033
    %v1037 = vmul.f32 %v569, %v1033
    %v1038 = vmul.f32 %v572, %v1033
    %v1039 = vmul.f32 %v577, %v1033
    %v1040 = vmul.f32 %v580, %v1033
    %v1041 = vmul.f32 %v585, %v1033
    %v1042 = vmul.f32 %v588, %v1033
    %v1043 = vmul.f32 %v593, %v1033
    %v1044 = vmul.f32 %v596, %v1033
    %v1045 = vmul.f32 %v601, %v1033
    %v1046 = vmul.f32 %v604, %v1033
    %v1047 = vmul.f32 %v609, %v1033
    %v1048 = vmul.f32 %v612, %v1033
    %v1049 = vmul.f32 %v617, %v1033
    %v1050 = vmul.f32 %v620, %v1033
    %v1051 = vmul.f32 %v625, %v1033
    %v1052 = vmul.f32 %v628, %v1033
    %v1053 = vmul.f32 %v633, %v1033
    %v1054 = vmul.f32 %v636, %v1033
    %v1055 = vmul.f32 %v641, %v1033
    %v1056 = vmul.f32 %v644, %v1033
    %v1057 = vmul.f32 %v649, %v1033
    %v1058 = vmul.f32 %v652, %v1033
    %v1059 = vmul.f32 %v657, %v1033
    %v1060 = vmul.f32 %v660, %v1033
    %v1061 = vmul.f32 %v665, %v1033
    %v1062 = vmul.f32 %v668, %v1033
    %v1063 = vmul.f32 %v673, %v1033
    %v1064 = vmul.f32 %v676, %v1033
    %v1065 = vmul.f32 %v681, %v1033
    %v1066 = vmul.f32 %v684, %v1033
    %v1067 = vmul.f32 %v689, %v1033
    %v1068 = vmul.f32 %v692, %v1033
    %v1069 = vmul.f32 %v697, %v1033
    %v1070 = vmul.f32 %v700, %v1033
    %v1071 = vmul.f32 %v705, %v1033
    %v1072 = vmul.f32 %v708, %v1033
    %v1073 = vmul.f32 %v713, %v1033
    %v1074 = vmul.f32 %v716, %v1033
    %v1075 = vmul.f32 %v721, %v1033
    %v1076 = vmul.f32 %v724, %v1033
    %v1077 = vmul.f32 %v729, %v1033
    %v1078 = vmul.f32 %v732, %v1033
    %v1079 = vmul.f32 %v737, %v1033
    %v1080 = vmul.f32 %v740, %v1033
    %v1081 = vmul.f32 %v745, %v1033
    %v1082 = vmul.f32 %v748, %v1033
    %v1083 = vmul.f32 %v753, %v1033
    %v1084 = vmul.f32 %v756, %v1033
    %v1085 = vmul.f32 %v761, %v1033
    %v1086 = vmul.f32 %v764, %v1033
    %v1087 = vmul.f32 %v769, %v1033
    %v1088 = vmul.f32 %v772, %v1033
    %v1089 = vmul.f32 %v777, %v1033
    %v1090 = vmul.f32 %v780, %v1033
    %v1091 = vmul.f32 %v785, %v1033
    %v1092 = vmul.f32 %v788, %v1033
    %v1093 = vmul.f32 %v793, %v1033
    %v1094 = vmul.f32 %v796, %v1033
    %v1095 = vmul.f32 %v801, %v1033
    %v1096 = vmul.f32 %v804, %v1033
    %v1097 = vmul.f32 %v809, %v1033
    %v1098 = vmul.f32 %v812, %v1033
    %v1100 = vlaneseq
    %v1101 = vshrl.u32 %v1100, 7
    %v1102 = vsub.s32 0, %v1101
    %v1103 = vrot.slane %v1028, %v1102
    %v1105 = vadd.f32 %v1035, %v1103
    %v1106 = vadd.f32 %v1036, %v1103
    %v1107 = vadd.f32 %v1037, %v1103
    %v1108 = vadd.f32 %v1038, %v1103
    %v1109 = vadd.f32 %v1039, %v1103
    %v1110 = vadd.f32 %v1040, %v1103
    %v1111 = vadd.f32 %v1041, %v1103
    %v1112 = vadd.f32 %v1042, %v1103
    %v1113 = vadd.f32 %v1043, %v1103
    %v1114 = vadd.f32 %v1044, %v1103
    %v1115 = vadd.f32 %v1045, %v1103
    %v1116 = vadd.f32 %v1046, %v1103
    %v1117 = vadd.f32 %v1047, %v1103
    %v1118 = vadd.f32 %v1048, %v1103
    %v1119 = vadd.f32 %v1049, %v1103
    %v1120 = vadd.f32 %v1050, %v1103
    %v1121 = vadd.f32 %v1051, %v1103
    %v1122 = vadd.f32 %v1052, %v1103
    %v1123 = vadd.f32 %v1053, %v1103
    %v1124 = vadd.f32 %v1054, %v1103
    %v1125 = vadd.f32 %v1055, %v1103
    %v1126 = vadd.f32 %v1056, %v1103
    %v1127 = vadd.f32 %v1057, %v1103
    %v1128 = vadd.f32 %v1058, %v1103
    %v1129 = vadd.f32 %v1059, %v1103
    %v1130 = vadd.f32 %v1060, %v1103
    %v1131 = vadd.f32 %v1061, %v1103
    %v1132 = vadd.f32 %v1062, %v1103
    %v1133 = vadd.f32 %v1063, %v1103
    %v1134 = vadd.f32 %v1064, %v1103
    %v1135 = vadd.f32 %v1065, %v1103
    %v1136 = vadd.f32 %v1066, %v1103
    %v1137 = vadd.f32 %v1067, %v1103
    %v1138 = vadd.f32 %v1068, %v1103
    %v1139 = vadd.f32 %v1069, %v1103
    %v1140 = vadd.f32 %v1070, %v1103
    %v1141 = vadd.f32 %v1071, %v1103
    %v1142 = vadd.f32 %v1072, %v1103
    %v1143 = vadd.f32 %v1073, %v1103
    %v1144 = vadd.f32 %v1074, %v1103
    %v1145 = vadd.f32 %v1075, %v1103
    %v1146 = vadd.f32 %v1076, %v1103
    %v1147 = vadd.f32 %v1077, %v1103
    %v1148 = vadd.f32 %v1078, %v1103
    %v1149 = vadd.f32 %v1079, %v1103
    %v1150 = vadd.f32 %v1080, %v1103
    %v1151 = vadd.f32 %v1081, %v1103
    %v1152 = vadd.f32 %v1082, %v1103
    %v1153 = vadd.f32 %v1083, %v1103
    %v1154 = vadd.f32 %v1084, %v1103
    %v1155 = vadd.f32 %v1085, %v1103
    %v1156 = vadd.f32 %v1086, %v1103
    %v1157 = vadd.f32 %v1087, %v1103
    %v1158 = vadd.f32 %v1088, %v1103
    %v1159 = vadd.f32 %v1089, %v1103
    %v1160 = vadd.f32 %v1090, %v1103
    %v1161 = vadd.f32 %v1091, %v1103
    %v1162 = vadd.f32 %v1092, %v1103
    %v1163 = vadd.f32 %v1093, %v1103
    %v1164 = vadd.f32 %v1094, %v1103
    %v1165 = vadd.f32 %v1095, %v1103
    %v1166 = vadd.f32 %v1096, %v1103
    %v1167 = vadd.f32 %v1097, %v1103
    %v1168 = vadd.f32 %v1098, %v1103
    %vm1169 = vcmp.ge.f32.partialorder %v1105, 0.0
    %vm1170 = vcmp.ge.f32.partialorder %v1106, 0.0
    %vm1171 = vcmp.ge.f32.partialorder %v1107, 0.0
    %vm1172 = vcmp.ge.f32.partialorder %v1108, 0.0
    %vm1173 = vcmp.ge.f32.partialorder %v1109, 0.0
    %vm1174 = vcmp.ge.f32.partialorder %v1110, 0.0
    %vm1175 = vcmp.ge.f32.partialorder %v1111, 0.0
    %vm1176 = vcmp.ge.f32.partialorder %v1112, 0.0
    %vm1177 = vcmp.ge.f32.partialorder %v1113, 0.0
    %vm1178 = vcmp.ge.f32.partialorder %v1114, 0.0
    %vm1179 = vcmp.ge.f32.partialorder %v1115, 0.0
    %vm1180 = vcmp.ge.f32.partialorder %v1116, 0.0
    %vm1181 = vcmp.ge.f32.partialorder %v1117, 0.0
    %vm1182 = vcmp.ge.f32.partialorder %v1118, 0.0
    %vm1183 = vcmp.ge.f32.partialorder %v1119, 0.0
    %vm1184 = vcmp.ge.f32.partialorder %v1120, 0.0
    %vm1185 = vcmp.ge.f32.partialorder %v1121, 0.0
    %vm1186 = vcmp.ge.f32.partialorder %v1122, 0.0
    %vm1187 = vcmp.ge.f32.partialorder %v1123, 0.0
    %vm1188 = vcmp.ge.f32.partialorder %v1124, 0.0
    %vm1189 = vcmp.ge.f32.partialorder %v1125, 0.0
    %vm1190 = vcmp.ge.f32.partialorder %v1126, 0.0
    %vm1191 = vcmp.ge.f32.partialorder %v1127, 0.0
    %vm1192 = vcmp.ge.f32.partialorder %v1128, 0.0
    %vm1193 = vcmp.ge.f32.partialorder %v1129, 0.0
    %vm1194 = vcmp.ge.f32.partialorder %v1130, 0.0
    %vm1195 = vcmp.ge.f32.partialorder %v1131, 0.0
    %vm1196 = vcmp.ge.f32.partialorder %v1132, 0.0
    %vm1197 = vcmp.ge.f32.partialorder %v1133, 0.0
    %vm1198 = vcmp.ge.f32.partialorder %v1134, 0.0
    %vm1199 = vcmp.ge.f32.partialorder %v1135, 0.0
    %vm1200 = vcmp.ge.f32.partialorder %v1136, 0.0
    %vm1201 = vcmp.ge.f32.partialorder %v1137, 0.0
    %vm1202 = vcmp.ge.f32.partialorder %v1138, 0.0
    %vm1203 = vcmp.ge.f32.partialorder %v1139, 0.0
    %vm1204 = vcmp.ge.f32.partialorder %v1140, 0.0
    %vm1205 = vcmp.ge.f32.partialorder %v1141, 0.0
    %vm1206 = vcmp.ge.f32.partialorder %v1142, 0.0
    %vm1207 = vcmp.ge.f32.partialorder %v1143, 0.0
    %vm1208 = vcmp.ge.f32.partialorder %v1144, 0.0
    %vm1209 = vcmp.ge.f32.partialorder %v1145, 0.0
    %vm1210 = vcmp.ge.f32.partialorder %v1146, 0.0
    %vm1211 = vcmp.ge.f32.partialorder %v1147, 0.0
    %vm1212 = vcmp.ge.f32.partialorder %v1148, 0.0
    %vm1213 = vcmp.ge.f32.partialorder %v1149, 0.0
    %vm1214 = vcmp.ge.f32.partialorder %v1150, 0.0
    %vm1215 = vcmp.ge.f32.partialorder %v1151, 0.0
    %vm1216 = vcmp.ge.f32.partialorder %v1152, 0.0
    %vm1217 = vcmp.ge.f32.partialorder %v1153, 0.0
    %vm1218 = vcmp.ge.f32.partialorder %v1154, 0.0
    %vm1219 = vcmp.ge.f32.partialorder %v1155, 0.0
    %vm1220 = vcmp.ge.f32.partialorder %v1156, 0.0
    %vm1221 = vcmp.ge.f32.partialorder %v1157, 0.0
    %vm1222 = vcmp.ge.f32.partialorder %v1158, 0.0
    %vm1223 = vcmp.ge.f32.partialorder %v1159, 0.0
    %vm1224 = vcmp.ge.f32.partialorder %v1160, 0.0
    %vm1225 = vcmp.ge.f32.partialorder %v1161, 0.0
    %vm1226 = vcmp.ge.f32.partialorder %v1162, 0.0
    %vm1227 = vcmp.ge.f32.partialorder %v1163, 0.0
    %vm1228 = vcmp.ge.f32.partialorder %v1164, 0.0
    %vm1229 = vcmp.ge.f32.partialorder %v1165, 0.0
    %vm1230 = vcmp.ge.f32.partialorder %v1166, 0.0
    %vm1231 = vcmp.ge.f32.partialorder %v1167, 0.0
    %vm1232 = vcmp.ge.f32.partialorder %v1168, 0.0
    %v1233 = vmul.f32 %v1105, 0.2
    %v1234 = vmul.f32 %v1106, 0.2
    %v1235 = vmul.f32 %v1107, 0.2
    %v1236 = vmul.f32 %v1108, 0.2
    %v1237 = vmul.f32 %v1109, 0.2
    %v1238 = vmul.f32 %v1110, 0.2
    %v1239 = vmul.f32 %v1111, 0.2
    %v1240 = vmul.f32 %v1112, 0.2
    %v1241 = vmul.f32 %v1113, 0.2
    %v1242 = vmul.f32 %v1114, 0.2
    %v1243 = vmul.f32 %v1115, 0.2
    %v1244 = vmul.f32 %v1116, 0.2
    %v1245 = vmul.f32 %v1117, 0.2
    %v1246 = vmul.f32 %v1118, 0.2
    %v1247 = vmul.f32 %v1119, 0.2
    %v1248 = vmul.f32 %v1120, 0.2
    %v1249 = vmul.f32 %v1121, 0.2
    %v1250 = vmul.f32 %v1122, 0.2
    %v1251 = vmul.f32 %v1123, 0.2
    %v1252 = vmul.f32 %v1124, 0.2
    %v1253 = vmul.f32 %v1125, 0.2
    %v1254 = vmul.f32 %v1126, 0.2
    %v1255 = vmul.f32 %v1127, 0.2
    %v1256 = vmul.f32 %v1128, 0.2
    %v1257 = vmul.f32 %v1129, 0.2
    %v1258 = vmul.f32 %v1130, 0.2
    %v1259 = vmul.f32 %v1131, 0.2
    %v1260 = vmul.f32 %v1132, 0.2
    %v1261 = vmul.f32 %v1133, 0.2
    %v1262 = vmul.f32 %v1134, 0.2
    %v1263 = vmul.f32 %v1135, 0.2
    %v1264 = vmul.f32 %v1136, 0.2
    %v1265 = vmul.f32 %v1137, 0.2
    %v1266 = vmul.f32 %v1138, 0.2
    %v1267 = vmul.f32 %v1139, 0.2
    %v1268 = vmul.f32 %v1140, 0.2
    %v1269 = vmul.f32 %v1141, 0.2
    %v1270 = vmul.f32 %v1142, 0.2
    %v1271 = vmul.f32 %v1143, 0.2
    %v1272 = vmul.f32 %v1144, 0.2
    %v1273 = vmul.f32 %v1145, 0.2
    %v1274 = vmul.f32 %v1146, 0.2
    %v1275 = vmul.f32 %v1147, 0.2
    %v1276 = vmul.f32 %v1148, 0.2
    %v1277 = vmul.f32 %v1149, 0.2
    %v1278 = vmul.f32 %v1150, 0.2
    %v1279 = vmul.f32 %v1151, 0.2
    %v1280 = vmul.f32 %v1152, 0.2
    %v1281 = vmul.f32 %v1153, 0.2
    %v1282 = vmul.f32 %v1154, 0.2
    %v1283 = vmul.f32 %v1155, 0.2
    %v1284 = vmul.f32 %v1156, 0.2
    %v1285 = vmul.f32 %v1157, 0.2
    %v1286 = vmul.f32 %v1158, 0.2
    %v1287 = vmul.f32 %v1159, 0.2
    %v1288 = vmul.f32 %v1160, 0.2
    %v1289 = vmul.f32 %v1161, 0.2
    %v1290 = vmul.f32 %v1162, 0.2
    %v1291 = vmul.f32 %v1163, 0.2
    %v1292 = vmul.f32 %v1164, 0.2
    %v1293 = vmul.f32 %v1165, 0.2
    %v1294 = vmul.f32 %v1166, 0.2
    %v1295 = vmul.f32 %v1167, 0.2
    %v1296 = vmul.f32 %v1168, 0.2
    %v1297 = vsel %vm1169, %v1105, %v1233
    %v1298 = vsel %vm1170, %v1106, %v1234
    %v1299 = vsel %vm1171, %v1107, %v1235
    %v1300 = vsel %vm1172, %v1108, %v1236
    %v1301 = vsel %vm1173, %v1109, %v1237
    %v1302 = vsel %vm1174, %v1110, %v1238
    %v1303 = vsel %vm1175, %v1111, %v1239
    %v1304 = vsel %vm1176, %v1112, %v1240
    %v1305 = vsel %vm1177, %v1113, %v1241
    %v1306 = vsel %vm1178, %v1114, %v1242
    %v1307 = vsel %vm1179, %v1115, %v1243
    %v1308 = vsel %vm1180, %v1116, %v1244
    %v1309 = vsel %vm1181, %v1117, %v1245
    %v1310 = vsel %vm1182, %v1118, %v1246
    %v1311 = vsel %vm1183, %v1119, %v1247
    %v1312 = vsel %vm1184, %v1120, %v1248
    %v1313 = vsel %vm1185, %v1121, %v1249
    %v1314 = vsel %vm1186, %v1122, %v1250
    %v1315 = vsel %vm1187, %v1123, %v1251
    %v1316 = vsel %vm1188, %v1124, %v1252
    %v1317 = vsel %vm1189, %v1125, %v1253
    %v1318 = vsel %vm1190, %v1126, %v1254
    %v1319 = vsel %vm1191, %v1127, %v1255
    %v1320 = vsel %vm1192, %v1128, %v1256
    %v1321 = vsel %vm1193, %v1129, %v1257
    %v1322 = vsel %vm1194, %v1130, %v1258
    %v1323 = vsel %vm1195, %v1131, %v1259
    %v1324 = vsel %vm1196, %v1132, %v1260
    %v1325 = vsel %vm1197, %v1133, %v1261
    %v1326 = vsel %vm1198, %v1134, %v1262
    %v1327 = vsel %vm1199, %v1135, %v1263
    %v1328 = vsel %vm1200, %v1136, %v1264
    %v1329 = vsel %vm1201, %v1137, %v1265
    %v1330 = vsel %vm1202, %v1138, %v1266
    %v1331 = vsel %vm1203, %v1139, %v1267
    %v1332 = vsel %vm1204, %v1140, %v1268
    %v1333 = vsel %vm1205, %v1141, %v1269
    %v1334 = vsel %vm1206, %v1142, %v1270
    %v1335 = vsel %vm1207, %v1143, %v1271
    %v1336 = vsel %vm1208, %v1144, %v1272
    %v1337 = vsel %vm1209, %v1145, %v1273
    %v1338 = vsel %vm1210, %v1146, %v1274
    %v1339 = vsel %vm1211, %v1147, %v1275
    %v1340 = vsel %vm1212, %v1148, %v1276
    %v1341 = vsel %vm1213, %v1149, %v1277
    %v1342 = vsel %vm1214, %v1150, %v1278
    %v1343 = vsel %vm1215, %v1151, %v1279
    %v1344 = vsel %vm1216, %v1152, %v1280
    %v1345 = vsel %vm1217, %v1153, %v1281
    %v1346 = vsel %vm1218, %v1154, %v1282
    %v1347 = vsel %vm1219, %v1155, %v1283
    %v1348 = vsel %vm1220, %v1156, %v1284
    %v1349 = vsel %vm1221, %v1157, %v1285
    %v1350 = vsel %vm1222, %v1158, %v1286
    %v1351 = vsel %vm1223, %v1159, %v1287
    %v1352 = vsel %vm1224, %v1160, %v1288
    %v1353 = vsel %vm1225, %v1161, %v1289
    %v1354 = vsel %vm1226, %v1162, %v1290
    %v1355 = vsel %vm1227, %v1163, %v1291
    %v1356 = vsel %vm1228, %v1164, %v1292
    %v1357 = vsel %vm1229, %v1165, %v1293
    %v1358 = vsel %vm1230, %v1166, %v1294
    %v1359 = vsel %vm1231, %v1167, %v1295
    %v1360 = vsel %vm1232, %v1168, %v1296
    %v1361 = vpack.c.bf16 %v1298, %v1297
    %v1362 = vpack.c.bf16 %v1300, %v1299
    %v1363 = vpack.c.bf16 %v1302, %v1301
    %v1364 = vpack.c.bf16 %v1304, %v1303
    %v1365 = vpack.c.bf16 %v1306, %v1305
    %v1366 = vpack.c.bf16 %v1308, %v1307
    %v1367 = vpack.c.bf16 %v1310, %v1309
    %v1368 = vpack.c.bf16 %v1312, %v1311
    %v1369 = vpack.c.bf16 %v1314, %v1313
    %v1370 = vpack.c.bf16 %v1316, %v1315
    %v1371 = vpack.c.bf16 %v1318, %v1317
    %v1372 = vpack.c.bf16 %v1320, %v1319
    %v1373 = vpack.c.bf16 %v1322, %v1321
    %v1374 = vpack.c.bf16 %v1324, %v1323
    %v1375 = vpack.c.bf16 %v1326, %v1325
    %v1376 = vpack.c.bf16 %v1328, %v1327
    %v1377 = vpack.c.bf16 %v1330, %v1329
    %v1378 = vpack.c.bf16 %v1332, %v1331
    %v1379 = vpack.c.bf16 %v1334, %v1333
    %v1380 = vpack.c.bf16 %v1336, %v1335
    %v1381 = vpack.c.bf16 %v1338, %v1337
    %v1382 = vpack.c.bf16 %v1340, %v1339
    %v1383 = vpack.c.bf16 %v1342, %v1341
    %v1384 = vpack.c.bf16 %v1344, %v1343
    %v1385 = vpack.c.bf16 %v1346, %v1345
    %v1386 = vpack.c.bf16 %v1348, %v1347
    %v1387 = vpack.c.bf16 %v1350, %v1349
    %v1388 = vpack.c.bf16 %v1352, %v1351
    %v1389 = vpack.c.bf16 %v1354, %v1353
    %v1390 = vpack.c.bf16 %v1356, %v1355
    %v1391 = vpack.c.bf16 %v1358, %v1357
    %v1392 = vpack.c.bf16 %v1360, %v1359
    %v1393 = vld [vmem:[#allocation8] sm:$0xff]
    %v1394 = vld [vmem:[#allocation8 + $0x8] sm:$0xff]
    %v1395 = vld [vmem:[#allocation8 + $0x10] sm:$0xff]
    %v1396 = vld [vmem:[#allocation8 + $0x18] sm:$0xff]
    %v1397 = vld [vmem:[#allocation8 + $0x20] sm:$0xff]
    %v1398 = vld [vmem:[#allocation8 + $0x28] sm:$0xff]
    %v1399 = vld [vmem:[#allocation8 + $0x30] sm:$0xff]
    %v1400 = vld [vmem:[#allocation8 + $0x38] sm:$0xff]
    %v1401 = vld [vmem:[#allocation8 + $0x40] sm:$0xff]
    %v1402 = vld [vmem:[#allocation8 + $0x48] sm:$0xff]
    %v1403 = vld [vmem:[#allocation8 + $0x50] sm:$0xff]
    %v1404 = vld [vmem:[#allocation8 + $0x58] sm:$0xff]
    %v1405 = vld [vmem:[#allocation8 + $0x60] sm:$0xff]
    %v1406 = vld [vmem:[#allocation8 + $0x68] sm:$0xff]
    %v1407 = vld [vmem:[#allocation8 + $0x70] sm:$0xff]
    %v1408 = vld [vmem:[#allocation8 + $0x78] sm:$0xff]
    %v1409 = vld [vmem:[#allocation8 + $0x80] sm:$0xff]
    %v1410 = vld [vmem:[#allocation8 + $0x88] sm:$0xff]
    %v1411 = vld [vmem:[#allocation8 + $0x90] sm:$0xff]
    %v1412 = vld [vmem:[#allocation8 + $0x98] sm:$0xff]
    %v1413 = vld [vmem:[#allocation8 + $0xa0] sm:$0xff]
    %v1414 = vld [vmem:[#allocation8 + $0xa8] sm:$0xff]
    %v1415 = vld [vmem:[#allocation8 + $0xb0] sm:$0xff]
    %v1416 = vld [vmem:[#allocation8 + $0xb8] sm:$0xff]
    %v1417 = vld [vmem:[#allocation8 + $0xc0] sm:$0xff]
    %v1418 = vld [vmem:[#allocation8 + $0xc8] sm:$0xff]
    %v1419 = vld [vmem:[#allocation8 + $0xd0] sm:$0xff]
    %v1420 = vld [vmem:[#allocation8 + $0xd8] sm:$0xff]
    %v1421 = vld [vmem:[#allocation8 + $0xe0] sm:$0xff]
    %v1422 = vld [vmem:[#allocation8 + $0xe8] sm:$0xff]
    %v1423 = vld [vmem:[#allocation8 + $0xf0] sm:$0xff]
    %v1424 = vld [vmem:[#allocation8 + $0xf8] sm:$0xff]
    %v1457 = vunpack.c.l.b16 %v1393
    %v1458 = vunpack.c.h.b16 %v1393
    %v1459 = vunpack.c.l.b16 %v1394
    %v1460 = vunpack.c.h.b16 %v1394
    %v1461 = vunpack.c.l.b16 %v1395
    %v1462 = vunpack.c.h.b16 %v1395
    %v1463 = vunpack.c.l.b16 %v1396
    %v1464 = vunpack.c.h.b16 %v1396
    %v1465 = vunpack.c.l.b16 %v1397
    %v1466 = vunpack.c.h.b16 %v1397
    %v1467 = vunpack.c.l.b16 %v1398
    %v1468 = vunpack.c.h.b16 %v1398
    %v1469 = vunpack.c.l.b16 %v1399
    %v1470 = vunpack.c.h.b16 %v1399
    %v1471 = vunpack.c.l.b16 %v1400
    %v1472 = vunpack.c.h.b16 %v1400
    %v1473 = vunpack.c.l.b16 %v1401
    %v1474 = vunpack.c.h.b16 %v1401
    %v1475 = vunpack.c.l.b16 %v1402
    %v1476 = vunpack.c.h.b16 %v1402
    %v1477 = vunpack.c.l.b16 %v1403
    %v1478 = vunpack.c.h.b16 %v1403
    %v1479 = vunpack.c.l.b16 %v1404
    %v1480 = vunpack.c.h.b16 %v1404
    %v1481 = vunpack.c.l.b16 %v1405
    %v1482 = vunpack.c.h.b16 %v1405
    %v1483 = vunpack.c.l.b16 %v1406
    %v1484 = vunpack.c.h.b16 %v1406
    %v1485 = vunpack.c.l.b16 %v1407
    %v1486 = vunpack.c.h.b16 %v1407
    %v1487 = vunpack.c.l.b16 %v1408
    %v1488 = vunpack.c.h.b16 %v1408
    %v1489 = vunpack.c.l.b16 %v1409
    %v1490 = vunpack.c.h.b16 %v1409
    %v1491 = vunpack.c.l.b16 %v1410
    %v1492 = vunpack.c.h.b16 %v1410
    %v1493 = vunpack.c.l.b16 %v1411
    %v1494 = vunpack.c.h.b16 %v1411
    %v1495 = vunpack.c.l.b16 %v1412
    %v1496 = vunpack.c.h.b16 %v1412
    %v1497 = vunpack.c.l.b16 %v1413
    %v1498 = vunpack.c.h.b16 %v1413
    %v1499 = vunpack.c.l.b16 %v1414
    %v1500 = vunpack.c.h.b16 %v1414
    %v1501 = vunpack.c.l.b16 %v1415
    %v1502 = vunpack.c.h.b16 %v1415
    %v1503 = vunpack.c.l.b16 %v1416
    %v1504 = vunpack.c.h.b16 %v1416
    %v1505 = vunpack.c.l.b16 %v1417
    %v1506 = vunpack.c.h.b16 %v1417
    %v1507 = vunpack.c.l.b16 %v1418
    %v1508 = vunpack.c.h.b16 %v1418
    %v1509 = vunpack.c.l.b16 %v1419
    %v1510 = vunpack.c.h.b16 %v1419
    %v1511 = vunpack.c.l.b16 %v1420
    %v1512 = vunpack.c.h.b16 %v1420
    %v1513 = vunpack.c.l.b16 %v1421
    %v1514 = vunpack.c.h.b16 %v1421
    %v1515 = vunpack.c.l.b16 %v1422
    %v1516 = vunpack.c.h.b16 %v1422
    %v1517 = vunpack.c.l.b16 %v1423
    %v1518 = vunpack.c.h.b16 %v1423
    %v1519 = vunpack.c.l.b16 %v1424
    %v1520 = vunpack.c.h.b16 %v1424
    %v1521 = vpack.c.b16 %v1461, %v1457
    %v1522 = vpack.c.b16 %v1462, %v1458
    %v1523 = vpack.c.b16 %v1463, %v1459
    %v1524 = vpack.c.b16 %v1464, %v1460
    %v1525 = vpack.c.b16 %v1469, %v1465
    %v1526 = vpack.c.b16 %v1470, %v1466
    %v1527 = vpack.c.b16 %v1471, %v1467
    %v1528 = vpack.c.b16 %v1472, %v1468
    %v1529 = vpack.c.b16 %v1477, %v1473
    %v1530 = vpack.c.b16 %v1478, %v1474
    %v1531 = vpack.c.b16 %v1479, %v1475
    %v1532 = vpack.c.b16 %v1480, %v1476
    %v1533 = vpack.c.b16 %v1485, %v1481
    %v1534 = vpack.c.b16 %v1486, %v1482
    %v1535 = vpack.c.b16 %v1487, %v1483
    %v1536 = vpack.c.b16 %v1488, %v1484
    %v1537 = vpack.c.b16 %v1493, %v1489
    %v1538 = vpack.c.b16 %v1494, %v1490
    %v1539 = vpack.c.b16 %v1495, %v1491
    %v1540 = vpack.c.b16 %v1496, %v1492
    %v1541 = vpack.c.b16 %v1501, %v1497
    %v1542 = vpack.c.b16 %v1502, %v1498
    %v1543 = vpack.c.b16 %v1503, %v1499
    %v1544 = vpack.c.b16 %v1504, %v1500
    %v1545 = vpack.c.b16 %v1509, %v1505
    %v1546 = vpack.c.b16 %v1510, %v1506
    %v1547 = vpack.c.b16 %v1511, %v1507
    %v1548 = vpack.c.b16 %v1512, %v1508
    %v1549 = vpack.c.b16 %v1517, %v1513
    %v1550 = vpack.c.b16 %v1518, %v1514
    %v1551 = vpack.c.b16 %v1519, %v1515
    %v1552 = vpack.c.b16 %v1520, %v1516
    %1585 = vmatprep.subr.bf16.mxu0 0
    %1586 = vmatpush1.bf16.msra.mxu0 %v1361
    %1587 = vmatprep.subr.bf16.mxu0 0
    %1588 = vmatpush1.bf16.msra.mxu0 %v1362
    %1589 = vmatprep.subr.bf16.mxu0 0
    %1590 = vmatpush1.bf16.msra.mxu0 %v1363
    %1591 = vmatprep.subr.bf16.mxu0 0
    %1592 = vmatpush1.bf16.msra.mxu0 %v1364
    %1593 = vmatprep.subr.bf16.mxu0 0
    %1594 = vmatpush1.bf16.msra.mxu0 %v1365
    %1595 = vmatprep.subr.bf16.mxu0 0
    %1596 = vmatpush1.bf16.msra.mxu0 %v1366
    %1597 = vmatprep.subr.bf16.mxu0 0
    %1598 = vmatpush1.bf16.msra.mxu0 %v1367
    %1599 = vmatprep.subr.bf16.mxu0 0
    %1600 = vmatpush1.bf16.msra.mxu0 %v1368
    %1601 = vmatprep.subr.bf16.mxu0 0
    %1602 = vmatpush1.bf16.msra.mxu0 %v1369
    %1603 = vmatprep.subr.bf16.mxu0 0
    %1604 = vmatpush1.bf16.msra.mxu0 %v1370
    %1605 = vmatprep.subr.bf16.mxu0 0
    %1606 = vmatpush1.bf16.msra.mxu0 %v1371
    %1607 = vmatprep.subr.bf16.mxu0 0
    %1608 = vmatpush1.bf16.msra.mxu0 %v1372
    %1609 = vmatprep.subr.bf16.mxu0 0
    %1610 = vmatpush1.bf16.msra.mxu0 %v1373
    %1611 = vmatprep.subr.bf16.mxu0 0
    %1612 = vmatpush1.bf16.msra.mxu0 %v1374
    %1613 = vmatprep.subr.bf16.mxu0 0
    %1614 = vmatpush1.bf16.msra.mxu0 %v1375
    %1615 = vmatprep.subr.bf16.mxu0 0
    %1616 = vmatpush1.bf16.msra.mxu0 %v1376
    %1617 = vmatprep.mubr.bf16.mxu0 %v1522
    %1618 = vmatmul.mubr.bf16.gmra.mrb[0].mxu0 %v1521
    %v1619 = vpop.f32.mrb[0].mxu0
    %v1620 = vadd.f32 0.0, %v1619
    %v1621 = vpop.f32.mrb[0].mxu0
    %v1622 = vpop.f32.mrb[0].mxu0
    %v1623 = vadd.f32 0.0, %v1622
    %v1624 = vpop.f32.mrb[0].mxu0
    %1625 = vmatprep.mubr.bf16.mxu0 %v1526
    %1626 = vmatmul.mubr.bf16.gmra.mrb[0].mxu0 %v1525
    %v1627 = vpop.f32.mrb[0].mxu0
    %v1628 = vadd.f32 0.0, %v1627
    %v1629 = vpop.f32.mrb[0].mxu0
    %v1630 = vpop.f32.mrb[0].mxu0
    %v1631 = vadd.f32 0.0, %v1630
    %v1632 = vpop.f32.mrb[0].mxu0
    %1633 = vmatprep.mubr.bf16.mxu0 %v1530
    %1634 = vmatmul.mubr.bf16.gmra.mrb[0].mxu0 %v1529
    %v1635 = vpop.f32.mrb[0].mxu0
    %v1636 = vadd.f32 0.0, %v1635
    %v1637 = vpop.f32.mrb[0].mxu0
    %v1638 = vpop.f32.mrb[0].mxu0
    %v1639 = vadd.f32 0.0, %v1638
    %v1640 = vpop.f32.mrb[0].mxu0
    %1641 = vmatprep.mubr.bf16.mxu0 %v1534
    %1642 = vmatmul.mubr.bf16.gmra.mrb[0].mxu0 %v1533
    %v1643 = vpop.f32.mrb[0].mxu0
    %v1644 = vadd.f32 0.0, %v1643
    %v1645 = vpop.f32.mrb[0].mxu0
    %v1646 = vpop.f32.mrb[0].mxu0
    %v1647 = vadd.f32 0.0, %v1646
    %v1648 = vpop.f32.mrb[0].mxu0
    %1649 = vmatprep.mubr.bf16.mxu0 %v1538
    %1650 = vmatmul.mubr.bf16.gmra.mrb[0].mxu0 %v1537
    %v1651 = vpop.f32.mrb[0].mxu0
    %v1652 = vadd.f32 0.0, %v1651
    %v1653 = vpop.f32.mrb[0].mxu0
    %v1654 = vpop.f32.mrb[0].mxu0
    %v1655 = vadd.f32 0.0, %v1654
    %v1656 = vpop.f32.mrb[0].mxu0
    %1657 = vmatprep.mubr.bf16.mxu0 %v1542
    %1658 = vmatmul.mubr.bf16.gmra.mrb[0].mxu0 %v1541
    %v1659 = vpop.f32.mrb[0].mxu0
    %v1660 = vadd.f32 0.0, %v1659
    %v1661 = vpop.f32.mrb[0].mxu0
    %v1662 = vpop.f32.mrb[0].mxu0
    %v1663 = vadd.f32 0.0, %v1662
    %v1664 = vpop.f32.mrb[0].mxu0
    %1665 = vmatprep.mubr.bf16.mxu0 %v1546
    %1666 = vmatmul.mubr.bf16.gmra.mrb[0].mxu0 %v1545
    %v1667 = vpop.f32.mrb[0].mxu0
    %v1668 = vadd.f32 0.0, %v1667
    %v1669 = vpop.f32.mrb[0].mxu0
    %v1670 = vpop.f32.mrb[0].mxu0
    %v1671 = vadd.f32 0.0, %v1670
    %v1672 = vpop.f32.mrb[0].mxu0
    %1673 = vmatprep.mubr.bf16.mxu0 %v1550
    %1674 = vmatmul.mubr.bf16.gmra.mrb[0].mxu0 %v1549
    %v1675 = vpop.f32.mrb[0].mxu0
    %v1676 = vadd.f32 0.0, %v1675
    %v1677 = vpop.f32.mrb[0].mxu0
    %v1678 = vpop.f32.mrb[0].mxu0
    %v1679 = vadd.f32 0.0, %v1678
    %v1680 = vpop.f32.mrb[0].mxu0
    %1681 = vdwg.mxu0
    %1682 = vmatprep.subr.bf16.mxu0 0
    %1683 = vmatpush1.bf16.msra.mxu0 %v1377
    %1684 = vmatprep.subr.bf16.mxu0 0
    %1685 = vmatpush1.bf16.msra.mxu0 %v1378
    %1686 = vmatprep.subr.bf16.mxu0 0
    %1687 = vmatpush1.bf16.msra.mxu0 %v1379
    %1688 = vmatprep.subr.bf16.mxu0 0
    %1689 = vmatpush1.bf16.msra.mxu0 %v1380
    %1690 = vmatprep.subr.bf16.mxu0 0
    %1691 = vmatpush1.bf16.msra.mxu0 %v1381
    %1692 = vmatprep.subr.bf16.mxu0 0
    %1693 = vmatpush1.bf16.msra.mxu0 %v1382
    %1694 = vmatprep.subr.bf16.mxu0 0
    %1695 = vmatpush1.bf16.msra.mxu0 %v1383
    %1696 = vmatprep.subr.bf16.mxu0 0
    %1697 = vmatpush1.bf16.msra.mxu0 %v1384
    %1698 = vmatprep.subr.bf16.mxu0 0
    %1699 = vmatpush1.bf16.msra.mxu0 %v1385
    %1700 = vmatprep.subr.bf16.mxu0 0
    %1701 = vmatpush1.bf16.msra.mxu0 %v1386
    %1702 = vmatprep.subr.bf16.mxu0 0
    %1703 = vmatpush1.bf16.msra.mxu0 %v1387
    %1704 = vmatprep.subr.bf16.mxu0 0
    %1705 = vmatpush1.bf16.msra.mxu0 %v1388
    %1706 = vmatprep.subr.bf16.mxu0 0
    %1707 = vmatpush1.bf16.msra.mxu0 %v1389
    %1708 = vmatprep.subr.bf16.mxu0 0
    %1709 = vmatpush1.bf16.msra.mxu0 %v1390
    %1710 = vmatprep.subr.bf16.mxu0 0
    %1711 = vmatpush1.bf16.msra.mxu0 %v1391
    %1712 = vmatprep.subr.bf16.mxu0 0
    %1713 = vmatpush1.bf16.msra.mxu0 %v1392
    %1714 = vmatprep.mubr.bf16.mxu0 %v1524
    %1715 = vmatmul.mubr.bf16.gmra.mrb[0].mxu0 %v1523
    %v1716 = vpop.f32.mrb[0].mxu0
    %v1717 = vadd.f32 %v1620, %v1716
    %v1718 = vpop.f32.mrb[0].mxu0
    %v1719 = vpop.f32.mrb[0].mxu0
    %v1720 = vadd.f32 %v1623, %v1719
    %v1721 = vpop.f32.mrb[0].mxu0
    %1722 = vmatprep.mubr.bf16.mxu0 %v1528
    %1723 = vmatmul.mubr.bf16.gmra.mrb[0].mxu0 %v1527
    %v1724 = vpop.f32.mrb[0].mxu0
    %v1725 = vadd.f32 %v1628, %v1724
    %v1726 = vpop.f32.mrb[0].mxu0
    %v1727 = vpop.f32.mrb[0].mxu0
    %v1728 = vadd.f32 %v1631, %v1727
    %v1729 = vpop.f32.mrb[0].mxu0
    %1730 = vmatprep.mubr.bf16.mxu0 %v1532
    %1731 = vmatmul.mubr.bf16.gmra.mrb[0].mxu0 %v1531
    %v1732 = vpop.f32.mrb[0].mxu0
    %v1733 = vadd.f32 %v1636, %v1732
    %v1734 = vpop.f32.mrb[0].mxu0
    %v1735 = vpop.f32.mrb[0].mxu0
    %v1736 = vadd.f32 %v1639, %v1735
    %v1737 = vpop.f32.mrb[0].mxu0
    %1738 = vmatprep.mubr.bf16.mxu0 %v1536
    %1739 = vmatmul.mubr.bf16.gmra.mrb[0].mxu0 %v1535
    %v1740 = vpop.f32.mrb[0].mxu0
    %v1741 = vadd.f32 %v1644, %v1740
    %v1742 = vpop.f32.mrb[0].mxu0
    %v1743 = vpop.f32.mrb[0].mxu0
    %v1744 = vadd.f32 %v1647, %v1743
    %v1745 = vpop.f32.mrb[0].mxu0
    %1746 = vmatprep.mubr.bf16.mxu0 %v1540
    %1747 = vmatmul.mubr.bf16.gmra.mrb[0].mxu0 %v1539
    %v1748 = vpop.f32.mrb[0].mxu0
    %v1749 = vadd.f32 %v1652, %v1748
    %v1750 = vpop.f32.mrb[0].mxu0
    %v1751 = vpop.f32.mrb[0].mxu0
    %v1752 = vadd.f32 %v1655, %v1751
    %v1753 = vpop.f32.mrb[0].mxu0
    %1754 = vmatprep.mubr.bf16.mxu0 %v1544
    %1755 = vmatmul.mubr.bf16.gmra.mrb[0].mxu0 %v1543
    %v1756 = vpop.f32.mrb[0].mxu0
    %v1757 = vadd.f32 %v1660, %v1756
    %v1758 = vpop.f32.mrb[0].mxu0
    %v1759 = vpop.f32.mrb[0].mxu0
    %v1760 = vadd.f32 %v1663, %v1759
    %v1761 = vpop.f32.mrb[0].mxu0
    %1762 = vmatprep.mubr.bf16.mxu0 %v1548
    %1763 = vmatmul.mubr.bf16.gmra.mrb[0].mxu0 %v1547
    %v1764 = vpop.f32.mrb[0].mxu0
    %v1765 = vadd.f32 %v1668, %v1764
    %v1766 = vpop.f32.mrb[0].mxu0
    %v1767 = vpop.f32.mrb[0].mxu0
    %v1768 = vadd.f32 %v1671, %v1767
    %v1769 = vpop.f32.mrb[0].mxu0
    %1770 = vmatprep.mubr.bf16.mxu0 %v1552
    %1771 = vmatmul.mubr.bf16.gmra.mrb[0].mxu0 %v1551
    %v1772 = vpop.f32.mrb[0].mxu0
    %v1773 = vadd.f32 %v1676, %v1772
    %v1774 = vpop.f32.mrb[0].mxu0
    %v1775 = vpop.f32.mrb[0].mxu0
    %v1776 = vadd.f32 %v1679, %v1775
    %v1777 = vpop.f32.mrb[0].mxu0
    %1778 = vdwg.mxu0
    %v1779 = vpack.c.bf16 %v1720, %v1717
    %v1780 = vpack.c.bf16 %v1728, %v1725
    %v1781 = vpack.c.bf16 %v1736, %v1733
    %v1782 = vpack.c.bf16 %v1744, %v1741
    %v1783 = vpack.c.bf16 %v1752, %v1749
    %v1784 = vpack.c.bf16 %v1760, %v1757
    %v1785 = vpack.c.bf16 %v1768, %v1765
    %v1786 = vpack.c.bf16 %v1776, %v1773
    %s1787 = scalar_lea.vmem [#allocation8], 256
    %v1788 = vld [vmem:[%s1787] sm:$0xff]
    %v1789 = vld [vmem:[%s1787 + $0x8] sm:$0xff]
    %v1790 = vld [vmem:[%s1787 + $0x10] sm:$0xff]
    %v1791 = vld [vmem:[%s1787 + $0x18] sm:$0xff]
    %v1792 = vld [vmem:[%s1787 + $0x20] sm:$0xff]
    %v1793 = vld [vmem:[%s1787 + $0x28] sm:$0xff]
    %v1794 = vld [vmem:[%s1787 + $0x30] sm:$0xff]
    %v1795 = vld [vmem:[%s1787 + $0x38] sm:$0xff]
    %v1796 = vld [vmem:[%s1787 + $0x40] sm:$0xff]
    %v1797 = vld [vmem:[%s1787 + $0x48] sm:$0xff]
    %v1798 = vld [vmem:[%s1787 + $0x50] sm:$0xff]
    %v1799 = vld [vmem:[%s1787 + $0x58] sm:$0xff]
    %v1800 = vld [vmem:[%s1787 + $0x60] sm:$0xff]
    %v1801 = vld [vmem:[%s1787 + $0x68] sm:$0xff]
    %v1802 = vld [vmem:[%s1787 + $0x70] sm:$0xff]
    %v1803 = vld [vmem:[%s1787 + $0x78] sm:$0xff]
    %v1804 = vld [vmem:[%s1787 + $0x80] sm:$0xff]
    %v1805 = vld [vmem:[%s1787 + $0x88] sm:$0xff]
    %v1806 = vld [vmem:[%s1787 + $0x90] sm:$0xff]
    %v1807 = vld [vmem:[%s1787 + $0x98] sm:$0xff]
    %v1808 = vld [vmem:[%s1787 + $0xa0] sm:$0xff]
    %v1809 = vld [vmem:[%s1787 + $0xa8] sm:$0xff]
    %v1810 = vld [vmem:[%s1787 + $0xb0] sm:$0xff]
    %v1811 = vld [vmem:[%s1787 + $0xb8] sm:$0xff]
    %v1812 = vld [vmem:[%s1787 + $0xc0] sm:$0xff]
    %v1813 = vld [vmem:[%s1787 + $0xc8] sm:$0xff]
    %v1814 = vld [vmem:[%s1787 + $0xd0] sm:$0xff]
    %v1815 = vld [vmem:[%s1787 + $0xd8] sm:$0xff]
    %v1816 = vld [vmem:[%s1787 + $0xe0] sm:$0xff]
    %v1817 = vld [vmem:[%s1787 + $0xe8] sm:$0xff]
    %v1818 = vld [vmem:[%s1787 + $0xf0] sm:$0xff]
    %v1819 = vld [vmem:[%s1787 + $0xf8] sm:$0xff]
    %v1852 = vunpack.c.l.b16 %v1788
    %v1853 = vunpack.c.h.b16 %v1788
    %v1854 = vunpack.c.l.b16 %v1789
    %v1855 = vunpack.c.h.b16 %v1789
    %v1856 = vunpack.c.l.b16 %v1790
    %v1857 = vunpack.c.h.b16 %v1790
    %v1858 = vunpack.c.l.b16 %v1791
    %v1859 = vunpack.c.h.b16 %v1791
    %v1860 = vunpack.c.l.b16 %v1792
    %v1861 = vunpack.c.h.b16 %v1792
    %v1862 = vunpack.c.l.b16 %v1793
    %v1863 = vunpack.c.h.b16 %v1793
    %v1864 = vunpack.c.l.b16 %v1794
    %v1865 = vunpack.c.h.b16 %v1794
    %v1866 = vunpack.c.l.b16 %v1795
    %v1867 = vunpack.c.h.b16 %v1795
    %v1868 = vunpack.c.l.b16 %v1796
    %v1869 = vunpack.c.h.b16 %v1796
    %v1870 = vunpack.c.l.b16 %v1797
    %v1871 = vunpack.c.h.b16 %v1797
    %v1872 = vunpack.c.l.b16 %v1798
    %v1873 = vunpack.c.h.b16 %v1798
    %v1874 = vunpack.c.l.b16 %v1799
    %v1875 = vunpack.c.h.b16 %v1799
    %v1876 = vunpack.c.l.b16 %v1800
    %v1877 = vunpack.c.h.b16 %v1800
    %v1878 = vunpack.c.l.b16 %v1801
    %v1879 = vunpack.c.h.b16 %v1801
    %v1880 = vunpack.c.l.b16 %v1802
    %v1881 = vunpack.c.h.b16 %v1802
    %v1882 = vunpack.c.l.b16 %v1803
    %v1883 = vunpack.c.h.b16 %v1803
    %v1884 = vunpack.c.l.b16 %v1804
    %v1885 = vunpack.c.h.b16 %v1804
    %v1886 = vunpack.c.l.b16 %v1805
    %v1887 = vunpack.c.h.b16 %v1805
    %v1888 = vunpack.c.l.b16 %v1806
    %v1889 = vunpack.c.h.b16 %v1806
    %v1890 = vunpack.c.l.b16 %v1807
    %v1891 = vunpack.c.h.b16 %v1807
    %v1892 = vunpack.c.l.b16 %v1808
    %v1893 = vunpack.c.h.b16 %v1808
    %v1894 = vunpack.c.l.b16 %v1809
    %v1895 = vunpack.c.h.b16 %v1809
    %v1896 = vunpack.c.l.b16 %v1810
    %v1897 = vunpack.c.h.b16 %v1810
    %v1898 = vunpack.c.l.b16 %v1811
    %v1899 = vunpack.c.h.b16 %v1811
    %v1900 = vunpack.c.l.b16 %v1812
    %v1901 = vunpack.c.h.b16 %v1812
    %v1902 = vunpack.c.l.b16 %v1813
    %v1903 = vunpack.c.h.b16 %v1813
    %v1904 = vunpack.c.l.b16 %v1814
    %v1905 = vunpack.c.h.b16 %v1814
    %v1906 = vunpack.c.l.b16 %v1815
    %v1907 = vunpack.c.h.b16 %v1815
    %v1908 = vunpack.c.l.b16 %v1816
    %v1909 = vunpack.c.h.b16 %v1816
    %v1910 = vunpack.c.l.b16 %v1817
    %v1911 = vunpack.c.h.b16 %v1817
    %v1912 = vunpack.c.l.b16 %v1818
    %v1913 = vunpack.c.h.b16 %v1818
    %v1914 = vunpack.c.l.b16 %v1819
    %v1915 = vunpack.c.h.b16 %v1819
    %v1916 = vpack.c.b16 %v1856, %v1852
    %v1917 = vpack.c.b16 %v1857, %v1853
    %v1918 = vpack.c.b16 %v1858, %v1854
    %v1919 = vpack.c.b16 %v1859, %v1855
    %v1920 = vpack.c.b16 %v1864, %v1860
    %v1921 = vpack.c.b16 %v1865, %v1861
    %v1922 = vpack.c.b16 %v1866, %v1862
    %v1923 = vpack.c.b16 %v1867, %v1863
    %v1924 = vpack.c.b16 %v1872, %v1868
    %v1925 = vpack.c.b16 %v1873, %v1869
    %v1926 = vpack.c.b16 %v1874, %v1870
    %v1927 = vpack.c.b16 %v1875, %v1871
    %v1928 = vpack.c.b16 %v1880, %v1876
    %v1929 = vpack.c.b16 %v1881, %v1877
    %v1930 = vpack.c.b16 %v1882, %v1878
    %v1931 = vpack.c.b16 %v1883, %v1879
    %v1932 = vpack.c.b16 %v1888, %v1884
    %v1933 = vpack.c.b16 %v1889, %v1885
    %v1934 = vpack.c.b16 %v1890, %v1886
    %v1935 = vpack.c.b16 %v1891, %v1887
    %v1936 = vpack.c.b16 %v1896, %v1892
    %v1937 = vpack.c.b16 %v1897, %v1893
    %v1938 = vpack.c.b16 %v1898, %v1894
    %v1939 = vpack.c.b16 %v1899, %v1895
    %v1940 = vpack.c.b16 %v1904, %v1900
    %v1941 = vpack.c.b16 %v1905, %v1901
    %v1942 = vpack.c.b16 %v1906, %v1902
    %v1943 = vpack.c.b16 %v1907, %v1903
    %v1944 = vpack.c.b16 %v1912, %v1908
    %v1945 = vpack.c.b16 %v1913, %v1909
    %v1946 = vpack.c.b16 %v1914, %v1910
    %v1947 = vpack.c.b16 %v1915, %v1911
    %1980 = vmatprep.subr.bf16.mxu0 0
    %1981 = vmatpush1.bf16.msra.mxu0 %v1361
    %1982 = vmatprep.subr.bf16.mxu0 0
    %1983 = vmatpush1.bf16.msra.mxu0 %v1362
    %1984 = vmatprep.subr.bf16.mxu0 0
    %1985 = vmatpush1.bf16.msra.mxu0 %v1363
    %1986 = vmatprep.subr.bf16.mxu0 0
    %1987 = vmatpush1.bf16.msra.mxu0 %v1364
    %1988 = vmatprep.subr.bf16.mxu0 0
    %1989 = vmatpush1.bf16.msra.mxu0 %v1365
    %1990 = vmatprep.subr.bf16.mxu0 0
    %1991 = vmatpush1.bf16.msra.mxu0 %v1366
    %1992 = vmatprep.subr.bf16.mxu0 0
    %1993 = vmatpush1.bf16.msra.mxu0 %v1367
    %1994 = vmatprep.subr.bf16.mxu0 0
    %1995 = vmatpush1.bf16.msra.mxu0 %v1368
    %1996 = vmatprep.subr.bf16.mxu0 0
    %1997 = vmatpush1.bf16.msra.mxu0 %v1369
    %1998 = vmatprep.subr.bf16.mxu0 0
    %1999 = vmatpush1.bf16.msra.mxu0 %v1370
    %2000 = vmatprep.subr.bf16.mxu0 0
    %2001 = vmatpush1.bf16.msra.mxu0 %v1371
    %2002 = vmatprep.subr.bf16.mxu0 0
    %2003 = vmatpush1.bf16.msra.mxu0 %v1372
    %2004 = vmatprep.subr.bf16.mxu0 0
    %2005 = vmatpush1.bf16.msra.mxu0 %v1373
    %2006 = vmatprep.subr.bf16.mxu0 0
    %2007 = vmatpush1.bf16.msra.mxu0 %v1374
    %2008 = vmatprep.subr.bf16.mxu0 0
    %2009 = vmatpush1.bf16.msra.mxu0 %v1375
    %2010 = vmatprep.subr.bf16.mxu0 0
    %2011 = vmatpush1.bf16.msra.mxu0 %v1376
    %2012 = vmatprep.mubr.bf16.mxu0 %v1917
    %2013 = vmatmul.mubr.bf16.gmra.mrb[0].mxu0 %v1916
    %v2014 = vpop.f32.mrb[0].mxu0
    %v2015 = vadd.f32 0.0, %v2014
    %v2016 = vpop.f32.mrb[0].mxu0
    %v2017 = vpop.f32.mrb[0].mxu0
    %v2018 = vadd.f32 0.0, %v2017
    %v2019 = vpop.f32.mrb[0].mxu0
    %2020 = vmatprep.mubr.bf16.mxu0 %v1921
    %2021 = vmatmul.mubr.bf16.gmra.mrb[0].mxu0 %v1920
    %v2022 = vpop.f32.mrb[0].mxu0
    %v2023 = vadd.f32 0.0, %v2022
    %v2024 = vpop.f32.mrb[0].mxu0
    %v2025 = vpop.f32.mrb[0].mxu0
    %v2026 = vadd.f32 0.0, %v2025
    %v2027 = vpop.f32.mrb[0].mxu0
    %2028 = vmatprep.mubr.bf16.mxu0 %v1925
    %2029 = vmatmul.mubr.bf16.gmra.mrb[0].mxu0 %v1924
    %v2030 = vpop.f32.mrb[0].mxu0
    %v2031 = vadd.f32 0.0, %v2030
    %v2032 = vpop.f32.mrb[0].mxu0
    %v2033 = vpop.f32.mrb[0].mxu0
    %v2034 = vadd.f32 0.0, %v2033
    %v2035 = vpop.f32.mrb[0].mxu0
    %2036 = vmatprep.mubr.bf16.mxu0 %v1929
    %2037 = vmatmul.mubr.bf16.gmra.mrb[0].mxu0 %v1928
    %v2038 = vpop.f32.mrb[0].mxu0
    %v2039 = vadd.f32 0.0, %v2038
    %v2040 = vpop.f32.mrb[0].mxu0
    %v2041 = vpop.f32.mrb[0].mxu0
    %v2042 = vadd.f32 0.0, %v2041
    %v2043 = vpop.f32.mrb[0].mxu0
    %2044 = vmatprep.mubr.bf16.mxu0 %v1933
    %2045 = vmatmul.mubr.bf16.gmra.mrb[0].mxu0 %v1932
    %v2046 = vpop.f32.mrb[0].mxu0
    %v2047 = vadd.f32 0.0, %v2046
    %v2048 = vpop.f32.mrb[0].mxu0
    %v2049 = vpop.f32.mrb[0].mxu0
    %v2050 = vadd.f32 0.0, %v2049
    %v2051 = vpop.f32.mrb[0].mxu0
    %2052 = vmatprep.mubr.bf16.mxu0 %v1937
    %2053 = vmatmul.mubr.bf16.gmra.mrb[0].mxu0 %v1936
    %v2054 = vpop.f32.mrb[0].mxu0
    %v2055 = vadd.f32 0.0, %v2054
    %v2056 = vpop.f32.mrb[0].mxu0
    %v2057 = vpop.f32.mrb[0].mxu0
    %v2058 = vadd.f32 0.0, %v2057
    %v2059 = vpop.f32.mrb[0].mxu0
    %2060 = vmatprep.mubr.bf16.mxu0 %v1941
    %2061 = vmatmul.mubr.bf16.gmra.mrb[0].mxu0 %v1940
    %v2062 = vpop.f32.mrb[0].mxu0
    %v2063 = vadd.f32 0.0, %v2062
    %v2064 = vpop.f32.mrb[0].mxu0
    %v2065 = vpop.f32.mrb[0].mxu0
    %v2066 = vadd.f32 0.0, %v2065
    %v2067 = vpop.f32.mrb[0].mxu0
    %2068 = vmatprep.mubr.bf16.mxu0 %v1945
    %2069 = vmatmul.mubr.bf16.gmra.mrb[0].mxu0 %v1944
    %v2070 = vpop.f32.mrb[0].mxu0
    %v2071 = vadd.f32 0.0, %v2070
    %v2072 = vpop.f32.mrb[0].mxu0
    %v2073 = vpop.f32.mrb[0].mxu0
    %v2074 = vadd.f32 0.0, %v2073
    %v2075 = vpop.f32.mrb[0].mxu0
    %2076 = vdwg.mxu0
    %2077 = vmatprep.subr.bf16.mxu0 0
    %2078 = vmatpush1.bf16.msra.mxu0 %v1377
    %2079 = vmatprep.subr.bf16.mxu0 0
    %2080 = vmatpush1.bf16.msra.mxu0 %v1378
    %2081 = vmatprep.subr.bf16.mxu0 0
    %2082 = vmatpush1.bf16.msra.mxu0 %v1379
    %2083 = vmatprep.subr.bf16.mxu0 0
    %2084 = vmatpush1.bf16.msra.mxu0 %v1380
    %2085 = vmatprep.subr.bf16.mxu0 0
    %2086 = vmatpush1.bf16.msra.mxu0 %v1381
    %2087 = vmatprep.subr.bf16.mxu0 0
    %2088 = vmatpush1.bf16.msra.mxu0 %v1382
    %2089 = vmatprep.subr.bf16.mxu0 0
    %2090 = vmatpush1.bf16.msra.mxu0 %v1383
    %2091 = vmatprep.subr.bf16.mxu0 0
    %2092 = vmatpush1.bf16.msra.mxu0 %v1384
    %2093 = vmatprep.subr.bf16.mxu0 0
    %2094 = vmatpush1.bf16.msra.mxu0 %v1385
    %2095 = vmatprep.subr.bf16.mxu0 0
    %2096 = vmatpush1.bf16.msra.mxu0 %v1386
    %2097 = vmatprep.subr.bf16.mxu0 0
    %2098 = vmatpush1.bf16.msra.mxu0 %v1387
    %2099 = vmatprep.subr.bf16.mxu0 0
    %2100 = vmatpush1.bf16.msra.mxu0 %v1388
    %2101 = vmatprep.subr.bf16.mxu0 0
    %2102 = vmatpush1.bf16.msra.mxu0 %v1389
    %2103 = vmatprep.subr.bf16.mxu0 0
    %2104 = vmatpush1.bf16.msra.mxu0 %v1390
    %2105 = vmatprep.subr.bf16.mxu0 0
    %2106 = vmatpush1.bf16.msra.mxu0 %v1391
    %2107 = vmatprep.subr.bf16.mxu0 0
    %2108 = vmatpush1.bf16.msra.mxu0 %v1392
    %2109 = vmatprep.mubr.bf16.mxu0 %v1919
    %2110 = vmatmul.mubr.bf16.gmra.mrb[0].mxu0 %v1918
    %v2111 = vpop.f32.mrb[0].mxu0
    %v2112 = vadd.f32 %v2015, %v2111
    %v2113 = vpop.f32.mrb[0].mxu0
    %v2114 = vpop.f32.mrb[0].mxu0
    %v2115 = vadd.f32 %v2018, %v2114
    %v2116 = vpop.f32.mrb[0].mxu0
    %2117 = vmatprep.mubr.bf16.mxu0 %v1923
    %2118 = vmatmul.mubr.bf16.gmra.mrb[0].mxu0 %v1922
    %v2119 = vpop.f32.mrb[0].mxu0
    %v2120 = vadd.f32 %v2023, %v2119
    %v2121 = vpop.f32.mrb[0].mxu0
    %v2122 = vpop.f32.mrb[0].mxu0
    %v2123 = vadd.f32 %v2026, %v2122
    %v2124 = vpop.f32.mrb[0].mxu0
    %2125 = vmatprep.mubr.bf16.mxu0 %v1927
    %2126 = vmatmul.mubr.bf16.gmra.mrb[0].mxu0 %v1926
    %v2127 = vpop.f32.mrb[0].mxu0
    %v2128 = vadd.f32 %v2031, %v2127
    %v2129 = vpop.f32.mrb[0].mxu0
    %v2130 = vpop.f32.mrb[0].mxu0
    %v2131 = vadd.f32 %v2034, %v2130
    %v2132 = vpop.f32.mrb[0].mxu0
    %2133 = vmatprep.mubr.bf16.mxu0 %v1931
    %2134 = vmatmul.mubr.bf16.gmra.mrb[0].mxu0 %v1930
    %v2135 = vpop.f32.mrb[0].mxu0
    %v2136 = vadd.f32 %v2039, %v2135
    %v2137 = vpop.f32.mrb[0].mxu0
    %v2138 = vpop.f32.mrb[0].mxu0
    %v2139 = vadd.f32 %v2042, %v2138
    %v2140 = vpop.f32.mrb[0].mxu0
    %2141 = vmatprep.mubr.bf16.mxu0 %v1935
    %2142 = vmatmul.mubr.bf16.gmra.mrb[0].mxu0 %v1934
    %v2143 = vpop.f32.mrb[0].mxu0
    %v2144 = vadd.f32 %v2047, %v2143
    %v2145 = vpop.f32.mrb[0].mxu0
    %v2146 = vpop.f32.mrb[0].mxu0
    %v2147 = vadd.f32 %v2050, %v2146
    %v2148 = vpop.f32.mrb[0].mxu0
    %2149 = vmatprep.mubr.bf16.mxu0 %v1939
    %2150 = vmatmul.mubr.bf16.gmra.mrb[0].mxu0 %v1938
    %v2151 = vpop.f32.mrb[0].mxu0
    %v2152 = vadd.f32 %v2055, %v2151
    %v2153 = vpop.f32.mrb[0].mxu0
    %v2154 = vpop.f32.mrb[0].mxu0
    %v2155 = vadd.f32 %v2058, %v2154
    %v2156 = vpop.f32.mrb[0].mxu0
    %2157 = vmatprep.mubr.bf16.mxu0 %v1943
    %2158 = vmatmul.mubr.bf16.gmra.mrb[0].mxu0 %v1942
    %v2159 = vpop.f32.mrb[0].mxu0
    %v2160 = vadd.f32 %v2063, %v2159
    %v2161 = vpop.f32.mrb[0].mxu0
    %v2162 = vpop.f32.mrb[0].mxu0
    %v2163 = vadd.f32 %v2066, %v2162
    %v2164 = vpop.f32.mrb[0].mxu0
    %2165 = vmatprep.mubr.bf16.mxu0 %v1947
    %2166 = vmatmul.mubr.bf16.gmra.mrb[0].mxu0 %v1946
    %v2167 = vpop.f32.mrb[0].mxu0
    %v2168 = vadd.f32 %v2071, %v2167
    %v2169 = vpop.f32.mrb[0].mxu0
    %v2170 = vpop.f32.mrb[0].mxu0
    %v2171 = vadd.f32 %v2074, %v2170
    %v2172 = vpop.f32.mrb[0].mxu0
    %2173 = vdwg.mxu0
    %v2174 = vpack.c.bf16 %v2115, %v2112
    %v2175 = vpack.c.bf16 %v2123, %v2120
    %v2176 = vpack.c.bf16 %v2131, %v2128
    %v2177 = vpack.c.bf16 %v2139, %v2136
    %v2178 = vpack.c.bf16 %v2147, %v2144
    %v2179 = vpack.c.bf16 %v2155, %v2152
    %v2180 = vpack.c.bf16 %v2163, %v2160
    %v2181 = vpack.c.bf16 %v2171, %v2168
    %s2182 = scalar_lea.vmem [#allocation8], 512
    %v2183 = vld [vmem:[%s2182] sm:$0xff]
    %v2184 = vld [vmem:[%s2182 + $0x8] sm:$0xff]
    %v2185 = vld [vmem:[%s2182 + $0x10] sm:$0xff]
    %v2186 = vld [vmem:[%s2182 + $0x18] sm:$0xff]
    %v2187 = vld [vmem:[%s2182 + $0x20] sm:$0xff]
    %v2188 = vld [vmem:[%s2182 + $0x28] sm:$0xff]
    %v2189 = vld [vmem:[%s2182 + $0x30] sm:$0xff]
    %v2190 = vld [vmem:[%s2182 + $0x38] sm:$0xff]
    %v2191 = vld [vmem:[%s2182 + $0x40] sm:$0xff]
    %v2192 = vld [vmem:[%s2182 + $0x48] sm:$0xff]
    %v2193 = vld [vmem:[%s2182 + $0x50] sm:$0xff]
    %v2194 = vld [vmem:[%s2182 + $0x58] sm:$0xff]
    %v2195 = vld [vmem:[%s2182 + $0x60] sm:$0xff]
    %v2196 = vld [vmem:[%s2182 + $0x68] sm:$0xff]
    %v2197 = vld [vmem:[%s2182 + $0x70] sm:$0xff]
    %v2198 = vld [vmem:[%s2182 + $0x78] sm:$0xff]
    %v2199 = vld [vmem:[%s2182 + $0x80] sm:$0xff]
    %v2200 = vld [vmem:[%s2182 + $0x88] sm:$0xff]
    %v2201 = vld [vmem:[%s2182 + $0x90] sm:$0xff]
    %v2202 = vld [vmem:[%s2182 + $0x98] sm:$0xff]
    %v2203 = vld [vmem:[%s2182 + $0xa0] sm:$0xff]
    %v2204 = vld [vmem:[%s2182 + $0xa8] sm:$0xff]
    %v2205 = vld [vmem:[%s2182 + $0xb0] sm:$0xff]
    %v2206 = vld [vmem:[%s2182 + $0xb8] sm:$0xff]
    %v2207 = vld [vmem:[%s2182 + $0xc0] sm:$0xff]
    %v2208 = vld [vmem:[%s2182 + $0xc8] sm:$0xff]
    %v2209 = vld [vmem:[%s2182 + $0xd0] sm:$0xff]
    %v2210 = vld [vmem:[%s2182 + $0xd8] sm:$0xff]
    %v2211 = vld [vmem:[%s2182 + $0xe0] sm:$0xff]
    %v2212 = vld [vmem:[%s2182 + $0xe8] sm:$0xff]
    %v2213 = vld [vmem:[%s2182 + $0xf0] sm:$0xff]
    %v2214 = vld [vmem:[%s2182 + $0xf8] sm:$0xff]
    %v2247 = vunpack.c.l.b16 %v2183
    %v2248 = vunpack.c.h.b16 %v2183
    %v2249 = vunpack.c.l.b16 %v2184
    %v2250 = vunpack.c.h.b16 %v2184
    %v2251 = vunpack.c.l.b16 %v2185
    %v2252 = vunpack.c.h.b16 %v2185
    %v2253 = vunpack.c.l.b16 %v2186
    %v2254 = vunpack.c.h.b16 %v2186
    %v2255 = vunpack.c.l.b16 %v2187
    %v2256 = vunpack.c.h.b16 %v2187
    %v2257 = vunpack.c.l.b16 %v2188
    %v2258 = vunpack.c.h.b16 %v2188
    %v2259 = vunpack.c.l.b16 %v2189
    %v2260 = vunpack.c.h.b16 %v2189
    %v2261 = vunpack.c.l.b16 %v2190
    %v2262 = vunpack.c.h.b16 %v2190
    %v2263 = vunpack.c.l.b16 %v2191
    %v2264 = vunpack.c.h.b16 %v2191
    %v2265 = vunpack.c.l.b16 %v2192
    %v2266 = vunpack.c.h.b16 %v2192
    %v2267 = vunpack.c.l.b16 %v2193
    %v2268 = vunpack.c.h.b16 %v2193
    %v2269 = vunpack.c.l.b16 %v2194
    %v2270 = vunpack.c.h.b16 %v2194
    %v2271 = vunpack.c.l.b16 %v2195
    %v2272 = vunpack.c.h.b16 %v2195
    %v2273 = vunpack.c.l.b16 %v2196
    %v2274 = vunpack.c.h.b16 %v2196
    %v2275 = vunpack.c.l.b16 %v2197
    %v2276 = vunpack.c.h.b16 %v2197
    %v2277 = vunpack.c.l.b16 %v2198
    %v2278 = vunpack.c.h.b16 %v2198
    %v2279 = vunpack.c.l.b16 %v2199
    %v2280 = vunpack.c.h.b16 %v2199
    %v2281 = vunpack.c.l.b16 %v2200
    %v2282 = vunpack.c.h.b16 %v2200
    %v2283 = vunpack.c.l.b16 %v2201
    %v2284 = vunpack.c.h.b16 %v2201
    %v2285 = vunpack.c.l.b16 %v2202
    %v2286 = vunpack.c.h.b16 %v2202
    %v2287 = vunpack.c.l.b16 %v2203
    %v2288 = vunpack.c.h.b16 %v2203
    %v2289 = vunpack.c.l.b16 %v2204
    %v2290 = vunpack.c.h.b16 %v2204
    %v2291 = vunpack.c.l.b16 %v2205
    %v2292 = vunpack.c.h.b16 %v2205
    %v2293 = vunpack.c.l.b16 %v2206
    %v2294 = vunpack.c.h.b16 %v2206
    %v2295 = vunpack.c.l.b16 %v2207
    %v2296 = vunpack.c.h.b16 %v2207
    %v2297 = vunpack.c.l.b16 %v2208
    %v2298 = vunpack.c.h.b16 %v2208
    %v2299 = vunpack.c.l.b16 %v2209
    %v2300 = vunpack.c.h.b16 %v2209
    %v2301 = vunpack.c.l.b16 %v2210
    %v2302 = vunpack.c.h.b16 %v2210
    %v2303 = vunpack.c.l.b16 %v2211
    %v2304 = vunpack.c.h.b16 %v2211
    %v2305 = vunpack.c.l.b16 %v2212
    %v2306 = vunpack.c.h.b16 %v2212
    %v2307 = vunpack.c.l.b16 %v2213
    %v2308 = vunpack.c.h.b16 %v2213
    %v2309 = vunpack.c.l.b16 %v2214
    %v2310 = vunpack.c.h.b16 %v2214
    %v2311 = vpack.c.b16 %v2251, %v2247
    %v2312 = vpack.c.b16 %v2252, %v2248
    %v2313 = vpack.c.b16 %v2253, %v2249
    %v2314 = vpack.c.b16 %v2254, %v2250
    %v2315 = vpack.c.b16 %v2259, %v2255
    %v2316 = vpack.c.b16 %v2260, %v2256
    %v2317 = vpack.c.b16 %v2261, %v2257
    %v2318 = vpack.c.b16 %v2262, %v2258
    %v2319 = vpack.c.b16 %v2267, %v2263
    %v2320 = vpack.c.b16 %v2268, %v2264
    %v2321 = vpack.c.b16 %v2269, %v2265
    %v2322 = vpack.c.b16 %v2270, %v2266
    %v2323 = vpack.c.b16 %v2275, %v2271
    %v2324 = vpack.c.b16 %v2276, %v2272
    %v2325 = vpack.c.b16 %v2277, %v2273
    %v2326 = vpack.c.b16 %v2278, %v2274
    %v2327 = vpack.c.b16 %v2283, %v2279
    %v2328 = vpack.c.b16 %v2284, %v2280
    %v2329 = vpack.c.b16 %v2285, %v2281
    %v2330 = vpack.c.b16 %v2286, %v2282
    %v2331 = vpack.c.b16 %v2291, %v2287
    %v2332 = vpack.c.b16 %v2292, %v2288
    %v2333 = vpack.c.b16 %v2293, %v2289
    %v2334 = vpack.c.b16 %v2294, %v2290
    %v2335 = vpack.c.b16 %v2299, %v2295
    %v2336 = vpack.c.b16 %v2300, %v2296
    %v2337 = vpack.c.b16 %v2301, %v2297
    %v2338 = vpack.c.b16 %v2302, %v2298
    %v2339 = vpack.c.b16 %v2307, %v2303
    %v2340 = vpack.c.b16 %v2308, %v2304
    %v2341 = vpack.c.b16 %v2309, %v2305
    %v2342 = vpack.c.b16 %v2310, %v2306
    %2375 = vmatprep.subr.bf16.mxu0 0
    %2376 = vmatpush1.bf16.msra.mxu0 %v1361
    %2377 = vmatprep.subr.bf16.mxu0 0
    %2378 = vmatpush1.bf16.msra.mxu0 %v1362
    %2379 = vmatprep.subr.bf16.mxu0 0
    %2380 = vmatpush1.bf16.msra.mxu0 %v1363
    %2381 = vmatprep.subr.bf16.mxu0 0
    %2382 = vmatpush1.bf16.msra.mxu0 %v1364
    %2383 = vmatprep.subr.bf16.mxu0 0
    %2384 = vmatpush1.bf16.msra.mxu0 %v1365
    %2385 = vmatprep.subr.bf16.mxu0 0
    %2386 = vmatpush1.bf16.msra.mxu0 %v1366
    %2387 = vmatprep.subr.bf16.mxu0 0
    %2388 = vmatpush1.bf16.msra.mxu0 %v1367
    %2389 = vmatprep.subr.bf16.mxu0 0
    %2390 = vmatpush1.bf16.msra.mxu0 %v1368
    %2391 = vmatprep.subr.bf16.mxu0 0
    %2392 = vmatpush1.bf16.msra.mxu0 %v1369
    %2393 = vmatprep.subr.bf16.mxu0 0
    %2394 = vmatpush1.bf16.msra.mxu0 %v1370
    %2395 = vmatprep.subr.bf16.mxu0 0
    %2396 = vmatpush1.bf16.msra.mxu0 %v1371
    %2397 = vmatprep.subr.bf16.mxu0 0
    %2398 = vmatpush1.bf16.msra.mxu0 %v1372
    %2399 = vmatprep.subr.bf16.mxu0 0
    %2400 = vmatpush1.bf16.msra.mxu0 %v1373
    %2401 = vmatprep.subr.bf16.mxu0 0
    %2402 = vmatpush1.bf16.msra.mxu0 %v1374
    %2403 = vmatprep.subr.bf16.mxu0 0
    %2404 = vmatpush1.bf16.msra.mxu0 %v1375
    %2405 = vmatprep.subr.bf16.mxu0 0
    %2406 = vmatpush1.bf16.msra.mxu0 %v1376
    %2407 = vmatprep.mubr.bf16.mxu0 %v2312
    %2408 = vmatmul.mubr.bf16.gmra.mrb[0].mxu0 %v2311
    %v2409 = vpop.f32.mrb[0].mxu0
    %v2410 = vadd.f32 0.0, %v2409
    %v2411 = vpop.f32.mrb[0].mxu0
    %v2412 = vpop.f32.mrb[0].mxu0
    %v2413 = vadd.f32 0.0, %v2412
    %v2414 = vpop.f32.mrb[0].mxu0
    %2415 = vmatprep.mubr.bf16.mxu0 %v2316
    %2416 = vmatmul.mubr.bf16.gmra.mrb[0].mxu0 %v2315
    %v2417 = vpop.f32.mrb[0].mxu0
    %v2418 = vadd.f32 0.0, %v2417
    %v2419 = vpop.f32.mrb[0].mxu0
    %v2420 = vpop.f32.mrb[0].mxu0
    %v2421 = vadd.f32 0.0, %v2420
    %v2422 = vpop.f32.mrb[0].mxu0
    %2423 = vmatprep.mubr.bf16.mxu0 %v2320
    %2424 = vmatmul.mubr.bf16.gmra.mrb[0].mxu0 %v2319
    %v2425 = vpop.f32.mrb[0].mxu0
    %v2426 = vadd.f32 0.0, %v2425
    %v2427 = vpop.f32.mrb[0].mxu0
    %v2428 = vpop.f32.mrb[0].mxu0
    %v2429 = vadd.f32 0.0, %v2428
    %v2430 = vpop.f32.mrb[0].mxu0
    %2431 = vmatprep.mubr.bf16.mxu0 %v2324
    %2432 = vmatmul.mubr.bf16.gmra.mrb[0].mxu0 %v2323
    %v2433 = vpop.f32.mrb[0].mxu0
    %v2434 = vadd.f32 0.0, %v2433
    %v2435 = vpop.f32.mrb[0].mxu0
    %v2436 = vpop.f32.mrb[0].mxu0
    %v2437 = vadd.f32 0.0, %v2436
    %v2438 = vpop.f32.mrb[0].mxu0
    %2439 = vmatprep.mubr.bf16.mxu0 %v2328
    %2440 = vmatmul.mubr.bf16.gmra.mrb[0].mxu0 %v2327
    %v2441 = vpop.f32.mrb[0].mxu0
    %v2442 = vadd.f32 0.0, %v2441
    %v2443 = vpop.f32.mrb[0].mxu0
    %v2444 = vpop.f32.mrb[0].mxu0
    %v2445 = vadd.f32 0.0, %v2444
    %v2446 = vpop.f32.mrb[0].mxu0
    %2447 = vmatprep.mubr.bf16.mxu0 %v2332
    %2448 = vmatmul.mubr.bf16.gmra.mrb[0].mxu0 %v2331
    %v2449 = vpop.f32.mrb[0].mxu0
    %v2450 = vadd.f32 0.0, %v2449
    %v2451 = vpop.f32.mrb[0].mxu0
    %v2452 = vpop.f32.mrb[0].mxu0
    %v2453 = vadd.f32 0.0, %v2452
    %v2454 = vpop.f32.mrb[0].mxu0
    %2455 = vmatprep.mubr.bf16.mxu0 %v2336
    %2456 = vmatmul.mubr.bf16.gmra.mrb[0].mxu0 %v2335
    %v2457 = vpop.f32.mrb[0].mxu0
    %v2458 = vadd.f32 0.0, %v2457
    %v2459 = vpop.f32.mrb[0].mxu0
    %v2460 = vpop.f32.mrb[0].mxu0
    %v2461 = vadd.f32 0.0, %v2460
    %v2462 = vpop.f32.mrb[0].mxu0
    %2463 = vmatprep.mubr.bf16.mxu0 %v2340
    %2464 = vmatmul.mubr.bf16.gmra.mrb[0].mxu0 %v2339
    %v2465 = vpop.f32.mrb[0].mxu0
    %v2466 = vadd.f32 0.0, %v2465
    %v2467 = vpop.f32.mrb[0].mxu0
    %v2468 = vpop.f32.mrb[0].mxu0
    %v2469 = vadd.f32 0.0, %v2468
    %v2470 = vpop.f32.mrb[0].mxu0
    %2471 = vdwg.mxu0
    %2472 = vmatprep.subr.bf16.mxu0 0
    %2473 = vmatpush1.bf16.msra.mxu0 %v1377
    %2474 = vmatprep.subr.bf16.mxu0 0
    %2475 = vmatpush1.bf16.msra.mxu0 %v1378
    %2476 = vmatprep.subr.bf16.mxu0 0
    %2477 = vmatpush1.bf16.msra.mxu0 %v1379
    %2478 = vmatprep.subr.bf16.mxu0 0
    %2479 = vmatpush1.bf16.msra.mxu0 %v1380
    %2480 = vmatprep.subr.bf16.mxu0 0
    %2481 = vmatpush1.bf16.msra.mxu0 %v1381
    %2482 = vmatprep.subr.bf16.mxu0 0
    %2483 = vmatpush1.bf16.msra.mxu0 %v1382
    %2484 = vmatprep.subr.bf16.mxu0 0
    %2485 = vmatpush1.bf16.msra.mxu0 %v1383
    %2486 = vmatprep.subr.bf16.mxu0 0
    %2487 = vmatpush1.bf16.msra.mxu0 %v1384
    %2488 = vmatprep.subr.bf16.mxu0 0
    %2489 = vmatpush1.bf16.msra.mxu0 %v1385
    %2490 = vmatprep.subr.bf16.mxu0 0
    %2491 = vmatpush1.bf16.msra.mxu0 %v1386
    %2492 = vmatprep.subr.bf16.mxu0 0
    %2493 = vmatpush1.bf16.msra.mxu0 %v1387
    %2494 = vmatprep.subr.bf16.mxu0 0
    %2495 = vmatpush1.bf16.msra.mxu0 %v1388
    %2496 = vmatprep.subr.bf16.mxu0 0
    %2497 = vmatpush1.bf16.msra.mxu0 %v1389
    %2498 = vmatprep.subr.bf16.mxu0 0
    %2499 = vmatpush1.bf16.msra.mxu0 %v1390
    %2500 = vmatprep.subr.bf16.mxu0 0
    %2501 = vmatpush1.bf16.msra.mxu0 %v1391
    %2502 = vmatprep.subr.bf16.mxu0 0
    %2503 = vmatpush1.bf16.msra.mxu0 %v1392
    %2504 = vmatprep.mubr.bf16.mxu0 %v2314
    %2505 = vmatmul.mubr.bf16.gmra.mrb[0].mxu0 %v2313
    %v2506 = vpop.f32.mrb[0].mxu0
    %v2507 = vadd.f32 %v2410, %v2506
    %v2508 = vpop.f32.mrb[0].mxu0
    %v2509 = vpop.f32.mrb[0].mxu0
    %v2510 = vadd.f32 %v2413, %v2509
    %v2511 = vpop.f32.mrb[0].mxu0
    %2512 = vmatprep.mubr.bf16.mxu0 %v2318
    %2513 = vmatmul.mubr.bf16.gmra.mrb[0].mxu0 %v2317
    %v2514 = vpop.f32.mrb[0].mxu0
    %v2515 = vadd.f32 %v2418, %v2514
    %v2516 = vpop.f32.mrb[0].mxu0
    %v2517 = vpop.f32.mrb[0].mxu0
    %v2518 = vadd.f32 %v2421, %v2517
    %v2519 = vpop.f32.mrb[0].mxu0
    %2520 = vmatprep.mubr.bf16.mxu0 %v2322
    %2521 = vmatmul.mubr.bf16.gmra.mrb[0].mxu0 %v2321
    %v2522 = vpop.f32.mrb[0].mxu0
    %v2523 = vadd.f32 %v2426, %v2522
    %v2524 = vpop.f32.mrb[0].mxu0
    %v2525 = vpop.f32.mrb[0].mxu0
    %v2526 = vadd.f32 %v2429, %v2525
    %v2527 = vpop.f32.mrb[0].mxu0
    %2528 = vmatprep.mubr.bf16.mxu0 %v2326
    %2529 = vmatmul.mubr.bf16.gmra.mrb[0].mxu0 %v2325
    %v2530 = vpop.f32.mrb[0].mxu0
    %v2531 = vadd.f32 %v2434, %v2530
    %v2532 = vpop.f32.mrb[0].mxu0
    %v2533 = vpop.f32.mrb[0].mxu0
    %v2534 = vadd.f32 %v2437, %v2533
    %v2535 = vpop.f32.mrb[0].mxu0
    %2536 = vmatprep.mubr.bf16.mxu0 %v2330
    %2537 = vmatmul.mubr.bf16.gmra.mrb[0].mxu0 %v2329
    %v2538 = vpop.f32.mrb[0].mxu0
    %v2539 = vadd.f32 %v2442, %v2538
    %v2540 = vpop.f32.mrb[0].mxu0
    %v2541 = vpop.f32.mrb[0].mxu0
    %v2542 = vadd.f32 %v2445, %v2541
    %v2543 = vpop.f32.mrb[0].mxu0
    %2544 = vmatprep.mubr.bf16.mxu0 %v2334
    %2545 = vmatmul.mubr.bf16.gmra.mrb[0].mxu0 %v2333
    %v2546 = vpop.f32.mrb[0].mxu0
    %v2547 = vadd.f32 %v2450, %v2546
    %v2548 = vpop.f32.mrb[0].mxu0
    %v2549 = vpop.f32.mrb[0].mxu0
    %v2550 = vadd.f32 %v2453, %v2549
    %v2551 = vpop.f32.mrb[0].mxu0
    %2552 = vmatprep.mubr.bf16.mxu0 %v2338
    %2553 = vmatmul.mubr.bf16.gmra.mrb[0].mxu0 %v2337
    %v2554 = vpop.f32.mrb[0].mxu0
    %v2555 = vadd.f32 %v2458, %v2554
    %v2556 = vpop.f32.mrb[0].mxu0
    %v2557 = vpop.f32.mrb[0].mxu0
    %v2558 = vadd.f32 %v2461, %v2557
    %v2559 = vpop.f32.mrb[0].mxu0
    %2560 = vmatprep.mubr.bf16.mxu0 %v2342
    %2561 = vmatmul.mubr.bf16.gmra.mrb[0].mxu0 %v2341
    %v2562 = vpop.f32.mrb[0].mxu0
    %v2563 = vadd.f32 %v2466, %v2562
    %v2564 = vpop.f32.mrb[0].mxu0
    %v2565 = vpop.f32.mrb[0].mxu0
    %v2566 = vadd.f32 %v2469, %v2565
    %v2567 = vpop.f32.mrb[0].mxu0
    %2568 = vdwg.mxu0
    %v2569 = vpack.c.bf16 %v2510, %v2507
    %v2570 = vpack.c.bf16 %v2518, %v2515
    %v2571 = vpack.c.bf16 %v2526, %v2523
    %v2572 = vpack.c.bf16 %v2534, %v2531
    %v2573 = vpack.c.bf16 %v2542, %v2539
    %v2574 = vpack.c.bf16 %v2550, %v2547
    %v2575 = vpack.c.bf16 %v2558, %v2555
    %v2576 = vpack.c.bf16 %v2566, %v2563
    %s2577 = scalar_lea.vmem [#allocation8], 768
    %v2578 = vld [vmem:[%s2577] sm:$0xff]
    %v2579 = vld [vmem:[%s2577 + $0x8] sm:$0xff]
    %v2580 = vld [vmem:[%s2577 + $0x10] sm:$0xff]
    %v2581 = vld [vmem:[%s2577 + $0x18] sm:$0xff]
    %v2582 = vld [vmem:[%s2577 + $0x20] sm:$0xff]
    %v2583 = vld [vmem:[%s2577 + $0x28] sm:$0xff]
    %v2584 = vld [vmem:[%s2577 + $0x30] sm:$0xff]
    %v2585 = vld [vmem:[%s2577 + $0x38] sm:$0xff]
    %v2586 = vld [vmem:[%s2577 + $0x40] sm:$0xff]
    %v2587 = vld [vmem:[%s2577 + $0x48] sm:$0xff]
    %v2588 = vld [vmem:[%s2577 + $0x50] sm:$0xff]
    %v2589 = vld [vmem:[%s2577 + $0x58] sm:$0xff]
    %v2590 = vld [vmem:[%s2577 + $0x60] sm:$0xff]
    %v2591 = vld [vmem:[%s2577 + $0x68] sm:$0xff]
    %v2592 = vld [vmem:[%s2577 + $0x70] sm:$0xff]
    %v2593 = vld [vmem:[%s2577 + $0x78] sm:$0xff]
    %v2594 = vld [vmem:[%s2577 + $0x80] sm:$0xff]
    %v2595 = vld [vmem:[%s2577 + $0x88] sm:$0xff]
    %v2596 = vld [vmem:[%s2577 + $0x90] sm:$0xff]
    %v2597 = vld [vmem:[%s2577 + $0x98] sm:$0xff]
    %v2598 = vld [vmem:[%s2577 + $0xa0] sm:$0xff]
    %v2599 = vld [vmem:[%s2577 + $0xa8] sm:$0xff]
    %v2600 = vld [vmem:[%s2577 + $0xb0] sm:$0xff]
    %v2601 = vld [vmem:[%s2577 + $0xb8] sm:$0xff]
    %v2602 = vld [vmem:[%s2577 + $0xc0] sm:$0xff]
    %v2603 = vld [vmem:[%s2577 + $0xc8] sm:$0xff]
    %v2604 = vld [vmem:[%s2577 + $0xd0] sm:$0xff]
    %v2605 = vld [vmem:[%s2577 + $0xd8] sm:$0xff]
    %v2606 = vld [vmem:[%s2577 + $0xe0] sm:$0xff]
    %v2607 = vld [vmem:[%s2577 + $0xe8] sm:$0xff]
    %v2608 = vld [vmem:[%s2577 + $0xf0] sm:$0xff]
    %v2609 = vld [vmem:[%s2577 + $0xf8] sm:$0xff]
    %v2642 = vunpack.c.l.b16 %v2578
    %v2643 = vunpack.c.h.b16 %v2578
    %v2644 = vunpack.c.l.b16 %v2579
    %v2645 = vunpack.c.h.b16 %v2579
    %v2646 = vunpack.c.l.b16 %v2580
    %v2647 = vunpack.c.h.b16 %v2580
    %v2648 = vunpack.c.l.b16 %v2581
    %v2649 = vunpack.c.h.b16 %v2581
    %v2650 = vunpack.c.l.b16 %v2582
    %v2651 = vunpack.c.h.b16 %v2582
    %v2652 = vunpack.c.l.b16 %v2583
    %v2653 = vunpack.c.h.b16 %v2583
    %v2654 = vunpack.c.l.b16 %v2584
    %v2655 = vunpack.c.h.b16 %v2584
    %v2656 = vunpack.c.l.b16 %v2585
    %v2657 = vunpack.c.h.b16 %v2585
    %v2658 = vunpack.c.l.b16 %v2586
    %v2659 = vunpack.c.h.b16 %v2586
    %v2660 = vunpack.c.l.b16 %v2587
    %v2661 = vunpack.c.h.b16 %v2587
    %v2662 = vunpack.c.l.b16 %v2588
    %v2663 = vunpack.c.h.b16 %v2588
    %v2664 = vunpack.c.l.b16 %v2589
    %v2665 = vunpack.c.h.b16 %v2589
    %v2666 = vunpack.c.l.b16 %v2590
    %v2667 = vunpack.c.h.b16 %v2590
    %v2668 = vunpack.c.l.b16 %v2591
    %v2669 = vunpack.c.h.b16 %v2591
    %v2670 = vunpack.c.l.b16 %v2592
    %v2671 = vunpack.c.h.b16 %v2592
    %v2672 = vunpack.c.l.b16 %v2593
    %v2673 = vunpack.c.h.b16 %v2593
    %v2674 = vunpack.c.l.b16 %v2594
    %v2675 = vunpack.c.h.b16 %v2594
    %v2676 = vunpack.c.l.b16 %v2595
    %v2677 = vunpack.c.h.b16 %v2595
    %v2678 = vunpack.c.l.b16 %v2596
    %v2679 = vunpack.c.h.b16 %v2596
    %v2680 = vunpack.c.l.b16 %v2597
    %v2681 = vunpack.c.h.b16 %v2597
    %v2682 = vunpack.c.l.b16 %v2598
    %v2683 = vunpack.c.h.b16 %v2598
    %v2684 = vunpack.c.l.b16 %v2599
    %v2685 = vunpack.c.h.b16 %v2599
    %v2686 = vunpack.c.l.b16 %v2600
    %v2687 = vunpack.c.h.b16 %v2600
    %v2688 = vunpack.c.l.b16 %v2601
    %v2689 = vunpack.c.h.b16 %v2601
    %v2690 = vunpack.c.l.b16 %v2602
    %v2691 = vunpack.c.h.b16 %v2602
    %v2692 = vunpack.c.l.b16 %v2603
    %v2693 = vunpack.c.h.b16 %v2603
    %v2694 = vunpack.c.l.b16 %v2604
    %v2695 = vunpack.c.h.b16 %v2604
    %v2696 = vunpack.c.l.b16 %v2605
    %v2697 = vunpack.c.h.b16 %v2605
    %v2698 = vunpack.c.l.b16 %v2606
    %v2699 = vunpack.c.h.b16 %v2606
    %v2700 = vunpack.c.l.b16 %v2607
    %v2701 = vunpack.c.h.b16 %v2607
    %v2702 = vunpack.c.l.b16 %v2608
    %v2703 = vunpack.c.h.b16 %v2608
    %v2704 = vunpack.c.l.b16 %v2609
    %v2705 = vunpack.c.h.b16 %v2609
    %v2706 = vpack.c.b16 %v2646, %v2642
    %v2707 = vpack.c.b16 %v2647, %v2643
    %v2708 = vpack.c.b16 %v2648, %v2644
    %v2709 = vpack.c.b16 %v2649, %v2645
    %v2710 = vpack.c.b16 %v2654, %v2650
    %v2711 = vpack.c.b16 %v2655, %v2651
    %v2712 = vpack.c.b16 %v2656, %v2652
    %v2713 = vpack.c.b16 %v2657, %v2653
    %v2714 = vpack.c.b16 %v2662, %v2658
    %v2715 = vpack.c.b16 %v2663, %v2659
    %v2716 = vpack.c.b16 %v2664, %v2660
    %v2717 = vpack.c.b16 %v2665, %v2661
    %v2718 = vpack.c.b16 %v2670, %v2666
    %v2719 = vpack.c.b16 %v2671, %v2667
    %v2720 = vpack.c.b16 %v2672, %v2668
    %v2721 = vpack.c.b16 %v2673, %v2669
    %v2722 = vpack.c.b16 %v2678, %v2674
    %v2723 = vpack.c.b16 %v2679, %v2675
    %v2724 = vpack.c.b16 %v2680, %v2676
    %v2725 = vpack.c.b16 %v2681, %v2677
    %v2726 = vpack.c.b16 %v2686, %v2682
    %v2727 = vpack.c.b16 %v2687, %v2683
    %v2728 = vpack.c.b16 %v2688, %v2684
    %v2729 = vpack.c.b16 %v2689, %v2685
    %v2730 = vpack.c.b16 %v2694, %v2690
    %v2731 = vpack.c.b16 %v2695, %v2691
    %v2732 = vpack.c.b16 %v2696, %v2692
    %v2733 = vpack.c.b16 %v2697, %v2693
    %v2734 = vpack.c.b16 %v2702, %v2698
    %v2735 = vpack.c.b16 %v2703, %v2699
    %v2736 = vpack.c.b16 %v2704, %v2700
    %v2737 = vpack.c.b16 %v2705, %v2701
    %2770 = vmatprep.subr.bf16.mxu0 0
    %2771 = vmatpush1.bf16.msra.mxu0 %v1361
    %2772 = vmatprep.subr.bf16.mxu0 0
    %2773 = vmatpush1.bf16.msra.mxu0 %v1362
    %2774 = vmatprep.subr.bf16.mxu0 0
    %2775 = vmatpush1.bf16.msra.mxu0 %v1363
    %2776 = vmatprep.subr.bf16.mxu0 0
    %2777 = vmatpush1.bf16.msra.mxu0 %v1364
    %2778 = vmatprep.subr.bf16.mxu0 0
    %2779 = vmatpush1.bf16.msra.mxu0 %v1365
    %2780 = vmatprep.subr.bf16.mxu0 0
    %2781 = vmatpush1.bf16.msra.mxu0 %v1366
    %2782 = vmatprep.subr.bf16.mxu0 0
    %2783 = vmatpush1.bf16.msra.mxu0 %v1367
    %2784 = vmatprep.subr.bf16.mxu0 0
    %2785 = vmatpush1.bf16.msra.mxu0 %v1368
    %2786 = vmatprep.subr.bf16.mxu0 0
    %2787 = vmatpush1.bf16.msra.mxu0 %v1369
    %2788 = vmatprep.subr.bf16.mxu0 0
    %2789 = vmatpush1.bf16.msra.mxu0 %v1370
    %2790 = vmatprep.subr.bf16.mxu0 0
    %2791 = vmatpush1.bf16.msra.mxu0 %v1371
    %2792 = vmatprep.subr.bf16.mxu0 0
    %2793 = vmatpush1.bf16.msra.mxu0 %v1372
    %2794 = vmatprep.subr.bf16.mxu0 0
    %2795 = vmatpush1.bf16.msra.mxu0 %v1373
    %2796 = vmatprep.subr.bf16.mxu0 0
    %2797 = vmatpush1.bf16.msra.mxu0 %v1374
    %2798 = vmatprep.subr.bf16.mxu0 0
    %2799 = vmatpush1.bf16.msra.mxu0 %v1375
    %2800 = vmatprep.subr.bf16.mxu0 0
    %2801 = vmatpush1.bf16.msra.mxu0 %v1376
    %2802 = vmatprep.mubr.bf16.mxu0 %v2707
    %2803 = vmatmul.mubr.bf16.gmra.mrb[0].mxu0 %v2706
    %v2804 = vpop.f32.mrb[0].mxu0
    %v2805 = vadd.f32 0.0, %v2804
    %v2806 = vpop.f32.mrb[0].mxu0
    %v2807 = vpop.f32.mrb[0].mxu0
    %v2808 = vadd.f32 0.0, %v2807
    %v2809 = vpop.f32.mrb[0].mxu0
    %2810 = vmatprep.mubr.bf16.mxu0 %v2711
    %2811 = vmatmul.mubr.bf16.gmra.mrb[0].mxu0 %v2710
    %v2812 = vpop.f32.mrb[0].mxu0
    %v2813 = vadd.f32 0.0, %v2812
    %v2814 = vpop.f32.mrb[0].mxu0
    %v2815 = vpop.f32.mrb[0].mxu0
    %v2816 = vadd.f32 0.0, %v2815
    %v2817 = vpop.f32.mrb[0].mxu0
    %2818 = vmatprep.mubr.bf16.mxu0 %v2715
    %2819 = vmatmul.mubr.bf16.gmra.mrb[0].mxu0 %v2714
    %v2820 = vpop.f32.mrb[0].mxu0
    %v2821 = vadd.f32 0.0, %v2820
    %v2822 = vpop.f32.mrb[0].mxu0
    %v2823 = vpop.f32.mrb[0].mxu0
    %v2824 = vadd.f32 0.0, %v2823
    %v2825 = vpop.f32.mrb[0].mxu0
    %2826 = vmatprep.mubr.bf16.mxu0 %v2719
    %2827 = vmatmul.mubr.bf16.gmra.mrb[0].mxu0 %v2718
    %v2828 = vpop.f32.mrb[0].mxu0
    %v2829 = vadd.f32 0.0, %v2828
    %v2830 = vpop.f32.mrb[0].mxu0
    %v2831 = vpop.f32.mrb[0].mxu0
    %v2832 = vadd.f32 0.0, %v2831
    %v2833 = vpop.f32.mrb[0].mxu0
    %2834 = vmatprep.mubr.bf16.mxu0 %v2723
    %2835 = vmatmul.mubr.bf16.gmra.mrb[0].mxu0 %v2722
    %v2836 = vpop.f32.mrb[0].mxu0
    %v2837 = vadd.f32 0.0, %v2836
    %v2838 = vpop.f32.mrb[0].mxu0
    %v2839 = vpop.f32.mrb[0].mxu0
    %v2840 = vadd.f32 0.0, %v2839
    %v2841 = vpop.f32.mrb[0].mxu0
    %2842 = vmatprep.mubr.bf16.mxu0 %v2727
    %2843 = vmatmul.mubr.bf16.gmra.mrb[0].mxu0 %v2726
    %v2844 = vpop.f32.mrb[0].mxu0
    %v2845 = vadd.f32 0.0, %v2844
    %v2846 = vpop.f32.mrb[0].mxu0
    %v2847 = vpop.f32.mrb[0].mxu0
    %v2848 = vadd.f32 0.0, %v2847
    %v2849 = vpop.f32.mrb[0].mxu0
    %2850 = vmatprep.mubr.bf16.mxu0 %v2731
    %2851 = vmatmul.mubr.bf16.gmra.mrb[0].mxu0 %v2730
    %v2852 = vpop.f32.mrb[0].mxu0
    %v2853 = vadd.f32 0.0, %v2852
    %v2854 = vpop.f32.mrb[0].mxu0
    %v2855 = vpop.f32.mrb[0].mxu0
    %v2856 = vadd.f32 0.0, %v2855
    %v2857 = vpop.f32.mrb[0].mxu0
    %2858 = vmatprep.mubr.bf16.mxu0 %v2735
    %2859 = vmatmul.mubr.bf16.gmra.mrb[0].mxu0 %v2734
    %v2860 = vpop.f32.mrb[0].mxu0
    %v2861 = vadd.f32 0.0, %v2860
    %v2862 = vpop.f32.mrb[0].mxu0
    %v2863 = vpop.f32.mrb[0].mxu0
    %v2864 = vadd.f32 0.0, %v2863
    %v2865 = vpop.f32.mrb[0].mxu0
    %2866 = vdwg.mxu0
    %2867 = vmatprep.subr.bf16.mxu0 0
    %2868 = vmatpush1.bf16.msra.mxu0 %v1377
    %2869 = vmatprep.subr.bf16.mxu0 0
    %2870 = vmatpush1.bf16.msra.mxu0 %v1378
    %2871 = vmatprep.subr.bf16.mxu0 0
    %2872 = vmatpush1.bf16.msra.mxu0 %v1379
    %2873 = vmatprep.subr.bf16.mxu0 0
    %2874 = vmatpush1.bf16.msra.mxu0 %v1380
    %2875 = vmatprep.subr.bf16.mxu0 0
    %2876 = vmatpush1.bf16.msra.mxu0 %v1381
    %2877 = vmatprep.subr.bf16.mxu0 0
    %2878 = vmatpush1.bf16.msra.mxu0 %v1382
    %2879 = vmatprep.subr.bf16.mxu0 0
    %2880 = vmatpush1.bf16.msra.mxu0 %v1383
    %2881 = vmatprep.subr.bf16.mxu0 0
    %2882 = vmatpush1.bf16.msra.mxu0 %v1384
    %2883 = vmatprep.subr.bf16.mxu0 0
    %2884 = vmatpush1.bf16.msra.mxu0 %v1385
    %2885 = vmatprep.subr.bf16.mxu0 0
    %2886 = vmatpush1.bf16.msra.mxu0 %v1386
    %2887 = vmatprep.subr.bf16.mxu0 0
    %2888 = vmatpush1.bf16.msra.mxu0 %v1387
    %2889 = vmatprep.subr.bf16.mxu0 0
    %2890 = vmatpush1.bf16.msra.mxu0 %v1388
    %2891 = vmatprep.subr.bf16.mxu0 0
    %2892 = vmatpush1.bf16.msra.mxu0 %v1389
    %2893 = vmatprep.subr.bf16.mxu0 0
    %2894 = vmatpush1.bf16.msra.mxu0 %v1390
    %2895 = vmatprep.subr.bf16.mxu0 0
    %2896 = vmatpush1.bf16.msra.mxu0 %v1391
    %2897 = vmatprep.subr.bf16.mxu0 0
    %2898 = vmatpush1.bf16.msra.mxu0 %v1392
    %2899 = vmatprep.mubr.bf16.mxu0 %v2709
    %2900 = vmatmul.mubr.bf16.gmra.mrb[0].mxu0 %v2708
    %v2901 = vpop.f32.mrb[0].mxu0
    %v2902 = vadd.f32 %v2805, %v2901
    %v2903 = vpop.f32.mrb[0].mxu0
    %v2904 = vpop.f32.mrb[0].mxu0
    %v2905 = vadd.f32 %v2808, %v2904
    %v2906 = vpop.f32.mrb[0].mxu0
    %2907 = vmatprep.mubr.bf16.mxu0 %v2713
    %2908 = vmatmul.mubr.bf16.gmra.mrb[0].mxu0 %v2712
    %v2909 = vpop.f32.mrb[0].mxu0
    %v2910 = vadd.f32 %v2813, %v2909
    %v2911 = vpop.f32.mrb[0].mxu0
    %v2912 = vpop.f32.mrb[0].mxu0
    %v2913 = vadd.f32 %v2816, %v2912
    %v2914 = vpop.f32.mrb[0].mxu0
    %2915 = vmatprep.mubr.bf16.mxu0 %v2717
    %2916 = vmatmul.mubr.bf16.gmra.mrb[0].mxu0 %v2716
    %v2917 = vpop.f32.mrb[0].mxu0
    %v2918 = vadd.f32 %v2821, %v2917
    %v2919 = vpop.f32.mrb[0].mxu0
    %v2920 = vpop.f32.mrb[0].mxu0
    %v2921 = vadd.f32 %v2824, %v2920
    %v2922 = vpop.f32.mrb[0].mxu0
    %2923 = vmatprep.mubr.bf16.mxu0 %v2721
    %2924 = vmatmul.mubr.bf16.gmra.mrb[0].mxu0 %v2720
    %v2925 = vpop.f32.mrb[0].mxu0
    %v2926 = vadd.f32 %v2829, %v2925
    %v2927 = vpop.f32.mrb[0].mxu0
    %v2928 = vpop.f32.mrb[0].mxu0
    %v2929 = vadd.f32 %v2832, %v2928
    %v2930 = vpop.f32.mrb[0].mxu0
    %2931 = vmatprep.mubr.bf16.mxu0 %v2725
    %2932 = vmatmul.mubr.bf16.gmra.mrb[0].mxu0 %v2724
    %v2933 = vpop.f32.mrb[0].mxu0
    %v2934 = vadd.f32 %v2837, %v2933
    %v2935 = vpop.f32.mrb[0].mxu0
    %v2936 = vpop.f32.mrb[0].mxu0
    %v2937 = vadd.f32 %v2840, %v2936
    %v2938 = vpop.f32.mrb[0].mxu0
    %2939 = vmatprep.mubr.bf16.mxu0 %v2729
    %2940 = vmatmul.mubr.bf16.gmra.mrb[0].mxu0 %v2728
    %v2941 = vpop.f32.mrb[0].mxu0
    %v2942 = vadd.f32 %v2845, %v2941
    %v2943 = vpop.f32.mrb[0].mxu0
    %v2944 = vpop.f32.mrb[0].mxu0
    %v2945 = vadd.f32 %v2848, %v2944
    %v2946 = vpop.f32.mrb[0].mxu0
    %2947 = vmatprep.mubr.bf16.mxu0 %v2733
    %2948 = vmatmul.mubr.bf16.gmra.mrb[0].mxu0 %v2732
    %v2949 = vpop.f32.mrb[0].mxu0
    %v2950 = vadd.f32 %v2853, %v2949
    %v2951 = vpop.f32.mrb[0].mxu0
    %v2952 = vpop.f32.mrb[0].mxu0
    %v2953 = vadd.f32 %v2856, %v2952
    %v2954 = vpop.f32.mrb[0].mxu0
    %2955 = vmatprep.mubr.bf16.mxu0 %v2737
    %2956 = vmatmul.mubr.bf16.gmra.mrb[0].mxu0 %v2736
    %v2957 = vpop.f32.mrb[0].mxu0
    %v2958 = vadd.f32 %v2861, %v2957
    %v2959 = vpop.f32.mrb[0].mxu0
    %v2960 = vpop.f32.mrb[0].mxu0
    %v2961 = vadd.f32 %v2864, %v2960
    %v2962 = vpop.f32.mrb[0].mxu0
    %2963 = vdwg.mxu0
    %v2964 = vpack.c.bf16 %v2905, %v2902
    %v2965 = vpack.c.bf16 %v2913, %v2910
    %v2966 = vpack.c.bf16 %v2921, %v2918
    %v2967 = vpack.c.bf16 %v2929, %v2926
    %v2968 = vpack.c.bf16 %v2937, %v2934
    %v2969 = vpack.c.bf16 %v2945, %v2942
    %v2970 = vpack.c.bf16 %v2953, %v2950
    %v2971 = vpack.c.bf16 %v2961, %v2958
    %s2972 = scalar_lea.vmem [#allocation8], 1024
    %v2973 = vld [vmem:[%s2972] sm:$0xff]
    %v2974 = vld [vmem:[%s2972 + $0x8] sm:$0xff]
    %v2975 = vld [vmem:[%s2972 + $0x10] sm:$0xff]
    %v2976 = vld [vmem:[%s2972 + $0x18] sm:$0xff]
    %v2977 = vld [vmem:[%s2972 + $0x20] sm:$0xff]
    %v2978 = vld [vmem:[%s2972 + $0x28] sm:$0xff]
    %v2979 = vld [vmem:[%s2972 + $0x30] sm:$0xff]
    %v2980 = vld [vmem:[%s2972 + $0x38] sm:$0xff]
    %v2981 = vld [vmem:[%s2972 + $0x40] sm:$0xff]
    %v2982 = vld [vmem:[%s2972 + $0x48] sm:$0xff]
    %v2983 = vld [vmem:[%s2972 + $0x50] sm:$0xff]
    %v2984 = vld [vmem:[%s2972 + $0x58] sm:$0xff]
    %v2985 = vld [vmem:[%s2972 + $0x60] sm:$0xff]
    %v2986 = vld [vmem:[%s2972 + $0x68] sm:$0xff]
    %v2987 = vld [vmem:[%s2972 + $0x70] sm:$0xff]
    %v2988 = vld [vmem:[%s2972 + $0x78] sm:$0xff]
    %v2989 = vld [vmem:[%s2972 + $0x80] sm:$0xff]
    %v2990 = vld [vmem:[%s2972 + $0x88] sm:$0xff]
    %v2991 = vld [vmem:[%s2972 + $0x90] sm:$0xff]
    %v2992 = vld [vmem:[%s2972 + $0x98] sm:$0xff]
    %v2993 = vld [vmem:[%s2972 + $0xa0] sm:$0xff]
    %v2994 = vld [vmem:[%s2972 + $0xa8] sm:$0xff]
    %v2995 = vld [vmem:[%s2972 + $0xb0] sm:$0xff]
    %v2996 = vld [vmem:[%s2972 + $0xb8] sm:$0xff]
    %v2997 = vld [vmem:[%s2972 + $0xc0] sm:$0xff]
    %v2998 = vld [vmem:[%s2972 + $0xc8] sm:$0xff]
    %v2999 = vld [vmem:[%s2972 + $0xd0] sm:$0xff]
    %v3000 = vld [vmem:[%s2972 + $0xd8] sm:$0xff]
    %v3001 = vld [vmem:[%s2972 + $0xe0] sm:$0xff]
    %v3002 = vld [vmem:[%s2972 + $0xe8] sm:$0xff]
    %v3003 = vld [vmem:[%s2972 + $0xf0] sm:$0xff]
    %v3004 = vld [vmem:[%s2972 + $0xf8] sm:$0xff]
    %v3037 = vunpack.c.l.b16 %v2973
    %v3038 = vunpack.c.h.b16 %v2973
    %v3039 = vunpack.c.l.b16 %v2974
    %v3040 = vunpack.c.h.b16 %v2974
    %v3041 = vunpack.c.l.b16 %v2975
    %v3042 = vunpack.c.h.b16 %v2975
    %v3043 = vunpack.c.l.b16 %v2976
    %v3044 = vunpack.c.h.b16 %v2976
    %v3045 = vunpack.c.l.b16 %v2977
    %v3046 = vunpack.c.h.b16 %v2977
    %v3047 = vunpack.c.l.b16 %v2978
    %v3048 = vunpack.c.h.b16 %v2978
    %v3049 = vunpack.c.l.b16 %v2979
    %v3050 = vunpack.c.h.b16 %v2979
    %v3051 = vunpack.c.l.b16 %v2980
    %v3052 = vunpack.c.h.b16 %v2980
    %v3053 = vunpack.c.l.b16 %v2981
    %v3054 = vunpack.c.h.b16 %v2981
    %v3055 = vunpack.c.l.b16 %v2982
    %v3056 = vunpack.c.h.b16 %v2982
    %v3057 = vunpack.c.l.b16 %v2983
    %v3058 = vunpack.c.h.b16 %v2983
    %v3059 = vunpack.c.l.b16 %v2984
    %v3060 = vunpack.c.h.b16 %v2984
    %v3061 = vunpack.c.l.b16 %v2985
    %v3062 = vunpack.c.h.b16 %v2985
    %v3063 = vunpack.c.l.b16 %v2986
    %v3064 = vunpack.c.h.b16 %v2986
    %v3065 = vunpack.c.l.b16 %v2987
    %v3066 = vunpack.c.h.b16 %v2987
    %v3067 = vunpack.c.l.b16 %v2988
    %v3068 = vunpack.c.h.b16 %v2988
    %v3069 = vunpack.c.l.b16 %v2989
    %v3070 = vunpack.c.h.b16 %v2989
    %v3071 = vunpack.c.l.b16 %v2990
    %v3072 = vunpack.c.h.b16 %v2990
    %v3073 = vunpack.c.l.b16 %v2991
    %v3074 = vunpack.c.h.b16 %v2991
    %v3075 = vunpack.c.l.b16 %v2992
    %v3076 = vunpack.c.h.b16 %v2992
    %v3077 = vunpack.c.l.b16 %v2993
    %v3078 = vunpack.c.h.b16 %v2993
    %v3079 = vunpack.c.l.b16 %v2994
    %v3080 = vunpack.c.h.b16 %v2994
    %v3081 = vunpack.c.l.b16 %v2995
    %v3082 = vunpack.c.h.b16 %v2995
    %v3083 = vunpack.c.l.b16 %v2996
    %v3084 = vunpack.c.h.b16 %v2996
    %v3085 = vunpack.c.l.b16 %v2997
    %v3086 = vunpack.c.h.b16 %v2997
    %v3087 = vunpack.c.l.b16 %v2998
    %v3088 = vunpack.c.h.b16 %v2998
    %v3089 = vunpack.c.l.b16 %v2999
    %v3090 = vunpack.c.h.b16 %v2999
    %v3091 = vunpack.c.l.b16 %v3000
    %v3092 = vunpack.c.h.b16 %v3000
    %v3093 = vunpack.c.l.b16 %v3001
    %v3094 = vunpack.c.h.b16 %v3001
    %v3095 = vunpack.c.l.b16 %v3002
    %v3096 = vunpack.c.h.b16 %v3002
    %v3097 = vunpack.c.l.b16 %v3003
    %v3098 = vunpack.c.h.b16 %v3003
    %v3099 = vunpack.c.l.b16 %v3004
    %v3100 = vunpack.c.h.b16 %v3004
    %v3101 = vpack.c.b16 %v3041, %v3037
    %v3102 = vpack.c.b16 %v3042, %v3038
    %v3103 = vpack.c.b16 %v3043, %v3039
    %v3104 = vpack.c.b16 %v3044, %v3040
    %v3105 = vpack.c.b16 %v3049, %v3045
    %v3106 = vpack.c.b16 %v3050, %v3046
    %v3107 = vpack.c.b16 %v3051, %v3047
    %v3108 = vpack.c.b16 %v3052, %v3048
    %v3109 = vpack.c.b16 %v3057, %v3053
    %v3110 = vpack.c.b16 %v3058, %v3054
    %v3111 = vpack.c.b16 %v3059, %v3055
    %v3112 = vpack.c.b16 %v3060, %v3056
    %v3113 = vpack.c.b16 %v3065, %v3061
    %v3114 = vpack.c.b16 %v3066, %v3062
    %v3115 = vpack.c.b16 %v3067, %v3063
    %v3116 = vpack.c.b16 %v3068, %v3064
    %v3117 = vpack.c.b16 %v3073, %v3069
    %v3118 = vpack.c.b16 %v3074, %v3070
    %v3119 = vpack.c.b16 %v3075, %v3071
    %v3120 = vpack.c.b16 %v3076, %v3072
    %v3121 = vpack.c.b16 %v3081, %v3077
    %v3122 = vpack.c.b16 %v3082, %v3078
    %v3123 = vpack.c.b16 %v3083, %v3079
    %v3124 = vpack.c.b16 %v3084, %v3080
    %v3125 = vpack.c.b16 %v3089, %v3085
    %v3126 = vpack.c.b16 %v3090, %v3086
    %v3127 = vpack.c.b16 %v3091, %v3087
    %v3128 = vpack.c.b16 %v3092, %v3088
    %v3129 = vpack.c.b16 %v3097, %v3093
    %v3130 = vpack.c.b16 %v3098, %v3094
    %v3131 = vpack.c.b16 %v3099, %v3095
    %v3132 = vpack.c.b16 %v3100, %v3096
    %3165 = vmatprep.subr.bf16.mxu0 0
    %3166 = vmatpush1.bf16.msra.mxu0 %v1361
    %3167 = vmatprep.subr.bf16.mxu0 0
    %3168 = vmatpush1.bf16.msra.mxu0 %v1362
    %3169 = vmatprep.subr.bf16.mxu0 0
    %3170 = vmatpush1.bf16.msra.mxu0 %v1363
    %3171 = vmatprep.subr.bf16.mxu0 0
    %3172 = vmatpush1.bf16.msra.mxu0 %v1364
    %3173 = vmatprep.subr.bf16.mxu0 0
    %3174 = vmatpush1.bf16.msra.mxu0 %v1365
    %3175 = vmatprep.subr.bf16.mxu0 0
    %3176 = vmatpush1.bf16.msra.mxu0 %v1366
    %3177 = vmatprep.subr.bf16.mxu0 0
    %3178 = vmatpush1.bf16.msra.mxu0 %v1367
    %3179 = vmatprep.subr.bf16.mxu0 0
    %3180 = vmatpush1.bf16.msra.mxu0 %v1368
    %3181 = vmatprep.subr.bf16.mxu0 0
    %3182 = vmatpush1.bf16.msra.mxu0 %v1369
    %3183 = vmatprep.subr.bf16.mxu0 0
    %3184 = vmatpush1.bf16.msra.mxu0 %v1370
    %3185 = vmatprep.subr.bf16.mxu0 0
    %3186 = vmatpush1.bf16.msra.mxu0 %v1371
    %3187 = vmatprep.subr.bf16.mxu0 0
    %3188 = vmatpush1.bf16.msra.mxu0 %v1372
    %3189 = vmatprep.subr.bf16.mxu0 0
    %3190 = vmatpush1.bf16.msra.mxu0 %v1373
    %3191 = vmatprep.subr.bf16.mxu0 0
    %3192 = vmatpush1.bf16.msra.mxu0 %v1374
    %3193 = vmatprep.subr.bf16.mxu0 0
    %3194 = vmatpush1.bf16.msra.mxu0 %v1375
    %3195 = vmatprep.subr.bf16.mxu0 0
    %3196 = vmatpush1.bf16.msra.mxu0 %v1376
    %3197 = vmatprep.mubr.bf16.mxu0 %v3102
    %3198 = vmatmul.mubr.bf16.gmra.mrb[0].mxu0 %v3101
    %v3199 = vpop.f32.mrb[0].mxu0
    %v3200 = vadd.f32 0.0, %v3199
    %v3201 = vpop.f32.mrb[0].mxu0
    %v3202 = vpop.f32.mrb[0].mxu0
    %v3203 = vadd.f32 0.0, %v3202
    %v3204 = vpop.f32.mrb[0].mxu0
    %3205 = vmatprep.mubr.bf16.mxu0 %v3106
    %3206 = vmatmul.mubr.bf16.gmra.mrb[0].mxu0 %v3105
    %v3207 = vpop.f32.mrb[0].mxu0
    %v3208 = vadd.f32 0.0, %v3207
    %v3209 = vpop.f32.mrb[0].mxu0
    %v3210 = vpop.f32.mrb[0].mxu0
    %v3211 = vadd.f32 0.0, %v3210
    %v3212 = vpop.f32.mrb[0].mxu0
    %3213 = vmatprep.mubr.bf16.mxu0 %v3110
    %3214 = vmatmul.mubr.bf16.gmra.mrb[0].mxu0 %v3109
    %v3215 = vpop.f32.mrb[0].mxu0
    %v3216 = vadd.f32 0.0, %v3215
    %v3217 = vpop.f32.mrb[0].mxu0
    %v3218 = vpop.f32.mrb[0].mxu0
    %v3219 = vadd.f32 0.0, %v3218
    %v3220 = vpop.f32.mrb[0].mxu0
    %3221 = vmatprep.mubr.bf16.mxu0 %v3114
    %3222 = vmatmul.mubr.bf16.gmra.mrb[0].mxu0 %v3113
    %v3223 = vpop.f32.mrb[0].mxu0
    %v3224 = vadd.f32 0.0, %v3223
    %v3225 = vpop.f32.mrb[0].mxu0
    %v3226 = vpop.f32.mrb[0].mxu0
    %v3227 = vadd.f32 0.0, %v3226
    %v3228 = vpop.f32.mrb[0].mxu0
    %3229 = vmatprep.mubr.bf16.mxu0 %v3118
    %3230 = vmatmul.mubr.bf16.gmra.mrb[0].mxu0 %v3117
    %v3231 = vpop.f32.mrb[0].mxu0
    %v3232 = vadd.f32 0.0, %v3231
    %v3233 = vpop.f32.mrb[0].mxu0
    %v3234 = vpop.f32.mrb[0].mxu0
    %v3235 = vadd.f32 0.0, %v3234
    %v3236 = vpop.f32.mrb[0].mxu0
    %3237 = vmatprep.mubr.bf16.mxu0 %v3122
    %3238 = vmatmul.mubr.bf16.gmra.mrb[0].mxu0 %v3121
    %v3239 = vpop.f32.mrb[0].mxu0
    %v3240 = vadd.f32 0.0, %v3239
    %v3241 = vpop.f32.mrb[0].mxu0
    %v3242 = vpop.f32.mrb[0].mxu0
    %v3243 = vadd.f32 0.0, %v3242
    %v3244 = vpop.f32.mrb[0].mxu0
    %3245 = vmatprep.mubr.bf16.mxu0 %v3126
    %3246 = vmatmul.mubr.bf16.gmra.mrb[0].mxu0 %v3125
    %v3247 = vpop.f32.mrb[0].mxu0
    %v3248 = vadd.f32 0.0, %v3247
    %v3249 = vpop.f32.mrb[0].mxu0
    %v3250 = vpop.f32.mrb[0].mxu0
    %v3251 = vadd.f32 0.0, %v3250
    %v3252 = vpop.f32.mrb[0].mxu0
    %3253 = vmatprep.mubr.bf16.mxu0 %v3130
    %3254 = vmatmul.mubr.bf16.gmra.mrb[0].mxu0 %v3129
    %v3255 = vpop.f32.mrb[0].mxu0
    %v3256 = vadd.f32 0.0, %v3255
    %v3257 = vpop.f32.mrb[0].mxu0
    %v3258 = vpop.f32.mrb[0].mxu0
    %v3259 = vadd.f32 0.0, %v3258
    %v3260 = vpop.f32.mrb[0].mxu0
    %3261 = vdwg.mxu0
    %3262 = vmatprep.subr.bf16.mxu0 0
    %3263 = vmatpush1.bf16.msra.mxu0 %v1377
    %3264 = vmatprep.subr.bf16.mxu0 0
    %3265 = vmatpush1.bf16.msra.mxu0 %v1378
    %3266 = vmatprep.subr.bf16.mxu0 0
    %3267 = vmatpush1.bf16.msra.mxu0 %v1379
    %3268 = vmatprep.subr.bf16.mxu0 0
    %3269 = vmatpush1.bf16.msra.mxu0 %v1380
    %3270 = vmatprep.subr.bf16.mxu0 0
    %3271 = vmatpush1.bf16.msra.mxu0 %v1381
    %3272 = vmatprep.subr.bf16.mxu0 0
    %3273 = vmatpush1.bf16.msra.mxu0 %v1382
    %3274 = vmatprep.subr.bf16.mxu0 0
    %3275 = vmatpush1.bf16.msra.mxu0 %v1383
    %3276 = vmatprep.subr.bf16.mxu0 0
    %3277 = vmatpush1.bf16.msra.mxu0 %v1384
    %3278 = vmatprep.subr.bf16.mxu0 0
    %3279 = vmatpush1.bf16.msra.mxu0 %v1385
    %3280 = vmatprep.subr.bf16.mxu0 0
    %3281 = vmatpush1.bf16.msra.mxu0 %v1386
    %3282 = vmatprep.subr.bf16.mxu0 0
    %3283 = vmatpush1.bf16.msra.mxu0 %v1387
    %3284 = vmatprep.subr.bf16.mxu0 0
    %3285 = vmatpush1.bf16.msra.mxu0 %v1388
    %3286 = vmatprep.subr.bf16.mxu0 0
    %3287 = vmatpush1.bf16.msra.mxu0 %v1389
    %3288 = vmatprep.subr.bf16.mxu0 0
    %3289 = vmatpush1.bf16.msra.mxu0 %v1390
    %3290 = vmatprep.subr.bf16.mxu0 0
    %3291 = vmatpush1.bf16.msra.mxu0 %v1391
    %3292 = vmatprep.subr.bf16.mxu0 0
    %3293 = vmatpush1.bf16.msra.mxu0 %v1392
    %3294 = vmatprep.mubr.bf16.mxu0 %v3104
    %3295 = vmatmul.mubr.bf16.gmra.mrb[0].mxu0 %v3103
    %v3296 = vpop.f32.mrb[0].mxu0
    %v3297 = vadd.f32 %v3200, %v3296
    %v3298 = vpop.f32.mrb[0].mxu0
    %v3299 = vpop.f32.mrb[0].mxu0
    %v3300 = vadd.f32 %v3203, %v3299
    %v3301 = vpop.f32.mrb[0].mxu0
    %3302 = vmatprep.mubr.bf16.mxu0 %v3108
    %3303 = vmatmul.mubr.bf16.gmra.mrb[0].mxu0 %v3107
    %v3304 = vpop.f32.mrb[0].mxu0
    %v3305 = vadd.f32 %v3208, %v3304
    %v3306 = vpop.f32.mrb[0].mxu0
    %v3307 = vpop.f32.mrb[0].mxu0
    %v3308 = vadd.f32 %v3211, %v3307
    %v3309 = vpop.f32.mrb[0].mxu0
    %3310 = vmatprep.mubr.bf16.mxu0 %v3112
    %3311 = vmatmul.mubr.bf16.gmra.mrb[0].mxu0 %v3111
    %v3312 = vpop.f32.mrb[0].mxu0
    %v3313 = vadd.f32 %v3216, %v3312
    %v3314 = vpop.f32.mrb[0].mxu0
    %v3315 = vpop.f32.mrb[0].mxu0
    %v3316 = vadd.f32 %v3219, %v3315
    %v3317 = vpop.f32.mrb[0].mxu0
    %3318 = vmatprep.mubr.bf16.mxu0 %v3116
    %3319 = vmatmul.mubr.bf16.gmra.mrb[0].mxu0 %v3115
    %v3320 = vpop.f32.mrb[0].mxu0
    %v3321 = vadd.f32 %v3224, %v3320
    %v3322 = vpop.f32.mrb[0].mxu0
    %v3323 = vpop.f32.mrb[0].mxu0
    %v3324 = vadd.f32 %v3227, %v3323
    %v3325 = vpop.f32.mrb[0].mxu0
    %3326 = vmatprep.mubr.bf16.mxu0 %v3120
    %3327 = vmatmul.mubr.bf16.gmra.mrb[0].mxu0 %v3119
    %v3328 = vpop.f32.mrb[0].mxu0
    %v3329 = vadd.f32 %v3232, %v3328
    %v3330 = vpop.f32.mrb[0].mxu0
    %v3331 = vpop.f32.mrb[0].mxu0
    %v3332 = vadd.f32 %v3235, %v3331
    %v3333 = vpop.f32.mrb[0].mxu0
    %3334 = vmatprep.mubr.bf16.mxu0 %v3124
    %3335 = vmatmul.mubr.bf16.gmra.mrb[0].mxu0 %v3123
    %v3336 = vpop.f32.mrb[0].mxu0
    %v3337 = vadd.f32 %v3240, %v3336
    %v3338 = vpop.f32.mrb[0].mxu0
    %v3339 = vpop.f32.mrb[0].mxu0
    %v3340 = vadd.f32 %v3243, %v3339
    %v3341 = vpop.f32.mrb[0].mxu0
    %3342 = vmatprep.mubr.bf16.mxu0 %v3128
    %3343 = vmatmul.mubr.bf16.gmra.mrb[0].mxu0 %v3127
    %v3344 = vpop.f32.mrb[0].mxu0
    %v3345 = vadd.f32 %v3248, %v3344
    %v3346 = vpop.f32.mrb[0].mxu0
    %v3347 = vpop.f32.mrb[0].mxu0
    %v3348 = vadd.f32 %v3251, %v3347
    %v3349 = vpop.f32.mrb[0].mxu0
    %3350 = vmatprep.mubr.bf16.mxu0 %v3132
    %3351 = vmatmul.mubr.bf16.gmra.mrb[0].mxu0 %v3131
    %v3352 = vpop.f32.mrb[0].mxu0
    %v3353 = vadd.f32 %v3256, %v3352
    %v3354 = vpop.f32.mrb[0].mxu0
    %v3355 = vpop.f32.mrb[0].mxu0
    %v3356 = vadd.f32 %v3259, %v3355
    %v3357 = vpop.f32.mrb[0].mxu0
    %3358 = vdwg.mxu0
    %v3359 = vpack.c.bf16 %v3300, %v3297
    %v3360 = vpack.c.bf16 %v3308, %v3305
    %v3361 = vpack.c.bf16 %v3316, %v3313
    %v3362 = vpack.c.bf16 %v3324, %v3321
    %v3363 = vpack.c.bf16 %v3332, %v3329
    %v3364 = vpack.c.bf16 %v3340, %v3337
    %v3365 = vpack.c.bf16 %v3348, %v3345
    %v3366 = vpack.c.bf16 %v3356, %v3353
    %s3367 = scalar_lea.vmem [#allocation8], 1280
    %v3368 = vld [vmem:[%s3367] sm:$0xff]
    %v3369 = vld [vmem:[%s3367 + $0x8] sm:$0xff]
    %v3370 = vld [vmem:[%s3367 + $0x10] sm:$0xff]
    %v3371 = vld [vmem:[%s3367 + $0x18] sm:$0xff]
    %v3372 = vld [vmem:[%s3367 + $0x20] sm:$0xff]
    %v3373 = vld [vmem:[%s3367 + $0x28] sm:$0xff]
    %v3374 = vld [vmem:[%s3367 + $0x30] sm:$0xff]
    %v3375 = vld [vmem:[%s3367 + $0x38] sm:$0xff]
    %v3376 = vld [vmem:[%s3367 + $0x40] sm:$0xff]
    %v3377 = vld [vmem:[%s3367 + $0x48] sm:$0xff]
    %v3378 = vld [vmem:[%s3367 + $0x50] sm:$0xff]
    %v3379 = vld [vmem:[%s3367 + $0x58] sm:$0xff]
    %v3380 = vld [vmem:[%s3367 + $0x60] sm:$0xff]
    %v3381 = vld [vmem:[%s3367 + $0x68] sm:$0xff]
    %v3382 = vld [vmem:[%s3367 + $0x70] sm:$0xff]
    %v3383 = vld [vmem:[%s3367 + $0x78] sm:$0xff]
    %v3384 = vld [vmem:[%s3367 + $0x80] sm:$0xff]
    %v3385 = vld [vmem:[%s3367 + $0x88] sm:$0xff]
    %v3386 = vld [vmem:[%s3367 + $0x90] sm:$0xff]
    %v3387 = vld [vmem:[%s3367 + $0x98] sm:$0xff]
    %v3388 = vld [vmem:[%s3367 + $0xa0] sm:$0xff]
    %v3389 = vld [vmem:[%s3367 + $0xa8] sm:$0xff]
    %v3390 = vld [vmem:[%s3367 + $0xb0] sm:$0xff]
    %v3391 = vld [vmem:[%s3367 + $0xb8] sm:$0xff]
    %v3392 = vld [vmem:[%s3367 + $0xc0] sm:$0xff]
    %v3393 = vld [vmem:[%s3367 + $0xc8] sm:$0xff]
    %v3394 = vld [vmem:[%s3367 + $0xd0] sm:$0xff]
    %v3395 = vld [vmem:[%s3367 + $0xd8] sm:$0xff]
    %v3396 = vld [vmem:[%s3367 + $0xe0] sm:$0xff]
    %v3397 = vld [vmem:[%s3367 + $0xe8] sm:$0xff]
    %v3398 = vld [vmem:[%s3367 + $0xf0] sm:$0xff]
    %v3399 = vld [vmem:[%s3367 + $0xf8] sm:$0xff]
    %v3432 = vunpack.c.l.b16 %v3368
    %v3433 = vunpack.c.h.b16 %v3368
    %v3434 = vunpack.c.l.b16 %v3369
    %v3435 = vunpack.c.h.b16 %v3369
    %v3436 = vunpack.c.l.b16 %v3370
    %v3437 = vunpack.c.h.b16 %v3370
    %v3438 = vunpack.c.l.b16 %v3371
    %v3439 = vunpack.c.h.b16 %v3371
    %v3440 = vunpack.c.l.b16 %v3372
    %v3441 = vunpack.c.h.b16 %v3372
    %v3442 = vunpack.c.l.b16 %v3373
    %v3443 = vunpack.c.h.b16 %v3373
    %v3444 = vunpack.c.l.b16 %v3374
    %v3445 = vunpack.c.h.b16 %v3374
    %v3446 = vunpack.c.l.b16 %v3375
    %v3447 = vunpack.c.h.b16 %v3375
    %v3448 = vunpack.c.l.b16 %v3376
    %v3449 = vunpack.c.h.b16 %v3376
    %v3450 = vunpack.c.l.b16 %v3377
    %v3451 = vunpack.c.h.b16 %v3377
    %v3452 = vunpack.c.l.b16 %v3378
    %v3453 = vunpack.c.h.b16 %v3378
    %v3454 = vunpack.c.l.b16 %v3379
    %v3455 = vunpack.c.h.b16 %v3379
    %v3456 = vunpack.c.l.b16 %v3380
    %v3457 = vunpack.c.h.b16 %v3380
    %v3458 = vunpack.c.l.b16 %v3381
    %v3459 = vunpack.c.h.b16 %v3381
    %v3460 = vunpack.c.l.b16 %v3382
    %v3461 = vunpack.c.h.b16 %v3382
    %v3462 = vunpack.c.l.b16 %v3383
    %v3463 = vunpack.c.h.b16 %v3383
    %v3464 = vunpack.c.l.b16 %v3384
    %v3465 = vunpack.c.h.b16 %v3384
    %v3466 = vunpack.c.l.b16 %v3385
    %v3467 = vunpack.c.h.b16 %v3385
    %v3468 = vunpack.c.l.b16 %v3386
    %v3469 = vunpack.c.h.b16 %v3386
    %v3470 = vunpack.c.l.b16 %v3387
    %v3471 = vunpack.c.h.b16 %v3387
    %v3472 = vunpack.c.l.b16 %v3388
    %v3473 = vunpack.c.h.b16 %v3388
    %v3474 = vunpack.c.l.b16 %v3389
    %v3475 = vunpack.c.h.b16 %v3389
    %v3476 = vunpack.c.l.b16 %v3390
    %v3477 = vunpack.c.h.b16 %v3390
    %v3478 = vunpack.c.l.b16 %v3391
    %v3479 = vunpack.c.h.b16 %v3391
    %v3480 = vunpack.c.l.b16 %v3392
    %v3481 = vunpack.c.h.b16 %v3392
    %v3482 = vunpack.c.l.b16 %v3393
    %v3483 = vunpack.c.h.b16 %v3393
    %v3484 = vunpack.c.l.b16 %v3394
    %v3485 = vunpack.c.h.b16 %v3394
    %v3486 = vunpack.c.l.b16 %v3395
    %v3487 = vunpack.c.h.b16 %v3395
    %v3488 = vunpack.c.l.b16 %v3396
    %v3489 = vunpack.c.h.b16 %v3396
    %v3490 = vunpack.c.l.b16 %v3397
    %v3491 = vunpack.c.h.b16 %v3397
    %v3492 = vunpack.c.l.b16 %v3398
    %v3493 = vunpack.c.h.b16 %v3398
    %v3494 = vunpack.c.l.b16 %v3399
    %v3495 = vunpack.c.h.b16 %v3399
    %v3496 = vpack.c.b16 %v3436, %v3432
    %v3497 = vpack.c.b16 %v3437, %v3433
    %v3498 = vpack.c.b16 %v3438, %v3434
    %v3499 = vpack.c.b16 %v3439, %v3435
    %v3500 = vpack.c.b16 %v3444, %v3440
    %v3501 = vpack.c.b16 %v3445, %v3441
    %v3502 = vpack.c.b16 %v3446, %v3442
    %v3503 = vpack.c.b16 %v3447, %v3443
    %v3504 = vpack.c.b16 %v3452, %v3448
    %v3505 = vpack.c.b16 %v3453, %v3449
    %v3506 = vpack.c.b16 %v3454, %v3450
    %v3507 = vpack.c.b16 %v3455, %v3451
    %v3508 = vpack.c.b16 %v3460, %v3456
    %v3509 = vpack.c.b16 %v3461, %v3457
    %v3510 = vpack.c.b16 %v3462, %v3458
    %v3511 = vpack.c.b16 %v3463, %v3459
    %v3512 = vpack.c.b16 %v3468, %v3464
    %v3513 = vpack.c.b16 %v3469, %v3465
    %v3514 = vpack.c.b16 %v3470, %v3466
    %v3515 = vpack.c.b16 %v3471, %v3467
    %v3516 = vpack.c.b16 %v3476, %v3472
    %v3517 = vpack.c.b16 %v3477, %v3473
    %v3518 = vpack.c.b16 %v3478, %v3474
    %v3519 = vpack.c.b16 %v3479, %v3475
    %v3520 = vpack.c.b16 %v3484, %v3480
    %v3521 = vpack.c.b16 %v3485, %v3481
    %v3522 = vpack.c.b16 %v3486, %v3482
    %v3523 = vpack.c.b16 %v3487, %v3483
    %v3524 = vpack.c.b16 %v3492, %v3488
    %v3525 = vpack.c.b16 %v3493, %v3489
    %v3526 = vpack.c.b16 %v3494, %v3490
    %v3527 = vpack.c.b16 %v3495, %v3491
    %3560 = vmatprep.subr.bf16.mxu0 0
    %3561 = vmatpush1.bf16.msra.mxu0 %v1361
    %3562 = vmatprep.subr.bf16.mxu0 0
    %3563 = vmatpush1.bf16.msra.mxu0 %v1362
    %3564 = vmatprep.subr.bf16.mxu0 0
    %3565 = vmatpush1.bf16.msra.mxu0 %v1363
    %3566 = vmatprep.subr.bf16.mxu0 0
    %3567 = vmatpush1.bf16.msra.mxu0 %v1364
    %3568 = vmatprep.subr.bf16.mxu0 0
    %3569 = vmatpush1.bf16.msra.mxu0 %v1365
    %3570 = vmatprep.subr.bf16.mxu0 0
    %3571 = vmatpush1.bf16.msra.mxu0 %v1366
    %3572 = vmatprep.subr.bf16.mxu0 0
    %3573 = vmatpush1.bf16.msra.mxu0 %v1367
    %3574 = vmatprep.subr.bf16.mxu0 0
    %3575 = vmatpush1.bf16.msra.mxu0 %v1368
    %3576 = vmatprep.subr.bf16.mxu0 0
    %3577 = vmatpush1.bf16.msra.mxu0 %v1369
    %3578 = vmatprep.subr.bf16.mxu0 0
    %3579 = vmatpush1.bf16.msra.mxu0 %v1370
    %3580 = vmatprep.subr.bf16.mxu0 0
    %3581 = vmatpush1.bf16.msra.mxu0 %v1371
    %3582 = vmatprep.subr.bf16.mxu0 0
    %3583 = vmatpush1.bf16.msra.mxu0 %v1372
    %3584 = vmatprep.subr.bf16.mxu0 0
    %3585 = vmatpush1.bf16.msra.mxu0 %v1373
    %3586 = vmatprep.subr.bf16.mxu0 0
    %3587 = vmatpush1.bf16.msra.mxu0 %v1374
    %3588 = vmatprep.subr.bf16.mxu0 0
    %3589 = vmatpush1.bf16.msra.mxu0 %v1375
    %3590 = vmatprep.subr.bf16.mxu0 0
    %3591 = vmatpush1.bf16.msra.mxu0 %v1376
    %3592 = vmatprep.mubr.bf16.mxu0 %v3497
    %3593 = vmatmul.mubr.bf16.gmra.mrb[0].mxu0 %v3496
    %v3594 = vpop.f32.mrb[0].mxu0
    %v3595 = vadd.f32 0.0, %v3594
    %v3596 = vpop.f32.mrb[0].mxu0
    %v3597 = vpop.f32.mrb[0].mxu0
    %v3598 = vadd.f32 0.0, %v3597
    %v3599 = vpop.f32.mrb[0].mxu0
    %3600 = vmatprep.mubr.bf16.mxu0 %v3501
    %3601 = vmatmul.mubr.bf16.gmra.mrb[0].mxu0 %v3500
    %v3602 = vpop.f32.mrb[0].mxu0
    %v3603 = vadd.f32 0.0, %v3602
    %v3604 = vpop.f32.mrb[0].mxu0
    %v3605 = vpop.f32.mrb[0].mxu0
    %v3606 = vadd.f32 0.0, %v3605
    %v3607 = vpop.f32.mrb[0].mxu0
    %3608 = vmatprep.mubr.bf16.mxu0 %v3505
    %3609 = vmatmul.mubr.bf16.gmra.mrb[0].mxu0 %v3504
    %v3610 = vpop.f32.mrb[0].mxu0
    %v3611 = vadd.f32 0.0, %v3610
    %v3612 = vpop.f32.mrb[0].mxu0
    %v3613 = vpop.f32.mrb[0].mxu0
    %v3614 = vadd.f32 0.0, %v3613
    %v3615 = vpop.f32.mrb[0].mxu0
    %3616 = vmatprep.mubr.bf16.mxu0 %v3509
    %3617 = vmatmul.mubr.bf16.gmra.mrb[0].mxu0 %v3508
    %v3618 = vpop.f32.mrb[0].mxu0
    %v3619 = vadd.f32 0.0, %v3618
    %v3620 = vpop.f32.mrb[0].mxu0
    %v3621 = vpop.f32.mrb[0].mxu0
    %v3622 = vadd.f32 0.0, %v3621
    %v3623 = vpop.f32.mrb[0].mxu0
    %3624 = vmatprep.mubr.bf16.mxu0 %v3513
    %3625 = vmatmul.mubr.bf16.gmra.mrb[0].mxu0 %v3512
    %v3626 = vpop.f32.mrb[0].mxu0
    %v3627 = vadd.f32 0.0, %v3626
    %v3628 = vpop.f32.mrb[0].mxu0
    %v3629 = vpop.f32.mrb[0].mxu0
    %v3630 = vadd.f32 0.0, %v3629
    %v3631 = vpop.f32.mrb[0].mxu0
    %3632 = vmatprep.mubr.bf16.mxu0 %v3517
    %3633 = vmatmul.mubr.bf16.gmra.mrb[0].mxu0 %v3516
    %v3634 = vpop.f32.mrb[0].mxu0
    %v3635 = vadd.f32 0.0, %v3634
    %v3636 = vpop.f32.mrb[0].mxu0
    %v3637 = vpop.f32.mrb[0].mxu0
    %v3638 = vadd.f32 0.0, %v3637
    %v3639 = vpop.f32.mrb[0].mxu0
    %3640 = vmatprep.mubr.bf16.mxu0 %v3521
    %3641 = vmatmul.mubr.bf16.gmra.mrb[0].mxu0 %v3520
    %v3642 = vpop.f32.mrb[0].mxu0
    %v3643 = vadd.f32 0.0, %v3642
    %v3644 = vpop.f32.mrb[0].mxu0
    %v3645 = vpop.f32.mrb[0].mxu0
    %v3646 = vadd.f32 0.0, %v3645
    %v3647 = vpop.f32.mrb[0].mxu0
    %3648 = vmatprep.mubr.bf16.mxu0 %v3525
    %3649 = vmatmul.mubr.bf16.gmra.mrb[0].mxu0 %v3524
    %v3650 = vpop.f32.mrb[0].mxu0
    %v3651 = vadd.f32 0.0, %v3650
    %v3652 = vpop.f32.mrb[0].mxu0
    %v3653 = vpop.f32.mrb[0].mxu0
    %v3654 = vadd.f32 0.0, %v3653
    %v3655 = vpop.f32.mrb[0].mxu0
    %3656 = vdwg.mxu0
    %3657 = vmatprep.subr.bf16.mxu0 0
    %3658 = vmatpush1.bf16.msra.mxu0 %v1377
    %3659 = vmatprep.subr.bf16.mxu0 0
    %3660 = vmatpush1.bf16.msra.mxu0 %v1378
    %3661 = vmatprep.subr.bf16.mxu0 0
    %3662 = vmatpush1.bf16.msra.mxu0 %v1379
    %3663 = vmatprep.subr.bf16.mxu0 0
    %3664 = vmatpush1.bf16.msra.mxu0 %v1380
    %3665 = vmatprep.subr.bf16.mxu0 0
    %3666 = vmatpush1.bf16.msra.mxu0 %v1381
    %3667 = vmatprep.subr.bf16.mxu0 0
    %3668 = vmatpush1.bf16.msra.mxu0 %v1382
    %3669 = vmatprep.subr.bf16.mxu0 0
    %3670 = vmatpush1.bf16.msra.mxu0 %v1383
    %3671 = vmatprep.subr.bf16.mxu0 0
    %3672 = vmatpush1.bf16.msra.mxu0 %v1384
    %3673 = vmatprep.subr.bf16.mxu0 0
    %3674 = vmatpush1.bf16.msra.mxu0 %v1385
    %3675 = vmatprep.subr.bf16.mxu0 0
    %3676 = vmatpush1.bf16.msra.mxu0 %v1386
    %3677 = vmatprep.subr.bf16.mxu0 0
    %3678 = vmatpush1.bf16.msra.mxu0 %v1387
    %3679 = vmatprep.subr.bf16.mxu0 0
    %3680 = vmatpush1.bf16.msra.mxu0 %v1388
    %3681 = vmatprep.subr.bf16.mxu0 0
    %3682 = vmatpush1.bf16.msra.mxu0 %v1389
    %3683 = vmatprep.subr.bf16.mxu0 0
    %3684 = vmatpush1.bf16.msra.mxu0 %v1390
    %3685 = vmatprep.subr.bf16.mxu0 0
    %3686 = vmatpush1.bf16.msra.mxu0 %v1391
    %3687 = vmatprep.subr.bf16.mxu0 0
    %3688 = vmatpush1.bf16.msra.mxu0 %v1392
    %3689 = vmatprep.mubr.bf16.mxu0 %v3499
    %3690 = vmatmul.mubr.bf16.gmra.mrb[0].mxu0 %v3498
    %v3691 = vpop.f32.mrb[0].mxu0
    %v3692 = vadd.f32 %v3595, %v3691
    %v3693 = vpop.f32.mrb[0].mxu0
    %v3694 = vpop.f32.mrb[0].mxu0
    %v3695 = vadd.f32 %v3598, %v3694
    %v3696 = vpop.f32.mrb[0].mxu0
    %3697 = vmatprep.mubr.bf16.mxu0 %v3503
    %3698 = vmatmul.mubr.bf16.gmra.mrb[0].mxu0 %v3502
    %v3699 = vpop.f32.mrb[0].mxu0
    %v3700 = vadd.f32 %v3603, %v3699
    %v3701 = vpop.f32.mrb[0].mxu0
    %v3702 = vpop.f32.mrb[0].mxu0
    %v3703 = vadd.f32 %v3606, %v3702
    %v3704 = vpop.f32.mrb[0].mxu0
    %3705 = vmatprep.mubr.bf16.mxu0 %v3507
    %3706 = vmatmul.mubr.bf16.gmra.mrb[0].mxu0 %v3506
    %v3707 = vpop.f32.mrb[0].mxu0
    %v3708 = vadd.f32 %v3611, %v3707
    %v3709 = vpop.f32.mrb[0].mxu0
    %v3710 = vpop.f32.mrb[0].mxu0
    %v3711 = vadd.f32 %v3614, %v3710
    %v3712 = vpop.f32.mrb[0].mxu0
    %3713 = vmatprep.mubr.bf16.mxu0 %v3511
    %3714 = vmatmul.mubr.bf16.gmra.mrb[0].mxu0 %v3510
    %v3715 = vpop.f32.mrb[0].mxu0
    %v3716 = vadd.f32 %v3619, %v3715
    %v3717 = vpop.f32.mrb[0].mxu0
    %v3718 = vpop.f32.mrb[0].mxu0
    %v3719 = vadd.f32 %v3622, %v3718
    %v3720 = vpop.f32.mrb[0].mxu0
    %3721 = vmatprep.mubr.bf16.mxu0 %v3515
    %3722 = vmatmul.mubr.bf16.gmra.mrb[0].mxu0 %v3514
    %v3723 = vpop.f32.mrb[0].mxu0
    %v3724 = vadd.f32 %v3627, %v3723
    %v3725 = vpop.f32.mrb[0].mxu0
    %v3726 = vpop.f32.mrb[0].mxu0
    %v3727 = vadd.f32 %v3630, %v3726
    %v3728 = vpop.f32.mrb[0].mxu0
    %3729 = vmatprep.mubr.bf16.mxu0 %v3519
    %3730 = vmatmul.mubr.bf16.gmra.mrb[0].mxu0 %v3518
    %v3731 = vpop.f32.mrb[0].mxu0
    %v3732 = vadd.f32 %v3635, %v3731
    %v3733 = vpop.f32.mrb[0].mxu0
    %v3734 = vpop.f32.mrb[0].mxu0
    %v3735 = vadd.f32 %v3638, %v3734
    %v3736 = vpop.f32.mrb[0].mxu0
    %3737 = vmatprep.mubr.bf16.mxu0 %v3523
    %3738 = vmatmul.mubr.bf16.gmra.mrb[0].mxu0 %v3522
    %v3739 = vpop.f32.mrb[0].mxu0
    %v3740 = vadd.f32 %v3643, %v3739
    %v3741 = vpop.f32.mrb[0].mxu0
    %v3742 = vpop.f32.mrb[0].mxu0
    %v3743 = vadd.f32 %v3646, %v3742
    %v3744 = vpop.f32.mrb[0].mxu0
    %3745 = vmatprep.mubr.bf16.mxu0 %v3527
    %3746 = vmatmul.mubr.bf16.gmra.mrb[0].mxu0 %v3526
    %v3747 = vpop.f32.mrb[0].mxu0
    %v3748 = vadd.f32 %v3651, %v3747
    %v3749 = vpop.f32.mrb[0].mxu0
    %v3750 = vpop.f32.mrb[0].mxu0
    %v3751 = vadd.f32 %v3654, %v3750
    %v3752 = vpop.f32.mrb[0].mxu0
    %3753 = vdwg.mxu0
    %v3754 = vpack.c.bf16 %v3695, %v3692
    %v3755 = vpack.c.bf16 %v3703, %v3700
    %v3756 = vpack.c.bf16 %v3711, %v3708
    %v3757 = vpack.c.bf16 %v3719, %v3716
    %v3758 = vpack.c.bf16 %v3727, %v3724
    %v3759 = vpack.c.bf16 %v3735, %v3732
    %v3760 = vpack.c.bf16 %v3743, %v3740
    %v3761 = vpack.c.bf16 %v3751, %v3748
    %s3762 = scalar_lea.vmem [#allocation8], 1536
    %v3763 = vld [vmem:[%s3762] sm:$0xff]
    %v3764 = vld [vmem:[%s3762 + $0x8] sm:$0xff]
    %v3765 = vld [vmem:[%s3762 + $0x10] sm:$0xff]
    %v3766 = vld [vmem:[%s3762 + $0x18] sm:$0xff]
    %v3767 = vld [vmem:[%s3762 + $0x20] sm:$0xff]
    %v3768 = vld [vmem:[%s3762 + $0x28] sm:$0xff]
    %v3769 = vld [vmem:[%s3762 + $0x30] sm:$0xff]
    %v3770 = vld [vmem:[%s3762 + $0x38] sm:$0xff]
    %v3771 = vld [vmem:[%s3762 + $0x40] sm:$0xff]
    %v3772 = vld [vmem:[%s3762 + $0x48] sm:$0xff]
    %v3773 = vld [vmem:[%s3762 + $0x50] sm:$0xff]
    %v3774 = vld [vmem:[%s3762 + $0x58] sm:$0xff]
    %v3775 = vld [vmem:[%s3762 + $0x60] sm:$0xff]
    %v3776 = vld [vmem:[%s3762 + $0x68] sm:$0xff]
    %v3777 = vld [vmem:[%s3762 + $0x70] sm:$0xff]
    %v3778 = vld [vmem:[%s3762 + $0x78] sm:$0xff]
    %v3779 = vld [vmem:[%s3762 + $0x80] sm:$0xff]
    %v3780 = vld [vmem:[%s3762 + $0x88] sm:$0xff]
    %v3781 = vld [vmem:[%s3762 + $0x90] sm:$0xff]
    %v3782 = vld [vmem:[%s3762 + $0x98] sm:$0xff]
    %v3783 = vld [vmem:[%s3762 + $0xa0] sm:$0xff]
    %v3784 = vld [vmem:[%s3762 + $0xa8] sm:$0xff]
    %v3785 = vld [vmem:[%s3762 + $0xb0] sm:$0xff]
    %v3786 = vld [vmem:[%s3762 + $0xb8] sm:$0xff]
    %v3787 = vld [vmem:[%s3762 + $0xc0] sm:$0xff]
    %v3788 = vld [vmem:[%s3762 + $0xc8] sm:$0xff]
    %v3789 = vld [vmem:[%s3762 + $0xd0] sm:$0xff]
    %v3790 = vld [vmem:[%s3762 + $0xd8] sm:$0xff]
    %v3791 = vld [vmem:[%s3762 + $0xe0] sm:$0xff]
    %v3792 = vld [vmem:[%s3762 + $0xe8] sm:$0xff]
    %v3793 = vld [vmem:[%s3762 + $0xf0] sm:$0xff]
    %v3794 = vld [vmem:[%s3762 + $0xf8] sm:$0xff]
    %v3827 = vunpack.c.l.b16 %v3763
    %v3828 = vunpack.c.h.b16 %v3763
    %v3829 = vunpack.c.l.b16 %v3764
    %v3830 = vunpack.c.h.b16 %v3764
    %v3831 = vunpack.c.l.b16 %v3765
    %v3832 = vunpack.c.h.b16 %v3765
    %v3833 = vunpack.c.l.b16 %v3766
    %v3834 = vunpack.c.h.b16 %v3766
    %v3835 = vunpack.c.l.b16 %v3767
    %v3836 = vunpack.c.h.b16 %v3767
    %v3837 = vunpack.c.l.b16 %v3768
    %v3838 = vunpack.c.h.b16 %v3768
    %v3839 = vunpack.c.l.b16 %v3769
    %v3840 = vunpack.c.h.b16 %v3769
    %v3841 = vunpack.c.l.b16 %v3770
    %v3842 = vunpack.c.h.b16 %v3770
    %v3843 = vunpack.c.l.b16 %v3771
    %v3844 = vunpack.c.h.b16 %v3771
    %v3845 = vunpack.c.l.b16 %v3772
    %v3846 = vunpack.c.h.b16 %v3772
    %v3847 = vunpack.c.l.b16 %v3773
    %v3848 = vunpack.c.h.b16 %v3773
    %v3849 = vunpack.c.l.b16 %v3774
    %v3850 = vunpack.c.h.b16 %v3774
    %v3851 = vunpack.c.l.b16 %v3775
    %v3852 = vunpack.c.h.b16 %v3775
    %v3853 = vunpack.c.l.b16 %v3776
    %v3854 = vunpack.c.h.b16 %v3776
    %v3855 = vunpack.c.l.b16 %v3777
    %v3856 = vunpack.c.h.b16 %v3777
    %v3857 = vunpack.c.l.b16 %v3778
    %v3858 = vunpack.c.h.b16 %v3778
    %v3859 = vunpack.c.l.b16 %v3779
    %v3860 = vunpack.c.h.b16 %v3779
    %v3861 = vunpack.c.l.b16 %v3780
    %v3862 = vunpack.c.h.b16 %v3780
    %v3863 = vunpack.c.l.b16 %v3781
    %v3864 = vunpack.c.h.b16 %v3781
    %v3865 = vunpack.c.l.b16 %v3782
    %v3866 = vunpack.c.h.b16 %v3782
    %v3867 = vunpack.c.l.b16 %v3783
    %v3868 = vunpack.c.h.b16 %v3783
    %v3869 = vunpack.c.l.b16 %v3784
    %v3870 = vunpack.c.h.b16 %v3784
    %v3871 = vunpack.c.l.b16 %v3785
    %v3872 = vunpack.c.h.b16 %v3785
    %v3873 = vunpack.c.l.b16 %v3786
    %v3874 = vunpack.c.h.b16 %v3786
    %v3875 = vunpack.c.l.b16 %v3787
    %v3876 = vunpack.c.h.b16 %v3787
    %v3877 = vunpack.c.l.b16 %v3788
    %v3878 = vunpack.c.h.b16 %v3788
    %v3879 = vunpack.c.l.b16 %v3789
    %v3880 = vunpack.c.h.b16 %v3789
    %v3881 = vunpack.c.l.b16 %v3790
    %v3882 = vunpack.c.h.b16 %v3790
    %v3883 = vunpack.c.l.b16 %v3791
    %v3884 = vunpack.c.h.b16 %v3791
    %v3885 = vunpack.c.l.b16 %v3792
    %v3886 = vunpack.c.h.b16 %v3792
    %v3887 = vunpack.c.l.b16 %v3793
    %v3888 = vunpack.c.h.b16 %v3793
    %v3889 = vunpack.c.l.b16 %v3794
    %v3890 = vunpack.c.h.b16 %v3794
    %v3891 = vpack.c.b16 %v3831, %v3827
    %v3892 = vpack.c.b16 %v3832, %v3828
    %v3893 = vpack.c.b16 %v3833, %v3829
    %v3894 = vpack.c.b16 %v3834, %v3830
    %v3895 = vpack.c.b16 %v3839, %v3835
    %v3896 = vpack.c.b16 %v3840, %v3836
    %v3897 = vpack.c.b16 %v3841, %v3837
    %v3898 = vpack.c.b16 %v3842, %v3838
    %v3899 = vpack.c.b16 %v3847, %v3843
    %v3900 = vpack.c.b16 %v3848, %v3844
    %v3901 = vpack.c.b16 %v3849, %v3845
    %v3902 = vpack.c.b16 %v3850, %v3846
    %v3903 = vpack.c.b16 %v3855, %v3851
    %v3904 = vpack.c.b16 %v3856, %v3852
    %v3905 = vpack.c.b16 %v3857, %v3853
    %v3906 = vpack.c.b16 %v3858, %v3854
    %v3907 = vpack.c.b16 %v3863, %v3859
    %v3908 = vpack.c.b16 %v3864, %v3860
    %v3909 = vpack.c.b16 %v3865, %v3861
    %v3910 = vpack.c.b16 %v3866, %v3862
    %v3911 = vpack.c.b16 %v3871, %v3867
    %v3912 = vpack.c.b16 %v3872, %v3868
    %v3913 = vpack.c.b16 %v3873, %v3869
    %v3914 = vpack.c.b16 %v3874, %v3870
    %v3915 = vpack.c.b16 %v3879, %v3875
    %v3916 = vpack.c.b16 %v3880, %v3876
    %v3917 = vpack.c.b16 %v3881, %v3877
    %v3918 = vpack.c.b16 %v3882, %v3878
    %v3919 = vpack.c.b16 %v3887, %v3883
    %v3920 = vpack.c.b16 %v3888, %v3884
    %v3921 = vpack.c.b16 %v3889, %v3885
    %v3922 = vpack.c.b16 %v3890, %v3886
    %3955 = vmatprep.subr.bf16.mxu0 0
    %3956 = vmatpush1.bf16.msra.mxu0 %v1361
    %3957 = vmatprep.subr.bf16.mxu0 0
    %3958 = vmatpush1.bf16.msra.mxu0 %v1362
    %3959 = vmatprep.subr.bf16.mxu0 0
    %3960 = vmatpush1.bf16.msra.mxu0 %v1363
    %3961 = vmatprep.subr.bf16.mxu0 0
    %3962 = vmatpush1.bf16.msra.mxu0 %v1364
    %3963 = vmatprep.subr.bf16.mxu0 0
    %3964 = vmatpush1.bf16.msra.mxu0 %v1365
    %3965 = vmatprep.subr.bf16.mxu0 0
    %3966 = vmatpush1.bf16.msra.mxu0 %v1366
    %3967 = vmatprep.subr.bf16.mxu0 0
    %3968 = vmatpush1.bf16.msra.mxu0 %v1367
    %3969 = vmatprep.subr.bf16.mxu0 0
    %3970 = vmatpush1.bf16.msra.mxu0 %v1368
    %3971 = vmatprep.subr.bf16.mxu0 0
    %3972 = vmatpush1.bf16.msra.mxu0 %v1369
    %3973 = vmatprep.subr.bf16.mxu0 0
    %3974 = vmatpush1.bf16.msra.mxu0 %v1370
    %3975 = vmatprep.subr.bf16.mxu0 0
    %3976 = vmatpush1.bf16.msra.mxu0 %v1371
    %3977 = vmatprep.subr.bf16.mxu0 0
    %3978 = vmatpush1.bf16.msra.mxu0 %v1372
    %3979 = vmatprep.subr.bf16.mxu0 0
    %3980 = vmatpush1.bf16.msra.mxu0 %v1373
    %3981 = vmatprep.subr.bf16.mxu0 0
    %3982 = vmatpush1.bf16.msra.mxu0 %v1374
    %3983 = vmatprep.subr.bf16.mxu0 0
    %3984 = vmatpush1.bf16.msra.mxu0 %v1375
    %3985 = vmatprep.subr.bf16.mxu0 0
    %3986 = vmatpush1.bf16.msra.mxu0 %v1376
    %3987 = vmatprep.mubr.bf16.mxu0 %v3892
    %3988 = vmatmul.mubr.bf16.gmra.mrb[0].mxu0 %v3891
    %v3989 = vpop.f32.mrb[0].mxu0
    %v3990 = vadd.f32 0.0, %v3989
    %v3991 = vpop.f32.mrb[0].mxu0
    %v3992 = vpop.f32.mrb[0].mxu0
    %v3993 = vadd.f32 0.0, %v3992
    %v3994 = vpop.f32.mrb[0].mxu0
    %3995 = vmatprep.mubr.bf16.mxu0 %v3896
    %3996 = vmatmul.mubr.bf16.gmra.mrb[0].mxu0 %v3895
    %v3997 = vpop.f32.mrb[0].mxu0
    %v3998 = vadd.f32 0.0, %v3997
    %v3999 = vpop.f32.mrb[0].mxu0
    %v4000 = vpop.f32.mrb[0].mxu0
    %v4001 = vadd.f32 0.0, %v4000
    %v4002 = vpop.f32.mrb[0].mxu0
    %4003 = vmatprep.mubr.bf16.mxu0 %v3900
    %4004 = vmatmul.mubr.bf16.gmra.mrb[0].mxu0 %v3899
    %v4005 = vpop.f32.mrb[0].mxu0
    %v4006 = vadd.f32 0.0, %v4005
    %v4007 = vpop.f32.mrb[0].mxu0
    %v4008 = vpop.f32.mrb[0].mxu0
    %v4009 = vadd.f32 0.0, %v4008
    %v4010 = vpop.f32.mrb[0].mxu0
    %4011 = vmatprep.mubr.bf16.mxu0 %v3904
    %4012 = vmatmul.mubr.bf16.gmra.mrb[0].mxu0 %v3903
    %v4013 = vpop.f32.mrb[0].mxu0
    %v4014 = vadd.f32 0.0, %v4013
    %v4015 = vpop.f32.mrb[0].mxu0
    %v4016 = vpop.f32.mrb[0].mxu0
    %v4017 = vadd.f32 0.0, %v4016
    %v4018 = vpop.f32.mrb[0].mxu0
    %4019 = vmatprep.mubr.bf16.mxu0 %v3908
    %4020 = vmatmul.mubr.bf16.gmra.mrb[0].mxu0 %v3907
    %v4021 = vpop.f32.mrb[0].mxu0
    %v4022 = vadd.f32 0.0, %v4021
    %v4023 = vpop.f32.mrb[0].mxu0
    %v4024 = vpop.f32.mrb[0].mxu0
    %v4025 = vadd.f32 0.0, %v4024
    %v4026 = vpop.f32.mrb[0].mxu0
    %4027 = vmatprep.mubr.bf16.mxu0 %v3912
    %4028 = vmatmul.mubr.bf16.gmra.mrb[0].mxu0 %v3911
    %v4029 = vpop.f32.mrb[0].mxu0
    %v4030 = vadd.f32 0.0, %v4029
    %v4031 = vpop.f32.mrb[0].mxu0
    %v4032 = vpop.f32.mrb[0].mxu0
    %v4033 = vadd.f32 0.0, %v4032
    %v4034 = vpop.f32.mrb[0].mxu0
    %4035 = vmatprep.mubr.bf16.mxu0 %v3916
    %4036 = vmatmul.mubr.bf16.gmra.mrb[0].mxu0 %v3915
    %v4037 = vpop.f32.mrb[0].mxu0
    %v4038 = vadd.f32 0.0, %v4037
    %v4039 = vpop.f32.mrb[0].mxu0
    %v4040 = vpop.f32.mrb[0].mxu0
    %v4041 = vadd.f32 0.0, %v4040
    %v4042 = vpop.f32.mrb[0].mxu0
    %4043 = vmatprep.mubr.bf16.mxu0 %v3920
    %4044 = vmatmul.mubr.bf16.gmra.mrb[0].mxu0 %v3919
    %v4045 = vpop.f32.mrb[0].mxu0
    %v4046 = vadd.f32 0.0, %v4045
    %v4047 = vpop.f32.mrb[0].mxu0
    %v4048 = vpop.f32.mrb[0].mxu0
    %v4049 = vadd.f32 0.0, %v4048
    %v4050 = vpop.f32.mrb[0].mxu0
    %4051 = vdwg.mxu0
    %4052 = vmatprep.subr.bf16.mxu0 0
    %4053 = vmatpush1.bf16.msra.mxu0 %v1377
    %4054 = vmatprep.subr.bf16.mxu0 0
    %4055 = vmatpush1.bf16.msra.mxu0 %v1378
    %4056 = vmatprep.subr.bf16.mxu0 0
    %4057 = vmatpush1.bf16.msra.mxu0 %v1379
    %4058 = vmatprep.subr.bf16.mxu0 0
    %4059 = vmatpush1.bf16.msra.mxu0 %v1380
    %4060 = vmatprep.subr.bf16.mxu0 0
    %4061 = vmatpush1.bf16.msra.mxu0 %v1381
    %4062 = vmatprep.subr.bf16.mxu0 0
    %4063 = vmatpush1.bf16.msra.mxu0 %v1382
    %4064 = vmatprep.subr.bf16.mxu0 0
    %4065 = vmatpush1.bf16.msra.mxu0 %v1383
    %4066 = vmatprep.subr.bf16.mxu0 0
    %4067 = vmatpush1.bf16.msra.mxu0 %v1384
    %4068 = vmatprep.subr.bf16.mxu0 0
    %4069 = vmatpush1.bf16.msra.mxu0 %v1385
    %4070 = vmatprep.subr.bf16.mxu0 0
    %4071 = vmatpush1.bf16.msra.mxu0 %v1386
    %4072 = vmatprep.subr.bf16.mxu0 0
    %4073 = vmatpush1.bf16.msra.mxu0 %v1387
    %4074 = vmatprep.subr.bf16.mxu0 0
    %4075 = vmatpush1.bf16.msra.mxu0 %v1388
    %4076 = vmatprep.subr.bf16.mxu0 0
    %4077 = vmatpush1.bf16.msra.mxu0 %v1389
    %4078 = vmatprep.subr.bf16.mxu0 0
    %4079 = vmatpush1.bf16.msra.mxu0 %v1390
    %4080 = vmatprep.subr.bf16.mxu0 0
    %4081 = vmatpush1.bf16.msra.mxu0 %v1391
    %4082 = vmatprep.subr.bf16.mxu0 0
    %4083 = vmatpush1.bf16.msra.mxu0 %v1392
    %4084 = vmatprep.mubr.bf16.mxu0 %v3894
    %4085 = vmatmul.mubr.bf16.gmra.mrb[0].mxu0 %v3893
    %v4086 = vpop.f32.mrb[0].mxu0
    %v4087 = vadd.f32 %v3990, %v4086
    %v4088 = vpop.f32.mrb[0].mxu0
    %v4089 = vpop.f32.mrb[0].mxu0
    %v4090 = vadd.f32 %v3993, %v4089
    %v4091 = vpop.f32.mrb[0].mxu0
    %4092 = vmatprep.mubr.bf16.mxu0 %v3898
    %4093 = vmatmul.mubr.bf16.gmra.mrb[0].mxu0 %v3897
    %v4094 = vpop.f32.mrb[0].mxu0
    %v4095 = vadd.f32 %v3998, %v4094
    %v4096 = vpop.f32.mrb[0].mxu0
    %v4097 = vpop.f32.mrb[0].mxu0
    %v4098 = vadd.f32 %v4001, %v4097
    %v4099 = vpop.f32.mrb[0].mxu0
    %4100 = vmatprep.mubr.bf16.mxu0 %v3902
    %4101 = vmatmul.mubr.bf16.gmra.mrb[0].mxu0 %v3901
    %v4102 = vpop.f32.mrb[0].mxu0
    %v4103 = vadd.f32 %v4006, %v4102
    %v4104 = vpop.f32.mrb[0].mxu0
    %v4105 = vpop.f32.mrb[0].mxu0
    %v4106 = vadd.f32 %v4009, %v4105
    %v4107 = vpop.f32.mrb[0].mxu0
    %4108 = vmatprep.mubr.bf16.mxu0 %v3906
    %4109 = vmatmul.mubr.bf16.gmra.mrb[0].mxu0 %v3905
    %v4110 = vpop.f32.mrb[0].mxu0
    %v4111 = vadd.f32 %v4014, %v4110
    %v4112 = vpop.f32.mrb[0].mxu0
    %v4113 = vpop.f32.mrb[0].mxu0
    %v4114 = vadd.f32 %v4017, %v4113
    %v4115 = vpop.f32.mrb[0].mxu0
    %4116 = vmatprep.mubr.bf16.mxu0 %v3910
    %4117 = vmatmul.mubr.bf16.gmra.mrb[0].mxu0 %v3909
    %v4118 = vpop.f32.mrb[0].mxu0
    %v4119 = vadd.f32 %v4022, %v4118
    %v4120 = vpop.f32.mrb[0].mxu0
    %v4121 = vpop.f32.mrb[0].mxu0
    %v4122 = vadd.f32 %v4025, %v4121
    %v4123 = vpop.f32.mrb[0].mxu0
    %4124 = vmatprep.mubr.bf16.mxu0 %v3914
    %4125 = vmatmul.mubr.bf16.gmra.mrb[0].mxu0 %v3913
    %v4126 = vpop.f32.mrb[0].mxu0
    %v4127 = vadd.f32 %v4030, %v4126
    %v4128 = vpop.f32.mrb[0].mxu0
    %v4129 = vpop.f32.mrb[0].mxu0
    %v4130 = vadd.f32 %v4033, %v4129
    %v4131 = vpop.f32.mrb[0].mxu0
    %4132 = vmatprep.mubr.bf16.mxu0 %v3918
    %4133 = vmatmul.mubr.bf16.gmra.mrb[0].mxu0 %v3917
    %v4134 = vpop.f32.mrb[0].mxu0
    %v4135 = vadd.f32 %v4038, %v4134
    %v4136 = vpop.f32.mrb[0].mxu0
    %v4137 = vpop.f32.mrb[0].mxu0
    %v4138 = vadd.f32 %v4041, %v4137
    %v4139 = vpop.f32.mrb[0].mxu0
    %4140 = vmatprep.mubr.bf16.mxu0 %v3922
    %4141 = vmatmul.mubr.bf16.gmra.mrb[0].mxu0 %v3921
    %v4142 = vpop.f32.mrb[0].mxu0
    %v4143 = vadd.f32 %v4046, %v4142
    %v4144 = vpop.f32.mrb[0].mxu0
    %v4145 = vpop.f32.mrb[0].mxu0
    %v4146 = vadd.f32 %v4049, %v4145
    %v4147 = vpop.f32.mrb[0].mxu0
    %4148 = vdwg.mxu0
    %v4149 = vpack.c.bf16 %v4090, %v4087
    %v4150 = vpack.c.bf16 %v4098, %v4095
    %v4151 = vpack.c.bf16 %v4106, %v4103
    %v4152 = vpack.c.bf16 %v4114, %v4111
    %v4153 = vpack.c.bf16 %v4122, %v4119
    %v4154 = vpack.c.bf16 %v4130, %v4127
    %v4155 = vpack.c.bf16 %v4138, %v4135
    %v4156 = vpack.c.bf16 %v4146, %v4143
    %s4157 = scalar_lea.vmem [#allocation8], 1792
    %v4158 = vld [vmem:[%s4157] sm:$0xff]
    %v4159 = vld [vmem:[%s4157 + $0x8] sm:$0xff]
    %v4160 = vld [vmem:[%s4157 + $0x10] sm:$0xff]
    %v4161 = vld [vmem:[%s4157 + $0x18] sm:$0xff]
    %v4162 = vld [vmem:[%s4157 + $0x20] sm:$0xff]
    %v4163 = vld [vmem:[%s4157 + $0x28] sm:$0xff]
    %v4164 = vld [vmem:[%s4157 + $0x30] sm:$0xff]
    %v4165 = vld [vmem:[%s4157 + $0x38] sm:$0xff]
    %v4166 = vld [vmem:[%s4157 + $0x40] sm:$0xff]
    %v4167 = vld [vmem:[%s4157 + $0x48] sm:$0xff]
    %v4168 = vld [vmem:[%s4157 + $0x50] sm:$0xff]
    %v4169 = vld [vmem:[%s4157 + $0x58] sm:$0xff]
    %v4170 = vld [vmem:[%s4157 + $0x60] sm:$0xff]
    %v4171 = vld [vmem:[%s4157 + $0x68] sm:$0xff]
    %v4172 = vld [vmem:[%s4157 + $0x70] sm:$0xff]
    %v4173 = vld [vmem:[%s4157 + $0x78] sm:$0xff]
    %v4174 = vld [vmem:[%s4157 + $0x80] sm:$0xff]
    %v4175 = vld [vmem:[%s4157 + $0x88] sm:$0xff]
    %v4176 = vld [vmem:[%s4157 + $0x90] sm:$0xff]
    %v4177 = vld [vmem:[%s4157 + $0x98] sm:$0xff]
    %v4178 = vld [vmem:[%s4157 + $0xa0] sm:$0xff]
    %v4179 = vld [vmem:[%s4157 + $0xa8] sm:$0xff]
    %v4180 = vld [vmem:[%s4157 + $0xb0] sm:$0xff]
    %v4181 = vld [vmem:[%s4157 + $0xb8] sm:$0xff]
    %v4182 = vld [vmem:[%s4157 + $0xc0] sm:$0xff]
    %v4183 = vld [vmem:[%s4157 + $0xc8] sm:$0xff]
    %v4184 = vld [vmem:[%s4157 + $0xd0] sm:$0xff]
    %v4185 = vld [vmem:[%s4157 + $0xd8] sm:$0xff]
    %v4186 = vld [vmem:[%s4157 + $0xe0] sm:$0xff]
    %v4187 = vld [vmem:[%s4157 + $0xe8] sm:$0xff]
    %v4188 = vld [vmem:[%s4157 + $0xf0] sm:$0xff]
    %v4189 = vld [vmem:[%s4157 + $0xf8] sm:$0xff]
    %v4222 = vunpack.c.l.b16 %v4158
    %v4223 = vunpack.c.h.b16 %v4158
    %v4224 = vunpack.c.l.b16 %v4159
    %v4225 = vunpack.c.h.b16 %v4159
    %v4226 = vunpack.c.l.b16 %v4160
    %v4227 = vunpack.c.h.b16 %v4160
    %v4228 = vunpack.c.l.b16 %v4161
    %v4229 = vunpack.c.h.b16 %v4161
    %v4230 = vunpack.c.l.b16 %v4162
    %v4231 = vunpack.c.h.b16 %v4162
    %v4232 = vunpack.c.l.b16 %v4163
    %v4233 = vunpack.c.h.b16 %v4163
    %v4234 = vunpack.c.l.b16 %v4164
    %v4235 = vunpack.c.h.b16 %v4164
    %v4236 = vunpack.c.l.b16 %v4165
    %v4237 = vunpack.c.h.b16 %v4165
    %v4238 = vunpack.c.l.b16 %v4166
    %v4239 = vunpack.c.h.b16 %v4166
    %v4240 = vunpack.c.l.b16 %v4167
    %v4241 = vunpack.c.h.b16 %v4167
    %v4242 = vunpack.c.l.b16 %v4168
    %v4243 = vunpack.c.h.b16 %v4168
    %v4244 = vunpack.c.l.b16 %v4169
    %v4245 = vunpack.c.h.b16 %v4169
    %v4246 = vunpack.c.l.b16 %v4170
    %v4247 = vunpack.c.h.b16 %v4170
    %v4248 = vunpack.c.l.b16 %v4171
    %v4249 = vunpack.c.h.b16 %v4171
    %v4250 = vunpack.c.l.b16 %v4172
    %v4251 = vunpack.c.h.b16 %v4172
    %v4252 = vunpack.c.l.b16 %v4173
    %v4253 = vunpack.c.h.b16 %v4173
    %v4254 = vunpack.c.l.b16 %v4174
    %v4255 = vunpack.c.h.b16 %v4174
    %v4256 = vunpack.c.l.b16 %v4175
    %v4257 = vunpack.c.h.b16 %v4175
    %v4258 = vunpack.c.l.b16 %v4176
    %v4259 = vunpack.c.h.b16 %v4176
    %v4260 = vunpack.c.l.b16 %v4177
    %v4261 = vunpack.c.h.b16 %v4177
    %v4262 = vunpack.c.l.b16 %v4178
    %v4263 = vunpack.c.h.b16 %v4178
    %v4264 = vunpack.c.l.b16 %v4179
    %v4265 = vunpack.c.h.b16 %v4179
    %v4266 = vunpack.c.l.b16 %v4180
    %v4267 = vunpack.c.h.b16 %v4180
    %v4268 = vunpack.c.l.b16 %v4181
    %v4269 = vunpack.c.h.b16 %v4181
    %v4270 = vunpack.c.l.b16 %v4182
    %v4271 = vunpack.c.h.b16 %v4182
    %v4272 = vunpack.c.l.b16 %v4183
    %v4273 = vunpack.c.h.b16 %v4183
    %v4274 = vunpack.c.l.b16 %v4184
    %v4275 = vunpack.c.h.b16 %v4184
    %v4276 = vunpack.c.l.b16 %v4185
    %v4277 = vunpack.c.h.b16 %v4185
    %v4278 = vunpack.c.l.b16 %v4186
    %v4279 = vunpack.c.h.b16 %v4186
    %v4280 = vunpack.c.l.b16 %v4187
    %v4281 = vunpack.c.h.b16 %v4187
    %v4282 = vunpack.c.l.b16 %v4188
    %v4283 = vunpack.c.h.b16 %v4188
    %v4284 = vunpack.c.l.b16 %v4189
    %v4285 = vunpack.c.h.b16 %v4189
    %v4286 = vpack.c.b16 %v4226, %v4222
    %v4287 = vpack.c.b16 %v4227, %v4223
    %v4288 = vpack.c.b16 %v4228, %v4224
    %v4289 = vpack.c.b16 %v4229, %v4225
    %v4290 = vpack.c.b16 %v4234, %v4230
    %v4291 = vpack.c.b16 %v4235, %v4231
    %v4292 = vpack.c.b16 %v4236, %v4232
    %v4293 = vpack.c.b16 %v4237, %v4233
    %v4294 = vpack.c.b16 %v4242, %v4238
    %v4295 = vpack.c.b16 %v4243, %v4239
    %v4296 = vpack.c.b16 %v4244, %v4240
    %v4297 = vpack.c.b16 %v4245, %v4241
    %v4298 = vpack.c.b16 %v4250, %v4246
    %v4299 = vpack.c.b16 %v4251, %v4247
    %v4300 = vpack.c.b16 %v4252, %v4248
    %v4301 = vpack.c.b16 %v4253, %v4249
    %v4302 = vpack.c.b16 %v4258, %v4254
    %v4303 = vpack.c.b16 %v4259, %v4255
    %v4304 = vpack.c.b16 %v4260, %v4256
    %v4305 = vpack.c.b16 %v4261, %v4257
    %v4306 = vpack.c.b16 %v4266, %v4262
    %v4307 = vpack.c.b16 %v4267, %v4263
    %v4308 = vpack.c.b16 %v4268, %v4264
    %v4309 = vpack.c.b16 %v4269, %v4265
    %v4310 = vpack.c.b16 %v4274, %v4270
    %v4311 = vpack.c.b16 %v4275, %v4271
    %v4312 = vpack.c.b16 %v4276, %v4272
    %v4313 = vpack.c.b16 %v4277, %v4273
    %v4314 = vpack.c.b16 %v4282, %v4278
    %v4315 = vpack.c.b16 %v4283, %v4279
    %v4316 = vpack.c.b16 %v4284, %v4280
    %v4317 = vpack.c.b16 %v4285, %v4281
    %4350 = vmatprep.subr.bf16.mxu0 0
    %4351 = vmatpush1.bf16.msra.mxu0 %v1361
    %4352 = vmatprep.subr.bf16.mxu0 0
    %4353 = vmatpush1.bf16.msra.mxu0 %v1362
    %4354 = vmatprep.subr.bf16.mxu0 0
    %4355 = vmatpush1.bf16.msra.mxu0 %v1363
    %4356 = vmatprep.subr.bf16.mxu0 0
    %4357 = vmatpush1.bf16.msra.mxu0 %v1364
    %4358 = vmatprep.subr.bf16.mxu0 0
    %4359 = vmatpush1.bf16.msra.mxu0 %v1365
    %4360 = vmatprep.subr.bf16.mxu0 0
    %4361 = vmatpush1.bf16.msra.mxu0 %v1366
    %4362 = vmatprep.subr.bf16.mxu0 0
    %4363 = vmatpush1.bf16.msra.mxu0 %v1367
    %4364 = vmatprep.subr.bf16.mxu0 0
    %4365 = vmatpush1.bf16.msra.mxu0 %v1368
    %4366 = vmatprep.subr.bf16.mxu0 0
    %4367 = vmatpush1.bf16.msra.mxu0 %v1369
    %4368 = vmatprep.subr.bf16.mxu0 0
    %4369 = vmatpush1.bf16.msra.mxu0 %v1370
    %4370 = vmatprep.subr.bf16.mxu0 0
    %4371 = vmatpush1.bf16.msra.mxu0 %v1371
    %4372 = vmatprep.subr.bf16.mxu0 0
    %4373 = vmatpush1.bf16.msra.mxu0 %v1372
    %4374 = vmatprep.subr.bf16.mxu0 0
    %4375 = vmatpush1.bf16.msra.mxu0 %v1373
    %4376 = vmatprep.subr.bf16.mxu0 0
    %4377 = vmatpush1.bf16.msra.mxu0 %v1374
    %4378 = vmatprep.subr.bf16.mxu0 0
    %4379 = vmatpush1.bf16.msra.mxu0 %v1375
    %4380 = vmatprep.subr.bf16.mxu0 0
    %4381 = vmatpush1.bf16.msra.mxu0 %v1376
    %4382 = vmatprep.mubr.bf16.mxu0 %v4287
    %4383 = vmatmul.mubr.bf16.gmra.mrb[0].mxu0 %v4286
    %v4384 = vpop.f32.mrb[0].mxu0
    %v4385 = vadd.f32 0.0, %v4384
    %v4386 = vpop.f32.mrb[0].mxu0
    %v4387 = vpop.f32.mrb[0].mxu0
    %v4388 = vadd.f32 0.0, %v4387
    %v4389 = vpop.f32.mrb[0].mxu0
    %4390 = vmatprep.mubr.bf16.mxu0 %v4291
    %4391 = vmatmul.mubr.bf16.gmra.mrb[0].mxu0 %v4290
    %v4392 = vpop.f32.mrb[0].mxu0
    %v4393 = vadd.f32 0.0, %v4392
    %v4394 = vpop.f32.mrb[0].mxu0
    %v4395 = vpop.f32.mrb[0].mxu0
    %v4396 = vadd.f32 0.0, %v4395
    %v4397 = vpop.f32.mrb[0].mxu0
    %4398 = vmatprep.mubr.bf16.mxu0 %v4295
    %4399 = vmatmul.mubr.bf16.gmra.mrb[0].mxu0 %v4294
    %v4400 = vpop.f32.mrb[0].mxu0
    %v4401 = vadd.f32 0.0, %v4400
    %v4402 = vpop.f32.mrb[0].mxu0
    %v4403 = vpop.f32.mrb[0].mxu0
    %v4404 = vadd.f32 0.0, %v4403
    %v4405 = vpop.f32.mrb[0].mxu0
    %4406 = vmatprep.mubr.bf16.mxu0 %v4299
    %4407 = vmatmul.mubr.bf16.gmra.mrb[0].mxu0 %v4298
    %v4408 = vpop.f32.mrb[0].mxu0
    %v4409 = vadd.f32 0.0, %v4408
    %v4410 = vpop.f32.mrb[0].mxu0
    %v4411 = vpop.f32.mrb[0].mxu0
    %v4412 = vadd.f32 0.0, %v4411
    %v4413 = vpop.f32.mrb[0].mxu0
    %4414 = vmatprep.mubr.bf16.mxu0 %v4303
    %4415 = vmatmul.mubr.bf16.gmra.mrb[0].mxu0 %v4302
    %v4416 = vpop.f32.mrb[0].mxu0
    %v4417 = vadd.f32 0.0, %v4416
    %v4418 = vpop.f32.mrb[0].mxu0
    %v4419 = vpop.f32.mrb[0].mxu0
    %v4420 = vadd.f32 0.0, %v4419
    %v4421 = vpop.f32.mrb[0].mxu0
    %4422 = vmatprep.mubr.bf16.mxu0 %v4307
    %4423 = vmatmul.mubr.bf16.gmra.mrb[0].mxu0 %v4306
    %v4424 = vpop.f32.mrb[0].mxu0
    %v4425 = vadd.f32 0.0, %v4424
    %v4426 = vpop.f32.mrb[0].mxu0
    %v4427 = vpop.f32.mrb[0].mxu0
    %v4428 = vadd.f32 0.0, %v4427
    %v4429 = vpop.f32.mrb[0].mxu0
    %4430 = vmatprep.mubr.bf16.mxu0 %v4311
    %4431 = vmatmul.mubr.bf16.gmra.mrb[0].mxu0 %v4310
    %v4432 = vpop.f32.mrb[0].mxu0
    %v4433 = vadd.f32 0.0, %v4432
    %v4434 = vpop.f32.mrb[0].mxu0
    %v4435 = vpop.f32.mrb[0].mxu0
    %v4436 = vadd.f32 0.0, %v4435
    %v4437 = vpop.f32.mrb[0].mxu0
    %4438 = vmatprep.mubr.bf16.mxu0 %v4315
    %4439 = vmatmul.mubr.bf16.gmra.mrb[0].mxu0 %v4314
    %v4440 = vpop.f32.mrb[0].mxu0
    %v4441 = vadd.f32 0.0, %v4440
    %v4442 = vpop.f32.mrb[0].mxu0
    %v4443 = vpop.f32.mrb[0].mxu0
    %v4444 = vadd.f32 0.0, %v4443
    %v4445 = vpop.f32.mrb[0].mxu0
    %4446 = vdwg.mxu0
    %4447 = vmatprep.subr.bf16.mxu0 0
    %4448 = vmatpush1.bf16.msra.mxu0 %v1377
    %4449 = vmatprep.subr.bf16.mxu0 0
    %4450 = vmatpush1.bf16.msra.mxu0 %v1378
    %4451 = vmatprep.subr.bf16.mxu0 0
    %4452 = vmatpush1.bf16.msra.mxu0 %v1379
    %4453 = vmatprep.subr.bf16.mxu0 0
    %4454 = vmatpush1.bf16.msra.mxu0 %v1380
    %4455 = vmatprep.subr.bf16.mxu0 0
    %4456 = vmatpush1.bf16.msra.mxu0 %v1381
    %4457 = vmatprep.subr.bf16.mxu0 0
    %4458 = vmatpush1.bf16.msra.mxu0 %v1382
    %4459 = vmatprep.subr.bf16.mxu0 0
    %4460 = vmatpush1.bf16.msra.mxu0 %v1383
    %4461 = vmatprep.subr.bf16.mxu0 0
    %4462 = vmatpush1.bf16.msra.mxu0 %v1384
    %4463 = vmatprep.subr.bf16.mxu0 0
    %4464 = vmatpush1.bf16.msra.mxu0 %v1385
    %4465 = vmatprep.subr.bf16.mxu0 0
    %4466 = vmatpush1.bf16.msra.mxu0 %v1386
    %4467 = vmatprep.subr.bf16.mxu0 0
    %4468 = vmatpush1.bf16.msra.mxu0 %v1387
    %4469 = vmatprep.subr.bf16.mxu0 0
    %4470 = vmatpush1.bf16.msra.mxu0 %v1388
    %4471 = vmatprep.subr.bf16.mxu0 0
    %4472 = vmatpush1.bf16.msra.mxu0 %v1389
    %4473 = vmatprep.subr.bf16.mxu0 0
    %4474 = vmatpush1.bf16.msra.mxu0 %v1390
    %4475 = vmatprep.subr.bf16.mxu0 0
    %4476 = vmatpush1.bf16.msra.mxu0 %v1391
    %4477 = vmatprep.subr.bf16.mxu0 0
    %4478 = vmatpush1.bf16.msra.mxu0 %v1392
    %4479 = vmatprep.mubr.bf16.mxu0 %v4289
    %4480 = vmatmul.mubr.bf16.gmra.mrb[0].mxu0 %v4288
    %v4481 = vpop.f32.mrb[0].mxu0
    %v4482 = vadd.f32 %v4385, %v4481
    %v4483 = vpop.f32.mrb[0].mxu0
    %v4484 = vpop.f32.mrb[0].mxu0
    %v4485 = vadd.f32 %v4388, %v4484
    %v4486 = vpop.f32.mrb[0].mxu0
    %4487 = vmatprep.mubr.bf16.mxu0 %v4293
    %4488 = vmatmul.mubr.bf16.gmra.mrb[0].mxu0 %v4292
    %v4489 = vpop.f32.mrb[0].mxu0
    %v4490 = vadd.f32 %v4393, %v4489
    %v4491 = vpop.f32.mrb[0].mxu0
    %v4492 = vpop.f32.mrb[0].mxu0
    %v4493 = vadd.f32 %v4396, %v4492
    %v4494 = vpop.f32.mrb[0].mxu0
    %4495 = vmatprep.mubr.bf16.mxu0 %v4297
    %4496 = vmatmul.mubr.bf16.gmra.mrb[0].mxu0 %v4296
    %v4497 = vpop.f32.mrb[0].mxu0
    %v4498 = vadd.f32 %v4401, %v4497
    %v4499 = vpop.f32.mrb[0].mxu0
    %v4500 = vpop.f32.mrb[0].mxu0
    %v4501 = vadd.f32 %v4404, %v4500
    %v4502 = vpop.f32.mrb[0].mxu0
    %4503 = vmatprep.mubr.bf16.mxu0 %v4301
    %4504 = vmatmul.mubr.bf16.gmra.mrb[0].mxu0 %v4300
    %v4505 = vpop.f32.mrb[0].mxu0
    %v4506 = vadd.f32 %v4409, %v4505
    %v4507 = vpop.f32.mrb[0].mxu0
    %v4508 = vpop.f32.mrb[0].mxu0
    %v4509 = vadd.f32 %v4412, %v4508
    %v4510 = vpop.f32.mrb[0].mxu0
    %4511 = vmatprep.mubr.bf16.mxu0 %v4305
    %4512 = vmatmul.mubr.bf16.gmra.mrb[0].mxu0 %v4304
    %v4513 = vpop.f32.mrb[0].mxu0
    %v4514 = vadd.f32 %v4417, %v4513
    %v4515 = vpop.f32.mrb[0].mxu0
    %v4516 = vpop.f32.mrb[0].mxu0
    %v4517 = vadd.f32 %v4420, %v4516
    %v4518 = vpop.f32.mrb[0].mxu0
    %4519 = vmatprep.mubr.bf16.mxu0 %v4309
    %4520 = vmatmul.mubr.bf16.gmra.mrb[0].mxu0 %v4308
    %v4521 = vpop.f32.mrb[0].mxu0
    %v4522 = vadd.f32 %v4425, %v4521
    %v4523 = vpop.f32.mrb[0].mxu0
    %v4524 = vpop.f32.mrb[0].mxu0
    %v4525 = vadd.f32 %v4428, %v4524
    %v4526 = vpop.f32.mrb[0].mxu0
    %4527 = vmatprep.mubr.bf16.mxu0 %v4313
    %4528 = vmatmul.mubr.bf16.gmra.mrb[0].mxu0 %v4312
    %v4529 = vpop.f32.mrb[0].mxu0
    %v4530 = vadd.f32 %v4433, %v4529
    %v4531 = vpop.f32.mrb[0].mxu0
    %v4532 = vpop.f32.mrb[0].mxu0
    %v4533 = vadd.f32 %v4436, %v4532
    %v4534 = vpop.f32.mrb[0].mxu0
    %4535 = vmatprep.mubr.bf16.mxu0 %v4317
    %4536 = vmatmul.mubr.bf16.gmra.mrb[0].mxu0 %v4316
    %v4537 = vpop.f32.mrb[0].mxu0
    %v4538 = vadd.f32 %v4441, %v4537
    %v4539 = vpop.f32.mrb[0].mxu0
    %v4540 = vpop.f32.mrb[0].mxu0
    %v4541 = vadd.f32 %v4444, %v4540
    %v4542 = vpop.f32.mrb[0].mxu0
    %4543 = vdwg.mxu0
    %v4544 = vpack.c.bf16 %v4485, %v4482
    %v4545 = vpack.c.bf16 %v4493, %v4490
    %v4546 = vpack.c.bf16 %v4501, %v4498
    %v4547 = vpack.c.bf16 %v4509, %v4506
    %v4548 = vpack.c.bf16 %v4517, %v4514
    %v4549 = vpack.c.bf16 %v4525, %v4522
    %v4550 = vpack.c.bf16 %v4533, %v4530
    %v4551 = vpack.c.bf16 %v4541, %v4538
    %s4552 = scalar_lea.vmem [#allocation8], 2048
    %v4553 = vld [vmem:[%s4552] sm:$0xff]
    %v4554 = vld [vmem:[%s4552 + $0x8] sm:$0xff]
    %v4555 = vld [vmem:[%s4552 + $0x10] sm:$0xff]
    %v4556 = vld [vmem:[%s4552 + $0x18] sm:$0xff]
    %v4557 = vld [vmem:[%s4552 + $0x20] sm:$0xff]
    %v4558 = vld [vmem:[%s4552 + $0x28] sm:$0xff]
    %v4559 = vld [vmem:[%s4552 + $0x30] sm:$0xff]
    %v4560 = vld [vmem:[%s4552 + $0x38] sm:$0xff]
    %v4561 = vld [vmem:[%s4552 + $0x40] sm:$0xff]
    %v4562 = vld [vmem:[%s4552 + $0x48] sm:$0xff]
    %v4563 = vld [vmem:[%s4552 + $0x50] sm:$0xff]
    %v4564 = vld [vmem:[%s4552 + $0x58] sm:$0xff]
    %v4565 = vld [vmem:[%s4552 + $0x60] sm:$0xff]
    %v4566 = vld [vmem:[%s4552 + $0x68] sm:$0xff]
    %v4567 = vld [vmem:[%s4552 + $0x70] sm:$0xff]
    %v4568 = vld [vmem:[%s4552 + $0x78] sm:$0xff]
    %v4569 = vld [vmem:[%s4552 + $0x80] sm:$0xff]
    %v4570 = vld [vmem:[%s4552 + $0x88] sm:$0xff]
    %v4571 = vld [vmem:[%s4552 + $0x90] sm:$0xff]
    %v4572 = vld [vmem:[%s4552 + $0x98] sm:$0xff]
    %v4573 = vld [vmem:[%s4552 + $0xa0] sm:$0xff]
    %v4574 = vld [vmem:[%s4552 + $0xa8] sm:$0xff]
    %v4575 = vld [vmem:[%s4552 + $0xb0] sm:$0xff]
    %v4576 = vld [vmem:[%s4552 + $0xb8] sm:$0xff]
    %v4577 = vld [vmem:[%s4552 + $0xc0] sm:$0xff]
    %v4578 = vld [vmem:[%s4552 + $0xc8] sm:$0xff]
    %v4579 = vld [vmem:[%s4552 + $0xd0] sm:$0xff]
    %v4580 = vld [vmem:[%s4552 + $0xd8] sm:$0xff]
    %v4581 = vld [vmem:[%s4552 + $0xe0] sm:$0xff]
    %v4582 = vld [vmem:[%s4552 + $0xe8] sm:$0xff]
    %v4583 = vld [vmem:[%s4552 + $0xf0] sm:$0xff]
    %v4584 = vld [vmem:[%s4552 + $0xf8] sm:$0xff]
    %v4617 = vunpack.c.l.b16 %v4553
    %v4618 = vunpack.c.h.b16 %v4553
    %v4619 = vunpack.c.l.b16 %v4554
    %v4620 = vunpack.c.h.b16 %v4554
    %v4621 = vunpack.c.l.b16 %v4555
    %v4622 = vunpack.c.h.b16 %v4555
    %v4623 = vunpack.c.l.b16 %v4556
    %v4624 = vunpack.c.h.b16 %v4556
    %v4625 = vunpack.c.l.b16 %v4557
    %v4626 = vunpack.c.h.b16 %v4557
    %v4627 = vunpack.c.l.b16 %v4558
    %v4628 = vunpack.c.h.b16 %v4558
    %v4629 = vunpack.c.l.b16 %v4559
    %v4630 = vunpack.c.h.b16 %v4559
    %v4631 = vunpack.c.l.b16 %v4560
    %v4632 = vunpack.c.h.b16 %v4560
    %v4633 = vunpack.c.l.b16 %v4561
    %v4634 = vunpack.c.h.b16 %v4561
    %v4635 = vunpack.c.l.b16 %v4562
    %v4636 = vunpack.c.h.b16 %v4562
    %v4637 = vunpack.c.l.b16 %v4563
    %v4638 = vunpack.c.h.b16 %v4563
    %v4639 = vunpack.c.l.b16 %v4564
    %v4640 = vunpack.c.h.b16 %v4564
    %v4641 = vunpack.c.l.b16 %v4565
    %v4642 = vunpack.c.h.b16 %v4565
    %v4643 = vunpack.c.l.b16 %v4566
    %v4644 = vunpack.c.h.b16 %v4566
    %v4645 = vunpack.c.l.b16 %v4567
    %v4646 = vunpack.c.h.b16 %v4567
    %v4647 = vunpack.c.l.b16 %v4568
    %v4648 = vunpack.c.h.b16 %v4568
    %v4649 = vunpack.c.l.b16 %v4569
    %v4650 = vunpack.c.h.b16 %v4569
    %v4651 = vunpack.c.l.b16 %v4570
    %v4652 = vunpack.c.h.b16 %v4570
    %v4653 = vunpack.c.l.b16 %v4571
    %v4654 = vunpack.c.h.b16 %v4571
    %v4655 = vunpack.c.l.b16 %v4572
    %v4656 = vunpack.c.h.b16 %v4572
    %v4657 = vunpack.c.l.b16 %v4573
    %v4658 = vunpack.c.h.b16 %v4573
    %v4659 = vunpack.c.l.b16 %v4574
    %v4660 = vunpack.c.h.b16 %v4574
    %v4661 = vunpack.c.l.b16 %v4575
    %v4662 = vunpack.c.h.b16 %v4575
    %v4663 = vunpack.c.l.b16 %v4576
    %v4664 = vunpack.c.h.b16 %v4576
    %v4665 = vunpack.c.l.b16 %v4577
    %v4666 = vunpack.c.h.b16 %v4577
    %v4667 = vunpack.c.l.b16 %v4578
    %v4668 = vunpack.c.h.b16 %v4578
    %v4669 = vunpack.c.l.b16 %v4579
    %v4670 = vunpack.c.h.b16 %v4579
    %v4671 = vunpack.c.l.b16 %v4580
    %v4672 = vunpack.c.h.b16 %v4580
    %v4673 = vunpack.c.l.b16 %v4581
    %v4674 = vunpack.c.h.b16 %v4581
    %v4675 = vunpack.c.l.b16 %v4582
    %v4676 = vunpack.c.h.b16 %v4582
    %v4677 = vunpack.c.l.b16 %v4583
    %v4678 = vunpack.c.h.b16 %v4583
    %v4679 = vunpack.c.l.b16 %v4584
    %v4680 = vunpack.c.h.b16 %v4584
    %v4681 = vpack.c.b16 %v4621, %v4617
    %v4682 = vpack.c.b16 %v4622, %v4618
    %v4683 = vpack.c.b16 %v4623, %v4619
    %v4684 = vpack.c.b16 %v4624, %v4620
    %v4685 = vpack.c.b16 %v4629, %v4625
    %v4686 = vpack.c.b16 %v4630, %v4626
    %v4687 = vpack.c.b16 %v4631, %v4627
    %v4688 = vpack.c.b16 %v4632, %v4628
    %v4689 = vpack.c.b16 %v4637, %v4633
    %v4690 = vpack.c.b16 %v4638, %v4634
    %v4691 = vpack.c.b16 %v4639, %v4635
    %v4692 = vpack.c.b16 %v4640, %v4636
    %v4693 = vpack.c.b16 %v4645, %v4641
    %v4694 = vpack.c.b16 %v4646, %v4642
    %v4695 = vpack.c.b16 %v4647, %v4643
    %v4696 = vpack.c.b16 %v4648, %v4644
    %v4697 = vpack.c.b16 %v4653, %v4649
    %v4698 = vpack.c.b16 %v4654, %v4650
    %v4699 = vpack.c.b16 %v4655, %v4651
    %v4700 = vpack.c.b16 %v4656, %v4652
    %v4701 = vpack.c.b16 %v4661, %v4657
    %v4702 = vpack.c.b16 %v4662, %v4658
    %v4703 = vpack.c.b16 %v4663, %v4659
    %v4704 = vpack.c.b16 %v4664, %v4660
    %v4705 = vpack.c.b16 %v4669, %v4665
    %v4706 = vpack.c.b16 %v4670, %v4666
    %v4707 = vpack.c.b16 %v4671, %v4667
    %v4708 = vpack.c.b16 %v4672, %v4668
    %v4709 = vpack.c.b16 %v4677, %v4673
    %v4710 = vpack.c.b16 %v4678, %v4674
    %v4711 = vpack.c.b16 %v4679, %v4675
    %v4712 = vpack.c.b16 %v4680, %v4676
    %4745 = vmatprep.subr.bf16.mxu0 0
    %4746 = vmatpush1.bf16.msra.mxu0 %v1361
    %4747 = vmatprep.subr.bf16.mxu0 0
    %4748 = vmatpush1.bf16.msra.mxu0 %v1362
    %4749 = vmatprep.subr.bf16.mxu0 0
    %4750 = vmatpush1.bf16.msra.mxu0 %v1363
    %4751 = vmatprep.subr.bf16.mxu0 0
    %4752 = vmatpush1.bf16.msra.mxu0 %v1364
    %4753 = vmatprep.subr.bf16.mxu0 0
    %4754 = vmatpush1.bf16.msra.mxu0 %v1365
    %4755 = vmatprep.subr.bf16.mxu0 0
    %4756 = vmatpush1.bf16.msra.mxu0 %v1366
    %4757 = vmatprep.subr.bf16.mxu0 0
    %4758 = vmatpush1.bf16.msra.mxu0 %v1367
    %4759 = vmatprep.subr.bf16.mxu0 0
    %4760 = vmatpush1.bf16.msra.mxu0 %v1368
    %4761 = vmatprep.subr.bf16.mxu0 0
    %4762 = vmatpush1.bf16.msra.mxu0 %v1369
    %4763 = vmatprep.subr.bf16.mxu0 0
    %4764 = vmatpush1.bf16.msra.mxu0 %v1370
    %4765 = vmatprep.subr.bf16.mxu0 0
    %4766 = vmatpush1.bf16.msra.mxu0 %v1371
    %4767 = vmatprep.subr.bf16.mxu0 0
    %4768 = vmatpush1.bf16.msra.mxu0 %v1372
    %4769 = vmatprep.subr.bf16.mxu0 0
    %4770 = vmatpush1.bf16.msra.mxu0 %v1373
    %4771 = vmatprep.subr.bf16.mxu0 0
    %4772 = vmatpush1.bf16.msra.mxu0 %v1374
    %4773 = vmatprep.subr.bf16.mxu0 0
    %4774 = vmatpush1.bf16.msra.mxu0 %v1375
    %4775 = vmatprep.subr.bf16.mxu0 0
    %4776 = vmatpush1.bf16.msra.mxu0 %v1376
    %4777 = vmatprep.mubr.bf16.mxu0 %v4682
    %4778 = vmatmul.mubr.bf16.gmra.mrb[0].mxu0 %v4681
    %v4779 = vpop.f32.mrb[0].mxu0
    %v4780 = vadd.f32 0.0, %v4779
    %v4781 = vpop.f32.mrb[0].mxu0
    %v4782 = vpop.f32.mrb[0].mxu0
    %v4783 = vadd.f32 0.0, %v4782
    %v4784 = vpop.f32.mrb[0].mxu0
    %4785 = vmatprep.mubr.bf16.mxu0 %v4686
    %4786 = vmatmul.mubr.bf16.gmra.mrb[0].mxu0 %v4685
    %v4787 = vpop.f32.mrb[0].mxu0
    %v4788 = vadd.f32 0.0, %v4787
    %v4789 = vpop.f32.mrb[0].mxu0
    %v4790 = vpop.f32.mrb[0].mxu0
    %v4791 = vadd.f32 0.0, %v4790
    %v4792 = vpop.f32.mrb[0].mxu0
    %4793 = vmatprep.mubr.bf16.mxu0 %v4690
    %4794 = vmatmul.mubr.bf16.gmra.mrb[0].mxu0 %v4689
    %v4795 = vpop.f32.mrb[0].mxu0
    %v4796 = vadd.f32 0.0, %v4795
    %v4797 = vpop.f32.mrb[0].mxu0
    %v4798 = vpop.f32.mrb[0].mxu0
    %v4799 = vadd.f32 0.0, %v4798
    %v4800 = vpop.f32.mrb[0].mxu0
    %4801 = vmatprep.mubr.bf16.mxu0 %v4694
    %4802 = vmatmul.mubr.bf16.gmra.mrb[0].mxu0 %v4693
    %v4803 = vpop.f32.mrb[0].mxu0
    %v4804 = vadd.f32 0.0, %v4803
    %v4805 = vpop.f32.mrb[0].mxu0
    %v4806 = vpop.f32.mrb[0].mxu0
    %v4807 = vadd.f32 0.0, %v4806
    %v4808 = vpop.f32.mrb[0].mxu0
    %4809 = vmatprep.mubr.bf16.mxu0 %v4698
    %4810 = vmatmul.mubr.bf16.gmra.mrb[0].mxu0 %v4697
    %v4811 = vpop.f32.mrb[0].mxu0
    %v4812 = vadd.f32 0.0, %v4811
    %v4813 = vpop.f32.mrb[0].mxu0
    %v4814 = vpop.f32.mrb[0].mxu0
    %v4815 = vadd.f32 0.0, %v4814
    %v4816 = vpop.f32.mrb[0].mxu0
    %4817 = vmatprep.mubr.bf16.mxu0 %v4702
    %4818 = vmatmul.mubr.bf16.gmra.mrb[0].mxu0 %v4701
    %v4819 = vpop.f32.mrb[0].mxu0
    %v4820 = vadd.f32 0.0, %v4819
    %v4821 = vpop.f32.mrb[0].mxu0
    %v4822 = vpop.f32.mrb[0].mxu0
    %v4823 = vadd.f32 0.0, %v4822
    %v4824 = vpop.f32.mrb[0].mxu0
    %4825 = vmatprep.mubr.bf16.mxu0 %v4706
    %4826 = vmatmul.mubr.bf16.gmra.mrb[0].mxu0 %v4705
    %v4827 = vpop.f32.mrb[0].mxu0
    %v4828 = vadd.f32 0.0, %v4827
    %v4829 = vpop.f32.mrb[0].mxu0
    %v4830 = vpop.f32.mrb[0].mxu0
    %v4831 = vadd.f32 0.0, %v4830
    %v4832 = vpop.f32.mrb[0].mxu0
    %4833 = vmatprep.mubr.bf16.mxu0 %v4710
    %4834 = vmatmul.mubr.bf16.gmra.mrb[0].mxu0 %v4709
    %v4835 = vpop.f32.mrb[0].mxu0
    %v4836 = vadd.f32 0.0, %v4835
    %v4837 = vpop.f32.mrb[0].mxu0
    %v4838 = vpop.f32.mrb[0].mxu0
    %v4839 = vadd.f32 0.0, %v4838
    %v4840 = vpop.f32.mrb[0].mxu0
    %4841 = vdwg.mxu0
    %4842 = vmatprep.subr.bf16.mxu0 0
    %4843 = vmatpush1.bf16.msra.mxu0 %v1377
    %4844 = vmatprep.subr.bf16.mxu0 0
    %4845 = vmatpush1.bf16.msra.mxu0 %v1378
    %4846 = vmatprep.subr.bf16.mxu0 0
    %4847 = vmatpush1.bf16.msra.mxu0 %v1379
    %4848 = vmatprep.subr.bf16.mxu0 0
    %4849 = vmatpush1.bf16.msra.mxu0 %v1380
    %4850 = vmatprep.subr.bf16.mxu0 0
    %4851 = vmatpush1.bf16.msra.mxu0 %v1381
    %4852 = vmatprep.subr.bf16.mxu0 0
    %4853 = vmatpush1.bf16.msra.mxu0 %v1382
    %4854 = vmatprep.subr.bf16.mxu0 0
    %4855 = vmatpush1.bf16.msra.mxu0 %v1383
    %4856 = vmatprep.subr.bf16.mxu0 0
    %4857 = vmatpush1.bf16.msra.mxu0 %v1384
    %4858 = vmatprep.subr.bf16.mxu0 0
    %4859 = vmatpush1.bf16.msra.mxu0 %v1385
    %4860 = vmatprep.subr.bf16.mxu0 0
    %4861 = vmatpush1.bf16.msra.mxu0 %v1386
    %4862 = vmatprep.subr.bf16.mxu0 0
    %4863 = vmatpush1.bf16.msra.mxu0 %v1387
    %4864 = vmatprep.subr.bf16.mxu0 0
    %4865 = vmatpush1.bf16.msra.mxu0 %v1388
    %4866 = vmatprep.subr.bf16.mxu0 0
    %4867 = vmatpush1.bf16.msra.mxu0 %v1389
    %4868 = vmatprep.subr.bf16.mxu0 0
    %4869 = vmatpush1.bf16.msra.mxu0 %v1390
    %4870 = vmatprep.subr.bf16.mxu0 0
    %4871 = vmatpush1.bf16.msra.mxu0 %v1391
    %4872 = vmatprep.subr.bf16.mxu0 0
    %4873 = vmatpush1.bf16.msra.mxu0 %v1392
    %4874 = vmatprep.mubr.bf16.mxu0 %v4684
    %4875 = vmatmul.mubr.bf16.gmra.mrb[0].mxu0 %v4683
    %v4876 = vpop.f32.mrb[0].mxu0
    %v4877 = vadd.f32 %v4780, %v4876
    %v4878 = vpop.f32.mrb[0].mxu0
    %v4879 = vpop.f32.mrb[0].mxu0
    %v4880 = vadd.f32 %v4783, %v4879
    %v4881 = vpop.f32.mrb[0].mxu0
    %4882 = vmatprep.mubr.bf16.mxu0 %v4688
    %4883 = vmatmul.mubr.bf16.gmra.mrb[0].mxu0 %v4687
    %v4884 = vpop.f32.mrb[0].mxu0
    %v4885 = vadd.f32 %v4788, %v4884
    %v4886 = vpop.f32.mrb[0].mxu0
    %v4887 = vpop.f32.mrb[0].mxu0
    %v4888 = vadd.f32 %v4791, %v4887
    %v4889 = vpop.f32.mrb[0].mxu0
    %4890 = vmatprep.mubr.bf16.mxu0 %v4692
    %4891 = vmatmul.mubr.bf16.gmra.mrb[0].mxu0 %v4691
    %v4892 = vpop.f32.mrb[0].mxu0
    %v4893 = vadd.f32 %v4796, %v4892
    %v4894 = vpop.f32.mrb[0].mxu0
    %v4895 = vpop.f32.mrb[0].mxu0
    %v4896 = vadd.f32 %v4799, %v4895
    %v4897 = vpop.f32.mrb[0].mxu0
    %4898 = vmatprep.mubr.bf16.mxu0 %v4696
    %4899 = vmatmul.mubr.bf16.gmra.mrb[0].mxu0 %v4695
    %v4900 = vpop.f32.mrb[0].mxu0
    %v4901 = vadd.f32 %v4804, %v4900
    %v4902 = vpop.f32.mrb[0].mxu0
    %v4903 = vpop.f32.mrb[0].mxu0
    %v4904 = vadd.f32 %v4807, %v4903
    %v4905 = vpop.f32.mrb[0].mxu0
    %4906 = vmatprep.mubr.bf16.mxu0 %v4700
    %4907 = vmatmul.mubr.bf16.gmra.mrb[0].mxu0 %v4699
    %v4908 = vpop.f32.mrb[0].mxu0
    %v4909 = vadd.f32 %v4812, %v4908
    %v4910 = vpop.f32.mrb[0].mxu0
    %v4911 = vpop.f32.mrb[0].mxu0
    %v4912 = vadd.f32 %v4815, %v4911
    %v4913 = vpop.f32.mrb[0].mxu0
    %4914 = vmatprep.mubr.bf16.mxu0 %v4704
    %4915 = vmatmul.mubr.bf16.gmra.mrb[0].mxu0 %v4703
    %v4916 = vpop.f32.mrb[0].mxu0
    %v4917 = vadd.f32 %v4820, %v4916
    %v4918 = vpop.f32.mrb[0].mxu0
    %v4919 = vpop.f32.mrb[0].mxu0
    %v4920 = vadd.f32 %v4823, %v4919
    %v4921 = vpop.f32.mrb[0].mxu0
    %4922 = vmatprep.mubr.bf16.mxu0 %v4708
    %4923 = vmatmul.mubr.bf16.gmra.mrb[0].mxu0 %v4707
    %v4924 = vpop.f32.mrb[0].mxu0
    %v4925 = vadd.f32 %v4828, %v4924
    %v4926 = vpop.f32.mrb[0].mxu0
    %v4927 = vpop.f32.mrb[0].mxu0
    %v4928 = vadd.f32 %v4831, %v4927
    %v4929 = vpop.f32.mrb[0].mxu0
    %4930 = vmatprep.mubr.bf16.mxu0 %v4712
    %4931 = vmatmul.mubr.bf16.gmra.mrb[0].mxu0 %v4711
    %v4932 = vpop.f32.mrb[0].mxu0
    %v4933 = vadd.f32 %v4836, %v4932
    %v4934 = vpop.f32.mrb[0].mxu0
    %v4935 = vpop.f32.mrb[0].mxu0
    %v4936 = vadd.f32 %v4839, %v4935
    %v4937 = vpop.f32.mrb[0].mxu0
    %4938 = vdwg.mxu0
    %v4939 = vpack.c.bf16 %v4880, %v4877
    %v4940 = vpack.c.bf16 %v4888, %v4885
    %v4941 = vpack.c.bf16 %v4896, %v4893
    %v4942 = vpack.c.bf16 %v4904, %v4901
    %v4943 = vpack.c.bf16 %v4912, %v4909
    %v4944 = vpack.c.bf16 %v4920, %v4917
    %v4945 = vpack.c.bf16 %v4928, %v4925
    %v4946 = vpack.c.bf16 %v4936, %v4933
    %s4947 = scalar_lea.vmem [#allocation8], 2304
    %v4948 = vld [vmem:[%s4947] sm:$0xff]
    %v4949 = vld [vmem:[%s4947 + $0x8] sm:$0xff]
    %v4950 = vld [vmem:[%s4947 + $0x10] sm:$0xff]
    %v4951 = vld [vmem:[%s4947 + $0x18] sm:$0xff]
    %v4952 = vld [vmem:[%s4947 + $0x20] sm:$0xff]
    %v4953 = vld [vmem:[%s4947 + $0x28] sm:$0xff]
    %v4954 = vld [vmem:[%s4947 + $0x30] sm:$0xff]
    %v4955 = vld [vmem:[%s4947 + $0x38] sm:$0xff]
    %v4956 = vld [vmem:[%s4947 + $0x40] sm:$0xff]
    %v4957 = vld [vmem:[%s4947 + $0x48] sm:$0xff]
    %v4958 = vld [vmem:[%s4947 + $0x50] sm:$0xff]
    %v4959 = vld [vmem:[%s4947 + $0x58] sm:$0xff]
    %v4960 = vld [vmem:[%s4947 + $0x60] sm:$0xff]
    %v4961 = vld [vmem:[%s4947 + $0x68] sm:$0xff]
    %v4962 = vld [vmem:[%s4947 + $0x70] sm:$0xff]
    %v4963 = vld [vmem:[%s4947 + $0x78] sm:$0xff]
    %v4964 = vld [vmem:[%s4947 + $0x80] sm:$0xff]
    %v4965 = vld [vmem:[%s4947 + $0x88] sm:$0xff]
    %v4966 = vld [vmem:[%s4947 + $0x90] sm:$0xff]
    %v4967 = vld [vmem:[%s4947 + $0x98] sm:$0xff]
    %v4968 = vld [vmem:[%s4947 + $0xa0] sm:$0xff]
    %v4969 = vld [vmem:[%s4947 + $0xa8] sm:$0xff]
    %v4970 = vld [vmem:[%s4947 + $0xb0] sm:$0xff]
    %v4971 = vld [vmem:[%s4947 + $0xb8] sm:$0xff]
    %v4972 = vld [vmem:[%s4947 + $0xc0] sm:$0xff]
    %v4973 = vld [vmem:[%s4947 + $0xc8] sm:$0xff]
    %v4974 = vld [vmem:[%s4947 + $0xd0] sm:$0xff]
    %v4975 = vld [vmem:[%s4947 + $0xd8] sm:$0xff]
    %v4976 = vld [vmem:[%s4947 + $0xe0] sm:$0xff]
    %v4977 = vld [vmem:[%s4947 + $0xe8] sm:$0xff]
    %v4978 = vld [vmem:[%s4947 + $0xf0] sm:$0xff]
    %v4979 = vld [vmem:[%s4947 + $0xf8] sm:$0xff]
    %v5012 = vunpack.c.l.b16 %v4948
    %v5013 = vunpack.c.h.b16 %v4948
    %v5014 = vunpack.c.l.b16 %v4949
    %v5015 = vunpack.c.h.b16 %v4949
    %v5016 = vunpack.c.l.b16 %v4950
    %v5017 = vunpack.c.h.b16 %v4950
    %v5018 = vunpack.c.l.b16 %v4951
    %v5019 = vunpack.c.h.b16 %v4951
    %v5020 = vunpack.c.l.b16 %v4952
    %v5021 = vunpack.c.h.b16 %v4952
    %v5022 = vunpack.c.l.b16 %v4953
    %v5023 = vunpack.c.h.b16 %v4953
    %v5024 = vunpack.c.l.b16 %v4954
    %v5025 = vunpack.c.h.b16 %v4954
    %v5026 = vunpack.c.l.b16 %v4955
    %v5027 = vunpack.c.h.b16 %v4955
    %v5028 = vunpack.c.l.b16 %v4956
    %v5029 = vunpack.c.h.b16 %v4956
    %v5030 = vunpack.c.l.b16 %v4957
    %v5031 = vunpack.c.h.b16 %v4957
    %v5032 = vunpack.c.l.b16 %v4958
    %v5033 = vunpack.c.h.b16 %v4958
    %v5034 = vunpack.c.l.b16 %v4959
    %v5035 = vunpack.c.h.b16 %v4959
    %v5036 = vunpack.c.l.b16 %v4960
    %v5037 = vunpack.c.h.b16 %v4960
    %v5038 = vunpack.c.l.b16 %v4961
    %v5039 = vunpack.c.h.b16 %v4961
    %v5040 = vunpack.c.l.b16 %v4962
    %v5041 = vunpack.c.h.b16 %v4962
    %v5042 = vunpack.c.l.b16 %v4963
    %v5043 = vunpack.c.h.b16 %v4963
    %v5044 = vunpack.c.l.b16 %v4964
    %v5045 = vunpack.c.h.b16 %v4964
    %v5046 = vunpack.c.l.b16 %v4965
    %v5047 = vunpack.c.h.b16 %v4965
    %v5048 = vunpack.c.l.b16 %v4966
    %v5049 = vunpack.c.h.b16 %v4966
    %v5050 = vunpack.c.l.b16 %v4967
    %v5051 = vunpack.c.h.b16 %v4967
    %v5052 = vunpack.c.l.b16 %v4968
    %v5053 = vunpack.c.h.b16 %v4968
    %v5054 = vunpack.c.l.b16 %v4969
    %v5055 = vunpack.c.h.b16 %v4969
    %v5056 = vunpack.c.l.b16 %v4970
    %v5057 = vunpack.c.h.b16 %v4970
    %v5058 = vunpack.c.l.b16 %v4971
    %v5059 = vunpack.c.h.b16 %v4971
    %v5060 = vunpack.c.l.b16 %v4972
    %v5061 = vunpack.c.h.b16 %v4972
    %v5062 = vunpack.c.l.b16 %v4973
    %v5063 = vunpack.c.h.b16 %v4973
    %v5064 = vunpack.c.l.b16 %v4974
    %v5065 = vunpack.c.h.b16 %v4974
    %v5066 = vunpack.c.l.b16 %v4975
    %v5067 = vunpack.c.h.b16 %v4975
    %v5068 = vunpack.c.l.b16 %v4976
    %v5069 = vunpack.c.h.b16 %v4976
    %v5070 = vunpack.c.l.b16 %v4977
    %v5071 = vunpack.c.h.b16 %v4977
    %v5072 = vunpack.c.l.b16 %v4978
    %v5073 = vunpack.c.h.b16 %v4978
    %v5074 = vunpack.c.l.b16 %v4979
    %v5075 = vunpack.c.h.b16 %v4979
    %v5076 = vpack.c.b16 %v5016, %v5012
    %v5077 = vpack.c.b16 %v5017, %v5013
    %v5078 = vpack.c.b16 %v5018, %v5014
    %v5079 = vpack.c.b16 %v5019, %v5015
    %v5080 = vpack.c.b16 %v5024, %v5020
    %v5081 = vpack.c.b16 %v5025, %v5021
    %v5082 = vpack.c.b16 %v5026, %v5022
    %v5083 = vpack.c.b16 %v5027, %v5023
    %v5084 = vpack.c.b16 %v5032, %v5028
    %v5085 = vpack.c.b16 %v5033, %v5029
    %v5086 = vpack.c.b16 %v5034, %v5030
    %v5087 = vpack.c.b16 %v5035, %v5031
    %v5088 = vpack.c.b16 %v5040, %v5036
    %v5089 = vpack.c.b16 %v5041, %v5037
    %v5090 = vpack.c.b16 %v5042, %v5038
    %v5091 = vpack.c.b16 %v5043, %v5039
    %v5092 = vpack.c.b16 %v5048, %v5044
    %v5093 = vpack.c.b16 %v5049, %v5045
    %v5094 = vpack.c.b16 %v5050, %v5046
    %v5095 = vpack.c.b16 %v5051, %v5047
    %v5096 = vpack.c.b16 %v5056, %v5052
    %v5097 = vpack.c.b16 %v5057, %v5053
    %v5098 = vpack.c.b16 %v5058, %v5054
    %v5099 = vpack.c.b16 %v5059, %v5055
    %v5100 = vpack.c.b16 %v5064, %v5060
    %v5101 = vpack.c.b16 %v5065, %v5061
    %v5102 = vpack.c.b16 %v5066, %v5062
    %v5103 = vpack.c.b16 %v5067, %v5063
    %v5104 = vpack.c.b16 %v5072, %v5068
    %v5105 = vpack.c.b16 %v5073, %v5069
    %v5106 = vpack.c.b16 %v5074, %v5070
    %v5107 = vpack.c.b16 %v5075, %v5071
    %5140 = vmatprep.subr.bf16.mxu0 0
    %5141 = vmatpush1.bf16.msra.mxu0 %v1361
    %5142 = vmatprep.subr.bf16.mxu0 0
    %5143 = vmatpush1.bf16.msra.mxu0 %v1362
    %5144 = vmatprep.subr.bf16.mxu0 0
    %5145 = vmatpush1.bf16.msra.mxu0 %v1363
    %5146 = vmatprep.subr.bf16.mxu0 0
    %5147 = vmatpush1.bf16.msra.mxu0 %v1364
    %5148 = vmatprep.subr.bf16.mxu0 0
    %5149 = vmatpush1.bf16.msra.mxu0 %v1365
    %5150 = vmatprep.subr.bf16.mxu0 0
    %5151 = vmatpush1.bf16.msra.mxu0 %v1366
    %5152 = vmatprep.subr.bf16.mxu0 0
    %5153 = vmatpush1.bf16.msra.mxu0 %v1367
    %5154 = vmatprep.subr.bf16.mxu0 0
    %5155 = vmatpush1.bf16.msra.mxu0 %v1368
    %5156 = vmatprep.subr.bf16.mxu0 0
    %5157 = vmatpush1.bf16.msra.mxu0 %v1369
    %5158 = vmatprep.subr.bf16.mxu0 0
    %5159 = vmatpush1.bf16.msra.mxu0 %v1370
    %5160 = vmatprep.subr.bf16.mxu0 0
    %5161 = vmatpush1.bf16.msra.mxu0 %v1371
    %5162 = vmatprep.subr.bf16.mxu0 0
    %5163 = vmatpush1.bf16.msra.mxu0 %v1372
    %5164 = vmatprep.subr.bf16.mxu0 0
    %5165 = vmatpush1.bf16.msra.mxu0 %v1373
    %5166 = vmatprep.subr.bf16.mxu0 0
    %5167 = vmatpush1.bf16.msra.mxu0 %v1374
    %5168 = vmatprep.subr.bf16.mxu0 0
    %5169 = vmatpush1.bf16.msra.mxu0 %v1375
    %5170 = vmatprep.subr.bf16.mxu0 0
    %5171 = vmatpush1.bf16.msra.mxu0 %v1376
    %5172 = vmatprep.mubr.bf16.mxu0 %v5077
    %5173 = vmatmul.mubr.bf16.gmra.mrb[0].mxu0 %v5076
    %v5174 = vpop.f32.mrb[0].mxu0
    %v5175 = vadd.f32 0.0, %v5174
    %v5176 = vpop.f32.mrb[0].mxu0
    %v5177 = vpop.f32.mrb[0].mxu0
    %v5178 = vadd.f32 0.0, %v5177
    %v5179 = vpop.f32.mrb[0].mxu0
    %5180 = vmatprep.mubr.bf16.mxu0 %v5081
    %5181 = vmatmul.mubr.bf16.gmra.mrb[0].mxu0 %v5080
    %v5182 = vpop.f32.mrb[0].mxu0
    %v5183 = vadd.f32 0.0, %v5182
    %v5184 = vpop.f32.mrb[0].mxu0
    %v5185 = vpop.f32.mrb[0].mxu0
    %v5186 = vadd.f32 0.0, %v5185
    %v5187 = vpop.f32.mrb[0].mxu0
    %5188 = vmatprep.mubr.bf16.mxu0 %v5085
    %5189 = vmatmul.mubr.bf16.gmra.mrb[0].mxu0 %v5084
    %v5190 = vpop.f32.mrb[0].mxu0
    %v5191 = vadd.f32 0.0, %v5190
    %v5192 = vpop.f32.mrb[0].mxu0
    %v5193 = vpop.f32.mrb[0].mxu0
    %v5194 = vadd.f32 0.0, %v5193
    %v5195 = vpop.f32.mrb[0].mxu0
    %5196 = vmatprep.mubr.bf16.mxu0 %v5089
    %5197 = vmatmul.mubr.bf16.gmra.mrb[0].mxu0 %v5088
    %v5198 = vpop.f32.mrb[0].mxu0
    %v5199 = vadd.f32 0.0, %v5198
    %v5200 = vpop.f32.mrb[0].mxu0
    %v5201 = vpop.f32.mrb[0].mxu0
    %v5202 = vadd.f32 0.0, %v5201
    %v5203 = vpop.f32.mrb[0].mxu0
    %5204 = vmatprep.mubr.bf16.mxu0 %v5093
    %5205 = vmatmul.mubr.bf16.gmra.mrb[0].mxu0 %v5092
    %v5206 = vpop.f32.mrb[0].mxu0
    %v5207 = vadd.f32 0.0, %v5206
    %v5208 = vpop.f32.mrb[0].mxu0
    %v5209 = vpop.f32.mrb[0].mxu0
    %v5210 = vadd.f32 0.0, %v5209
    %v5211 = vpop.f32.mrb[0].mxu0
    %5212 = vmatprep.mubr.bf16.mxu0 %v5097
    %5213 = vmatmul.mubr.bf16.gmra.mrb[0].mxu0 %v5096
    %v5214 = vpop.f32.mrb[0].mxu0
    %v5215 = vadd.f32 0.0, %v5214
    %v5216 = vpop.f32.mrb[0].mxu0
    %v5217 = vpop.f32.mrb[0].mxu0
    %v5218 = vadd.f32 0.0, %v5217
    %v5219 = vpop.f32.mrb[0].mxu0
    %5220 = vmatprep.mubr.bf16.mxu0 %v5101
    %5221 = vmatmul.mubr.bf16.gmra.mrb[0].mxu0 %v5100
    %v5222 = vpop.f32.mrb[0].mxu0
    %v5223 = vadd.f32 0.0, %v5222
    %v5224 = vpop.f32.mrb[0].mxu0
    %v5225 = vpop.f32.mrb[0].mxu0
    %v5226 = vadd.f32 0.0, %v5225
    %v5227 = vpop.f32.mrb[0].mxu0
    %5228 = vmatprep.mubr.bf16.mxu0 %v5105
    %5229 = vmatmul.mubr.bf16.gmra.mrb[0].mxu0 %v5104
    %v5230 = vpop.f32.mrb[0].mxu0
    %v5231 = vadd.f32 0.0, %v5230
    %v5232 = vpop.f32.mrb[0].mxu0
    %v5233 = vpop.f32.mrb[0].mxu0
    %v5234 = vadd.f32 0.0, %v5233
    %v5235 = vpop.f32.mrb[0].mxu0
    %5236 = vdwg.mxu0
    %5237 = vmatprep.subr.bf16.mxu0 0
    %5238 = vmatpush1.bf16.msra.mxu0 %v1377
    %5239 = vmatprep.subr.bf16.mxu0 0
    %5240 = vmatpush1.bf16.msra.mxu0 %v1378
    %5241 = vmatprep.subr.bf16.mxu0 0
    %5242 = vmatpush1.bf16.msra.mxu0 %v1379
    %5243 = vmatprep.subr.bf16.mxu0 0
    %5244 = vmatpush1.bf16.msra.mxu0 %v1380
    %5245 = vmatprep.subr.bf16.mxu0 0
    %5246 = vmatpush1.bf16.msra.mxu0 %v1381
    %5247 = vmatprep.subr.bf16.mxu0 0
    %5248 = vmatpush1.bf16.msra.mxu0 %v1382
    %5249 = vmatprep.subr.bf16.mxu0 0
    %5250 = vmatpush1.bf16.msra.mxu0 %v1383
    %5251 = vmatprep.subr.bf16.mxu0 0
    %5252 = vmatpush1.bf16.msra.mxu0 %v1384
    %5253 = vmatprep.subr.bf16.mxu0 0
    %5254 = vmatpush1.bf16.msra.mxu0 %v1385
    %5255 = vmatprep.subr.bf16.mxu0 0
    %5256 = vmatpush1.bf16.msra.mxu0 %v1386
    %5257 = vmatprep.subr.bf16.mxu0 0
    %5258 = vmatpush1.bf16.msra.mxu0 %v1387
    %5259 = vmatprep.subr.bf16.mxu0 0
    %5260 = vmatpush1.bf16.msra.mxu0 %v1388
    %5261 = vmatprep.subr.bf16.mxu0 0
    %5262 = vmatpush1.bf16.msra.mxu0 %v1389
    %5263 = vmatprep.subr.bf16.mxu0 0
    %5264 = vmatpush1.bf16.msra.mxu0 %v1390
    %5265 = vmatprep.subr.bf16.mxu0 0
    %5266 = vmatpush1.bf16.msra.mxu0 %v1391
    %5267 = vmatprep.subr.bf16.mxu0 0
    %5268 = vmatpush1.bf16.msra.mxu0 %v1392
    %5269 = vmatprep.mubr.bf16.mxu0 %v5079
    %5270 = vmatmul.mubr.bf16.gmra.mrb[0].mxu0 %v5078
    %v5271 = vpop.f32.mrb[0].mxu0
    %v5272 = vadd.f32 %v5175, %v5271
    %v5273 = vpop.f32.mrb[0].mxu0
    %v5274 = vpop.f32.mrb[0].mxu0
    %v5275 = vadd.f32 %v5178, %v5274
    %v5276 = vpop.f32.mrb[0].mxu0
    %5277 = vmatprep.mubr.bf16.mxu0 %v5083
    %5278 = vmatmul.mubr.bf16.gmra.mrb[0].mxu0 %v5082
    %v5279 = vpop.f32.mrb[0].mxu0
    %v5280 = vadd.f32 %v5183, %v5279
    %v5281 = vpop.f32.mrb[0].mxu0
    %v5282 = vpop.f32.mrb[0].mxu0
    %v5283 = vadd.f32 %v5186, %v5282
    %v5284 = vpop.f32.mrb[0].mxu0
    %5285 = vmatprep.mubr.bf16.mxu0 %v5087
    %5286 = vmatmul.mubr.bf16.gmra.mrb[0].mxu0 %v5086
    %v5287 = vpop.f32.mrb[0].mxu0
    %v5288 = vadd.f32 %v5191, %v5287
    %v5289 = vpop.f32.mrb[0].mxu0
    %v5290 = vpop.f32.mrb[0].mxu0
    %v5291 = vadd.f32 %v5194, %v5290
    %v5292 = vpop.f32.mrb[0].mxu0
    %5293 = vmatprep.mubr.bf16.mxu0 %v5091
    %5294 = vmatmul.mubr.bf16.gmra.mrb[0].mxu0 %v5090
    %v5295 = vpop.f32.mrb[0].mxu0
    %v5296 = vadd.f32 %v5199, %v5295
    %v5297 = vpop.f32.mrb[0].mxu0
    %v5298 = vpop.f32.mrb[0].mxu0
    %v5299 = vadd.f32 %v5202, %v5298
    %v5300 = vpop.f32.mrb[0].mxu0
    %5301 = vmatprep.mubr.bf16.mxu0 %v5095
    %5302 = vmatmul.mubr.bf16.gmra.mrb[0].mxu0 %v5094
    %v5303 = vpop.f32.mrb[0].mxu0
    %v5304 = vadd.f32 %v5207, %v5303
    %v5305 = vpop.f32.mrb[0].mxu0
    %v5306 = vpop.f32.mrb[0].mxu0
    %v5307 = vadd.f32 %v5210, %v5306
    %v5308 = vpop.f32.mrb[0].mxu0
    %5309 = vmatprep.mubr.bf16.mxu0 %v5099
    %5310 = vmatmul.mubr.bf16.gmra.mrb[0].mxu0 %v5098
    %v5311 = vpop.f32.mrb[0].mxu0
    %v5312 = vadd.f32 %v5215, %v5311
    %v5313 = vpop.f32.mrb[0].mxu0
    %v5314 = vpop.f32.mrb[0].mxu0
    %v5315 = vadd.f32 %v5218, %v5314
    %v5316 = vpop.f32.mrb[0].mxu0
    %5317 = vmatprep.mubr.bf16.mxu0 %v5103
    %5318 = vmatmul.mubr.bf16.gmra.mrb[0].mxu0 %v5102
    %v5319 = vpop.f32.mrb[0].mxu0
    %v5320 = vadd.f32 %v5223, %v5319
    %v5321 = vpop.f32.mrb[0].mxu0
    %v5322 = vpop.f32.mrb[0].mxu0
    %v5323 = vadd.f32 %v5226, %v5322
    %v5324 = vpop.f32.mrb[0].mxu0
    %5325 = vmatprep.mubr.bf16.mxu0 %v5107
    %5326 = vmatmul.mubr.bf16.gmra.mrb[0].mxu0 %v5106
    %v5327 = vpop.f32.mrb[0].mxu0
    %v5328 = vadd.f32 %v5231, %v5327
    %v5329 = vpop.f32.mrb[0].mxu0
    %v5330 = vpop.f32.mrb[0].mxu0
    %v5331 = vadd.f32 %v5234, %v5330
    %v5332 = vpop.f32.mrb[0].mxu0
    %5333 = vdwg.mxu0
    %v5334 = vpack.c.bf16 %v5275, %v5272
    %v5335 = vpack.c.bf16 %v5283, %v5280
    %v5336 = vpack.c.bf16 %v5291, %v5288
    %v5337 = vpack.c.bf16 %v5299, %v5296
    %v5338 = vpack.c.bf16 %v5307, %v5304
    %v5339 = vpack.c.bf16 %v5315, %v5312
    %v5340 = vpack.c.bf16 %v5323, %v5320
    %v5341 = vpack.c.bf16 %v5331, %v5328
    %s5342 = scalar_lea.vmem [#allocation8], 2560
    %v5343 = vld [vmem:[%s5342] sm:$0xff]
    %v5344 = vld [vmem:[%s5342 + $0x8] sm:$0xff]
    %v5345 = vld [vmem:[%s5342 + $0x10] sm:$0xff]
    %v5346 = vld [vmem:[%s5342 + $0x18] sm:$0xff]
    %v5347 = vld [vmem:[%s5342 + $0x20] sm:$0xff]
    %v5348 = vld [vmem:[%s5342 + $0x28] sm:$0xff]
    %v5349 = vld [vmem:[%s5342 + $0x30] sm:$0xff]
    %v5350 = vld [vmem:[%s5342 + $0x38] sm:$0xff]
    %v5351 = vld [vmem:[%s5342 + $0x40] sm:$0xff]
    %v5352 = vld [vmem:[%s5342 + $0x48] sm:$0xff]
    %v5353 = vld [vmem:[%s5342 + $0x50] sm:$0xff]
    %v5354 = vld [vmem:[%s5342 + $0x58] sm:$0xff]
    %v5355 = vld [vmem:[%s5342 + $0x60] sm:$0xff]
    %v5356 = vld [vmem:[%s5342 + $0x68] sm:$0xff]
    %v5357 = vld [vmem:[%s5342 + $0x70] sm:$0xff]
    %v5358 = vld [vmem:[%s5342 + $0x78] sm:$0xff]
    %v5359 = vld [vmem:[%s5342 + $0x80] sm:$0xff]
    %v5360 = vld [vmem:[%s5342 + $0x88] sm:$0xff]
    %v5361 = vld [vmem:[%s5342 + $0x90] sm:$0xff]
    %v5362 = vld [vmem:[%s5342 + $0x98] sm:$0xff]
    %v5363 = vld [vmem:[%s5342 + $0xa0] sm:$0xff]
    %v5364 = vld [vmem:[%s5342 + $0xa8] sm:$0xff]
    %v5365 = vld [vmem:[%s5342 + $0xb0] sm:$0xff]
    %v5366 = vld [vmem:[%s5342 + $0xb8] sm:$0xff]
    %v5367 = vld [vmem:[%s5342 + $0xc0] sm:$0xff]
    %v5368 = vld [vmem:[%s5342 + $0xc8] sm:$0xff]
    %v5369 = vld [vmem:[%s5342 + $0xd0] sm:$0xff]
    %v5370 = vld [vmem:[%s5342 + $0xd8] sm:$0xff]
    %v5371 = vld [vmem:[%s5342 + $0xe0] sm:$0xff]
    %v5372 = vld [vmem:[%s5342 + $0xe8] sm:$0xff]
    %v5373 = vld [vmem:[%s5342 + $0xf0] sm:$0xff]
    %v5374 = vld [vmem:[%s5342 + $0xf8] sm:$0xff]
    %v5407 = vunpack.c.l.b16 %v5343
    %v5408 = vunpack.c.h.b16 %v5343
    %v5409 = vunpack.c.l.b16 %v5344
    %v5410 = vunpack.c.h.b16 %v5344
    %v5411 = vunpack.c.l.b16 %v5345
    %v5412 = vunpack.c.h.b16 %v5345
    %v5413 = vunpack.c.l.b16 %v5346
    %v5414 = vunpack.c.h.b16 %v5346
    %v5415 = vunpack.c.l.b16 %v5347
    %v5416 = vunpack.c.h.b16 %v5347
    %v5417 = vunpack.c.l.b16 %v5348
    %v5418 = vunpack.c.h.b16 %v5348
    %v5419 = vunpack.c.l.b16 %v5349
    %v5420 = vunpack.c.h.b16 %v5349
    %v5421 = vunpack.c.l.b16 %v5350
    %v5422 = vunpack.c.h.b16 %v5350
    %v5423 = vunpack.c.l.b16 %v5351
    %v5424 = vunpack.c.h.b16 %v5351
    %v5425 = vunpack.c.l.b16 %v5352
    %v5426 = vunpack.c.h.b16 %v5352
    %v5427 = vunpack.c.l.b16 %v5353
    %v5428 = vunpack.c.h.b16 %v5353
    %v5429 = vunpack.c.l.b16 %v5354
    %v5430 = vunpack.c.h.b16 %v5354
    %v5431 = vunpack.c.l.b16 %v5355
    %v5432 = vunpack.c.h.b16 %v5355
    %v5433 = vunpack.c.l.b16 %v5356
    %v5434 = vunpack.c.h.b16 %v5356
    %v5435 = vunpack.c.l.b16 %v5357
    %v5436 = vunpack.c.h.b16 %v5357
    %v5437 = vunpack.c.l.b16 %v5358
    %v5438 = vunpack.c.h.b16 %v5358
    %v5439 = vunpack.c.l.b16 %v5359
    %v5440 = vunpack.c.h.b16 %v5359
    %v5441 = vunpack.c.l.b16 %v5360
    %v5442 = vunpack.c.h.b16 %v5360
    %v5443 = vunpack.c.l.b16 %v5361
    %v5444 = vunpack.c.h.b16 %v5361
    %v5445 = vunpack.c.l.b16 %v5362
    %v5446 = vunpack.c.h.b16 %v5362
    %v5447 = vunpack.c.l.b16 %v5363
    %v5448 = vunpack.c.h.b16 %v5363
    %v5449 = vunpack.c.l.b16 %v5364
    %v5450 = vunpack.c.h.b16 %v5364
    %v5451 = vunpack.c.l.b16 %v5365
    %v5452 = vunpack.c.h.b16 %v5365
    %v5453 = vunpack.c.l.b16 %v5366
    %v5454 = vunpack.c.h.b16 %v5366
    %v5455 = vunpack.c.l.b16 %v5367
    %v5456 = vunpack.c.h.b16 %v5367
    %v5457 = vunpack.c.l.b16 %v5368
    %v5458 = vunpack.c.h.b16 %v5368
    %v5459 = vunpack.c.l.b16 %v5369
    %v5460 = vunpack.c.h.b16 %v5369
    %v5461 = vunpack.c.l.b16 %v5370
    %v5462 = vunpack.c.h.b16 %v5370
    %v5463 = vunpack.c.l.b16 %v5371
    %v5464 = vunpack.c.h.b16 %v5371
    %v5465 = vunpack.c.l.b16 %v5372
    %v5466 = vunpack.c.h.b16 %v5372
    %v5467 = vunpack.c.l.b16 %v5373
    %v5468 = vunpack.c.h.b16 %v5373
    %v5469 = vunpack.c.l.b16 %v5374
    %v5470 = vunpack.c.h.b16 %v5374
    %v5471 = vpack.c.b16 %v5411, %v5407
    %v5472 = vpack.c.b16 %v5412, %v5408
    %v5473 = vpack.c.b16 %v5413, %v5409
    %v5474 = vpack.c.b16 %v5414, %v5410
    %v5475 = vpack.c.b16 %v5419, %v5415
    %v5476 = vpack.c.b16 %v5420, %v5416
    %v5477 = vpack.c.b16 %v5421, %v5417
    %v5478 = vpack.c.b16 %v5422, %v5418
    %v5479 = vpack.c.b16 %v5427, %v5423
    %v5480 = vpack.c.b16 %v5428, %v5424
    %v5481 = vpack.c.b16 %v5429, %v5425
    %v5482 = vpack.c.b16 %v5430, %v5426
    %v5483 = vpack.c.b16 %v5435, %v5431
    %v5484 = vpack.c.b16 %v5436, %v5432
    %v5485 = vpack.c.b16 %v5437, %v5433
    %v5486 = vpack.c.b16 %v5438, %v5434
    %v5487 = vpack.c.b16 %v5443, %v5439
    %v5488 = vpack.c.b16 %v5444, %v5440
    %v5489 = vpack.c.b16 %v5445, %v5441
    %v5490 = vpack.c.b16 %v5446, %v5442
    %v5491 = vpack.c.b16 %v5451, %v5447
    %v5492 = vpack.c.b16 %v5452, %v5448
    %v5493 = vpack.c.b16 %v5453, %v5449
    %v5494 = vpack.c.b16 %v5454, %v5450
    %v5495 = vpack.c.b16 %v5459, %v5455
    %v5496 = vpack.c.b16 %v5460, %v5456
    %v5497 = vpack.c.b16 %v5461, %v5457
    %v5498 = vpack.c.b16 %v5462, %v5458
    %v5499 = vpack.c.b16 %v5467, %v5463
    %v5500 = vpack.c.b16 %v5468, %v5464
    %v5501 = vpack.c.b16 %v5469, %v5465
    %v5502 = vpack.c.b16 %v5470, %v5466
    %5535 = vmatprep.subr.bf16.mxu0 0
    %5536 = vmatpush1.bf16.msra.mxu0 %v1361
    %5537 = vmatprep.subr.bf16.mxu0 0
    %5538 = vmatpush1.bf16.msra.mxu0 %v1362
    %5539 = vmatprep.subr.bf16.mxu0 0
    %5540 = vmatpush1.bf16.msra.mxu0 %v1363
    %5541 = vmatprep.subr.bf16.mxu0 0
    %5542 = vmatpush1.bf16.msra.mxu0 %v1364
    %5543 = vmatprep.subr.bf16.mxu0 0
    %5544 = vmatpush1.bf16.msra.mxu0 %v1365
    %5545 = vmatprep.subr.bf16.mxu0 0
    %5546 = vmatpush1.bf16.msra.mxu0 %v1366
    %5547 = vmatprep.subr.bf16.mxu0 0
    %5548 = vmatpush1.bf16.msra.mxu0 %v1367
    %5549 = vmatprep.subr.bf16.mxu0 0
    %5550 = vmatpush1.bf16.msra.mxu0 %v1368
    %5551 = vmatprep.subr.bf16.mxu0 0
    %5552 = vmatpush1.bf16.msra.mxu0 %v1369
    %5553 = vmatprep.subr.bf16.mxu0 0
    %5554 = vmatpush1.bf16.msra.mxu0 %v1370
    %5555 = vmatprep.subr.bf16.mxu0 0
    %5556 = vmatpush1.bf16.msra.mxu0 %v1371
    %5557 = vmatprep.subr.bf16.mxu0 0
    %5558 = vmatpush1.bf16.msra.mxu0 %v1372
    %5559 = vmatprep.subr.bf16.mxu0 0
    %5560 = vmatpush1.bf16.msra.mxu0 %v1373
    %5561 = vmatprep.subr.bf16.mxu0 0
    %5562 = vmatpush1.bf16.msra.mxu0 %v1374
    %5563 = vmatprep.subr.bf16.mxu0 0
    %5564 = vmatpush1.bf16.msra.mxu0 %v1375
    %5565 = vmatprep.subr.bf16.mxu0 0
    %5566 = vmatpush1.bf16.msra.mxu0 %v1376
    %5567 = vmatprep.mubr.bf16.mxu0 %v5472
    %5568 = vmatmul.mubr.bf16.gmra.mrb[0].mxu0 %v5471
    %v5569 = vpop.f32.mrb[0].mxu0
    %v5570 = vadd.f32 0.0, %v5569
    %v5571 = vpop.f32.mrb[0].mxu0
    %v5572 = vpop.f32.mrb[0].mxu0
    %v5573 = vadd.f32 0.0, %v5572
    %v5574 = vpop.f32.mrb[0].mxu0
    %5575 = vmatprep.mubr.bf16.mxu0 %v5476
    %5576 = vmatmul.mubr.bf16.gmra.mrb[0].mxu0 %v5475
    %v5577 = vpop.f32.mrb[0].mxu0
    %v5578 = vadd.f32 0.0, %v5577
    %v5579 = vpop.f32.mrb[0].mxu0
    %v5580 = vpop.f32.mrb[0].mxu0
    %v5581 = vadd.f32 0.0, %v5580
    %v5582 = vpop.f32.mrb[0].mxu0
    %5583 = vmatprep.mubr.bf16.mxu0 %v5480
    %5584 = vmatmul.mubr.bf16.gmra.mrb[0].mxu0 %v5479
    %v5585 = vpop.f32.mrb[0].mxu0
    %v5586 = vadd.f32 0.0, %v5585
    %v5587 = vpop.f32.mrb[0].mxu0
    %v5588 = vpop.f32.mrb[0].mxu0
    %v5589 = vadd.f32 0.0, %v5588
    %v5590 = vpop.f32.mrb[0].mxu0
    %5591 = vmatprep.mubr.bf16.mxu0 %v5484
    %5592 = vmatmul.mubr.bf16.gmra.mrb[0].mxu0 %v5483
    %v5593 = vpop.f32.mrb[0].mxu0
    %v5594 = vadd.f32 0.0, %v5593
    %v5595 = vpop.f32.mrb[0].mxu0
    %v5596 = vpop.f32.mrb[0].mxu0
    %v5597 = vadd.f32 0.0, %v5596
    %v5598 = vpop.f32.mrb[0].mxu0
    %5599 = vmatprep.mubr.bf16.mxu0 %v5488
    %5600 = vmatmul.mubr.bf16.gmra.mrb[0].mxu0 %v5487
    %v5601 = vpop.f32.mrb[0].mxu0
    %v5602 = vadd.f32 0.0, %v5601
    %v5603 = vpop.f32.mrb[0].mxu0
    %v5604 = vpop.f32.mrb[0].mxu0
    %v5605 = vadd.f32 0.0, %v5604
    %v5606 = vpop.f32.mrb[0].mxu0
    %5607 = vmatprep.mubr.bf16.mxu0 %v5492
    %5608 = vmatmul.mubr.bf16.gmra.mrb[0].mxu0 %v5491
    %v5609 = vpop.f32.mrb[0].mxu0
    %v5610 = vadd.f32 0.0, %v5609
    %v5611 = vpop.f32.mrb[0].mxu0
    %v5612 = vpop.f32.mrb[0].mxu0
    %v5613 = vadd.f32 0.0, %v5612
    %v5614 = vpop.f32.mrb[0].mxu0
    %5615 = vmatprep.mubr.bf16.mxu0 %v5496
    %5616 = vmatmul.mubr.bf16.gmra.mrb[0].mxu0 %v5495
    %v5617 = vpop.f32.mrb[0].mxu0
    %v5618 = vadd.f32 0.0, %v5617
    %v5619 = vpop.f32.mrb[0].mxu0
    %v5620 = vpop.f32.mrb[0].mxu0
    %v5621 = vadd.f32 0.0, %v5620
    %v5622 = vpop.f32.mrb[0].mxu0
    %5623 = vmatprep.mubr.bf16.mxu0 %v5500
    %5624 = vmatmul.mubr.bf16.gmra.mrb[0].mxu0 %v5499
    %v5625 = vpop.f32.mrb[0].mxu0
    %v5626 = vadd.f32 0.0, %v5625
    %v5627 = vpop.f32.mrb[0].mxu0
    %v5628 = vpop.f32.mrb[0].mxu0
    %v5629 = vadd.f32 0.0, %v5628
    %v5630 = vpop.f32.mrb[0].mxu0
    %5631 = vdwg.mxu0
    %5632 = vmatprep.subr.bf16.mxu0 0
    %5633 = vmatpush1.bf16.msra.mxu0 %v1377
    %5634 = vmatprep.subr.bf16.mxu0 0
    %5635 = vmatpush1.bf16.msra.mxu0 %v1378
    %5636 = vmatprep.subr.bf16.mxu0 0
    %5637 = vmatpush1.bf16.msra.mxu0 %v1379
    %5638 = vmatprep.subr.bf16.mxu0 0
    %5639 = vmatpush1.bf16.msra.mxu0 %v1380
    %5640 = vmatprep.subr.bf16.mxu0 0
    %5641 = vmatpush1.bf16.msra.mxu0 %v1381
    %5642 = vmatprep.subr.bf16.mxu0 0
    %5643 = vmatpush1.bf16.msra.mxu0 %v1382
    %5644 = vmatprep.subr.bf16.mxu0 0
    %5645 = vmatpush1.bf16.msra.mxu0 %v1383
    %5646 = vmatprep.subr.bf16.mxu0 0
    %5647 = vmatpush1.bf16.msra.mxu0 %v1384
    %5648 = vmatprep.subr.bf16.mxu0 0
    %5649 = vmatpush1.bf16.msra.mxu0 %v1385
    %5650 = vmatprep.subr.bf16.mxu0 0
    %5651 = vmatpush1.bf16.msra.mxu0 %v1386
    %5652 = vmatprep.subr.bf16.mxu0 0
    %5653 = vmatpush1.bf16.msra.mxu0 %v1387
    %5654 = vmatprep.subr.bf16.mxu0 0
    %5655 = vmatpush1.bf16.msra.mxu0 %v1388
    %5656 = vmatprep.subr.bf16.mxu0 0
    %5657 = vmatpush1.bf16.msra.mxu0 %v1389
    %5658 = vmatprep.subr.bf16.mxu0 0
    %5659 = vmatpush1.bf16.msra.mxu0 %v1390
    %5660 = vmatprep.subr.bf16.mxu0 0
    %5661 = vmatpush1.bf16.msra.mxu0 %v1391
    %5662 = vmatprep.subr.bf16.mxu0 0
    %5663 = vmatpush1.bf16.msra.mxu0 %v1392
    %5664 = vmatprep.mubr.bf16.mxu0 %v5474
    %5665 = vmatmul.mubr.bf16.gmra.mrb[0].mxu0 %v5473
    %v5666 = vpop.f32.mrb[0].mxu0
    %v5667 = vadd.f32 %v5570, %v5666
    %v5668 = vpop.f32.mrb[0].mxu0
    %v5669 = vpop.f32.mrb[0].mxu0
    %v5670 = vadd.f32 %v5573, %v5669
    %v5671 = vpop.f32.mrb[0].mxu0
    %5672 = vmatprep.mubr.bf16.mxu0 %v5478
    %5673 = vmatmul.mubr.bf16.gmra.mrb[0].mxu0 %v5477
    %v5674 = vpop.f32.mrb[0].mxu0
    %v5675 = vadd.f32 %v5578, %v5674
    %v5676 = vpop.f32.mrb[0].mxu0
    %v5677 = vpop.f32.mrb[0].mxu0
    %v5678 = vadd.f32 %v5581, %v5677
    %v5679 = vpop.f32.mrb[0].mxu0
    %5680 = vmatprep.mubr.bf16.mxu0 %v5482
    %5681 = vmatmul.mubr.bf16.gmra.mrb[0].mxu0 %v5481
    %v5682 = vpop.f32.mrb[0].mxu0
    %v5683 = vadd.f32 %v5586, %v5682
    %v5684 = vpop.f32.mrb[0].mxu0
    %v5685 = vpop.f32.mrb[0].mxu0
    %v5686 = vadd.f32 %v5589, %v5685
    %v5687 = vpop.f32.mrb[0].mxu0
    %5688 = vmatprep.mubr.bf16.mxu0 %v5486
    %5689 = vmatmul.mubr.bf16.gmra.mrb[0].mxu0 %v5485
    %v5690 = vpop.f32.mrb[0].mxu0
    %v5691 = vadd.f32 %v5594, %v5690
    %v5692 = vpop.f32.mrb[0].mxu0
    %v5693 = vpop.f32.mrb[0].mxu0
    %v5694 = vadd.f32 %v5597, %v5693
    %v5695 = vpop.f32.mrb[0].mxu0
    %5696 = vmatprep.mubr.bf16.mxu0 %v5490
    %5697 = vmatmul.mubr.bf16.gmra.mrb[0].mxu0 %v5489
    %v5698 = vpop.f32.mrb[0].mxu0
    %v5699 = vadd.f32 %v5602, %v5698
    %v5700 = vpop.f32.mrb[0].mxu0
    %v5701 = vpop.f32.mrb[0].mxu0
    %v5702 = vadd.f32 %v5605, %v5701
    %v5703 = vpop.f32.mrb[0].mxu0
    %5704 = vmatprep.mubr.bf16.mxu0 %v5494
    %5705 = vmatmul.mubr.bf16.gmra.mrb[0].mxu0 %v5493
    %v5706 = vpop.f32.mrb[0].mxu0
    %v5707 = vadd.f32 %v5610, %v5706
    %v5708 = vpop.f32.mrb[0].mxu0
    %v5709 = vpop.f32.mrb[0].mxu0
    %v5710 = vadd.f32 %v5613, %v5709
    %v5711 = vpop.f32.mrb[0].mxu0
    %5712 = vmatprep.mubr.bf16.mxu0 %v5498
    %5713 = vmatmul.mubr.bf16.gmra.mrb[0].mxu0 %v5497
    %v5714 = vpop.f32.mrb[0].mxu0
    %v5715 = vadd.f32 %v5618, %v5714
    %v5716 = vpop.f32.mrb[0].mxu0
    %v5717 = vpop.f32.mrb[0].mxu0
    %v5718 = vadd.f32 %v5621, %v5717
    %v5719 = vpop.f32.mrb[0].mxu0
    %5720 = vmatprep.mubr.bf16.mxu0 %v5502
    %5721 = vmatmul.mubr.bf16.gmra.mrb[0].mxu0 %v5501
    %v5722 = vpop.f32.mrb[0].mxu0
    %v5723 = vadd.f32 %v5626, %v5722
    %v5724 = vpop.f32.mrb[0].mxu0
    %v5725 = vpop.f32.mrb[0].mxu0
    %v5726 = vadd.f32 %v5629, %v5725
    %v5727 = vpop.f32.mrb[0].mxu0
    %5728 = vdwg.mxu0
    %v5729 = vpack.c.bf16 %v5670, %v5667
    %v5730 = vpack.c.bf16 %v5678, %v5675
    %v5731 = vpack.c.bf16 %v5686, %v5683
    %v5732 = vpack.c.bf16 %v5694, %v5691
    %v5733 = vpack.c.bf16 %v5702, %v5699
    %v5734 = vpack.c.bf16 %v5710, %v5707
    %v5735 = vpack.c.bf16 %v5718, %v5715
    %v5736 = vpack.c.bf16 %v5726, %v5723
    %s5737 = scalar_lea.vmem [#allocation8], 2816
    %v5738 = vld [vmem:[%s5737] sm:$0xff]
    %v5739 = vld [vmem:[%s5737 + $0x8] sm:$0xff]
    %v5740 = vld [vmem:[%s5737 + $0x10] sm:$0xff]
    %v5741 = vld [vmem:[%s5737 + $0x18] sm:$0xff]
    %v5742 = vld [vmem:[%s5737 + $0x20] sm:$0xff]
    %v5743 = vld [vmem:[%s5737 + $0x28] sm:$0xff]
    %v5744 = vld [vmem:[%s5737 + $0x30] sm:$0xff]
    %v5745 = vld [vmem:[%s5737 + $0x38] sm:$0xff]
    %v5746 = vld [vmem:[%s5737 + $0x40] sm:$0xff]
    %v5747 = vld [vmem:[%s5737 + $0x48] sm:$0xff]
    %v5748 = vld [vmem:[%s5737 + $0x50] sm:$0xff]
    %v5749 = vld [vmem:[%s5737 + $0x58] sm:$0xff]
    %v5750 = vld [vmem:[%s5737 + $0x60] sm:$0xff]
    %v5751 = vld [vmem:[%s5737 + $0x68] sm:$0xff]
    %v5752 = vld [vmem:[%s5737 + $0x70] sm:$0xff]
    %v5753 = vld [vmem:[%s5737 + $0x78] sm:$0xff]
    %v5754 = vld [vmem:[%s5737 + $0x80] sm:$0xff]
    %v5755 = vld [vmem:[%s5737 + $0x88] sm:$0xff]
    %v5756 = vld [vmem:[%s5737 + $0x90] sm:$0xff]
    %v5757 = vld [vmem:[%s5737 + $0x98] sm:$0xff]
    %v5758 = vld [vmem:[%s5737 + $0xa0] sm:$0xff]
    %v5759 = vld [vmem:[%s5737 + $0xa8] sm:$0xff]
    %v5760 = vld [vmem:[%s5737 + $0xb0] sm:$0xff]
    %v5761 = vld [vmem:[%s5737 + $0xb8] sm:$0xff]
    %v5762 = vld [vmem:[%s5737 + $0xc0] sm:$0xff]
    %v5763 = vld [vmem:[%s5737 + $0xc8] sm:$0xff]
    %v5764 = vld [vmem:[%s5737 + $0xd0] sm:$0xff]
    %v5765 = vld [vmem:[%s5737 + $0xd8] sm:$0xff]
    %v5766 = vld [vmem:[%s5737 + $0xe0] sm:$0xff]
    %v5767 = vld [vmem:[%s5737 + $0xe8] sm:$0xff]
    %v5768 = vld [vmem:[%s5737 + $0xf0] sm:$0xff]
    %v5769 = vld [vmem:[%s5737 + $0xf8] sm:$0xff]
    %v5802 = vunpack.c.l.b16 %v5738
    %v5803 = vunpack.c.h.b16 %v5738
    %v5804 = vunpack.c.l.b16 %v5739
    %v5805 = vunpack.c.h.b16 %v5739
    %v5806 = vunpack.c.l.b16 %v5740
    %v5807 = vunpack.c.h.b16 %v5740
    %v5808 = vunpack.c.l.b16 %v5741
    %v5809 = vunpack.c.h.b16 %v5741
    %v5810 = vunpack.c.l.b16 %v5742
    %v5811 = vunpack.c.h.b16 %v5742
    %v5812 = vunpack.c.l.b16 %v5743
    %v5813 = vunpack.c.h.b16 %v5743
    %v5814 = vunpack.c.l.b16 %v5744
    %v5815 = vunpack.c.h.b16 %v5744
    %v5816 = vunpack.c.l.b16 %v5745
    %v5817 = vunpack.c.h.b16 %v5745
    %v5818 = vunpack.c.l.b16 %v5746
    %v5819 = vunpack.c.h.b16 %v5746
    %v5820 = vunpack.c.l.b16 %v5747
    %v5821 = vunpack.c.h.b16 %v5747
    %v5822 = vunpack.c.l.b16 %v5748
    %v5823 = vunpack.c.h.b16 %v5748
    %v5824 = vunpack.c.l.b16 %v5749
    %v5825 = vunpack.c.h.b16 %v5749
    %v5826 = vunpack.c.l.b16 %v5750
    %v5827 = vunpack.c.h.b16 %v5750
    %v5828 = vunpack.c.l.b16 %v5751
    %v5829 = vunpack.c.h.b16 %v5751
    %v5830 = vunpack.c.l.b16 %v5752
    %v5831 = vunpack.c.h.b16 %v5752
    %v5832 = vunpack.c.l.b16 %v5753
    %v5833 = vunpack.c.h.b16 %v5753
    %v5834 = vunpack.c.l.b16 %v5754
    %v5835 = vunpack.c.h.b16 %v5754
    %v5836 = vunpack.c.l.b16 %v5755
    %v5837 = vunpack.c.h.b16 %v5755
    %v5838 = vunpack.c.l.b16 %v5756
    %v5839 = vunpack.c.h.b16 %v5756
    %v5840 = vunpack.c.l.b16 %v5757
    %v5841 = vunpack.c.h.b16 %v5757
    %v5842 = vunpack.c.l.b16 %v5758
    %v5843 = vunpack.c.h.b16 %v5758
    %v5844 = vunpack.c.l.b16 %v5759
    %v5845 = vunpack.c.h.b16 %v5759
    %v5846 = vunpack.c.l.b16 %v5760
    %v5847 = vunpack.c.h.b16 %v5760
    %v5848 = vunpack.c.l.b16 %v5761
    %v5849 = vunpack.c.h.b16 %v5761
    %v5850 = vunpack.c.l.b16 %v5762
    %v5851 = vunpack.c.h.b16 %v5762
    %v5852 = vunpack.c.l.b16 %v5763
    %v5853 = vunpack.c.h.b16 %v5763
    %v5854 = vunpack.c.l.b16 %v5764
    %v5855 = vunpack.c.h.b16 %v5764
    %v5856 = vunpack.c.l.b16 %v5765
    %v5857 = vunpack.c.h.b16 %v5765
    %v5858 = vunpack.c.l.b16 %v5766
    %v5859 = vunpack.c.h.b16 %v5766
    %v5860 = vunpack.c.l.b16 %v5767
    %v5861 = vunpack.c.h.b16 %v5767
    %v5862 = vunpack.c.l.b16 %v5768
    %v5863 = vunpack.c.h.b16 %v5768
    %v5864 = vunpack.c.l.b16 %v5769
    %v5865 = vunpack.c.h.b16 %v5769
    %v5866 = vpack.c.b16 %v5806, %v5802
    %v5867 = vpack.c.b16 %v5807, %v5803
    %v5868 = vpack.c.b16 %v5808, %v5804
    %v5869 = vpack.c.b16 %v5809, %v5805
    %v5870 = vpack.c.b16 %v5814, %v5810
    %v5871 = vpack.c.b16 %v5815, %v5811
    %v5872 = vpack.c.b16 %v5816, %v5812
    %v5873 = vpack.c.b16 %v5817, %v5813
    %v5874 = vpack.c.b16 %v5822, %v5818
    %v5875 = vpack.c.b16 %v5823, %v5819
    %v5876 = vpack.c.b16 %v5824, %v5820
    %v5877 = vpack.c.b16 %v5825, %v5821
    %v5878 = vpack.c.b16 %v5830, %v5826
    %v5879 = vpack.c.b16 %v5831, %v5827
    %v5880 = vpack.c.b16 %v5832, %v5828
    %v5881 = vpack.c.b16 %v5833, %v5829
    %v5882 = vpack.c.b16 %v5838, %v5834
    %v5883 = vpack.c.b16 %v5839, %v5835
    %v5884 = vpack.c.b16 %v5840, %v5836
    %v5885 = vpack.c.b16 %v5841, %v5837
    %v5886 = vpack.c.b16 %v5846, %v5842
    %v5887 = vpack.c.b16 %v5847, %v5843
    %v5888 = vpack.c.b16 %v5848, %v5844
    %v5889 = vpack.c.b16 %v5849, %v5845
    %v5890 = vpack.c.b16 %v5854, %v5850
    %v5891 = vpack.c.b16 %v5855, %v5851
    %v5892 = vpack.c.b16 %v5856, %v5852
    %v5893 = vpack.c.b16 %v5857, %v5853
    %v5894 = vpack.c.b16 %v5862, %v5858
    %v5895 = vpack.c.b16 %v5863, %v5859
    %v5896 = vpack.c.b16 %v5864, %v5860
    %v5897 = vpack.c.b16 %v5865, %v5861
    %5930 = vmatprep.subr.bf16.mxu0 0
    %5931 = vmatpush1.bf16.msra.mxu0 %v1361
    %5932 = vmatprep.subr.bf16.mxu0 0
    %5933 = vmatpush1.bf16.msra.mxu0 %v1362
    %5934 = vmatprep.subr.bf16.mxu0 0
    %5935 = vmatpush1.bf16.msra.mxu0 %v1363
    %5936 = vmatprep.subr.bf16.mxu0 0
    %5937 = vmatpush1.bf16.msra.mxu0 %v1364
    %5938 = vmatprep.subr.bf16.mxu0 0
    %5939 = vmatpush1.bf16.msra.mxu0 %v1365
    %5940 = vmatprep.subr.bf16.mxu0 0
    %5941 = vmatpush1.bf16.msra.mxu0 %v1366
    %5942 = vmatprep.subr.bf16.mxu0 0
    %5943 = vmatpush1.bf16.msra.mxu0 %v1367
    %5944 = vmatprep.subr.bf16.mxu0 0
    %5945 = vmatpush1.bf16.msra.mxu0 %v1368
    %5946 = vmatprep.subr.bf16.mxu0 0
    %5947 = vmatpush1.bf16.msra.mxu0 %v1369
    %5948 = vmatprep.subr.bf16.mxu0 0
    %5949 = vmatpush1.bf16.msra.mxu0 %v1370
    %5950 = vmatprep.subr.bf16.mxu0 0
    %5951 = vmatpush1.bf16.msra.mxu0 %v1371
    %5952 = vmatprep.subr.bf16.mxu0 0
    %5953 = vmatpush1.bf16.msra.mxu0 %v1372
    %5954 = vmatprep.subr.bf16.mxu0 0
    %5955 = vmatpush1.bf16.msra.mxu0 %v1373
    %5956 = vmatprep.subr.bf16.mxu0 0
    %5957 = vmatpush1.bf16.msra.mxu0 %v1374
    %5958 = vmatprep.subr.bf16.mxu0 0
    %5959 = vmatpush1.bf16.msra.mxu0 %v1375
    %5960 = vmatprep.subr.bf16.mxu0 0
    %5961 = vmatpush1.bf16.msra.mxu0 %v1376
    %5962 = vmatprep.mubr.bf16.mxu0 %v5867
    %5963 = vmatmul.mubr.bf16.gmra.mrb[0].mxu0 %v5866
    %v5964 = vpop.f32.mrb[0].mxu0
    %v5965 = vadd.f32 0.0, %v5964
    %v5966 = vpop.f32.mrb[0].mxu0
    %v5967 = vpop.f32.mrb[0].mxu0
    %v5968 = vadd.f32 0.0, %v5967
    %v5969 = vpop.f32.mrb[0].mxu0
    %5970 = vmatprep.mubr.bf16.mxu0 %v5871
    %5971 = vmatmul.mubr.bf16.gmra.mrb[0].mxu0 %v5870
    %v5972 = vpop.f32.mrb[0].mxu0
    %v5973 = vadd.f32 0.0, %v5972
    %v5974 = vpop.f32.mrb[0].mxu0
    %v5975 = vpop.f32.mrb[0].mxu0
    %v5976 = vadd.f32 0.0, %v5975
    %v5977 = vpop.f32.mrb[0].mxu0
    %5978 = vmatprep.mubr.bf16.mxu0 %v5875
    %5979 = vmatmul.mubr.bf16.gmra.mrb[0].mxu0 %v5874
    %v5980 = vpop.f32.mrb[0].mxu0
    %v5981 = vadd.f32 0.0, %v5980
    %v5982 = vpop.f32.mrb[0].mxu0
    %v5983 = vpop.f32.mrb[0].mxu0
    %v5984 = vadd.f32 0.0, %v5983
    %v5985 = vpop.f32.mrb[0].mxu0
    %5986 = vmatprep.mubr.bf16.mxu0 %v5879
    %5987 = vmatmul.mubr.bf16.gmra.mrb[0].mxu0 %v5878
    %v5988 = vpop.f32.mrb[0].mxu0
    %v5989 = vadd.f32 0.0, %v5988
    %v5990 = vpop.f32.mrb[0].mxu0
    %v5991 = vpop.f32.mrb[0].mxu0
    %v5992 = vadd.f32 0.0, %v5991
    %v5993 = vpop.f32.mrb[0].mxu0
    %5994 = vmatprep.mubr.bf16.mxu0 %v5883
    %5995 = vmatmul.mubr.bf16.gmra.mrb[0].mxu0 %v5882
    %v5996 = vpop.f32.mrb[0].mxu0
    %v5997 = vadd.f32 0.0, %v5996
    %v5998 = vpop.f32.mrb[0].mxu0
    %v5999 = vpop.f32.mrb[0].mxu0
    %v6000 = vadd.f32 0.0, %v5999
    %v6001 = vpop.f32.mrb[0].mxu0
    %6002 = vmatprep.mubr.bf16.mxu0 %v5887
    %6003 = vmatmul.mubr.bf16.gmra.mrb[0].mxu0 %v5886
    %v6004 = vpop.f32.mrb[0].mxu0
    %v6005 = vadd.f32 0.0, %v6004
    %v6006 = vpop.f32.mrb[0].mxu0
    %v6007 = vpop.f32.mrb[0].mxu0
    %v6008 = vadd.f32 0.0, %v6007
    %v6009 = vpop.f32.mrb[0].mxu0
    %6010 = vmatprep.mubr.bf16.mxu0 %v5891
    %6011 = vmatmul.mubr.bf16.gmra.mrb[0].mxu0 %v5890
    %v6012 = vpop.f32.mrb[0].mxu0
    %v6013 = vadd.f32 0.0, %v6012
    %v6014 = vpop.f32.mrb[0].mxu0
    %v6015 = vpop.f32.mrb[0].mxu0
    %v6016 = vadd.f32 0.0, %v6015
    %v6017 = vpop.f32.mrb[0].mxu0
    %6018 = vmatprep.mubr.bf16.mxu0 %v5895
    %6019 = vmatmul.mubr.bf16.gmra.mrb[0].mxu0 %v5894
    %v6020 = vpop.f32.mrb[0].mxu0
    %v6021 = vadd.f32 0.0, %v6020
    %v6022 = vpop.f32.mrb[0].mxu0
    %v6023 = vpop.f32.mrb[0].mxu0
    %v6024 = vadd.f32 0.0, %v6023
    %v6025 = vpop.f32.mrb[0].mxu0
    %6026 = vdwg.mxu0
    %6027 = vmatprep.subr.bf16.mxu0 0
    %6028 = vmatpush1.bf16.msra.mxu0 %v1377
    %6029 = vmatprep.subr.bf16.mxu0 0
    %6030 = vmatpush1.bf16.msra.mxu0 %v1378
    %6031 = vmatprep.subr.bf16.mxu0 0
    %6032 = vmatpush1.bf16.msra.mxu0 %v1379
    %6033 = vmatprep.subr.bf16.mxu0 0
    %6034 = vmatpush1.bf16.msra.mxu0 %v1380
    %6035 = vmatprep.subr.bf16.mxu0 0
    %6036 = vmatpush1.bf16.msra.mxu0 %v1381
    %6037 = vmatprep.subr.bf16.mxu0 0
    %6038 = vmatpush1.bf16.msra.mxu0 %v1382
    %6039 = vmatprep.subr.bf16.mxu0 0
    %6040 = vmatpush1.bf16.msra.mxu0 %v1383
    %6041 = vmatprep.subr.bf16.mxu0 0
    %6042 = vmatpush1.bf16.msra.mxu0 %v1384
    %6043 = vmatprep.subr.bf16.mxu0 0
    %6044 = vmatpush1.bf16.msra.mxu0 %v1385
    %6045 = vmatprep.subr.bf16.mxu0 0
    %6046 = vmatpush1.bf16.msra.mxu0 %v1386
    %6047 = vmatprep.subr.bf16.mxu0 0
    %6048 = vmatpush1.bf16.msra.mxu0 %v1387
    %6049 = vmatprep.subr.bf16.mxu0 0
    %6050 = vmatpush1.bf16.msra.mxu0 %v1388
    %6051 = vmatprep.subr.bf16.mxu0 0
    %6052 = vmatpush1.bf16.msra.mxu0 %v1389
    %6053 = vmatprep.subr.bf16.mxu0 0
    %6054 = vmatpush1.bf16.msra.mxu0 %v1390
    %6055 = vmatprep.subr.bf16.mxu0 0
    %6056 = vmatpush1.bf16.msra.mxu0 %v1391
    %6057 = vmatprep.subr.bf16.mxu0 0
    %6058 = vmatpush1.bf16.msra.mxu0 %v1392
    %6059 = vmatprep.mubr.bf16.mxu0 %v5869
    %6060 = vmatmul.mubr.bf16.gmra.mrb[0].mxu0 %v5868
    %v6061 = vpop.f32.mrb[0].mxu0
    %v6062 = vadd.f32 %v5965, %v6061
    %v6063 = vpop.f32.mrb[0].mxu0
    %v6064 = vpop.f32.mrb[0].mxu0
    %v6065 = vadd.f32 %v5968, %v6064
    %v6066 = vpop.f32.mrb[0].mxu0
    %6067 = vmatprep.mubr.bf16.mxu0 %v5873
    %6068 = vmatmul.mubr.bf16.gmra.mrb[0].mxu0 %v5872
    %v6069 = vpop.f32.mrb[0].mxu0
    %v6070 = vadd.f32 %v5973, %v6069
    %v6071 = vpop.f32.mrb[0].mxu0
    %v6072 = vpop.f32.mrb[0].mxu0
    %v6073 = vadd.f32 %v5976, %v6072
    %v6074 = vpop.f32.mrb[0].mxu0
    %6075 = vmatprep.mubr.bf16.mxu0 %v5877
    %6076 = vmatmul.mubr.bf16.gmra.mrb[0].mxu0 %v5876
    %v6077 = vpop.f32.mrb[0].mxu0
    %v6078 = vadd.f32 %v5981, %v6077
    %v6079 = vpop.f32.mrb[0].mxu0
    %v6080 = vpop.f32.mrb[0].mxu0
    %v6081 = vadd.f32 %v5984, %v6080
    %v6082 = vpop.f32.mrb[0].mxu0
    %6083 = vmatprep.mubr.bf16.mxu0 %v5881
    %6084 = vmatmul.mubr.bf16.gmra.mrb[0].mxu0 %v5880
    %v6085 = vpop.f32.mrb[0].mxu0
    %v6086 = vadd.f32 %v5989, %v6085
    %v6087 = vpop.f32.mrb[0].mxu0
    %v6088 = vpop.f32.mrb[0].mxu0
    %v6089 = vadd.f32 %v5992, %v6088
    %v6090 = vpop.f32.mrb[0].mxu0
    %6091 = vmatprep.mubr.bf16.mxu0 %v5885
    %6092 = vmatmul.mubr.bf16.gmra.mrb[0].mxu0 %v5884
    %v6093 = vpop.f32.mrb[0].mxu0
    %v6094 = vadd.f32 %v5997, %v6093
    %v6095 = vpop.f32.mrb[0].mxu0
    %v6096 = vpop.f32.mrb[0].mxu0
    %v6097 = vadd.f32 %v6000, %v6096
    %v6098 = vpop.f32.mrb[0].mxu0
    %6099 = vmatprep.mubr.bf16.mxu0 %v5889
    %6100 = vmatmul.mubr.bf16.gmra.mrb[0].mxu0 %v5888
    %v6101 = vpop.f32.mrb[0].mxu0
    %v6102 = vadd.f32 %v6005, %v6101
    %v6103 = vpop.f32.mrb[0].mxu0
    %v6104 = vpop.f32.mrb[0].mxu0
    %v6105 = vadd.f32 %v6008, %v6104
    %v6106 = vpop.f32.mrb[0].mxu0
    %6107 = vmatprep.mubr.bf16.mxu0 %v5893
    %6108 = vmatmul.mubr.bf16.gmra.mrb[0].mxu0 %v5892
    %v6109 = vpop.f32.mrb[0].mxu0
    %v6110 = vadd.f32 %v6013, %v6109
    %v6111 = vpop.f32.mrb[0].mxu0
    %v6112 = vpop.f32.mrb[0].mxu0
    %v6113 = vadd.f32 %v6016, %v6112
    %v6114 = vpop.f32.mrb[0].mxu0
    %6115 = vmatprep.mubr.bf16.mxu0 %v5897
    %6116 = vmatmul.mubr.bf16.gmra.mrb[0].mxu0 %v5896
    %v6117 = vpop.f32.mrb[0].mxu0
    %v6118 = vadd.f32 %v6021, %v6117
    %v6119 = vpop.f32.mrb[0].mxu0
    %v6120 = vpop.f32.mrb[0].mxu0
    %v6121 = vadd.f32 %v6024, %v6120
    %v6122 = vpop.f32.mrb[0].mxu0
    %6123 = vdwg.mxu0
    %v6124 = vpack.c.bf16 %v6065, %v6062
    %v6125 = vpack.c.bf16 %v6073, %v6070
    %v6126 = vpack.c.bf16 %v6081, %v6078
    %v6127 = vpack.c.bf16 %v6089, %v6086
    %v6128 = vpack.c.bf16 %v6097, %v6094
    %v6129 = vpack.c.bf16 %v6105, %v6102
    %v6130 = vpack.c.bf16 %v6113, %v6110
    %v6131 = vpack.c.bf16 %v6121, %v6118
    %s6132 = scalar_lea.vmem [#allocation8], 3072
    %v6133 = vld [vmem:[%s6132] sm:$0xff]
    %v6134 = vld [vmem:[%s6132 + $0x8] sm:$0xff]
    %v6135 = vld [vmem:[%s6132 + $0x10] sm:$0xff]
    %v6136 = vld [vmem:[%s6132 + $0x18] sm:$0xff]
    %v6137 = vld [vmem:[%s6132 + $0x20] sm:$0xff]
    %v6138 = vld [vmem:[%s6132 + $0x28] sm:$0xff]
    %v6139 = vld [vmem:[%s6132 + $0x30] sm:$0xff]
    %v6140 = vld [vmem:[%s6132 + $0x38] sm:$0xff]
    %v6141 = vld [vmem:[%s6132 + $0x40] sm:$0xff]
    %v6142 = vld [vmem:[%s6132 + $0x48] sm:$0xff]
    %v6143 = vld [vmem:[%s6132 + $0x50] sm:$0xff]
    %v6144 = vld [vmem:[%s6132 + $0x58] sm:$0xff]
    %v6145 = vld [vmem:[%s6132 + $0x60] sm:$0xff]
    %v6146 = vld [vmem:[%s6132 + $0x68] sm:$0xff]
    %v6147 = vld [vmem:[%s6132 + $0x70] sm:$0xff]
    %v6148 = vld [vmem:[%s6132 + $0x78] sm:$0xff]
    %v6149 = vld [vmem:[%s6132 + $0x80] sm:$0xff]
    %v6150 = vld [vmem:[%s6132 + $0x88] sm:$0xff]
    %v6151 = vld [vmem:[%s6132 + $0x90] sm:$0xff]
    %v6152 = vld [vmem:[%s6132 + $0x98] sm:$0xff]
    %v6153 = vld [vmem:[%s6132 + $0xa0] sm:$0xff]
    %v6154 = vld [vmem:[%s6132 + $0xa8] sm:$0xff]
    %v6155 = vld [vmem:[%s6132 + $0xb0] sm:$0xff]
    %v6156 = vld [vmem:[%s6132 + $0xb8] sm:$0xff]
    %v6157 = vld [vmem:[%s6132 + $0xc0] sm:$0xff]
    %v6158 = vld [vmem:[%s6132 + $0xc8] sm:$0xff]
    %v6159 = vld [vmem:[%s6132 + $0xd0] sm:$0xff]
    %v6160 = vld [vmem:[%s6132 + $0xd8] sm:$0xff]
    %v6161 = vld [vmem:[%s6132 + $0xe0] sm:$0xff]
    %v6162 = vld [vmem:[%s6132 + $0xe8] sm:$0xff]
    %v6163 = vld [vmem:[%s6132 + $0xf0] sm:$0xff]
    %v6164 = vld [vmem:[%s6132 + $0xf8] sm:$0xff]
    %v6197 = vunpack.c.l.b16 %v6133
    %v6198 = vunpack.c.h.b16 %v6133
    %v6199 = vunpack.c.l.b16 %v6134
    %v6200 = vunpack.c.h.b16 %v6134
    %v6201 = vunpack.c.l.b16 %v6135
    %v6202 = vunpack.c.h.b16 %v6135
    %v6203 = vunpack.c.l.b16 %v6136
    %v6204 = vunpack.c.h.b16 %v6136
    %v6205 = vunpack.c.l.b16 %v6137
    %v6206 = vunpack.c.h.b16 %v6137
    %v6207 = vunpack.c.l.b16 %v6138
    %v6208 = vunpack.c.h.b16 %v6138
    %v6209 = vunpack.c.l.b16 %v6139
    %v6210 = vunpack.c.h.b16 %v6139
    %v6211 = vunpack.c.l.b16 %v6140
    %v6212 = vunpack.c.h.b16 %v6140
    %v6213 = vunpack.c.l.b16 %v6141
    %v6214 = vunpack.c.h.b16 %v6141
    %v6215 = vunpack.c.l.b16 %v6142
    %v6216 = vunpack.c.h.b16 %v6142
    %v6217 = vunpack.c.l.b16 %v6143
    %v6218 = vunpack.c.h.b16 %v6143
    %v6219 = vunpack.c.l.b16 %v6144
    %v6220 = vunpack.c.h.b16 %v6144
    %v6221 = vunpack.c.l.b16 %v6145
    %v6222 = vunpack.c.h.b16 %v6145
    %v6223 = vunpack.c.l.b16 %v6146
    %v6224 = vunpack.c.h.b16 %v6146
    %v6225 = vunpack.c.l.b16 %v6147
    %v6226 = vunpack.c.h.b16 %v6147
    %v6227 = vunpack.c.l.b16 %v6148
    %v6228 = vunpack.c.h.b16 %v6148
    %v6229 = vunpack.c.l.b16 %v6149
    %v6230 = vunpack.c.h.b16 %v6149
    %v6231 = vunpack.c.l.b16 %v6150
    %v6232 = vunpack.c.h.b16 %v6150
    %v6233 = vunpack.c.l.b16 %v6151
    %v6234 = vunpack.c.h.b16 %v6151
    %v6235 = vunpack.c.l.b16 %v6152
    %v6236 = vunpack.c.h.b16 %v6152
    %v6237 = vunpack.c.l.b16 %v6153
    %v6238 = vunpack.c.h.b16 %v6153
    %v6239 = vunpack.c.l.b16 %v6154
    %v6240 = vunpack.c.h.b16 %v6154
    %v6241 = vunpack.c.l.b16 %v6155
    %v6242 = vunpack.c.h.b16 %v6155
    %v6243 = vunpack.c.l.b16 %v6156
    %v6244 = vunpack.c.h.b16 %v6156
    %v6245 = vunpack.c.l.b16 %v6157
    %v6246 = vunpack.c.h.b16 %v6157
    %v6247 = vunpack.c.l.b16 %v6158
    %v6248 = vunpack.c.h.b16 %v6158
    %v6249 = vunpack.c.l.b16 %v6159
    %v6250 = vunpack.c.h.b16 %v6159
    %v6251 = vunpack.c.l.b16 %v6160
    %v6252 = vunpack.c.h.b16 %v6160
    %v6253 = vunpack.c.l.b16 %v6161
    %v6254 = vunpack.c.h.b16 %v6161
    %v6255 = vunpack.c.l.b16 %v6162
    %v6256 = vunpack.c.h.b16 %v6162
    %v6257 = vunpack.c.l.b16 %v6163
    %v6258 = vunpack.c.h.b16 %v6163
    %v6259 = vunpack.c.l.b16 %v6164
    %v6260 = vunpack.c.h.b16 %v6164
    %v6261 = vpack.c.b16 %v6201, %v6197
    %v6262 = vpack.c.b16 %v6202, %v6198
    %v6263 = vpack.c.b16 %v6203, %v6199
    %v6264 = vpack.c.b16 %v6204, %v6200
    %v6265 = vpack.c.b16 %v6209, %v6205
    %v6266 = vpack.c.b16 %v6210, %v6206
    %v6267 = vpack.c.b16 %v6211, %v6207
    %v6268 = vpack.c.b16 %v6212, %v6208
    %v6269 = vpack.c.b16 %v6217, %v6213
    %v6270 = vpack.c.b16 %v6218, %v6214
    %v6271 = vpack.c.b16 %v6219, %v6215
    %v6272 = vpack.c.b16 %v6220, %v6216
    %v6273 = vpack.c.b16 %v6225, %v6221
    %v6274 = vpack.c.b16 %v6226, %v6222
    %v6275 = vpack.c.b16 %v6227, %v6223
    %v6276 = vpack.c.b16 %v6228, %v6224
    %v6277 = vpack.c.b16 %v6233, %v6229
    %v6278 = vpack.c.b16 %v6234, %v6230
    %v6279 = vpack.c.b16 %v6235, %v6231
    %v6280 = vpack.c.b16 %v6236, %v6232
    %v6281 = vpack.c.b16 %v6241, %v6237
    %v6282 = vpack.c.b16 %v6242, %v6238
    %v6283 = vpack.c.b16 %v6243, %v6239
    %v6284 = vpack.c.b16 %v6244, %v6240
    %v6285 = vpack.c.b16 %v6249, %v6245
    %v6286 = vpack.c.b16 %v6250, %v6246
    %v6287 = vpack.c.b16 %v6251, %v6247
    %v6288 = vpack.c.b16 %v6252, %v6248
    %v6289 = vpack.c.b16 %v6257, %v6253
    %v6290 = vpack.c.b16 %v6258, %v6254
    %v6291 = vpack.c.b16 %v6259, %v6255
    %v6292 = vpack.c.b16 %v6260, %v6256
    %6325 = vmatprep.subr.bf16.mxu0 0
    %6326 = vmatpush1.bf16.msra.mxu0 %v1361
    %6327 = vmatprep.subr.bf16.mxu0 0
    %6328 = vmatpush1.bf16.msra.mxu0 %v1362
    %6329 = vmatprep.subr.bf16.mxu0 0
    %6330 = vmatpush1.bf16.msra.mxu0 %v1363
    %6331 = vmatprep.subr.bf16.mxu0 0
    %6332 = vmatpush1.bf16.msra.mxu0 %v1364
    %6333 = vmatprep.subr.bf16.mxu0 0
    %6334 = vmatpush1.bf16.msra.mxu0 %v1365
    %6335 = vmatprep.subr.bf16.mxu0 0
    %6336 = vmatpush1.bf16.msra.mxu0 %v1366
    %6337 = vmatprep.subr.bf16.mxu0 0
    %6338 = vmatpush1.bf16.msra.mxu0 %v1367
    %6339 = vmatprep.subr.bf16.mxu0 0
    %6340 = vmatpush1.bf16.msra.mxu0 %v1368
    %6341 = vmatprep.subr.bf16.mxu0 0
    %6342 = vmatpush1.bf16.msra.mxu0 %v1369
    %6343 = vmatprep.subr.bf16.mxu0 0
    %6344 = vmatpush1.bf16.msra.mxu0 %v1370
    %6345 = vmatprep.subr.bf16.mxu0 0
    %6346 = vmatpush1.bf16.msra.mxu0 %v1371
    %6347 = vmatprep.subr.bf16.mxu0 0
    %6348 = vmatpush1.bf16.msra.mxu0 %v1372
    %6349 = vmatprep.subr.bf16.mxu0 0
    %6350 = vmatpush1.bf16.msra.mxu0 %v1373
    %6351 = vmatprep.subr.bf16.mxu0 0
    %6352 = vmatpush1.bf16.msra.mxu0 %v1374
    %6353 = vmatprep.subr.bf16.mxu0 0
    %6354 = vmatpush1.bf16.msra.mxu0 %v1375
    %6355 = vmatprep.subr.bf16.mxu0 0
    %6356 = vmatpush1.bf16.msra.mxu0 %v1376
    %6357 = vmatprep.mubr.bf16.mxu0 %v6262
    %6358 = vmatmul.mubr.bf16.gmra.mrb[0].mxu0 %v6261
    %v6359 = vpop.f32.mrb[0].mxu0
    %v6360 = vadd.f32 0.0, %v6359
    %v6361 = vpop.f32.mrb[0].mxu0
    %v6362 = vpop.f32.mrb[0].mxu0
    %v6363 = vadd.f32 0.0, %v6362
    %v6364 = vpop.f32.mrb[0].mxu0
    %6365 = vmatprep.mubr.bf16.mxu0 %v6266
    %6366 = vmatmul.mubr.bf16.gmra.mrb[0].mxu0 %v6265
    %v6367 = vpop.f32.mrb[0].mxu0
    %v6368 = vadd.f32 0.0, %v6367
    %v6369 = vpop.f32.mrb[0].mxu0
    %v6370 = vpop.f32.mrb[0].mxu0
    %v6371 = vadd.f32 0.0, %v6370
    %v6372 = vpop.f32.mrb[0].mxu0
    %6373 = vmatprep.mubr.bf16.mxu0 %v6270
    %6374 = vmatmul.mubr.bf16.gmra.mrb[0].mxu0 %v6269
    %v6375 = vpop.f32.mrb[0].mxu0
    %v6376 = vadd.f32 0.0, %v6375
    %v6377 = vpop.f32.mrb[0].mxu0
    %v6378 = vpop.f32.mrb[0].mxu0
    %v6379 = vadd.f32 0.0, %v6378
    %v6380 = vpop.f32.mrb[0].mxu0
    %6381 = vmatprep.mubr.bf16.mxu0 %v6274
    %6382 = vmatmul.mubr.bf16.gmra.mrb[0].mxu0 %v6273
    %v6383 = vpop.f32.mrb[0].mxu0
    %v6384 = vadd.f32 0.0, %v6383
    %v6385 = vpop.f32.mrb[0].mxu0
    %v6386 = vpop.f32.mrb[0].mxu0
    %v6387 = vadd.f32 0.0, %v6386
    %v6388 = vpop.f32.mrb[0].mxu0
    %6389 = vmatprep.mubr.bf16.mxu0 %v6278
    %6390 = vmatmul.mubr.bf16.gmra.mrb[0].mxu0 %v6277
    %v6391 = vpop.f32.mrb[0].mxu0
    %v6392 = vadd.f32 0.0, %v6391
    %v6393 = vpop.f32.mrb[0].mxu0
    %v6394 = vpop.f32.mrb[0].mxu0
    %v6395 = vadd.f32 0.0, %v6394
    %v6396 = vpop.f32.mrb[0].mxu0
    %6397 = vmatprep.mubr.bf16.mxu0 %v6282
    %6398 = vmatmul.mubr.bf16.gmra.mrb[0].mxu0 %v6281
    %v6399 = vpop.f32.mrb[0].mxu0
    %v6400 = vadd.f32 0.0, %v6399
    %v6401 = vpop.f32.mrb[0].mxu0
    %v6402 = vpop.f32.mrb[0].mxu0
    %v6403 = vadd.f32 0.0, %v6402
    %v6404 = vpop.f32.mrb[0].mxu0
    %6405 = vmatprep.mubr.bf16.mxu0 %v6286
    %6406 = vmatmul.mubr.bf16.gmra.mrb[0].mxu0 %v6285
    %v6407 = vpop.f32.mrb[0].mxu0
    %v6408 = vadd.f32 0.0, %v6407
    %v6409 = vpop.f32.mrb[0].mxu0
    %v6410 = vpop.f32.mrb[0].mxu0
    %v6411 = vadd.f32 0.0, %v6410
    %v6412 = vpop.f32.mrb[0].mxu0
    %6413 = vmatprep.mubr.bf16.mxu0 %v6290
    %6414 = vmatmul.mubr.bf16.gmra.mrb[0].mxu0 %v6289
    %v6415 = vpop.f32.mrb[0].mxu0
    %v6416 = vadd.f32 0.0, %v6415
    %v6417 = vpop.f32.mrb[0].mxu0
    %v6418 = vpop.f32.mrb[0].mxu0
    %v6419 = vadd.f32 0.0, %v6418
    %v6420 = vpop.f32.mrb[0].mxu0
    %6421 = vdwg.mxu0
    %6422 = vmatprep.subr.bf16.mxu0 0
    %6423 = vmatpush1.bf16.msra.mxu0 %v1377
    %6424 = vmatprep.subr.bf16.mxu0 0
    %6425 = vmatpush1.bf16.msra.mxu0 %v1378
    %6426 = vmatprep.subr.bf16.mxu0 0
    %6427 = vmatpush1.bf16.msra.mxu0 %v1379
    %6428 = vmatprep.subr.bf16.mxu0 0
    %6429 = vmatpush1.bf16.msra.mxu0 %v1380
    %6430 = vmatprep.subr.bf16.mxu0 0
    %6431 = vmatpush1.bf16.msra.mxu0 %v1381
    %6432 = vmatprep.subr.bf16.mxu0 0
    %6433 = vmatpush1.bf16.msra.mxu0 %v1382
    %6434 = vmatprep.subr.bf16.mxu0 0
    %6435 = vmatpush1.bf16.msra.mxu0 %v1383
    %6436 = vmatprep.subr.bf16.mxu0 0
    %6437 = vmatpush1.bf16.msra.mxu0 %v1384
    %6438 = vmatprep.subr.bf16.mxu0 0
    %6439 = vmatpush1.bf16.msra.mxu0 %v1385
    %6440 = vmatprep.subr.bf16.mxu0 0
    %6441 = vmatpush1.bf16.msra.mxu0 %v1386
    %6442 = vmatprep.subr.bf16.mxu0 0
    %6443 = vmatpush1.bf16.msra.mxu0 %v1387
    %6444 = vmatprep.subr.bf16.mxu0 0
    %6445 = vmatpush1.bf16.msra.mxu0 %v1388
    %6446 = vmatprep.subr.bf16.mxu0 0
    %6447 = vmatpush1.bf16.msra.mxu0 %v1389
    %6448 = vmatprep.subr.bf16.mxu0 0
    %6449 = vmatpush1.bf16.msra.mxu0 %v1390
    %6450 = vmatprep.subr.bf16.mxu0 0
    %6451 = vmatpush1.bf16.msra.mxu0 %v1391
    %6452 = vmatprep.subr.bf16.mxu0 0
    %6453 = vmatpush1.bf16.msra.mxu0 %v1392
    %6454 = vmatprep.mubr.bf16.mxu0 %v6264
    %6455 = vmatmul.mubr.bf16.gmra.mrb[0].mxu0 %v6263
    %v6456 = vpop.f32.mrb[0].mxu0
    %v6457 = vadd.f32 %v6360, %v6456
    %v6458 = vpop.f32.mrb[0].mxu0
    %v6459 = vpop.f32.mrb[0].mxu0
    %v6460 = vadd.f32 %v6363, %v6459
    %v6461 = vpop.f32.mrb[0].mxu0
    %6462 = vmatprep.mubr.bf16.mxu0 %v6268
    %6463 = vmatmul.mubr.bf16.gmra.mrb[0].mxu0 %v6267
    %v6464 = vpop.f32.mrb[0].mxu0
    %v6465 = vadd.f32 %v6368, %v6464
    %v6466 = vpop.f32.mrb[0].mxu0
    %v6467 = vpop.f32.mrb[0].mxu0
    %v6468 = vadd.f32 %v6371, %v6467
    %v6469 = vpop.f32.mrb[0].mxu0
    %6470 = vmatprep.mubr.bf16.mxu0 %v6272
    %6471 = vmatmul.mubr.bf16.gmra.mrb[0].mxu0 %v6271
    %v6472 = vpop.f32.mrb[0].mxu0
    %v6473 = vadd.f32 %v6376, %v6472
    %v6474 = vpop.f32.mrb[0].mxu0
    %v6475 = vpop.f32.mrb[0].mxu0
    %v6476 = vadd.f32 %v6379, %v6475
    %v6477 = vpop.f32.mrb[0].mxu0
    %6478 = vmatprep.mubr.bf16.mxu0 %v6276
    %6479 = vmatmul.mubr.bf16.gmra.mrb[0].mxu0 %v6275
    %v6480 = vpop.f32.mrb[0].mxu0
    %v6481 = vadd.f32 %v6384, %v6480
    %v6482 = vpop.f32.mrb[0].mxu0
    %v6483 = vpop.f32.mrb[0].mxu0
    %v6484 = vadd.f32 %v6387, %v6483
    %v6485 = vpop.f32.mrb[0].mxu0
    %6486 = vmatprep.mubr.bf16.mxu0 %v6280
    %6487 = vmatmul.mubr.bf16.gmra.mrb[0].mxu0 %v6279
    %v6488 = vpop.f32.mrb[0].mxu0
    %v6489 = vadd.f32 %v6392, %v6488
    %v6490 = vpop.f32.mrb[0].mxu0
    %v6491 = vpop.f32.mrb[0].mxu0
    %v6492 = vadd.f32 %v6395, %v6491
    %v6493 = vpop.f32.mrb[0].mxu0
    %6494 = vmatprep.mubr.bf16.mxu0 %v6284
    %6495 = vmatmul.mubr.bf16.gmra.mrb[0].mxu0 %v6283
    %v6496 = vpop.f32.mrb[0].mxu0
    %v6497 = vadd.f32 %v6400, %v6496
    %v6498 = vpop.f32.mrb[0].mxu0
    %v6499 = vpop.f32.mrb[0].mxu0
    %v6500 = vadd.f32 %v6403, %v6499
    %v6501 = vpop.f32.mrb[0].mxu0
    %6502 = vmatprep.mubr.bf16.mxu0 %v6288
    %6503 = vmatmul.mubr.bf16.gmra.mrb[0].mxu0 %v6287
    %v6504 = vpop.f32.mrb[0].mxu0
    %v6505 = vadd.f32 %v6408, %v6504
    %v6506 = vpop.f32.mrb[0].mxu0
    %v6507 = vpop.f32.mrb[0].mxu0
    %v6508 = vadd.f32 %v6411, %v6507
    %v6509 = vpop.f32.mrb[0].mxu0
    %6510 = vmatprep.mubr.bf16.mxu0 %v6292
    %6511 = vmatmul.mubr.bf16.gmra.mrb[0].mxu0 %v6291
    %v6512 = vpop.f32.mrb[0].mxu0
    %v6513 = vadd.f32 %v6416, %v6512
    %v6514 = vpop.f32.mrb[0].mxu0
    %v6515 = vpop.f32.mrb[0].mxu0
    %v6516 = vadd.f32 %v6419, %v6515
    %v6517 = vpop.f32.mrb[0].mxu0
    %6518 = vdwg.mxu0
    %v6519 = vpack.c.bf16 %v6460, %v6457
    %v6520 = vpack.c.bf16 %v6468, %v6465
    %v6521 = vpack.c.bf16 %v6476, %v6473
    %v6522 = vpack.c.bf16 %v6484, %v6481
    %v6523 = vpack.c.bf16 %v6492, %v6489
    %v6524 = vpack.c.bf16 %v6500, %v6497
    %v6525 = vpack.c.bf16 %v6508, %v6505
    %v6526 = vpack.c.bf16 %v6516, %v6513
    %s6527 = scalar_lea.vmem [#allocation8], 3328
    %v6528 = vld [vmem:[%s6527] sm:$0xff]
    %v6529 = vld [vmem:[%s6527 + $0x8] sm:$0xff]
    %v6530 = vld [vmem:[%s6527 + $0x10] sm:$0xff]
    %v6531 = vld [vmem:[%s6527 + $0x18] sm:$0xff]
    %v6532 = vld [vmem:[%s6527 + $0x20] sm:$0xff]
    %v6533 = vld [vmem:[%s6527 + $0x28] sm:$0xff]
    %v6534 = vld [vmem:[%s6527 + $0x30] sm:$0xff]
    %v6535 = vld [vmem:[%s6527 + $0x38] sm:$0xff]
    %v6536 = vld [vmem:[%s6527 + $0x40] sm:$0xff]
    %v6537 = vld [vmem:[%s6527 + $0x48] sm:$0xff]
    %v6538 = vld [vmem:[%s6527 + $0x50] sm:$0xff]
    %v6539 = vld [vmem:[%s6527 + $0x58] sm:$0xff]
    %v6540 = vld [vmem:[%s6527 + $0x60] sm:$0xff]
    %v6541 = vld [vmem:[%s6527 + $0x68] sm:$0xff]
    %v6542 = vld [vmem:[%s6527 + $0x70] sm:$0xff]
    %v6543 = vld [vmem:[%s6527 + $0x78] sm:$0xff]
    %v6544 = vld [vmem:[%s6527 + $0x80] sm:$0xff]
    %v6545 = vld [vmem:[%s6527 + $0x88] sm:$0xff]
    %v6546 = vld [vmem:[%s6527 + $0x90] sm:$0xff]
    %v6547 = vld [vmem:[%s6527 + $0x98] sm:$0xff]
    %v6548 = vld [vmem:[%s6527 + $0xa0] sm:$0xff]
    %v6549 = vld [vmem:[%s6527 + $0xa8] sm:$0xff]
    %v6550 = vld [vmem:[%s6527 + $0xb0] sm:$0xff]
    %v6551 = vld [vmem:[%s6527 + $0xb8] sm:$0xff]
    %v6552 = vld [vmem:[%s6527 + $0xc0] sm:$0xff]
    %v6553 = vld [vmem:[%s6527 + $0xc8] sm:$0xff]
    %v6554 = vld [vmem:[%s6527 + $0xd0] sm:$0xff]
    %v6555 = vld [vmem:[%s6527 + $0xd8] sm:$0xff]
    %v6556 = vld [vmem:[%s6527 + $0xe0] sm:$0xff]
    %v6557 = vld [vmem:[%s6527 + $0xe8] sm:$0xff]
    %v6558 = vld [vmem:[%s6527 + $0xf0] sm:$0xff]
    %v6559 = vld [vmem:[%s6527 + $0xf8] sm:$0xff]
    %v6592 = vunpack.c.l.b16 %v6528
    %v6593 = vunpack.c.h.b16 %v6528
    %v6594 = vunpack.c.l.b16 %v6529
    %v6595 = vunpack.c.h.b16 %v6529
    %v6596 = vunpack.c.l.b16 %v6530
    %v6597 = vunpack.c.h.b16 %v6530
    %v6598 = vunpack.c.l.b16 %v6531
    %v6599 = vunpack.c.h.b16 %v6531
    %v6600 = vunpack.c.l.b16 %v6532
    %v6601 = vunpack.c.h.b16 %v6532
    %v6602 = vunpack.c.l.b16 %v6533
    %v6603 = vunpack.c.h.b16 %v6533
    %v6604 = vunpack.c.l.b16 %v6534
    %v6605 = vunpack.c.h.b16 %v6534
    %v6606 = vunpack.c.l.b16 %v6535
    %v6607 = vunpack.c.h.b16 %v6535
    %v6608 = vunpack.c.l.b16 %v6536
    %v6609 = vunpack.c.h.b16 %v6536
    %v6610 = vunpack.c.l.b16 %v6537
    %v6611 = vunpack.c.h.b16 %v6537
    %v6612 = vunpack.c.l.b16 %v6538
    %v6613 = vunpack.c.h.b16 %v6538
    %v6614 = vunpack.c.l.b16 %v6539
    %v6615 = vunpack.c.h.b16 %v6539
    %v6616 = vunpack.c.l.b16 %v6540
    %v6617 = vunpack.c.h.b16 %v6540
    %v6618 = vunpack.c.l.b16 %v6541
    %v6619 = vunpack.c.h.b16 %v6541
    %v6620 = vunpack.c.l.b16 %v6542
    %v6621 = vunpack.c.h.b16 %v6542
    %v6622 = vunpack.c.l.b16 %v6543
    %v6623 = vunpack.c.h.b16 %v6543
    %v6624 = vunpack.c.l.b16 %v6544
    %v6625 = vunpack.c.h.b16 %v6544
    %v6626 = vunpack.c.l.b16 %v6545
    %v6627 = vunpack.c.h.b16 %v6545
    %v6628 = vunpack.c.l.b16 %v6546
    %v6629 = vunpack.c.h.b16 %v6546
    %v6630 = vunpack.c.l.b16 %v6547
    %v6631 = vunpack.c.h.b16 %v6547
    %v6632 = vunpack.c.l.b16 %v6548
    %v6633 = vunpack.c.h.b16 %v6548
    %v6634 = vunpack.c.l.b16 %v6549
    %v6635 = vunpack.c.h.b16 %v6549
    %v6636 = vunpack.c.l.b16 %v6550
    %v6637 = vunpack.c.h.b16 %v6550
    %v6638 = vunpack.c.l.b16 %v6551
    %v6639 = vunpack.c.h.b16 %v6551
    %v6640 = vunpack.c.l.b16 %v6552
    %v6641 = vunpack.c.h.b16 %v6552
    %v6642 = vunpack.c.l.b16 %v6553
    %v6643 = vunpack.c.h.b16 %v6553
    %v6644 = vunpack.c.l.b16 %v6554
    %v6645 = vunpack.c.h.b16 %v6554
    %v6646 = vunpack.c.l.b16 %v6555
    %v6647 = vunpack.c.h.b16 %v6555
    %v6648 = vunpack.c.l.b16 %v6556
    %v6649 = vunpack.c.h.b16 %v6556
    %v6650 = vunpack.c.l.b16 %v6557
    %v6651 = vunpack.c.h.b16 %v6557
    %v6652 = vunpack.c.l.b16 %v6558
    %v6653 = vunpack.c.h.b16 %v6558
    %v6654 = vunpack.c.l.b16 %v6559
    %v6655 = vunpack.c.h.b16 %v6559
    %v6656 = vpack.c.b16 %v6596, %v6592
    %v6657 = vpack.c.b16 %v6597, %v6593
    %v6658 = vpack.c.b16 %v6598, %v6594
    %v6659 = vpack.c.b16 %v6599, %v6595
    %v6660 = vpack.c.b16 %v6604, %v6600
    %v6661 = vpack.c.b16 %v6605, %v6601
    %v6662 = vpack.c.b16 %v6606, %v6602
    %v6663 = vpack.c.b16 %v6607, %v6603
    %v6664 = vpack.c.b16 %v6612, %v6608
    %v6665 = vpack.c.b16 %v6613, %v6609
    %v6666 = vpack.c.b16 %v6614, %v6610
    %v6667 = vpack.c.b16 %v6615, %v6611
    %v6668 = vpack.c.b16 %v6620, %v6616
    %v6669 = vpack.c.b16 %v6621, %v6617
    %v6670 = vpack.c.b16 %v6622, %v6618
    %v6671 = vpack.c.b16 %v6623, %v6619
    %v6672 = vpack.c.b16 %v6628, %v6624
    %v6673 = vpack.c.b16 %v6629, %v6625
    %v6674 = vpack.c.b16 %v6630, %v6626
    %v6675 = vpack.c.b16 %v6631, %v6627
    %v6676 = vpack.c.b16 %v6636, %v6632
    %v6677 = vpack.c.b16 %v6637, %v6633
    %v6678 = vpack.c.b16 %v6638, %v6634
    %v6679 = vpack.c.b16 %v6639, %v6635
    %v6680 = vpack.c.b16 %v6644, %v6640
    %v6681 = vpack.c.b16 %v6645, %v6641
    %v6682 = vpack.c.b16 %v6646, %v6642
    %v6683 = vpack.c.b16 %v6647, %v6643
    %v6684 = vpack.c.b16 %v6652, %v6648
    %v6685 = vpack.c.b16 %v6653, %v6649
    %v6686 = vpack.c.b16 %v6654, %v6650
    %v6687 = vpack.c.b16 %v6655, %v6651
    %6720 = vmatprep.subr.bf16.mxu0 0
    %6721 = vmatpush1.bf16.msra.mxu0 %v1361
    %6722 = vmatprep.subr.bf16.mxu0 0
    %6723 = vmatpush1.bf16.msra.mxu0 %v1362
    %6724 = vmatprep.subr.bf16.mxu0 0
    %6725 = vmatpush1.bf16.msra.mxu0 %v1363
    %6726 = vmatprep.subr.bf16.mxu0 0
    %6727 = vmatpush1.bf16.msra.mxu0 %v1364
    %6728 = vmatprep.subr.bf16.mxu0 0
    %6729 = vmatpush1.bf16.msra.mxu0 %v1365
    %6730 = vmatprep.subr.bf16.mxu0 0
    %6731 = vmatpush1.bf16.msra.mxu0 %v1366
    %6732 = vmatprep.subr.bf16.mxu0 0
    %6733 = vmatpush1.bf16.msra.mxu0 %v1367
    %6734 = vmatprep.subr.bf16.mxu0 0
    %6735 = vmatpush1.bf16.msra.mxu0 %v1368
    %6736 = vmatprep.subr.bf16.mxu0 0
    %6737 = vmatpush1.bf16.msra.mxu0 %v1369
    %6738 = vmatprep.subr.bf16.mxu0 0
    %6739 = vmatpush1.bf16.msra.mxu0 %v1370
    %6740 = vmatprep.subr.bf16.mxu0 0
    %6741 = vmatpush1.bf16.msra.mxu0 %v1371
    %6742 = vmatprep.subr.bf16.mxu0 0
    %6743 = vmatpush1.bf16.msra.mxu0 %v1372
    %6744 = vmatprep.subr.bf16.mxu0 0
    %6745 = vmatpush1.bf16.msra.mxu0 %v1373
    %6746 = vmatprep.subr.bf16.mxu0 0
    %6747 = vmatpush1.bf16.msra.mxu0 %v1374
    %6748 = vmatprep.subr.bf16.mxu0 0
    %6749 = vmatpush1.bf16.msra.mxu0 %v1375
    %6750 = vmatprep.subr.bf16.mxu0 0
    %6751 = vmatpush1.bf16.msra.mxu0 %v1376
    %6752 = vmatprep.mubr.bf16.mxu0 %v6657
    %6753 = vmatmul.mubr.bf16.gmra.mrb[0].mxu0 %v6656
    %v6754 = vpop.f32.mrb[0].mxu0
    %v6755 = vadd.f32 0.0, %v6754
    %v6756 = vpop.f32.mrb[0].mxu0
    %v6757 = vpop.f32.mrb[0].mxu0
    %v6758 = vadd.f32 0.0, %v6757
    %v6759 = vpop.f32.mrb[0].mxu0
    %6760 = vmatprep.mubr.bf16.mxu0 %v6661
    %6761 = vmatmul.mubr.bf16.gmra.mrb[0].mxu0 %v6660
    %v6762 = vpop.f32.mrb[0].mxu0
    %v6763 = vadd.f32 0.0, %v6762
    %v6764 = vpop.f32.mrb[0].mxu0
    %v6765 = vpop.f32.mrb[0].mxu0
    %v6766 = vadd.f32 0.0, %v6765
    %v6767 = vpop.f32.mrb[0].mxu0
    %6768 = vmatprep.mubr.bf16.mxu0 %v6665
    %6769 = vmatmul.mubr.bf16.gmra.mrb[0].mxu0 %v6664
    %v6770 = vpop.f32.mrb[0].mxu0
    %v6771 = vadd.f32 0.0, %v6770
    %v6772 = vpop.f32.mrb[0].mxu0
    %v6773 = vpop.f32.mrb[0].mxu0
    %v6774 = vadd.f32 0.0, %v6773
    %v6775 = vpop.f32.mrb[0].mxu0
    %6776 = vmatprep.mubr.bf16.mxu0 %v6669
    %6777 = vmatmul.mubr.bf16.gmra.mrb[0].mxu0 %v6668
    %v6778 = vpop.f32.mrb[0].mxu0
    %v6779 = vadd.f32 0.0, %v6778
    %v6780 = vpop.f32.mrb[0].mxu0
    %v6781 = vpop.f32.mrb[0].mxu0
    %v6782 = vadd.f32 0.0, %v6781
    %v6783 = vpop.f32.mrb[0].mxu0
    %6784 = vmatprep.mubr.bf16.mxu0 %v6673
    %6785 = vmatmul.mubr.bf16.gmra.mrb[0].mxu0 %v6672
    %v6786 = vpop.f32.mrb[0].mxu0
    %v6787 = vadd.f32 0.0, %v6786
    %v6788 = vpop.f32.mrb[0].mxu0
    %v6789 = vpop.f32.mrb[0].mxu0
    %v6790 = vadd.f32 0.0, %v6789
    %v6791 = vpop.f32.mrb[0].mxu0
    %6792 = vmatprep.mubr.bf16.mxu0 %v6677
    %6793 = vmatmul.mubr.bf16.gmra.mrb[0].mxu0 %v6676
    %v6794 = vpop.f32.mrb[0].mxu0
    %v6795 = vadd.f32 0.0, %v6794
    %v6796 = vpop.f32.mrb[0].mxu0
    %v6797 = vpop.f32.mrb[0].mxu0
    %v6798 = vadd.f32 0.0, %v6797
    %v6799 = vpop.f32.mrb[0].mxu0
    %6800 = vmatprep.mubr.bf16.mxu0 %v6681
    %6801 = vmatmul.mubr.bf16.gmra.mrb[0].mxu0 %v6680
    %v6802 = vpop.f32.mrb[0].mxu0
    %v6803 = vadd.f32 0.0, %v6802
    %v6804 = vpop.f32.mrb[0].mxu0
    %v6805 = vpop.f32.mrb[0].mxu0
    %v6806 = vadd.f32 0.0, %v6805
    %v6807 = vpop.f32.mrb[0].mxu0
    %6808 = vmatprep.mubr.bf16.mxu0 %v6685
    %6809 = vmatmul.mubr.bf16.gmra.mrb[0].mxu0 %v6684
    %v6810 = vpop.f32.mrb[0].mxu0
    %v6811 = vadd.f32 0.0, %v6810
    %v6812 = vpop.f32.mrb[0].mxu0
    %v6813 = vpop.f32.mrb[0].mxu0
    %v6814 = vadd.f32 0.0, %v6813
    %v6815 = vpop.f32.mrb[0].mxu0
    %6816 = vdwg.mxu0
    %6817 = vmatprep.subr.bf16.mxu0 0
    %6818 = vmatpush1.bf16.msra.mxu0 %v1377
    %6819 = vmatprep.subr.bf16.mxu0 0
    %6820 = vmatpush1.bf16.msra.mxu0 %v1378
    %6821 = vmatprep.subr.bf16.mxu0 0
    %6822 = vmatpush1.bf16.msra.mxu0 %v1379
    %6823 = vmatprep.subr.bf16.mxu0 0
    %6824 = vmatpush1.bf16.msra.mxu0 %v1380
    %6825 = vmatprep.subr.bf16.mxu0 0
    %6826 = vmatpush1.bf16.msra.mxu0 %v1381
    %6827 = vmatprep.subr.bf16.mxu0 0
    %6828 = vmatpush1.bf16.msra.mxu0 %v1382
    %6829 = vmatprep.subr.bf16.mxu0 0
    %6830 = vmatpush1.bf16.msra.mxu0 %v1383
    %6831 = vmatprep.subr.bf16.mxu0 0
    %6832 = vmatpush1.bf16.msra.mxu0 %v1384
    %6833 = vmatprep.subr.bf16.mxu0 0
    %6834 = vmatpush1.bf16.msra.mxu0 %v1385
    %6835 = vmatprep.subr.bf16.mxu0 0
    %6836 = vmatpush1.bf16.msra.mxu0 %v1386
    %6837 = vmatprep.subr.bf16.mxu0 0
    %6838 = vmatpush1.bf16.msra.mxu0 %v1387
    %6839 = vmatprep.subr.bf16.mxu0 0
    %6840 = vmatpush1.bf16.msra.mxu0 %v1388
    %6841 = vmatprep.subr.bf16.mxu0 0
    %6842 = vmatpush1.bf16.msra.mxu0 %v1389
    %6843 = vmatprep.subr.bf16.mxu0 0
    %6844 = vmatpush1.bf16.msra.mxu0 %v1390
    %6845 = vmatprep.subr.bf16.mxu0 0
    %6846 = vmatpush1.bf16.msra.mxu0 %v1391
    %6847 = vmatprep.subr.bf16.mxu0 0
    %6848 = vmatpush1.bf16.msra.mxu0 %v1392
    %6849 = vmatprep.mubr.bf16.mxu0 %v6659
    %6850 = vmatmul.mubr.bf16.gmra.mrb[0].mxu0 %v6658
    %v6851 = vpop.f32.mrb[0].mxu0
    %v6852 = vadd.f32 %v6755, %v6851
    %v6853 = vpop.f32.mrb[0].mxu0
    %v6854 = vpop.f32.mrb[0].mxu0
    %v6855 = vadd.f32 %v6758, %v6854
    %v6856 = vpop.f32.mrb[0].mxu0
    %6857 = vmatprep.mubr.bf16.mxu0 %v6663
    %6858 = vmatmul.mubr.bf16.gmra.mrb[0].mxu0 %v6662
    %v6859 = vpop.f32.mrb[0].mxu0
    %v6860 = vadd.f32 %v6763, %v6859
    %v6861 = vpop.f32.mrb[0].mxu0
    %v6862 = vpop.f32.mrb[0].mxu0
    %v6863 = vadd.f32 %v6766, %v6862
    %v6864 = vpop.f32.mrb[0].mxu0
    %6865 = vmatprep.mubr.bf16.mxu0 %v6667
    %6866 = vmatmul.mubr.bf16.gmra.mrb[0].mxu0 %v6666
    %v6867 = vpop.f32.mrb[0].mxu0
    %v6868 = vadd.f32 %v6771, %v6867
    %v6869 = vpop.f32.mrb[0].mxu0
    %v6870 = vpop.f32.mrb[0].mxu0
    %v6871 = vadd.f32 %v6774, %v6870
    %v6872 = vpop.f32.mrb[0].mxu0
    %6873 = vmatprep.mubr.bf16.mxu0 %v6671
    %6874 = vmatmul.mubr.bf16.gmra.mrb[0].mxu0 %v6670
    %v6875 = vpop.f32.mrb[0].mxu0
    %v6876 = vadd.f32 %v6779, %v6875
    %v6877 = vpop.f32.mrb[0].mxu0
    %v6878 = vpop.f32.mrb[0].mxu0
    %v6879 = vadd.f32 %v6782, %v6878
    %v6880 = vpop.f32.mrb[0].mxu0
    %6881 = vmatprep.mubr.bf16.mxu0 %v6675
    %6882 = vmatmul.mubr.bf16.gmra.mrb[0].mxu0 %v6674
    %v6883 = vpop.f32.mrb[0].mxu0
    %v6884 = vadd.f32 %v6787, %v6883
    %v6885 = vpop.f32.mrb[0].mxu0
    %v6886 = vpop.f32.mrb[0].mxu0
    %v6887 = vadd.f32 %v6790, %v6886
    %v6888 = vpop.f32.mrb[0].mxu0
    %6889 = vmatprep.mubr.bf16.mxu0 %v6679
    %6890 = vmatmul.mubr.bf16.gmra.mrb[0].mxu0 %v6678
    %v6891 = vpop.f32.mrb[0].mxu0
    %v6892 = vadd.f32 %v6795, %v6891
    %v6893 = vpop.f32.mrb[0].mxu0
    %v6894 = vpop.f32.mrb[0].mxu0
    %v6895 = vadd.f32 %v6798, %v6894
    %v6896 = vpop.f32.mrb[0].mxu0
    %6897 = vmatprep.mubr.bf16.mxu0 %v6683
    %6898 = vmatmul.mubr.bf16.gmra.mrb[0].mxu0 %v6682
    %v6899 = vpop.f32.mrb[0].mxu0
    %v6900 = vadd.f32 %v6803, %v6899
    %v6901 = vpop.f32.mrb[0].mxu0
    %v6902 = vpop.f32.mrb[0].mxu0
    %v6903 = vadd.f32 %v6806, %v6902
    %v6904 = vpop.f32.mrb[0].mxu0
    %6905 = vmatprep.mubr.bf16.mxu0 %v6687
    %6906 = vmatmul.mubr.bf16.gmra.mrb[0].mxu0 %v6686
    %v6907 = vpop.f32.mrb[0].mxu0
    %v6908 = vadd.f32 %v6811, %v6907
    %v6909 = vpop.f32.mrb[0].mxu0
    %v6910 = vpop.f32.mrb[0].mxu0
    %v6911 = vadd.f32 %v6814, %v6910
    %v6912 = vpop.f32.mrb[0].mxu0
    %6913 = vdwg.mxu0
    %v6914 = vpack.c.bf16 %v6855, %v6852
    %v6915 = vpack.c.bf16 %v6863, %v6860
    %v6916 = vpack.c.bf16 %v6871, %v6868
    %v6917 = vpack.c.bf16 %v6879, %v6876
    %v6918 = vpack.c.bf16 %v6887, %v6884
    %v6919 = vpack.c.bf16 %v6895, %v6892
    %v6920 = vpack.c.bf16 %v6903, %v6900
    %v6921 = vpack.c.bf16 %v6911, %v6908
    %s6922 = scalar_lea.vmem [#allocation8], 3584
    %v6923 = vld [vmem:[%s6922] sm:$0xff]
    %v6924 = vld [vmem:[%s6922 + $0x8] sm:$0xff]
    %v6925 = vld [vmem:[%s6922 + $0x10] sm:$0xff]
    %v6926 = vld [vmem:[%s6922 + $0x18] sm:$0xff]
    %v6927 = vld [vmem:[%s6922 + $0x20] sm:$0xff]
    %v6928 = vld [vmem:[%s6922 + $0x28] sm:$0xff]
    %v6929 = vld [vmem:[%s6922 + $0x30] sm:$0xff]
    %v6930 = vld [vmem:[%s6922 + $0x38] sm:$0xff]
    %v6931 = vld [vmem:[%s6922 + $0x40] sm:$0xff]
    %v6932 = vld [vmem:[%s6922 + $0x48] sm:$0xff]
    %v6933 = vld [vmem:[%s6922 + $0x50] sm:$0xff]
    %v6934 = vld [vmem:[%s6922 + $0x58] sm:$0xff]
    %v6935 = vld [vmem:[%s6922 + $0x60] sm:$0xff]
    %v6936 = vld [vmem:[%s6922 + $0x68] sm:$0xff]
    %v6937 = vld [vmem:[%s6922 + $0x70] sm:$0xff]
    %v6938 = vld [vmem:[%s6922 + $0x78] sm:$0xff]
    %v6939 = vld [vmem:[%s6922 + $0x80] sm:$0xff]
    %v6940 = vld [vmem:[%s6922 + $0x88] sm:$0xff]
    %v6941 = vld [vmem:[%s6922 + $0x90] sm:$0xff]
    %v6942 = vld [vmem:[%s6922 + $0x98] sm:$0xff]
    %v6943 = vld [vmem:[%s6922 + $0xa0] sm:$0xff]
    %v6944 = vld [vmem:[%s6922 + $0xa8] sm:$0xff]
    %v6945 = vld [vmem:[%s6922 + $0xb0] sm:$0xff]
    %v6946 = vld [vmem:[%s6922 + $0xb8] sm:$0xff]
    %v6947 = vld [vmem:[%s6922 + $0xc0] sm:$0xff]
    %v6948 = vld [vmem:[%s6922 + $0xc8] sm:$0xff]
    %v6949 = vld [vmem:[%s6922 + $0xd0] sm:$0xff]
    %v6950 = vld [vmem:[%s6922 + $0xd8] sm:$0xff]
    %v6951 = vld [vmem:[%s6922 + $0xe0] sm:$0xff]
    %v6952 = vld [vmem:[%s6922 + $0xe8] sm:$0xff]
    %v6953 = vld [vmem:[%s6922 + $0xf0] sm:$0xff]
    %v6954 = vld [vmem:[%s6922 + $0xf8] sm:$0xff]
    %v6987 = vunpack.c.l.b16 %v6923
    %v6988 = vunpack.c.h.b16 %v6923
    %v6989 = vunpack.c.l.b16 %v6924
    %v6990 = vunpack.c.h.b16 %v6924
    %v6991 = vunpack.c.l.b16 %v6925
    %v6992 = vunpack.c.h.b16 %v6925
    %v6993 = vunpack.c.l.b16 %v6926
    %v6994 = vunpack.c.h.b16 %v6926
    %v6995 = vunpack.c.l.b16 %v6927
    %v6996 = vunpack.c.h.b16 %v6927
    %v6997 = vunpack.c.l.b16 %v6928
    %v6998 = vunpack.c.h.b16 %v6928
    %v6999 = vunpack.c.l.b16 %v6929
    %v7000 = vunpack.c.h.b16 %v6929
    %v7001 = vunpack.c.l.b16 %v6930
    %v7002 = vunpack.c.h.b16 %v6930
    %v7003 = vunpack.c.l.b16 %v6931
    %v7004 = vunpack.c.h.b16 %v6931
    %v7005 = vunpack.c.l.b16 %v6932
    %v7006 = vunpack.c.h.b16 %v6932
    %v7007 = vunpack.c.l.b16 %v6933
    %v7008 = vunpack.c.h.b16 %v6933
    %v7009 = vunpack.c.l.b16 %v6934
    %v7010 = vunpack.c.h.b16 %v6934
    %v7011 = vunpack.c.l.b16 %v6935
    %v7012 = vunpack.c.h.b16 %v6935
    %v7013 = vunpack.c.l.b16 %v6936
    %v7014 = vunpack.c.h.b16 %v6936
    %v7015 = vunpack.c.l.b16 %v6937
    %v7016 = vunpack.c.h.b16 %v6937
    %v7017 = vunpack.c.l.b16 %v6938
    %v7018 = vunpack.c.h.b16 %v6938
    %v7019 = vunpack.c.l.b16 %v6939
    %v7020 = vunpack.c.h.b16 %v6939
    %v7021 = vunpack.c.l.b16 %v6940
    %v7022 = vunpack.c.h.b16 %v6940
    %v7023 = vunpack.c.l.b16 %v6941
    %v7024 = vunpack.c.h.b16 %v6941
    %v7025 = vunpack.c.l.b16 %v6942
    %v7026 = vunpack.c.h.b16 %v6942
    %v7027 = vunpack.c.l.b16 %v6943
    %v7028 = vunpack.c.h.b16 %v6943
    %v7029 = vunpack.c.l.b16 %v6944
    %v7030 = vunpack.c.h.b16 %v6944
    %v7031 = vunpack.c.l.b16 %v6945
    %v7032 = vunpack.c.h.b16 %v6945
    %v7033 = vunpack.c.l.b16 %v6946
    %v7034 = vunpack.c.h.b16 %v6946
    %v7035 = vunpack.c.l.b16 %v6947
    %v7036 = vunpack.c.h.b16 %v6947
    %v7037 = vunpack.c.l.b16 %v6948
    %v7038 = vunpack.c.h.b16 %v6948
    %v7039 = vunpack.c.l.b16 %v6949
    %v7040 = vunpack.c.h.b16 %v6949
    %v7041 = vunpack.c.l.b16 %v6950
    %v7042 = vunpack.c.h.b16 %v6950
    %v7043 = vunpack.c.l.b16 %v6951
    %v7044 = vunpack.c.h.b16 %v6951
    %v7045 = vunpack.c.l.b16 %v6952
    %v7046 = vunpack.c.h.b16 %v6952
    %v7047 = vunpack.c.l.b16 %v6953
    %v7048 = vunpack.c.h.b16 %v6953
    %v7049 = vunpack.c.l.b16 %v6954
    %v7050 = vunpack.c.h.b16 %v6954
    %v7051 = vpack.c.b16 %v6991, %v6987
    %v7052 = vpack.c.b16 %v6992, %v6988
    %v7053 = vpack.c.b16 %v6993, %v6989
    %v7054 = vpack.c.b16 %v6994, %v6990
    %v7055 = vpack.c.b16 %v6999, %v6995
    %v7056 = vpack.c.b16 %v7000, %v6996
    %v7057 = vpack.c.b16 %v7001, %v6997
    %v7058 = vpack.c.b16 %v7002, %v6998
    %v7059 = vpack.c.b16 %v7007, %v7003
    %v7060 = vpack.c.b16 %v7008, %v7004
    %v7061 = vpack.c.b16 %v7009, %v7005
    %v7062 = vpack.c.b16 %v7010, %v7006
    %v7063 = vpack.c.b16 %v7015, %v7011
    %v7064 = vpack.c.b16 %v7016, %v7012
    %v7065 = vpack.c.b16 %v7017, %v7013
    %v7066 = vpack.c.b16 %v7018, %v7014
    %v7067 = vpack.c.b16 %v7023, %v7019
    %v7068 = vpack.c.b16 %v7024, %v7020
    %v7069 = vpack.c.b16 %v7025, %v7021
    %v7070 = vpack.c.b16 %v7026, %v7022
    %v7071 = vpack.c.b16 %v7031, %v7027
    %v7072 = vpack.c.b16 %v7032, %v7028
    %v7073 = vpack.c.b16 %v7033, %v7029
    %v7074 = vpack.c.b16 %v7034, %v7030
    %v7075 = vpack.c.b16 %v7039, %v7035
    %v7076 = vpack.c.b16 %v7040, %v7036
    %v7077 = vpack.c.b16 %v7041, %v7037
    %v7078 = vpack.c.b16 %v7042, %v7038
    %v7079 = vpack.c.b16 %v7047, %v7043
    %v7080 = vpack.c.b16 %v7048, %v7044
    %v7081 = vpack.c.b16 %v7049, %v7045
    %v7082 = vpack.c.b16 %v7050, %v7046
    %7115 = vmatprep.subr.bf16.mxu0 0
    %7116 = vmatpush1.bf16.msra.mxu0 %v1361
    %7117 = vmatprep.subr.bf16.mxu0 0
    %7118 = vmatpush1.bf16.msra.mxu0 %v1362
    %7119 = vmatprep.subr.bf16.mxu0 0
    %7120 = vmatpush1.bf16.msra.mxu0 %v1363
    %7121 = vmatprep.subr.bf16.mxu0 0
    %7122 = vmatpush1.bf16.msra.mxu0 %v1364
    %7123 = vmatprep.subr.bf16.mxu0 0
    %7124 = vmatpush1.bf16.msra.mxu0 %v1365
    %7125 = vmatprep.subr.bf16.mxu0 0
    %7126 = vmatpush1.bf16.msra.mxu0 %v1366
    %7127 = vmatprep.subr.bf16.mxu0 0
    %7128 = vmatpush1.bf16.msra.mxu0 %v1367
    %7129 = vmatprep.subr.bf16.mxu0 0
    %7130 = vmatpush1.bf16.msra.mxu0 %v1368
    %7131 = vmatprep.subr.bf16.mxu0 0
    %7132 = vmatpush1.bf16.msra.mxu0 %v1369
    %7133 = vmatprep.subr.bf16.mxu0 0
    %7134 = vmatpush1.bf16.msra.mxu0 %v1370
    %7135 = vmatprep.subr.bf16.mxu0 0
    %7136 = vmatpush1.bf16.msra.mxu0 %v1371
    %7137 = vmatprep.subr.bf16.mxu0 0
    %7138 = vmatpush1.bf16.msra.mxu0 %v1372
    %7139 = vmatprep.subr.bf16.mxu0 0
    %7140 = vmatpush1.bf16.msra.mxu0 %v1373
    %7141 = vmatprep.subr.bf16.mxu0 0
    %7142 = vmatpush1.bf16.msra.mxu0 %v1374
    %7143 = vmatprep.subr.bf16.mxu0 0
    %7144 = vmatpush1.bf16.msra.mxu0 %v1375
    %7145 = vmatprep.subr.bf16.mxu0 0
    %7146 = vmatpush1.bf16.msra.mxu0 %v1376
    %7147 = vmatprep.mubr.bf16.mxu0 %v7052
    %7148 = vmatmul.mubr.bf16.gmra.mrb[0].mxu0 %v7051
    %v7149 = vpop.f32.mrb[0].mxu0
    %v7150 = vadd.f32 0.0, %v7149
    %v7151 = vpop.f32.mrb[0].mxu0
    %v7152 = vpop.f32.mrb[0].mxu0
    %v7153 = vadd.f32 0.0, %v7152
    %v7154 = vpop.f32.mrb[0].mxu0
    %7155 = vmatprep.mubr.bf16.mxu0 %v7056
    %7156 = vmatmul.mubr.bf16.gmra.mrb[0].mxu0 %v7055
    %v7157 = vpop.f32.mrb[0].mxu0
    %v7158 = vadd.f32 0.0, %v7157
    %v7159 = vpop.f32.mrb[0].mxu0
    %v7160 = vpop.f32.mrb[0].mxu0
    %v7161 = vadd.f32 0.0, %v7160
    %v7162 = vpop.f32.mrb[0].mxu0
    %7163 = vmatprep.mubr.bf16.mxu0 %v7060
    %7164 = vmatmul.mubr.bf16.gmra.mrb[0].mxu0 %v7059
    %v7165 = vpop.f32.mrb[0].mxu0
    %v7166 = vadd.f32 0.0, %v7165
    %v7167 = vpop.f32.mrb[0].mxu0
    %v7168 = vpop.f32.mrb[0].mxu0
    %v7169 = vadd.f32 0.0, %v7168
    %v7170 = vpop.f32.mrb[0].mxu0
    %7171 = vmatprep.mubr.bf16.mxu0 %v7064
    %7172 = vmatmul.mubr.bf16.gmra.mrb[0].mxu0 %v7063
    %v7173 = vpop.f32.mrb[0].mxu0
    %v7174 = vadd.f32 0.0, %v7173
    %v7175 = vpop.f32.mrb[0].mxu0
    %v7176 = vpop.f32.mrb[0].mxu0
    %v7177 = vadd.f32 0.0, %v7176
    %v7178 = vpop.f32.mrb[0].mxu0
    %7179 = vmatprep.mubr.bf16.mxu0 %v7068
    %7180 = vmatmul.mubr.bf16.gmra.mrb[0].mxu0 %v7067
    %v7181 = vpop.f32.mrb[0].mxu0
    %v7182 = vadd.f32 0.0, %v7181
    %v7183 = vpop.f32.mrb[0].mxu0
    %v7184 = vpop.f32.mrb[0].mxu0
    %v7185 = vadd.f32 0.0, %v7184
    %v7186 = vpop.f32.mrb[0].mxu0
    %7187 = vmatprep.mubr.bf16.mxu0 %v7072
    %7188 = vmatmul.mubr.bf16.gmra.mrb[0].mxu0 %v7071
    %v7189 = vpop.f32.mrb[0].mxu0
    %v7190 = vadd.f32 0.0, %v7189
    %v7191 = vpop.f32.mrb[0].mxu0
    %v7192 = vpop.f32.mrb[0].mxu0
    %v7193 = vadd.f32 0.0, %v7192
    %v7194 = vpop.f32.mrb[0].mxu0
    %7195 = vmatprep.mubr.bf16.mxu0 %v7076
    %7196 = vmatmul.mubr.bf16.gmra.mrb[0].mxu0 %v7075
    %v7197 = vpop.f32.mrb[0].mxu0
    %v7198 = vadd.f32 0.0, %v7197
    %v7199 = vpop.f32.mrb[0].mxu0
    %v7200 = vpop.f32.mrb[0].mxu0
    %v7201 = vadd.f32 0.0, %v7200
    %v7202 = vpop.f32.mrb[0].mxu0
    %7203 = vmatprep.mubr.bf16.mxu0 %v7080
    %7204 = vmatmul.mubr.bf16.gmra.mrb[0].mxu0 %v7079
    %v7205 = vpop.f32.mrb[0].mxu0
    %v7206 = vadd.f32 0.0, %v7205
    %v7207 = vpop.f32.mrb[0].mxu0
    %v7208 = vpop.f32.mrb[0].mxu0
    %v7209 = vadd.f32 0.0, %v7208
    %v7210 = vpop.f32.mrb[0].mxu0
    %7211 = vdwg.mxu0
    %7212 = vmatprep.subr.bf16.mxu0 0
    %7213 = vmatpush1.bf16.msra.mxu0 %v1377
    %7214 = vmatprep.subr.bf16.mxu0 0
    %7215 = vmatpush1.bf16.msra.mxu0 %v1378
    %7216 = vmatprep.subr.bf16.mxu0 0
    %7217 = vmatpush1.bf16.msra.mxu0 %v1379
    %7218 = vmatprep.subr.bf16.mxu0 0
    %7219 = vmatpush1.bf16.msra.mxu0 %v1380
    %7220 = vmatprep.subr.bf16.mxu0 0
    %7221 = vmatpush1.bf16.msra.mxu0 %v1381
    %7222 = vmatprep.subr.bf16.mxu0 0
    %7223 = vmatpush1.bf16.msra.mxu0 %v1382
    %7224 = vmatprep.subr.bf16.mxu0 0
    %7225 = vmatpush1.bf16.msra.mxu0 %v1383
    %7226 = vmatprep.subr.bf16.mxu0 0
    %7227 = vmatpush1.bf16.msra.mxu0 %v1384
    %7228 = vmatprep.subr.bf16.mxu0 0
    %7229 = vmatpush1.bf16.msra.mxu0 %v1385
    %7230 = vmatprep.subr.bf16.mxu0 0
    %7231 = vmatpush1.bf16.msra.mxu0 %v1386
    %7232 = vmatprep.subr.bf16.mxu0 0
    %7233 = vmatpush1.bf16.msra.mxu0 %v1387
    %7234 = vmatprep.subr.bf16.mxu0 0
    %7235 = vmatpush1.bf16.msra.mxu0 %v1388
    %7236 = vmatprep.subr.bf16.mxu0 0
    %7237 = vmatpush1.bf16.msra.mxu0 %v1389
    %7238 = vmatprep.subr.bf16.mxu0 0
    %7239 = vmatpush1.bf16.msra.mxu0 %v1390
    %7240 = vmatprep.subr.bf16.mxu0 0
    %7241 = vmatpush1.bf16.msra.mxu0 %v1391
    %7242 = vmatprep.subr.bf16.mxu0 0
    %7243 = vmatpush1.bf16.msra.mxu0 %v1392
    %7244 = vmatprep.mubr.bf16.mxu0 %v7054
    %7245 = vmatmul.mubr.bf16.gmra.mrb[0].mxu0 %v7053
    %v7246 = vpop.f32.mrb[0].mxu0
    %v7247 = vadd.f32 %v7150, %v7246
    %v7248 = vpop.f32.mrb[0].mxu0
    %v7249 = vpop.f32.mrb[0].mxu0
    %v7250 = vadd.f32 %v7153, %v7249
    %v7251 = vpop.f32.mrb[0].mxu0
    %7252 = vmatprep.mubr.bf16.mxu0 %v7058
    %7253 = vmatmul.mubr.bf16.gmra.mrb[0].mxu0 %v7057
    %v7254 = vpop.f32.mrb[0].mxu0
    %v7255 = vadd.f32 %v7158, %v7254
    %v7256 = vpop.f32.mrb[0].mxu0
    %v7257 = vpop.f32.mrb[0].mxu0
    %v7258 = vadd.f32 %v7161, %v7257
    %v7259 = vpop.f32.mrb[0].mxu0
    %7260 = vmatprep.mubr.bf16.mxu0 %v7062
    %7261 = vmatmul.mubr.bf16.gmra.mrb[0].mxu0 %v7061
    %v7262 = vpop.f32.mrb[0].mxu0
    %v7263 = vadd.f32 %v7166, %v7262
    %v7264 = vpop.f32.mrb[0].mxu0
    %v7265 = vpop.f32.mrb[0].mxu0
    %v7266 = vadd.f32 %v7169, %v7265
    %v7267 = vpop.f32.mrb[0].mxu0
    %7268 = vmatprep.mubr.bf16.mxu0 %v7066
    %7269 = vmatmul.mubr.bf16.gmra.mrb[0].mxu0 %v7065
    %v7270 = vpop.f32.mrb[0].mxu0
    %v7271 = vadd.f32 %v7174, %v7270
    %v7272 = vpop.f32.mrb[0].mxu0
    %v7273 = vpop.f32.mrb[0].mxu0
    %v7274 = vadd.f32 %v7177, %v7273
    %v7275 = vpop.f32.mrb[0].mxu0
    %7276 = vmatprep.mubr.bf16.mxu0 %v7070
    %7277 = vmatmul.mubr.bf16.gmra.mrb[0].mxu0 %v7069
    %v7278 = vpop.f32.mrb[0].mxu0
    %v7279 = vadd.f32 %v7182, %v7278
    %v7280 = vpop.f32.mrb[0].mxu0
    %v7281 = vpop.f32.mrb[0].mxu0
    %v7282 = vadd.f32 %v7185, %v7281
    %v7283 = vpop.f32.mrb[0].mxu0
    %7284 = vmatprep.mubr.bf16.mxu0 %v7074
    %7285 = vmatmul.mubr.bf16.gmra.mrb[0].mxu0 %v7073
    %v7286 = vpop.f32.mrb[0].mxu0
    %v7287 = vadd.f32 %v7190, %v7286
    %v7288 = vpop.f32.mrb[0].mxu0
    %v7289 = vpop.f32.mrb[0].mxu0
    %v7290 = vadd.f32 %v7193, %v7289
    %v7291 = vpop.f32.mrb[0].mxu0
    %7292 = vmatprep.mubr.bf16.mxu0 %v7078
    %7293 = vmatmul.mubr.bf16.gmra.mrb[0].mxu0 %v7077
    %v7294 = vpop.f32.mrb[0].mxu0
    %v7295 = vadd.f32 %v7198, %v7294
    %v7296 = vpop.f32.mrb[0].mxu0
    %v7297 = vpop.f32.mrb[0].mxu0
    %v7298 = vadd.f32 %v7201, %v7297
    %v7299 = vpop.f32.mrb[0].mxu0
    %7300 = vmatprep.mubr.bf16.mxu0 %v7082
    %7301 = vmatmul.mubr.bf16.gmra.mrb[0].mxu0 %v7081
    %v7302 = vpop.f32.mrb[0].mxu0
    %v7303 = vadd.f32 %v7206, %v7302
    %v7304 = vpop.f32.mrb[0].mxu0
    %v7305 = vpop.f32.mrb[0].mxu0
    %v7306 = vadd.f32 %v7209, %v7305
    %v7307 = vpop.f32.mrb[0].mxu0
    %7308 = vdwg.mxu0
    %v7309 = vpack.c.bf16 %v7250, %v7247
    %v7310 = vpack.c.bf16 %v7258, %v7255
    %v7311 = vpack.c.bf16 %v7266, %v7263
    %v7312 = vpack.c.bf16 %v7274, %v7271
    %v7313 = vpack.c.bf16 %v7282, %v7279
    %v7314 = vpack.c.bf16 %v7290, %v7287
    %v7315 = vpack.c.bf16 %v7298, %v7295
    %v7316 = vpack.c.bf16 %v7306, %v7303
    %s7317 = scalar_lea.vmem [#allocation8], 3840
    %v7318 = vld [vmem:[%s7317] sm:$0xff]
    %v7319 = vld [vmem:[%s7317 + $0x8] sm:$0xff]
    %v7320 = vld [vmem:[%s7317 + $0x10] sm:$0xff]
    %v7321 = vld [vmem:[%s7317 + $0x18] sm:$0xff]
    %v7322 = vld [vmem:[%s7317 + $0x20] sm:$0xff]
    %v7323 = vld [vmem:[%s7317 + $0x28] sm:$0xff]
    %v7324 = vld [vmem:[%s7317 + $0x30] sm:$0xff]
    %v7325 = vld [vmem:[%s7317 + $0x38] sm:$0xff]
    %v7326 = vld [vmem:[%s7317 + $0x40] sm:$0xff]
    %v7327 = vld [vmem:[%s7317 + $0x48] sm:$0xff]
    %v7328 = vld [vmem:[%s7317 + $0x50] sm:$0xff]
    %v7329 = vld [vmem:[%s7317 + $0x58] sm:$0xff]
    %v7330 = vld [vmem:[%s7317 + $0x60] sm:$0xff]
    %v7331 = vld [vmem:[%s7317 + $0x68] sm:$0xff]
    %v7332 = vld [vmem:[%s7317 + $0x70] sm:$0xff]
    %v7333 = vld [vmem:[%s7317 + $0x78] sm:$0xff]
    %v7334 = vld [vmem:[%s7317 + $0x80] sm:$0xff]
    %v7335 = vld [vmem:[%s7317 + $0x88] sm:$0xff]
    %v7336 = vld [vmem:[%s7317 + $0x90] sm:$0xff]
    %v7337 = vld [vmem:[%s7317 + $0x98] sm:$0xff]
    %v7338 = vld [vmem:[%s7317 + $0xa0] sm:$0xff]
    %v7339 = vld [vmem:[%s7317 + $0xa8] sm:$0xff]
    %v7340 = vld [vmem:[%s7317 + $0xb0] sm:$0xff]
    %v7341 = vld [vmem:[%s7317 + $0xb8] sm:$0xff]
    %v7342 = vld [vmem:[%s7317 + $0xc0] sm:$0xff]
    %v7343 = vld [vmem:[%s7317 + $0xc8] sm:$0xff]
    %v7344 = vld [vmem:[%s7317 + $0xd0] sm:$0xff]
    %v7345 = vld [vmem:[%s7317 + $0xd8] sm:$0xff]
    %v7346 = vld [vmem:[%s7317 + $0xe0] sm:$0xff]
    %v7347 = vld [vmem:[%s7317 + $0xe8] sm:$0xff]
    %v7348 = vld [vmem:[%s7317 + $0xf0] sm:$0xff]
    %v7349 = vld [vmem:[%s7317 + $0xf8] sm:$0xff]
    %v7382 = vunpack.c.l.b16 %v7318
    %v7383 = vunpack.c.h.b16 %v7318
    %v7384 = vunpack.c.l.b16 %v7319
    %v7385 = vunpack.c.h.b16 %v7319
    %v7386 = vunpack.c.l.b16 %v7320
    %v7387 = vunpack.c.h.b16 %v7320
    %v7388 = vunpack.c.l.b16 %v7321
    %v7389 = vunpack.c.h.b16 %v7321
    %v7390 = vunpack.c.l.b16 %v7322
    %v7391 = vunpack.c.h.b16 %v7322
    %v7392 = vunpack.c.l.b16 %v7323
    %v7393 = vunpack.c.h.b16 %v7323
    %v7394 = vunpack.c.l.b16 %v7324
    %v7395 = vunpack.c.h.b16 %v7324
    %v7396 = vunpack.c.l.b16 %v7325
    %v7397 = vunpack.c.h.b16 %v7325
    %v7398 = vunpack.c.l.b16 %v7326
    %v7399 = vunpack.c.h.b16 %v7326
    %v7400 = vunpack.c.l.b16 %v7327
    %v7401 = vunpack.c.h.b16 %v7327
    %v7402 = vunpack.c.l.b16 %v7328
    %v7403 = vunpack.c.h.b16 %v7328
    %v7404 = vunpack.c.l.b16 %v7329
    %v7405 = vunpack.c.h.b16 %v7329
    %v7406 = vunpack.c.l.b16 %v7330
    %v7407 = vunpack.c.h.b16 %v7330
    %v7408 = vunpack.c.l.b16 %v7331
    %v7409 = vunpack.c.h.b16 %v7331
    %v7410 = vunpack.c.l.b16 %v7332
    %v7411 = vunpack.c.h.b16 %v7332
    %v7412 = vunpack.c.l.b16 %v7333
    %v7413 = vunpack.c.h.b16 %v7333
    %v7414 = vunpack.c.l.b16 %v7334
    %v7415 = vunpack.c.h.b16 %v7334
    %v7416 = vunpack.c.l.b16 %v7335
    %v7417 = vunpack.c.h.b16 %v7335
    %v7418 = vunpack.c.l.b16 %v7336
    %v7419 = vunpack.c.h.b16 %v7336
    %v7420 = vunpack.c.l.b16 %v7337
    %v7421 = vunpack.c.h.b16 %v7337
    %v7422 = vunpack.c.l.b16 %v7338
    %v7423 = vunpack.c.h.b16 %v7338
    %v7424 = vunpack.c.l.b16 %v7339
    %v7425 = vunpack.c.h.b16 %v7339
    %v7426 = vunpack.c.l.b16 %v7340
    %v7427 = vunpack.c.h.b16 %v7340
    %v7428 = vunpack.c.l.b16 %v7341
    %v7429 = vunpack.c.h.b16 %v7341
    %v7430 = vunpack.c.l.b16 %v7342
    %v7431 = vunpack.c.h.b16 %v7342
    %v7432 = vunpack.c.l.b16 %v7343
    %v7433 = vunpack.c.h.b16 %v7343
    %v7434 = vunpack.c.l.b16 %v7344
    %v7435 = vunpack.c.h.b16 %v7344
    %v7436 = vunpack.c.l.b16 %v7345
    %v7437 = vunpack.c.h.b16 %v7345
    %v7438 = vunpack.c.l.b16 %v7346
    %v7439 = vunpack.c.h.b16 %v7346
    %v7440 = vunpack.c.l.b16 %v7347
    %v7441 = vunpack.c.h.b16 %v7347
    %v7442 = vunpack.c.l.b16 %v7348
    %v7443 = vunpack.c.h.b16 %v7348
    %v7444 = vunpack.c.l.b16 %v7349
    %v7445 = vunpack.c.h.b16 %v7349
    %v7446 = vpack.c.b16 %v7386, %v7382
    %v7447 = vpack.c.b16 %v7387, %v7383
    %v7448 = vpack.c.b16 %v7388, %v7384
    %v7449 = vpack.c.b16 %v7389, %v7385
    %v7450 = vpack.c.b16 %v7394, %v7390
    %v7451 = vpack.c.b16 %v7395, %v7391
    %v7452 = vpack.c.b16 %v7396, %v7392
    %v7453 = vpack.c.b16 %v7397, %v7393
    %v7454 = vpack.c.b16 %v7402, %v7398
    %v7455 = vpack.c.b16 %v7403, %v7399
    %v7456 = vpack.c.b16 %v7404, %v7400
    %v7457 = vpack.c.b16 %v7405, %v7401
    %v7458 = vpack.c.b16 %v7410, %v7406
    %v7459 = vpack.c.b16 %v7411, %v7407
    %v7460 = vpack.c.b16 %v7412, %v7408
    %v7461 = vpack.c.b16 %v7413, %v7409
    %v7462 = vpack.c.b16 %v7418, %v7414
    %v7463 = vpack.c.b16 %v7419, %v7415
    %v7464 = vpack.c.b16 %v7420, %v7416
    %v7465 = vpack.c.b16 %v7421, %v7417
    %v7466 = vpack.c.b16 %v7426, %v7422
    %v7467 = vpack.c.b16 %v7427, %v7423
    %v7468 = vpack.c.b16 %v7428, %v7424
    %v7469 = vpack.c.b16 %v7429, %v7425
    %v7470 = vpack.c.b16 %v7434, %v7430
    %v7471 = vpack.c.b16 %v7435, %v7431
    %v7472 = vpack.c.b16 %v7436, %v7432
    %v7473 = vpack.c.b16 %v7437, %v7433
    %v7474 = vpack.c.b16 %v7442, %v7438
    %v7475 = vpack.c.b16 %v7443, %v7439
    %v7476 = vpack.c.b16 %v7444, %v7440
    %v7477 = vpack.c.b16 %v7445, %v7441
    %7510 = vmatprep.subr.bf16.mxu0 0
    %7511 = vmatpush1.bf16.msra.mxu0 %v1361
    %7512 = vmatprep.subr.bf16.mxu0 0
    %7513 = vmatpush1.bf16.msra.mxu0 %v1362
    %7514 = vmatprep.subr.bf16.mxu0 0
    %7515 = vmatpush1.bf16.msra.mxu0 %v1363
    %7516 = vmatprep.subr.bf16.mxu0 0
    %7517 = vmatpush1.bf16.msra.mxu0 %v1364
    %7518 = vmatprep.subr.bf16.mxu0 0
    %7519 = vmatpush1.bf16.msra.mxu0 %v1365
    %7520 = vmatprep.subr.bf16.mxu0 0
    %7521 = vmatpush1.bf16.msra.mxu0 %v1366
    %7522 = vmatprep.subr.bf16.mxu0 0
    %7523 = vmatpush1.bf16.msra.mxu0 %v1367
    %7524 = vmatprep.subr.bf16.mxu0 0
    %7525 = vmatpush1.bf16.msra.mxu0 %v1368
    %7526 = vmatprep.subr.bf16.mxu0 0
    %7527 = vmatpush1.bf16.msra.mxu0 %v1369
    %7528 = vmatprep.subr.bf16.mxu0 0
    %7529 = vmatpush1.bf16.msra.mxu0 %v1370
    %7530 = vmatprep.subr.bf16.mxu0 0
    %7531 = vmatpush1.bf16.msra.mxu0 %v1371
    %7532 = vmatprep.subr.bf16.mxu0 0
    %7533 = vmatpush1.bf16.msra.mxu0 %v1372
    %7534 = vmatprep.subr.bf16.mxu0 0
    %7535 = vmatpush1.bf16.msra.mxu0 %v1373
    %7536 = vmatprep.subr.bf16.mxu0 0
    %7537 = vmatpush1.bf16.msra.mxu0 %v1374
    %7538 = vmatprep.subr.bf16.mxu0 0
    %7539 = vmatpush1.bf16.msra.mxu0 %v1375
    %7540 = vmatprep.subr.bf16.mxu0 0
    %7541 = vmatpush1.bf16.msra.mxu0 %v1376
    %7542 = vmatprep.mubr.bf16.mxu0 %v7447
    %7543 = vmatmul.mubr.bf16.gmra.mrb[0].mxu0 %v7446
    %v7544 = vpop.f32.mrb[0].mxu0
    %v7545 = vadd.f32 0.0, %v7544
    %v7546 = vpop.f32.mrb[0].mxu0
    %v7547 = vpop.f32.mrb[0].mxu0
    %v7548 = vadd.f32 0.0, %v7547
    %v7549 = vpop.f32.mrb[0].mxu0
    %7550 = vmatprep.mubr.bf16.mxu0 %v7451
    %7551 = vmatmul.mubr.bf16.gmra.mrb[0].mxu0 %v7450
    %v7552 = vpop.f32.mrb[0].mxu0
    %v7553 = vadd.f32 0.0, %v7552
    %v7554 = vpop.f32.mrb[0].mxu0
    %v7555 = vpop.f32.mrb[0].mxu0
    %v7556 = vadd.f32 0.0, %v7555
    %v7557 = vpop.f32.mrb[0].mxu0
    %7558 = vmatprep.mubr.bf16.mxu0 %v7455
    %7559 = vmatmul.mubr.bf16.gmra.mrb[0].mxu0 %v7454
    %v7560 = vpop.f32.mrb[0].mxu0
    %v7561 = vadd.f32 0.0, %v7560
    %v7562 = vpop.f32.mrb[0].mxu0
    %v7563 = vpop.f32.mrb[0].mxu0
    %v7564 = vadd.f32 0.0, %v7563
    %v7565 = vpop.f32.mrb[0].mxu0
    %7566 = vmatprep.mubr.bf16.mxu0 %v7459
    %7567 = vmatmul.mubr.bf16.gmra.mrb[0].mxu0 %v7458
    %v7568 = vpop.f32.mrb[0].mxu0
    %v7569 = vadd.f32 0.0, %v7568
    %v7570 = vpop.f32.mrb[0].mxu0
    %v7571 = vpop.f32.mrb[0].mxu0
    %v7572 = vadd.f32 0.0, %v7571
    %v7573 = vpop.f32.mrb[0].mxu0
    %7574 = vmatprep.mubr.bf16.mxu0 %v7463
    %7575 = vmatmul.mubr.bf16.gmra.mrb[0].mxu0 %v7462
    %v7576 = vpop.f32.mrb[0].mxu0
    %v7577 = vadd.f32 0.0, %v7576
    %v7578 = vpop.f32.mrb[0].mxu0
    %v7579 = vpop.f32.mrb[0].mxu0
    %v7580 = vadd.f32 0.0, %v7579
    %v7581 = vpop.f32.mrb[0].mxu0
    %7582 = vmatprep.mubr.bf16.mxu0 %v7467
    %7583 = vmatmul.mubr.bf16.gmra.mrb[0].mxu0 %v7466
    %v7584 = vpop.f32.mrb[0].mxu0
    %v7585 = vadd.f32 0.0, %v7584
    %v7586 = vpop.f32.mrb[0].mxu0
    %v7587 = vpop.f32.mrb[0].mxu0
    %v7588 = vadd.f32 0.0, %v7587
    %v7589 = vpop.f32.mrb[0].mxu0
    %7590 = vmatprep.mubr.bf16.mxu0 %v7471
    %7591 = vmatmul.mubr.bf16.gmra.mrb[0].mxu0 %v7470
    %v7592 = vpop.f32.mrb[0].mxu0
    %v7593 = vadd.f32 0.0, %v7592
    %v7594 = vpop.f32.mrb[0].mxu0
    %v7595 = vpop.f32.mrb[0].mxu0
    %v7596 = vadd.f32 0.0, %v7595
    %v7597 = vpop.f32.mrb[0].mxu0
    %7598 = vmatprep.mubr.bf16.mxu0 %v7475
    %7599 = vmatmul.mubr.bf16.gmra.mrb[0].mxu0 %v7474
    %v7600 = vpop.f32.mrb[0].mxu0
    %v7601 = vadd.f32 0.0, %v7600
    %v7602 = vpop.f32.mrb[0].mxu0
    %v7603 = vpop.f32.mrb[0].mxu0
    %v7604 = vadd.f32 0.0, %v7603
    %v7605 = vpop.f32.mrb[0].mxu0
    %7606 = vdwg.mxu0
    %7607 = vmatprep.subr.bf16.mxu0 0
    %7608 = vmatpush1.bf16.msra.mxu0 %v1377
    %7609 = vmatprep.subr.bf16.mxu0 0
    %7610 = vmatpush1.bf16.msra.mxu0 %v1378
    %7611 = vmatprep.subr.bf16.mxu0 0
    %7612 = vmatpush1.bf16.msra.mxu0 %v1379
    %7613 = vmatprep.subr.bf16.mxu0 0
    %7614 = vmatpush1.bf16.msra.mxu0 %v1380
    %7615 = vmatprep.subr.bf16.mxu0 0
    %7616 = vmatpush1.bf16.msra.mxu0 %v1381
    %7617 = vmatprep.subr.bf16.mxu0 0
    %7618 = vmatpush1.bf16.msra.mxu0 %v1382
    %7619 = vmatprep.subr.bf16.mxu0 0
    %7620 = vmatpush1.bf16.msra.mxu0 %v1383
    %7621 = vmatprep.subr.bf16.mxu0 0
    %7622 = vmatpush1.bf16.msra.mxu0 %v1384
    %7623 = vmatprep.subr.bf16.mxu0 0
    %7624 = vmatpush1.bf16.msra.mxu0 %v1385
    %7625 = vmatprep.subr.bf16.mxu0 0
    %7626 = vmatpush1.bf16.msra.mxu0 %v1386
    %7627 = vmatprep.subr.bf16.mxu0 0
    %7628 = vmatpush1.bf16.msra.mxu0 %v1387
    %7629 = vmatprep.subr.bf16.mxu0 0
    %7630 = vmatpush1.bf16.msra.mxu0 %v1388
    %7631 = vmatprep.subr.bf16.mxu0 0
    %7632 = vmatpush1.bf16.msra.mxu0 %v1389
    %7633 = vmatprep.subr.bf16.mxu0 0
    %7634 = vmatpush1.bf16.msra.mxu0 %v1390
    %7635 = vmatprep.subr.bf16.mxu0 0
    %7636 = vmatpush1.bf16.msra.mxu0 %v1391
    %7637 = vmatprep.subr.bf16.mxu0 0
    %7638 = vmatpush1.bf16.msra.mxu0 %v1392
    %7639 = vmatprep.mubr.bf16.mxu0 %v7449
    %7640 = vmatmul.mubr.bf16.gmra.mrb[0].mxu0 %v7448
    %v7641 = vpop.f32.mrb[0].mxu0
    %v7642 = vadd.f32 %v7545, %v7641
    %v7643 = vpop.f32.mrb[0].mxu0
    %v7644 = vpop.f32.mrb[0].mxu0
    %v7645 = vadd.f32 %v7548, %v7644
    %v7646 = vpop.f32.mrb[0].mxu0
    %7647 = vmatprep.mubr.bf16.mxu0 %v7453
    %7648 = vmatmul.mubr.bf16.gmra.mrb[0].mxu0 %v7452
    %v7649 = vpop.f32.mrb[0].mxu0
    %v7650 = vadd.f32 %v7553, %v7649
    %v7651 = vpop.f32.mrb[0].mxu0
    %v7652 = vpop.f32.mrb[0].mxu0
    %v7653 = vadd.f32 %v7556, %v7652
    %v7654 = vpop.f32.mrb[0].mxu0
    %7655 = vmatprep.mubr.bf16.mxu0 %v7457
    %7656 = vmatmul.mubr.bf16.gmra.mrb[0].mxu0 %v7456
    %v7657 = vpop.f32.mrb[0].mxu0
    %v7658 = vadd.f32 %v7561, %v7657
    %v7659 = vpop.f32.mrb[0].mxu0
    %v7660 = vpop.f32.mrb[0].mxu0
    %v7661 = vadd.f32 %v7564, %v7660
    %v7662 = vpop.f32.mrb[0].mxu0
    %7663 = vmatprep.mubr.bf16.mxu0 %v7461
    %7664 = vmatmul.mubr.bf16.gmra.mrb[0].mxu0 %v7460
    %v7665 = vpop.f32.mrb[0].mxu0
    %v7666 = vadd.f32 %v7569, %v7665
    %v7667 = vpop.f32.mrb[0].mxu0
    %v7668 = vpop.f32.mrb[0].mxu0
    %v7669 = vadd.f32 %v7572, %v7668
    %v7670 = vpop.f32.mrb[0].mxu0
    %7671 = vmatprep.mubr.bf16.mxu0 %v7465
    %7672 = vmatmul.mubr.bf16.gmra.mrb[0].mxu0 %v7464
    %v7673 = vpop.f32.mrb[0].mxu0
    %v7674 = vadd.f32 %v7577, %v7673
    %v7675 = vpop.f32.mrb[0].mxu0
    %v7676 = vpop.f32.mrb[0].mxu0
    %v7677 = vadd.f32 %v7580, %v7676
    %v7678 = vpop.f32.mrb[0].mxu0
    %7679 = vmatprep.mubr.bf16.mxu0 %v7469
    %7680 = vmatmul.mubr.bf16.gmra.mrb[0].mxu0 %v7468
    %v7681 = vpop.f32.mrb[0].mxu0
    %v7682 = vadd.f32 %v7585, %v7681
    %v7683 = vpop.f32.mrb[0].mxu0
    %v7684 = vpop.f32.mrb[0].mxu0
    %v7685 = vadd.f32 %v7588, %v7684
    %v7686 = vpop.f32.mrb[0].mxu0
    %7687 = vmatprep.mubr.bf16.mxu0 %v7473
    %7688 = vmatmul.mubr.bf16.gmra.mrb[0].mxu0 %v7472
    %v7689 = vpop.f32.mrb[0].mxu0
    %v7690 = vadd.f32 %v7593, %v7689
    %v7691 = vpop.f32.mrb[0].mxu0
    %v7692 = vpop.f32.mrb[0].mxu0
    %v7693 = vadd.f32 %v7596, %v7692
    %v7694 = vpop.f32.mrb[0].mxu0
    %7695 = vmatprep.mubr.bf16.mxu0 %v7477
    %7696 = vmatmul.mubr.bf16.gmra.mrb[0].mxu0 %v7476
    %v7697 = vpop.f32.mrb[0].mxu0
    %v7698 = vadd.f32 %v7601, %v7697
    %v7699 = vpop.f32.mrb[0].mxu0
    %v7700 = vpop.f32.mrb[0].mxu0
    %v7701 = vadd.f32 %v7604, %v7700
    %v7702 = vpop.f32.mrb[0].mxu0
    %7703 = vdwg.mxu0
    %v7704 = vpack.c.bf16 %v7645, %v7642
    %v7705 = vpack.c.bf16 %v7653, %v7650
    %v7706 = vpack.c.bf16 %v7661, %v7658
    %v7707 = vpack.c.bf16 %v7669, %v7666
    %v7708 = vpack.c.bf16 %v7677, %v7674
    %v7709 = vpack.c.bf16 %v7685, %v7682
    %v7710 = vpack.c.bf16 %v7693, %v7690
    %v7711 = vpack.c.bf16 %v7701, %v7698
    %v7712 = vld [vmem:[#allocation10] sm:$0xf]
    %v7713 = vld [vmem:[#allocation10 + $0x4] sm:$0xf]
    %v7714 = vld [vmem:[#allocation10 + $0x8] sm:$0xf]
    %v7715 = vld [vmem:[#allocation10 + $0xc] sm:$0xf]
    %v7716 = vld [vmem:[#allocation10 + $0x10] sm:$0xf]
    %v7717 = vld [vmem:[#allocation10 + $0x14] sm:$0xf]
    %v7718 = vld [vmem:[#allocation10 + $0x18] sm:$0xf]
    %v7719 = vld [vmem:[#allocation10 + $0x1c] sm:$0xf]
    %v7720 = vld [vmem:[#allocation10 + $0x20] sm:$0xf]
    %v7721 = vld [vmem:[#allocation10 + $0x24] sm:$0xf]
    %v7722 = vld [vmem:[#allocation10 + $0x28] sm:$0xf]
    %v7723 = vld [vmem:[#allocation10 + $0x2c] sm:$0xf]
    %v7724 = vld [vmem:[#allocation10 + $0x30] sm:$0xf]
    %v7725 = vld [vmem:[#allocation10 + $0x34] sm:$0xf]
    %v7726 = vld [vmem:[#allocation10 + $0x38] sm:$0xf]
    %v7727 = vld [vmem:[#allocation10 + $0x3c] sm:$0xf]
    %v7728 = vld [vmem:[#allocation10 + $0x40] sm:$0xf]
    %v7729 = vld [vmem:[#allocation10 + $0x44] sm:$0xf]
    %v7730 = vld [vmem:[#allocation10 + $0x48] sm:$0xf]
    %v7731 = vld [vmem:[#allocation10 + $0x4c] sm:$0xf]
    %v7732 = vld [vmem:[#allocation10 + $0x50] sm:$0xf]
    %v7733 = vld [vmem:[#allocation10 + $0x54] sm:$0xf]
    %v7734 = vld [vmem:[#allocation10 + $0x58] sm:$0xf]
    %v7735 = vld [vmem:[#allocation10 + $0x5c] sm:$0xf]
    %v7736 = vld [vmem:[#allocation10 + $0x60] sm:$0xf]
    %v7737 = vld [vmem:[#allocation10 + $0x64] sm:$0xf]
    %v7738 = vld [vmem:[#allocation10 + $0x68] sm:$0xf]
    %v7739 = vld [vmem:[#allocation10 + $0x6c] sm:$0xf]
    %v7740 = vld [vmem:[#allocation10 + $0x70] sm:$0xf]
    %v7741 = vld [vmem:[#allocation10 + $0x74] sm:$0xf]
    %v7742 = vld [vmem:[#allocation10 + $0x78] sm:$0xf]
    %v7743 = vld [vmem:[#allocation10 + $0x7c] sm:$0xf]
    %v7744 = vld [vmem:[#allocation10 + $0x80] sm:$0xf]
    %v7745 = vld [vmem:[#allocation10 + $0x84] sm:$0xf]
    %v7746 = vld [vmem:[#allocation10 + $0x88] sm:$0xf]
    %v7747 = vld [vmem:[#allocation10 + $0x8c] sm:$0xf]
    %v7748 = vld [vmem:[#allocation10 + $0x90] sm:$0xf]
    %v7749 = vld [vmem:[#allocation10 + $0x94] sm:$0xf]
    %v7750 = vld [vmem:[#allocation10 + $0x98] sm:$0xf]
    %v7751 = vld [vmem:[#allocation10 + $0x9c] sm:$0xf]
    %v7752 = vld [vmem:[#allocation10 + $0xa0] sm:$0xf]
    %v7753 = vld [vmem:[#allocation10 + $0xa4] sm:$0xf]
    %v7754 = vld [vmem:[#allocation10 + $0xa8] sm:$0xf]
    %v7755 = vld [vmem:[#allocation10 + $0xac] sm:$0xf]
    %v7756 = vld [vmem:[#allocation10 + $0xb0] sm:$0xf]
    %v7757 = vld [vmem:[#allocation10 + $0xb4] sm:$0xf]
    %v7758 = vld [vmem:[#allocation10 + $0xb8] sm:$0xf]
    %v7759 = vld [vmem:[#allocation10 + $0xbc] sm:$0xf]
    %v7760 = vld [vmem:[#allocation10 + $0xc0] sm:$0xf]
    %v7761 = vld [vmem:[#allocation10 + $0xc4] sm:$0xf]
    %v7762 = vld [vmem:[#allocation10 + $0xc8] sm:$0xf]
    %v7763 = vld [vmem:[#allocation10 + $0xcc] sm:$0xf]
    %v7764 = vld [vmem:[#allocation10 + $0xd0] sm:$0xf]
    %v7765 = vld [vmem:[#allocation10 + $0xd4] sm:$0xf]
    %v7766 = vld [vmem:[#allocation10 + $0xd8] sm:$0xf]
    %v7767 = vld [vmem:[#allocation10 + $0xdc] sm:$0xf]
    %v7768 = vld [vmem:[#allocation10 + $0xe0] sm:$0xf]
    %v7769 = vld [vmem:[#allocation10 + $0xe4] sm:$0xf]
    %v7770 = vld [vmem:[#allocation10 + $0xe8] sm:$0xf]
    %v7771 = vld [vmem:[#allocation10 + $0xec] sm:$0xf]
    %v7772 = vld [vmem:[#allocation10 + $0xf0] sm:$0xf]
    %v7773 = vld [vmem:[#allocation10 + $0xf4] sm:$0xf]
    %v7774 = vld [vmem:[#allocation10 + $0xf8] sm:$0xf]
    %v7775 = vld [vmem:[#allocation10 + $0xfc] sm:$0xf]
    %v7776 = vld [vmem:[#allocation10 + $0x100] sm:$0xf]
    %v7777 = vld [vmem:[#allocation10 + $0x104] sm:$0xf]
    %v7778 = vld [vmem:[#allocation10 + $0x108] sm:$0xf]
    %v7779 = vld [vmem:[#allocation10 + $0x10c] sm:$0xf]
    %v7780 = vld [vmem:[#allocation10 + $0x110] sm:$0xf]
    %v7781 = vld [vmem:[#allocation10 + $0x114] sm:$0xf]
    %v7782 = vld [vmem:[#allocation10 + $0x118] sm:$0xf]
    %v7783 = vld [vmem:[#allocation10 + $0x11c] sm:$0xf]
    %v7784 = vld [vmem:[#allocation10 + $0x120] sm:$0xf]
    %v7785 = vld [vmem:[#allocation10 + $0x124] sm:$0xf]
    %v7786 = vld [vmem:[#allocation10 + $0x128] sm:$0xf]
    %v7787 = vld [vmem:[#allocation10 + $0x12c] sm:$0xf]
    %v7788 = vld [vmem:[#allocation10 + $0x130] sm:$0xf]
    %v7789 = vld [vmem:[#allocation10 + $0x134] sm:$0xf]
    %v7790 = vld [vmem:[#allocation10 + $0x138] sm:$0xf]
    %v7791 = vld [vmem:[#allocation10 + $0x13c] sm:$0xf]
    %v7792 = vld [vmem:[#allocation10 + $0x140] sm:$0xf]
    %v7793 = vld [vmem:[#allocation10 + $0x144] sm:$0xf]
    %v7794 = vld [vmem:[#allocation10 + $0x148] sm:$0xf]
    %v7795 = vld [vmem:[#allocation10 + $0x14c] sm:$0xf]
    %v7796 = vld [vmem:[#allocation10 + $0x150] sm:$0xf]
    %v7797 = vld [vmem:[#allocation10 + $0x154] sm:$0xf]
    %v7798 = vld [vmem:[#allocation10 + $0x158] sm:$0xf]
    %v7799 = vld [vmem:[#allocation10 + $0x15c] sm:$0xf]
    %v7800 = vld [vmem:[#allocation10 + $0x160] sm:$0xf]
    %v7801 = vld [vmem:[#allocation10 + $0x164] sm:$0xf]
    %v7802 = vld [vmem:[#allocation10 + $0x168] sm:$0xf]
    %v7803 = vld [vmem:[#allocation10 + $0x16c] sm:$0xf]
    %v7804 = vld [vmem:[#allocation10 + $0x170] sm:$0xf]
    %v7805 = vld [vmem:[#allocation10 + $0x174] sm:$0xf]
    %v7806 = vld [vmem:[#allocation10 + $0x178] sm:$0xf]
    %v7807 = vld [vmem:[#allocation10 + $0x17c] sm:$0xf]
    %v7808 = vld [vmem:[#allocation10 + $0x180] sm:$0xf]
    %v7809 = vld [vmem:[#allocation10 + $0x184] sm:$0xf]
    %v7810 = vld [vmem:[#allocation10 + $0x188] sm:$0xf]
    %v7811 = vld [vmem:[#allocation10 + $0x18c] sm:$0xf]
    %v7812 = vld [vmem:[#allocation10 + $0x190] sm:$0xf]
    %v7813 = vld [vmem:[#allocation10 + $0x194] sm:$0xf]
    %v7814 = vld [vmem:[#allocation10 + $0x198] sm:$0xf]
    %v7815 = vld [vmem:[#allocation10 + $0x19c] sm:$0xf]
    %v7816 = vld [vmem:[#allocation10 + $0x1a0] sm:$0xf]
    %v7817 = vld [vmem:[#allocation10 + $0x1a4] sm:$0xf]
    %v7818 = vld [vmem:[#allocation10 + $0x1a8] sm:$0xf]
    %v7819 = vld [vmem:[#allocation10 + $0x1ac] sm:$0xf]
    %v7820 = vld [vmem:[#allocation10 + $0x1b0] sm:$0xf]
    %v7821 = vld [vmem:[#allocation10 + $0x1b4] sm:$0xf]
    %v7822 = vld [vmem:[#allocation10 + $0x1b8] sm:$0xf]
    %v7823 = vld [vmem:[#allocation10 + $0x1bc] sm:$0xf]
    %v7824 = vld [vmem:[#allocation10 + $0x1c0] sm:$0xf]
    %v7825 = vld [vmem:[#allocation10 + $0x1c4] sm:$0xf]
    %v7826 = vld [vmem:[#allocation10 + $0x1c8] sm:$0xf]
    %v7827 = vld [vmem:[#allocation10 + $0x1cc] sm:$0xf]
    %v7828 = vld [vmem:[#allocation10 + $0x1d0] sm:$0xf]
    %v7829 = vld [vmem:[#allocation10 + $0x1d4] sm:$0xf]
    %v7830 = vld [vmem:[#allocation10 + $0x1d8] sm:$0xf]
    %v7831 = vld [vmem:[#allocation10 + $0x1dc] sm:$0xf]
    %v7832 = vld [vmem:[#allocation10 + $0x1e0] sm:$0xf]
    %v7833 = vld [vmem:[#allocation10 + $0x1e4] sm:$0xf]
    %v7834 = vld [vmem:[#allocation10 + $0x1e8] sm:$0xf]
    %v7835 = vld [vmem:[#allocation10 + $0x1ec] sm:$0xf]
    %v7836 = vld [vmem:[#allocation10 + $0x1f0] sm:$0xf]
    %v7837 = vld [vmem:[#allocation10 + $0x1f4] sm:$0xf]
    %v7838 = vld [vmem:[#allocation10 + $0x1f8] sm:$0xf]
    %v7839 = vld [vmem:[#allocation10 + $0x1fc] sm:$0xf]
    %v7840 = vld [vmem:[#allocation10 + $0x200] sm:$0xf]
    %v7841 = vld [vmem:[#allocation10 + $0x204] sm:$0xf]
    %v7842 = vld [vmem:[#allocation10 + $0x208] sm:$0xf]
    %v7843 = vld [vmem:[#allocation10 + $0x20c] sm:$0xf]
    %v7844 = vld [vmem:[#allocation10 + $0x210] sm:$0xf]
    %v7845 = vld [vmem:[#allocation10 + $0x214] sm:$0xf]
    %v7846 = vld [vmem:[#allocation10 + $0x218] sm:$0xf]
    %v7847 = vld [vmem:[#allocation10 + $0x21c] sm:$0xf]
    %v7848 = vld [vmem:[#allocation10 + $0x220] sm:$0xf]
    %v7849 = vld [vmem:[#allocation10 + $0x224] sm:$0xf]
    %v7850 = vld [vmem:[#allocation10 + $0x228] sm:$0xf]
    %v7851 = vld [vmem:[#allocation10 + $0x22c] sm:$0xf]
    %v7852 = vld [vmem:[#allocation10 + $0x230] sm:$0xf]
    %v7853 = vld [vmem:[#allocation10 + $0x234] sm:$0xf]
    %v7854 = vld [vmem:[#allocation10 + $0x238] sm:$0xf]
    %v7855 = vld [vmem:[#allocation10 + $0x23c] sm:$0xf]
    %v7856 = vld [vmem:[#allocation10 + $0x240] sm:$0xf]
    %v7857 = vld [vmem:[#allocation10 + $0x244] sm:$0xf]
    %v7858 = vld [vmem:[#allocation10 + $0x248] sm:$0xf]
    %v7859 = vld [vmem:[#allocation10 + $0x24c] sm:$0xf]
    %v7860 = vld [vmem:[#allocation10 + $0x250] sm:$0xf]
    %v7861 = vld [vmem:[#allocation10 + $0x254] sm:$0xf]
    %v7862 = vld [vmem:[#allocation10 + $0x258] sm:$0xf]
    %v7863 = vld [vmem:[#allocation10 + $0x25c] sm:$0xf]
    %v7864 = vld [vmem:[#allocation10 + $0x260] sm:$0xf]
    %v7865 = vld [vmem:[#allocation10 + $0x264] sm:$0xf]
    %v7866 = vld [vmem:[#allocation10 + $0x268] sm:$0xf]
    %v7867 = vld [vmem:[#allocation10 + $0x26c] sm:$0xf]
    %v7868 = vld [vmem:[#allocation10 + $0x270] sm:$0xf]
    %v7869 = vld [vmem:[#allocation10 + $0x274] sm:$0xf]
    %v7870 = vld [vmem:[#allocation10 + $0x278] sm:$0xf]
    %v7871 = vld [vmem:[#allocation10 + $0x27c] sm:$0xf]
    %v7872 = vld [vmem:[#allocation10 + $0x280] sm:$0xf]
    %v7873 = vld [vmem:[#allocation10 + $0x284] sm:$0xf]
    %v7874 = vld [vmem:[#allocation10 + $0x288] sm:$0xf]
    %v7875 = vld [vmem:[#allocation10 + $0x28c] sm:$0xf]
    %v7876 = vld [vmem:[#allocation10 + $0x290] sm:$0xf]
    %v7877 = vld [vmem:[#allocation10 + $0x294] sm:$0xf]
    %v7878 = vld [vmem:[#allocation10 + $0x298] sm:$0xf]
    %v7879 = vld [vmem:[#allocation10 + $0x29c] sm:$0xf]
    %v7880 = vld [vmem:[#allocation10 + $0x2a0] sm:$0xf]
    %v7881 = vld [vmem:[#allocation10 + $0x2a4] sm:$0xf]
    %v7882 = vld [vmem:[#allocation10 + $0x2a8] sm:$0xf]
    %v7883 = vld [vmem:[#allocation10 + $0x2ac] sm:$0xf]
    %v7884 = vld [vmem:[#allocation10 + $0x2b0] sm:$0xf]
    %v7885 = vld [vmem:[#allocation10 + $0x2b4] sm:$0xf]
    %v7886 = vld [vmem:[#allocation10 + $0x2b8] sm:$0xf]
    %v7887 = vld [vmem:[#allocation10 + $0x2bc] sm:$0xf]
    %v7888 = vld [vmem:[#allocation10 + $0x2c0] sm:$0xf]
    %v7889 = vld [vmem:[#allocation10 + $0x2c4] sm:$0xf]
    %v7890 = vld [vmem:[#allocation10 + $0x2c8] sm:$0xf]
    %v7891 = vld [vmem:[#allocation10 + $0x2cc] sm:$0xf]
    %v7892 = vld [vmem:[#allocation10 + $0x2d0] sm:$0xf]
    %v7893 = vld [vmem:[#allocation10 + $0x2d4] sm:$0xf]
    %v7894 = vld [vmem:[#allocation10 + $0x2d8] sm:$0xf]
    %v7895 = vld [vmem:[#allocation10 + $0x2dc] sm:$0xf]
    %v7896 = vld [vmem:[#allocation10 + $0x2e0] sm:$0xf]
    %v7897 = vld [vmem:[#allocation10 + $0x2e4] sm:$0xf]
    %v7898 = vld [vmem:[#allocation10 + $0x2e8] sm:$0xf]
    %v7899 = vld [vmem:[#allocation10 + $0x2ec] sm:$0xf]
    %v7900 = vld [vmem:[#allocation10 + $0x2f0] sm:$0xf]
    %v7901 = vld [vmem:[#allocation10 + $0x2f4] sm:$0xf]
    %v7902 = vld [vmem:[#allocation10 + $0x2f8] sm:$0xf]
    %v7903 = vld [vmem:[#allocation10 + $0x2fc] sm:$0xf]
    %v7904 = vld [vmem:[#allocation10 + $0x300] sm:$0xf]
    %v7905 = vld [vmem:[#allocation10 + $0x304] sm:$0xf]
    %v7906 = vld [vmem:[#allocation10 + $0x308] sm:$0xf]
    %v7907 = vld [vmem:[#allocation10 + $0x30c] sm:$0xf]
    %v7908 = vld [vmem:[#allocation10 + $0x310] sm:$0xf]
    %v7909 = vld [vmem:[#allocation10 + $0x314] sm:$0xf]
    %v7910 = vld [vmem:[#allocation10 + $0x318] sm:$0xf]
    %v7911 = vld [vmem:[#allocation10 + $0x31c] sm:$0xf]
    %v7912 = vld [vmem:[#allocation10 + $0x320] sm:$0xf]
    %v7913 = vld [vmem:[#allocation10 + $0x324] sm:$0xf]
    %v7914 = vld [vmem:[#allocation10 + $0x328] sm:$0xf]
    %v7915 = vld [vmem:[#allocation10 + $0x32c] sm:$0xf]
    %v7916 = vld [vmem:[#allocation10 + $0x330] sm:$0xf]
    %v7917 = vld [vmem:[#allocation10 + $0x334] sm:$0xf]
    %v7918 = vld [vmem:[#allocation10 + $0x338] sm:$0xf]
    %v7919 = vld [vmem:[#allocation10 + $0x33c] sm:$0xf]
    %v7920 = vld [vmem:[#allocation10 + $0x340] sm:$0xf]
    %v7921 = vld [vmem:[#allocation10 + $0x344] sm:$0xf]
    %v7922 = vld [vmem:[#allocation10 + $0x348] sm:$0xf]
    %v7923 = vld [vmem:[#allocation10 + $0x34c] sm:$0xf]
    %v7924 = vld [vmem:[#allocation10 + $0x350] sm:$0xf]
    %v7925 = vld [vmem:[#allocation10 + $0x354] sm:$0xf]
    %v7926 = vld [vmem:[#allocation10 + $0x358] sm:$0xf]
    %v7927 = vld [vmem:[#allocation10 + $0x35c] sm:$0xf]
    %v7928 = vld [vmem:[#allocation10 + $0x360] sm:$0xf]
    %v7929 = vld [vmem:[#allocation10 + $0x364] sm:$0xf]
    %v7930 = vld [vmem:[#allocation10 + $0x368] sm:$0xf]
    %v7931 = vld [vmem:[#allocation10 + $0x36c] sm:$0xf]
    %v7932 = vld [vmem:[#allocation10 + $0x370] sm:$0xf]
    %v7933 = vld [vmem:[#allocation10 + $0x374] sm:$0xf]
    %v7934 = vld [vmem:[#allocation10 + $0x378] sm:$0xf]
    %v7935 = vld [vmem:[#allocation10 + $0x37c] sm:$0xf]
    %v7936 = vld [vmem:[#allocation10 + $0x380] sm:$0xf]
    %v7937 = vld [vmem:[#allocation10 + $0x384] sm:$0xf]
    %v7938 = vld [vmem:[#allocation10 + $0x388] sm:$0xf]
    %v7939 = vld [vmem:[#allocation10 + $0x38c] sm:$0xf]
    %v7940 = vld [vmem:[#allocation10 + $0x390] sm:$0xf]
    %v7941 = vld [vmem:[#allocation10 + $0x394] sm:$0xf]
    %v7942 = vld [vmem:[#allocation10 + $0x398] sm:$0xf]
    %v7943 = vld [vmem:[#allocation10 + $0x39c] sm:$0xf]
    %v7944 = vld [vmem:[#allocation10 + $0x3a0] sm:$0xf]
    %v7945 = vld [vmem:[#allocation10 + $0x3a4] sm:$0xf]
    %v7946 = vld [vmem:[#allocation10 + $0x3a8] sm:$0xf]
    %v7947 = vld [vmem:[#allocation10 + $0x3ac] sm:$0xf]
    %v7948 = vld [vmem:[#allocation10 + $0x3b0] sm:$0xf]
    %v7949 = vld [vmem:[#allocation10 + $0x3b4] sm:$0xf]
    %v7950 = vld [vmem:[#allocation10 + $0x3b8] sm:$0xf]
    %v7951 = vld [vmem:[#allocation10 + $0x3bc] sm:$0xf]
    %v7952 = vld [vmem:[#allocation10 + $0x3c0] sm:$0xf]
    %v7953 = vld [vmem:[#allocation10 + $0x3c4] sm:$0xf]
    %v7954 = vld [vmem:[#allocation10 + $0x3c8] sm:$0xf]
    %v7955 = vld [vmem:[#allocation10 + $0x3cc] sm:$0xf]
    %v7956 = vld [vmem:[#allocation10 + $0x3d0] sm:$0xf]
    %v7957 = vld [vmem:[#allocation10 + $0x3d4] sm:$0xf]
    %v7958 = vld [vmem:[#allocation10 + $0x3d8] sm:$0xf]
    %v7959 = vld [vmem:[#allocation10 + $0x3dc] sm:$0xf]
    %v7960 = vld [vmem:[#allocation10 + $0x3e0] sm:$0xf]
    %v7961 = vld [vmem:[#allocation10 + $0x3e4] sm:$0xf]
    %v7962 = vld [vmem:[#allocation10 + $0x3e8] sm:$0xf]
    %v7963 = vld [vmem:[#allocation10 + $0x3ec] sm:$0xf]
    %v7964 = vld [vmem:[#allocation10 + $0x3f0] sm:$0xf]
    %v7965 = vld [vmem:[#allocation10 + $0x3f4] sm:$0xf]
    %v7966 = vld [vmem:[#allocation10 + $0x3f8] sm:$0xf]
    %v7967 = vld [vmem:[#allocation10 + $0x3fc] sm:$0xf]
    %v8224 = vunpack.c.l.b16 %v7712
    %v8225 = vunpack.c.l.b16 %v7713
    %v8226 = vunpack.c.l.b16 %v7714
    %v8227 = vunpack.c.l.b16 %v7715
    %v8228 = vunpack.c.l.b16 %v7716
    %v8229 = vunpack.c.l.b16 %v7717
    %v8230 = vunpack.c.l.b16 %v7718
    %v8231 = vunpack.c.l.b16 %v7719
    %v8232 = vunpack.c.l.b16 %v7720
    %v8233 = vunpack.c.l.b16 %v7721
    %v8234 = vunpack.c.l.b16 %v7722
    %v8235 = vunpack.c.l.b16 %v7723
    %v8236 = vunpack.c.l.b16 %v7724
    %v8237 = vunpack.c.l.b16 %v7725
    %v8238 = vunpack.c.l.b16 %v7726
    %v8239 = vunpack.c.l.b16 %v7727
    %v8240 = vunpack.c.l.b16 %v7728
    %v8241 = vunpack.c.l.b16 %v7729
    %v8242 = vunpack.c.l.b16 %v7730
    %v8243 = vunpack.c.l.b16 %v7731
    %v8244 = vunpack.c.l.b16 %v7732
    %v8245 = vunpack.c.l.b16 %v7733
    %v8246 = vunpack.c.l.b16 %v7734
    %v8247 = vunpack.c.l.b16 %v7735
    %v8248 = vunpack.c.l.b16 %v7736
    %v8249 = vunpack.c.l.b16 %v7737
    %v8250 = vunpack.c.l.b16 %v7738
    %v8251 = vunpack.c.l.b16 %v7739
    %v8252 = vunpack.c.l.b16 %v7740
    %v8253 = vunpack.c.l.b16 %v7741
    %v8254 = vunpack.c.l.b16 %v7742
    %v8255 = vunpack.c.l.b16 %v7743
    %v8256 = vunpack.c.l.b16 %v7744
    %v8257 = vunpack.c.l.b16 %v7745
    %v8258 = vunpack.c.l.b16 %v7746
    %v8259 = vunpack.c.l.b16 %v7747
    %v8260 = vunpack.c.l.b16 %v7748
    %v8261 = vunpack.c.l.b16 %v7749
    %v8262 = vunpack.c.l.b16 %v7750
    %v8263 = vunpack.c.l.b16 %v7751
    %v8264 = vunpack.c.l.b16 %v7752
    %v8265 = vunpack.c.l.b16 %v7753
    %v8266 = vunpack.c.l.b16 %v7754
    %v8267 = vunpack.c.l.b16 %v7755
    %v8268 = vunpack.c.l.b16 %v7756
    %v8269 = vunpack.c.l.b16 %v7757
    %v8270 = vunpack.c.l.b16 %v7758
    %v8271 = vunpack.c.l.b16 %v7759
    %v8272 = vunpack.c.l.b16 %v7760
    %v8273 = vunpack.c.l.b16 %v7761
    %v8274 = vunpack.c.l.b16 %v7762
    %v8275 = vunpack.c.l.b16 %v7763
    %v8276 = vunpack.c.l.b16 %v7764
    %v8277 = vunpack.c.l.b16 %v7765
    %v8278 = vunpack.c.l.b16 %v7766
    %v8279 = vunpack.c.l.b16 %v7767
    %v8280 = vunpack.c.l.b16 %v7768
    %v8281 = vunpack.c.l.b16 %v7769
    %v8282 = vunpack.c.l.b16 %v7770
    %v8283 = vunpack.c.l.b16 %v7771
    %v8284 = vunpack.c.l.b16 %v7772
    %v8285 = vunpack.c.l.b16 %v7773
    %v8286 = vunpack.c.l.b16 %v7774
    %v8287 = vunpack.c.l.b16 %v7775
    %v8288 = vunpack.c.l.b16 %v7776
    %v8289 = vunpack.c.l.b16 %v7777
    %v8290 = vunpack.c.l.b16 %v7778
    %v8291 = vunpack.c.l.b16 %v7779
    %v8292 = vunpack.c.l.b16 %v7780
    %v8293 = vunpack.c.l.b16 %v7781
    %v8294 = vunpack.c.l.b16 %v7782
    %v8295 = vunpack.c.l.b16 %v7783
    %v8296 = vunpack.c.l.b16 %v7784
    %v8297 = vunpack.c.l.b16 %v7785
    %v8298 = vunpack.c.l.b16 %v7786
    %v8299 = vunpack.c.l.b16 %v7787
    %v8300 = vunpack.c.l.b16 %v7788
    %v8301 = vunpack.c.l.b16 %v7789
    %v8302 = vunpack.c.l.b16 %v7790
    %v8303 = vunpack.c.l.b16 %v7791
    %v8304 = vunpack.c.l.b16 %v7792
    %v8305 = vunpack.c.l.b16 %v7793
    %v8306 = vunpack.c.l.b16 %v7794
    %v8307 = vunpack.c.l.b16 %v7795
    %v8308 = vunpack.c.l.b16 %v7796
    %v8309 = vunpack.c.l.b16 %v7797
    %v8310 = vunpack.c.l.b16 %v7798
    %v8311 = vunpack.c.l.b16 %v7799
    %v8312 = vunpack.c.l.b16 %v7800
    %v8313 = vunpack.c.l.b16 %v7801
    %v8314 = vunpack.c.l.b16 %v7802
    %v8315 = vunpack.c.l.b16 %v7803
    %v8316 = vunpack.c.l.b16 %v7804
    %v8317 = vunpack.c.l.b16 %v7805
    %v8318 = vunpack.c.l.b16 %v7806
    %v8319 = vunpack.c.l.b16 %v7807
    %v8320 = vunpack.c.l.b16 %v7808
    %v8321 = vunpack.c.l.b16 %v7809
    %v8322 = vunpack.c.l.b16 %v7810
    %v8323 = vunpack.c.l.b16 %v7811
    %v8324 = vunpack.c.l.b16 %v7812
    %v8325 = vunpack.c.l.b16 %v7813
    %v8326 = vunpack.c.l.b16 %v7814
    %v8327 = vunpack.c.l.b16 %v7815
    %v8328 = vunpack.c.l.b16 %v7816
    %v8329 = vunpack.c.l.b16 %v7817
    %v8330 = vunpack.c.l.b16 %v7818
    %v8331 = vunpack.c.l.b16 %v7819
    %v8332 = vunpack.c.l.b16 %v7820
    %v8333 = vunpack.c.l.b16 %v7821
    %v8334 = vunpack.c.l.b16 %v7822
    %v8335 = vunpack.c.l.b16 %v7823
    %v8336 = vunpack.c.l.b16 %v7824
    %v8337 = vunpack.c.l.b16 %v7825
    %v8338 = vunpack.c.l.b16 %v7826
    %v8339 = vunpack.c.l.b16 %v7827
    %v8340 = vunpack.c.l.b16 %v7828
    %v8341 = vunpack.c.l.b16 %v7829
    %v8342 = vunpack.c.l.b16 %v7830
    %v8343 = vunpack.c.l.b16 %v7831
    %v8344 = vunpack.c.l.b16 %v7832
    %v8345 = vunpack.c.l.b16 %v7833
    %v8346 = vunpack.c.l.b16 %v7834
    %v8347 = vunpack.c.l.b16 %v7835
    %v8348 = vunpack.c.l.b16 %v7836
    %v8349 = vunpack.c.l.b16 %v7837
    %v8350 = vunpack.c.l.b16 %v7838
    %v8351 = vunpack.c.l.b16 %v7839
    %v8352 = vunpack.c.l.b16 %v7840
    %v8353 = vunpack.c.l.b16 %v7841
    %v8354 = vunpack.c.l.b16 %v7842
    %v8355 = vunpack.c.l.b16 %v7843
    %v8356 = vunpack.c.l.b16 %v7844
    %v8357 = vunpack.c.l.b16 %v7845
    %v8358 = vunpack.c.l.b16 %v7846
    %v8359 = vunpack.c.l.b16 %v7847
    %v8360 = vunpack.c.l.b16 %v7848
    %v8361 = vunpack.c.l.b16 %v7849
    %v8362 = vunpack.c.l.b16 %v7850
    %v8363 = vunpack.c.l.b16 %v7851
    %v8364 = vunpack.c.l.b16 %v7852
    %v8365 = vunpack.c.l.b16 %v7853
    %v8366 = vunpack.c.l.b16 %v7854
    %v8367 = vunpack.c.l.b16 %v7855
    %v8368 = vunpack.c.l.b16 %v7856
    %v8369 = vunpack.c.l.b16 %v7857
    %v8370 = vunpack.c.l.b16 %v7858
    %v8371 = vunpack.c.l.b16 %v7859
    %v8372 = vunpack.c.l.b16 %v7860
    %v8373 = vunpack.c.l.b16 %v7861
    %v8374 = vunpack.c.l.b16 %v7862
    %v8375 = vunpack.c.l.b16 %v7863
    %v8376 = vunpack.c.l.b16 %v7864
    %v8377 = vunpack.c.l.b16 %v7865
    %v8378 = vunpack.c.l.b16 %v7866
    %v8379 = vunpack.c.l.b16 %v7867
    %v8380 = vunpack.c.l.b16 %v7868
    %v8381 = vunpack.c.l.b16 %v7869
    %v8382 = vunpack.c.l.b16 %v7870
    %v8383 = vunpack.c.l.b16 %v7871
    %v8384 = vunpack.c.l.b16 %v7872
    %v8385 = vunpack.c.l.b16 %v7873
    %v8386 = vunpack.c.l.b16 %v7874
    %v8387 = vunpack.c.l.b16 %v7875
    %v8388 = vunpack.c.l.b16 %v7876
    %v8389 = vunpack.c.l.b16 %v7877
    %v8390 = vunpack.c.l.b16 %v7878
    %v8391 = vunpack.c.l.b16 %v7879
    %v8392 = vunpack.c.l.b16 %v7880
    %v8393 = vunpack.c.l.b16 %v7881
    %v8394 = vunpack.c.l.b16 %v7882
    %v8395 = vunpack.c.l.b16 %v7883
    %v8396 = vunpack.c.l.b16 %v7884
    %v8397 = vunpack.c.l.b16 %v7885
    %v8398 = vunpack.c.l.b16 %v7886
    %v8399 = vunpack.c.l.b16 %v7887
    %v8400 = vunpack.c.l.b16 %v7888
    %v8401 = vunpack.c.l.b16 %v7889
    %v8402 = vunpack.c.l.b16 %v7890
    %v8403 = vunpack.c.l.b16 %v7891
    %v8404 = vunpack.c.l.b16 %v7892
    %v8405 = vunpack.c.l.b16 %v7893
    %v8406 = vunpack.c.l.b16 %v7894
    %v8407 = vunpack.c.l.b16 %v7895
    %v8408 = vunpack.c.l.b16 %v7896
    %v8409 = vunpack.c.l.b16 %v7897
    %v8410 = vunpack.c.l.b16 %v7898
    %v8411 = vunpack.c.l.b16 %v7899
    %v8412 = vunpack.c.l.b16 %v7900
    %v8413 = vunpack.c.l.b16 %v7901
    %v8414 = vunpack.c.l.b16 %v7902
    %v8415 = vunpack.c.l.b16 %v7903
    %v8416 = vunpack.c.l.b16 %v7904
    %v8417 = vunpack.c.l.b16 %v7905
    %v8418 = vunpack.c.l.b16 %v7906
    %v8419 = vunpack.c.l.b16 %v7907
    %v8420 = vunpack.c.l.b16 %v7908
    %v8421 = vunpack.c.l.b16 %v7909
    %v8422 = vunpack.c.l.b16 %v7910
    %v8423 = vunpack.c.l.b16 %v7911
    %v8424 = vunpack.c.l.b16 %v7912
    %v8425 = vunpack.c.l.b16 %v7913
    %v8426 = vunpack.c.l.b16 %v7914
    %v8427 = vunpack.c.l.b16 %v7915
    %v8428 = vunpack.c.l.b16 %v7916
    %v8429 = vunpack.c.l.b16 %v7917
    %v8430 = vunpack.c.l.b16 %v7918
    %v8431 = vunpack.c.l.b16 %v7919
    %v8432 = vunpack.c.l.b16 %v7920
    %v8433 = vunpack.c.l.b16 %v7921
    %v8434 = vunpack.c.l.b16 %v7922
    %v8435 = vunpack.c.l.b16 %v7923
    %v8436 = vunpack.c.l.b16 %v7924
    %v8437 = vunpack.c.l.b16 %v7925
    %v8438 = vunpack.c.l.b16 %v7926
    %v8439 = vunpack.c.l.b16 %v7927
    %v8440 = vunpack.c.l.b16 %v7928
    %v8441 = vunpack.c.l.b16 %v7929
    %v8442 = vunpack.c.l.b16 %v7930
    %v8443 = vunpack.c.l.b16 %v7931
    %v8444 = vunpack.c.l.b16 %v7932
    %v8445 = vunpack.c.l.b16 %v7933
    %v8446 = vunpack.c.l.b16 %v7934
    %v8447 = vunpack.c.l.b16 %v7935
    %v8448 = vunpack.c.l.b16 %v7936
    %v8449 = vunpack.c.l.b16 %v7937
    %v8450 = vunpack.c.l.b16 %v7938
    %v8451 = vunpack.c.l.b16 %v7939
    %v8452 = vunpack.c.l.b16 %v7940
    %v8453 = vunpack.c.l.b16 %v7941
    %v8454 = vunpack.c.l.b16 %v7942
    %v8455 = vunpack.c.l.b16 %v7943
    %v8456 = vunpack.c.l.b16 %v7944
    %v8457 = vunpack.c.l.b16 %v7945
    %v8458 = vunpack.c.l.b16 %v7946
    %v8459 = vunpack.c.l.b16 %v7947
    %v8460 = vunpack.c.l.b16 %v7948
    %v8461 = vunpack.c.l.b16 %v7949
    %v8462 = vunpack.c.l.b16 %v7950
    %v8463 = vunpack.c.l.b16 %v7951
    %v8464 = vunpack.c.l.b16 %v7952
    %v8465 = vunpack.c.l.b16 %v7953
    %v8466 = vunpack.c.l.b16 %v7954
    %v8467 = vunpack.c.l.b16 %v7955
    %v8468 = vunpack.c.l.b16 %v7956
    %v8469 = vunpack.c.l.b16 %v7957
    %v8470 = vunpack.c.l.b16 %v7958
    %v8471 = vunpack.c.l.b16 %v7959
    %v8472 = vunpack.c.l.b16 %v7960
    %v8473 = vunpack.c.l.b16 %v7961
    %v8474 = vunpack.c.l.b16 %v7962
    %v8475 = vunpack.c.l.b16 %v7963
    %v8476 = vunpack.c.l.b16 %v7964
    %v8477 = vunpack.c.l.b16 %v7965
    %v8478 = vunpack.c.l.b16 %v7966
    %v8479 = vunpack.c.l.b16 %v7967
    %v8480 = vpack.c.b16 %v8225, %v8224
    %v8481 = vpack.c.b16 %v8227, %v8226
    %v8482 = vpack.c.b16 %v8229, %v8228
    %v8483 = vpack.c.b16 %v8231, %v8230
    %v8484 = vpack.c.b16 %v8233, %v8232
    %v8485 = vpack.c.b16 %v8235, %v8234
    %v8486 = vpack.c.b16 %v8237, %v8236
    %v8487 = vpack.c.b16 %v8239, %v8238
    %v8488 = vpack.c.b16 %v8241, %v8240
    %v8489 = vpack.c.b16 %v8243, %v8242
    %v8490 = vpack.c.b16 %v8245, %v8244
    %v8491 = vpack.c.b16 %v8247, %v8246
    %v8492 = vpack.c.b16 %v8249, %v8248
    %v8493 = vpack.c.b16 %v8251, %v8250
    %v8494 = vpack.c.b16 %v8253, %v8252
    %v8495 = vpack.c.b16 %v8255, %v8254
    %v8496 = vpack.c.b16 %v8257, %v8256
    %v8497 = vpack.c.b16 %v8259, %v8258
    %v8498 = vpack.c.b16 %v8261, %v8260
    %v8499 = vpack.c.b16 %v8263, %v8262
    %v8500 = vpack.c.b16 %v8265, %v8264
    %v8501 = vpack.c.b16 %v8267, %v8266
    %v8502 = vpack.c.b16 %v8269, %v8268
    %v8503 = vpack.c.b16 %v8271, %v8270
    %v8504 = vpack.c.b16 %v8273, %v8272
    %v8505 = vpack.c.b16 %v8275, %v8274
    %v8506 = vpack.c.b16 %v8277, %v8276
    %v8507 = vpack.c.b16 %v8279, %v8278
    %v8508 = vpack.c.b16 %v8281, %v8280
    %v8509 = vpack.c.b16 %v8283, %v8282
    %v8510 = vpack.c.b16 %v8285, %v8284
    %v8511 = vpack.c.b16 %v8287, %v8286
    %v8512 = vpack.c.b16 %v8289, %v8288
    %v8513 = vpack.c.b16 %v8291, %v8290
    %v8514 = vpack.c.b16 %v8293, %v8292
    %v8515 = vpack.c.b16 %v8295, %v8294
    %v8516 = vpack.c.b16 %v8297, %v8296
    %v8517 = vpack.c.b16 %v8299, %v8298
    %v8518 = vpack.c.b16 %v8301, %v8300
    %v8519 = vpack.c.b16 %v8303, %v8302
    %v8520 = vpack.c.b16 %v8305, %v8304
    %v8521 = vpack.c.b16 %v8307, %v8306
    %v8522 = vpack.c.b16 %v8309, %v8308
    %v8523 = vpack.c.b16 %v8311, %v8310
    %v8524 = vpack.c.b16 %v8313, %v8312
    %v8525 = vpack.c.b16 %v8315, %v8314
    %v8526 = vpack.c.b16 %v8317, %v8316
    %v8527 = vpack.c.b16 %v8319, %v8318
    %v8528 = vpack.c.b16 %v8321, %v8320
    %v8529 = vpack.c.b16 %v8323, %v8322
    %v8530 = vpack.c.b16 %v8325, %v8324
    %v8531 = vpack.c.b16 %v8327, %v8326
    %v8532 = vpack.c.b16 %v8329, %v8328
    %v8533 = vpack.c.b16 %v8331, %v8330
    %v8534 = vpack.c.b16 %v8333, %v8332
    %v8535 = vpack.c.b16 %v8335, %v8334
    %v8536 = vpack.c.b16 %v8337, %v8336
    %v8537 = vpack.c.b16 %v8339, %v8338
    %v8538 = vpack.c.b16 %v8341, %v8340
    %v8539 = vpack.c.b16 %v8343, %v8342
    %v8540 = vpack.c.b16 %v8345, %v8344
    %v8541 = vpack.c.b16 %v8347, %v8346
    %v8542 = vpack.c.b16 %v8349, %v8348
    %v8543 = vpack.c.b16 %v8351, %v8350
    %v8544 = vpack.c.b16 %v8353, %v8352
    %v8545 = vpack.c.b16 %v8355, %v8354
    %v8546 = vpack.c.b16 %v8357, %v8356
    %v8547 = vpack.c.b16 %v8359, %v8358
    %v8548 = vpack.c.b16 %v8361, %v8360
    %v8549 = vpack.c.b16 %v8363, %v8362
    %v8550 = vpack.c.b16 %v8365, %v8364
    %v8551 = vpack.c.b16 %v8367, %v8366
    %v8552 = vpack.c.b16 %v8369, %v8368
    %v8553 = vpack.c.b16 %v8371, %v8370
    %v8554 = vpack.c.b16 %v8373, %v8372
    %v8555 = vpack.c.b16 %v8375, %v8374
    %v8556 = vpack.c.b16 %v8377, %v8376
    %v8557 = vpack.c.b16 %v8379, %v8378
    %v8558 = vpack.c.b16 %v8381, %v8380
    %v8559 = vpack.c.b16 %v8383, %v8382
    %v8560 = vpack.c.b16 %v8385, %v8384
    %v8561 = vpack.c.b16 %v8387, %v8386
    %v8562 = vpack.c.b16 %v8389, %v8388
    %v8563 = vpack.c.b16 %v8391, %v8390
    %v8564 = vpack.c.b16 %v8393, %v8392
    %v8565 = vpack.c.b16 %v8395, %v8394
    %v8566 = vpack.c.b16 %v8397, %v8396
    %v8567 = vpack.c.b16 %v8399, %v8398
    %v8568 = vpack.c.b16 %v8401, %v8400
    %v8569 = vpack.c.b16 %v8403, %v8402
    %v8570 = vpack.c.b16 %v8405, %v8404
    %v8571 = vpack.c.b16 %v8407, %v8406
    %v8572 = vpack.c.b16 %v8409, %v8408
    %v8573 = vpack.c.b16 %v8411, %v8410
    %v8574 = vpack.c.b16 %v8413, %v8412
    %v8575 = vpack.c.b16 %v8415, %v8414
    %v8576 = vpack.c.b16 %v8417, %v8416
    %v8577 = vpack.c.b16 %v8419, %v8418
    %v8578 = vpack.c.b16 %v8421, %v8420
    %v8579 = vpack.c.b16 %v8423, %v8422
    %v8580 = vpack.c.b16 %v8425, %v8424
    %v8581 = vpack.c.b16 %v8427, %v8426
    %v8582 = vpack.c.b16 %v8429, %v8428
    %v8583 = vpack.c.b16 %v8431, %v8430
    %v8584 = vpack.c.b16 %v8433, %v8432
    %v8585 = vpack.c.b16 %v8435, %v8434
    %v8586 = vpack.c.b16 %v8437, %v8436
    %v8587 = vpack.c.b16 %v8439, %v8438
    %v8588 = vpack.c.b16 %v8441, %v8440
    %v8589 = vpack.c.b16 %v8443, %v8442
    %v8590 = vpack.c.b16 %v8445, %v8444
    %v8591 = vpack.c.b16 %v8447, %v8446
    %v8592 = vpack.c.b16 %v8449, %v8448
    %v8593 = vpack.c.b16 %v8451, %v8450
    %v8594 = vpack.c.b16 %v8453, %v8452
    %v8595 = vpack.c.b16 %v8455, %v8454
    %v8596 = vpack.c.b16 %v8457, %v8456
    %v8597 = vpack.c.b16 %v8459, %v8458
    %v8598 = vpack.c.b16 %v8461, %v8460
    %v8599 = vpack.c.b16 %v8463, %v8462
    %v8600 = vpack.c.b16 %v8465, %v8464
    %v8601 = vpack.c.b16 %v8467, %v8466
    %v8602 = vpack.c.b16 %v8469, %v8468
    %v8603 = vpack.c.b16 %v8471, %v8470
    %v8604 = vpack.c.b16 %v8473, %v8472
    %v8605 = vpack.c.b16 %v8475, %v8474
    %v8606 = vpack.c.b16 %v8477, %v8476
    %v8607 = vpack.c.b16 %v8479, %v8478
    %8736 = vmatprep.subr.bf16.mxu0 0
    %8737 = vmatpush1.bf16.msra.mxu0 %v8480
    %8738 = vmatprep.subr.bf16.mxu0 0
    %8739 = vmatpush1.bf16.msra.mxu0 %v8481
    %8740 = vmatprep.subr.bf16.mxu0 0
    %8741 = vmatpush1.bf16.msra.mxu0 %v8482
    %8742 = vmatprep.subr.bf16.mxu0 0
    %8743 = vmatpush1.bf16.msra.mxu0 %v8483
    %8744 = vmatprep.subr.bf16.mxu0 0
    %8745 = vmatpush1.bf16.msra.mxu0 %v8484
    %8746 = vmatprep.subr.bf16.mxu0 0
    %8747 = vmatpush1.bf16.msra.mxu0 %v8485
    %8748 = vmatprep.subr.bf16.mxu0 0
    %8749 = vmatpush1.bf16.msra.mxu0 %v8486
    %8750 = vmatprep.subr.bf16.mxu0 0
    %8751 = vmatpush1.bf16.msra.mxu0 %v8487
    %8752 = vmatprep.subr.bf16.mxu0 0
    %8753 = vmatpush1.bf16.msra.mxu0 %v8488
    %8754 = vmatprep.subr.bf16.mxu0 0
    %8755 = vmatpush1.bf16.msra.mxu0 %v8489
    %8756 = vmatprep.subr.bf16.mxu0 0
    %8757 = vmatpush1.bf16.msra.mxu0 %v8490
    %8758 = vmatprep.subr.bf16.mxu0 0
    %8759 = vmatpush1.bf16.msra.mxu0 %v8491
    %8760 = vmatprep.subr.bf16.mxu0 0
    %8761 = vmatpush1.bf16.msra.mxu0 %v8492
    %8762 = vmatprep.subr.bf16.mxu0 0
    %8763 = vmatpush1.bf16.msra.mxu0 %v8493
    %8764 = vmatprep.subr.bf16.mxu0 0
    %8765 = vmatpush1.bf16.msra.mxu0 %v8494
    %8766 = vmatprep.subr.bf16.mxu0 0
    %8767 = vmatpush1.bf16.msra.mxu0 %v8495
    %8768 = vmatprep.mubr.bf16.mxu0 %v2174
    %8769 = vmatmul.mubr.bf16.gmra.mrb[0].mxu0 %v1779
    %v8770 = vpop.f32.mrb[0].mxu0
    %v8771 = vadd.f32 0.0, %v8770
    %v8772 = vpop.f32.mrb[0].mxu0
    %v8773 = vpop.f32.mrb[0].mxu0
    %v8774 = vadd.f32 0.0, %v8773
    %v8775 = vpop.f32.mrb[0].mxu0
    %8776 = vmatprep.mubr.bf16.mxu0 %v2175
    %8777 = vmatmul.mubr.bf16.gmra.mrb[0].mxu0 %v1780
    %v8778 = vpop.f32.mrb[0].mxu0
    %v8779 = vadd.f32 0.0, %v8778
    %v8780 = vpop.f32.mrb[0].mxu0
    %v8781 = vpop.f32.mrb[0].mxu0
    %v8782 = vadd.f32 0.0, %v8781
    %v8783 = vpop.f32.mrb[0].mxu0
    %8784 = vmatprep.mubr.bf16.mxu0 %v2176
    %8785 = vmatmul.mubr.bf16.gmra.mrb[0].mxu0 %v1781
    %v8786 = vpop.f32.mrb[0].mxu0
    %v8787 = vadd.f32 0.0, %v8786
    %v8788 = vpop.f32.mrb[0].mxu0
    %v8789 = vpop.f32.mrb[0].mxu0
    %v8790 = vadd.f32 0.0, %v8789
    %v8791 = vpop.f32.mrb[0].mxu0
    %8792 = vmatprep.mubr.bf16.mxu0 %v2177
    %8793 = vmatmul.mubr.bf16.gmra.mrb[0].mxu0 %v1782
    %v8794 = vpop.f32.mrb[0].mxu0
    %v8795 = vadd.f32 0.0, %v8794
    %v8796 = vpop.f32.mrb[0].mxu0
    %v8797 = vpop.f32.mrb[0].mxu0
    %v8798 = vadd.f32 0.0, %v8797
    %v8799 = vpop.f32.mrb[0].mxu0
    %8800 = vmatprep.mubr.bf16.mxu0 %v2178
    %8801 = vmatmul.mubr.bf16.gmra.mrb[0].mxu0 %v1783
    %v8802 = vpop.f32.mrb[0].mxu0
    %v8803 = vadd.f32 0.0, %v8802
    %v8804 = vpop.f32.mrb[0].mxu0
    %v8805 = vpop.f32.mrb[0].mxu0
    %v8806 = vadd.f32 0.0, %v8805
    %v8807 = vpop.f32.mrb[0].mxu0
    %8808 = vmatprep.mubr.bf16.mxu0 %v2179
    %8809 = vmatmul.mubr.bf16.gmra.mrb[0].mxu0 %v1784
    %v8810 = vpop.f32.mrb[0].mxu0
    %v8811 = vadd.f32 0.0, %v8810
    %v8812 = vpop.f32.mrb[0].mxu0
    %v8813 = vpop.f32.mrb[0].mxu0
    %v8814 = vadd.f32 0.0, %v8813
    %v8815 = vpop.f32.mrb[0].mxu0
    %8816 = vmatprep.mubr.bf16.mxu0 %v2180
    %8817 = vmatmul.mubr.bf16.gmra.mrb[0].mxu0 %v1785
    %v8818 = vpop.f32.mrb[0].mxu0
    %v8819 = vadd.f32 0.0, %v8818
    %v8820 = vpop.f32.mrb[0].mxu0
    %v8821 = vpop.f32.mrb[0].mxu0
    %v8822 = vadd.f32 0.0, %v8821
    %v8823 = vpop.f32.mrb[0].mxu0
    %8824 = vmatprep.mubr.bf16.mxu0 %v2181
    %8825 = vmatmul.mubr.bf16.gmra.mrb[0].mxu0 %v1786
    %v8826 = vpop.f32.mrb[0].mxu0
    %v8827 = vadd.f32 0.0, %v8826
    %v8828 = vpop.f32.mrb[0].mxu0
    %v8829 = vpop.f32.mrb[0].mxu0
    %v8830 = vadd.f32 0.0, %v8829
    %v8831 = vpop.f32.mrb[0].mxu0
    %8832 = vdwg.mxu0
    %8833 = vmatprep.subr.bf16.mxu0 0
    %8834 = vmatpush1.bf16.msra.mxu0 %v8496
    %8835 = vmatprep.subr.bf16.mxu0 0
    %8836 = vmatpush1.bf16.msra.mxu0 %v8497
    %8837 = vmatprep.subr.bf16.mxu0 0
    %8838 = vmatpush1.bf16.msra.mxu0 %v8498
    %8839 = vmatprep.subr.bf16.mxu0 0
    %8840 = vmatpush1.bf16.msra.mxu0 %v8499
    %8841 = vmatprep.subr.bf16.mxu0 0
    %8842 = vmatpush1.bf16.msra.mxu0 %v8500
    %8843 = vmatprep.subr.bf16.mxu0 0
    %8844 = vmatpush1.bf16.msra.mxu0 %v8501
    %8845 = vmatprep.subr.bf16.mxu0 0
    %8846 = vmatpush1.bf16.msra.mxu0 %v8502
    %8847 = vmatprep.subr.bf16.mxu0 0
    %8848 = vmatpush1.bf16.msra.mxu0 %v8503
    %8849 = vmatprep.subr.bf16.mxu0 0
    %8850 = vmatpush1.bf16.msra.mxu0 %v8504
    %8851 = vmatprep.subr.bf16.mxu0 0
    %8852 = vmatpush1.bf16.msra.mxu0 %v8505
    %8853 = vmatprep.subr.bf16.mxu0 0
    %8854 = vmatpush1.bf16.msra.mxu0 %v8506
    %8855 = vmatprep.subr.bf16.mxu0 0
    %8856 = vmatpush1.bf16.msra.mxu0 %v8507
    %8857 = vmatprep.subr.bf16.mxu0 0
    %8858 = vmatpush1.bf16.msra.mxu0 %v8508
    %8859 = vmatprep.subr.bf16.mxu0 0
    %8860 = vmatpush1.bf16.msra.mxu0 %v8509
    %8861 = vmatprep.subr.bf16.mxu0 0
    %8862 = vmatpush1.bf16.msra.mxu0 %v8510
    %8863 = vmatprep.subr.bf16.mxu0 0
    %8864 = vmatpush1.bf16.msra.mxu0 %v8511
    %8865 = vmatprep.mubr.bf16.mxu0 %v2964
    %8866 = vmatmul.mubr.bf16.gmra.mrb[0].mxu0 %v2569
    %v8867 = vpop.f32.mrb[0].mxu0
    %v8868 = vadd.f32 %v8771, %v8867
    %v8869 = vpop.f32.mrb[0].mxu0
    %v8870 = vpop.f32.mrb[0].mxu0
    %v8871 = vadd.f32 %v8774, %v8870
    %v8872 = vpop.f32.mrb[0].mxu0
    %8873 = vmatprep.mubr.bf16.mxu0 %v2965
    %8874 = vmatmul.mubr.bf16.gmra.mrb[0].mxu0 %v2570
    %v8875 = vpop.f32.mrb[0].mxu0
    %v8876 = vadd.f32 %v8779, %v8875
    %v8877 = vpop.f32.mrb[0].mxu0
    %v8878 = vpop.f32.mrb[0].mxu0
    %v8879 = vadd.f32 %v8782, %v8878
    %v8880 = vpop.f32.mrb[0].mxu0
    %8881 = vmatprep.mubr.bf16.mxu0 %v2966
    %8882 = vmatmul.mubr.bf16.gmra.mrb[0].mxu0 %v2571
    %v8883 = vpop.f32.mrb[0].mxu0
    %v8884 = vadd.f32 %v8787, %v8883
    %v8885 = vpop.f32.mrb[0].mxu0
    %v8886 = vpop.f32.mrb[0].mxu0
    %v8887 = vadd.f32 %v8790, %v8886
    %v8888 = vpop.f32.mrb[0].mxu0
    %8889 = vmatprep.mubr.bf16.mxu0 %v2967
    %8890 = vmatmul.mubr.bf16.gmra.mrb[0].mxu0 %v2572
    %v8891 = vpop.f32.mrb[0].mxu0
    %v8892 = vadd.f32 %v8795, %v8891
    %v8893 = vpop.f32.mrb[0].mxu0
    %v8894 = vpop.f32.mrb[0].mxu0
    %v8895 = vadd.f32 %v8798, %v8894
    %v8896 = vpop.f32.mrb[0].mxu0
    %8897 = vmatprep.mubr.bf16.mxu0 %v2968
    %8898 = vmatmul.mubr.bf16.gmra.mrb[0].mxu0 %v2573
    %v8899 = vpop.f32.mrb[0].mxu0
    %v8900 = vadd.f32 %v8803, %v8899
    %v8901 = vpop.f32.mrb[0].mxu0
    %v8902 = vpop.f32.mrb[0].mxu0
    %v8903 = vadd.f32 %v8806, %v8902
    %v8904 = vpop.f32.mrb[0].mxu0
    %8905 = vmatprep.mubr.bf16.mxu0 %v2969
    %8906 = vmatmul.mubr.bf16.gmra.mrb[0].mxu0 %v2574
    %v8907 = vpop.f32.mrb[0].mxu0
    %v8908 = vadd.f32 %v8811, %v8907
    %v8909 = vpop.f32.mrb[0].mxu0
    %v8910 = vpop.f32.mrb[0].mxu0
    %v8911 = vadd.f32 %v8814, %v8910
    %v8912 = vpop.f32.mrb[0].mxu0
    %8913 = vmatprep.mubr.bf16.mxu0 %v2970
    %8914 = vmatmul.mubr.bf16.gmra.mrb[0].mxu0 %v2575
    %v8915 = vpop.f32.mrb[0].mxu0
    %v8916 = vadd.f32 %v8819, %v8915
    %v8917 = vpop.f32.mrb[0].mxu0
    %v8918 = vpop.f32.mrb[0].mxu0
    %v8919 = vadd.f32 %v8822, %v8918
    %v8920 = vpop.f32.mrb[0].mxu0
    %8921 = vmatprep.mubr.bf16.mxu0 %v2971
    %8922 = vmatmul.mubr.bf16.gmra.mrb[0].mxu0 %v2576
    %v8923 = vpop.f32.mrb[0].mxu0
    %v8924 = vadd.f32 %v8827, %v8923
    %v8925 = vpop.f32.mrb[0].mxu0
    %v8926 = vpop.f32.mrb[0].mxu0
    %v8927 = vadd.f32 %v8830, %v8926
    %v8928 = vpop.f32.mrb[0].mxu0
    %8929 = vdwg.mxu0
    %8930 = vmatprep.subr.bf16.mxu0 0
    %8931 = vmatpush1.bf16.msra.mxu0 %v8512
    %8932 = vmatprep.subr.bf16.mxu0 0
    %8933 = vmatpush1.bf16.msra.mxu0 %v8513
    %8934 = vmatprep.subr.bf16.mxu0 0
    %8935 = vmatpush1.bf16.msra.mxu0 %v8514
    %8936 = vmatprep.subr.bf16.mxu0 0
    %8937 = vmatpush1.bf16.msra.mxu0 %v8515
    %8938 = vmatprep.subr.bf16.mxu0 0
    %8939 = vmatpush1.bf16.msra.mxu0 %v8516
    %8940 = vmatprep.subr.bf16.mxu0 0
    %8941 = vmatpush1.bf16.msra.mxu0 %v8517
    %8942 = vmatprep.subr.bf16.mxu0 0
    %8943 = vmatpush1.bf16.msra.mxu0 %v8518
    %8944 = vmatprep.subr.bf16.mxu0 0
    %8945 = vmatpush1.bf16.msra.mxu0 %v8519
    %8946 = vmatprep.subr.bf16.mxu0 0
    %8947 = vmatpush1.bf16.msra.mxu0 %v8520
    %8948 = vmatprep.subr.bf16.mxu0 0
    %8949 = vmatpush1.bf16.msra.mxu0 %v8521
    %8950 = vmatprep.subr.bf16.mxu0 0
    %8951 = vmatpush1.bf16.msra.mxu0 %v8522
    %8952 = vmatprep.subr.bf16.mxu0 0
    %8953 = vmatpush1.bf16.msra.mxu0 %v8523
    %8954 = vmatprep.subr.bf16.mxu0 0
    %8955 = vmatpush1.bf16.msra.mxu0 %v8524
    %8956 = vmatprep.subr.bf16.mxu0 0
    %8957 = vmatpush1.bf16.msra.mxu0 %v8525
    %8958 = vmatprep.subr.bf16.mxu0 0
    %8959 = vmatpush1.bf16.msra.mxu0 %v8526
    %8960 = vmatprep.subr.bf16.mxu0 0
    %8961 = vmatpush1.bf16.msra.mxu0 %v8527
    %8962 = vmatprep.mubr.bf16.mxu0 %v3754
    %8963 = vmatmul.mubr.bf16.gmra.mrb[0].mxu0 %v3359
    %v8964 = vpop.f32.mrb[0].mxu0
    %v8965 = vadd.f32 %v8868, %v8964
    %v8966 = vpop.f32.mrb[0].mxu0
    %v8967 = vpop.f32.mrb[0].mxu0
    %v8968 = vadd.f32 %v8871, %v8967
    %v8969 = vpop.f32.mrb[0].mxu0
    %8970 = vmatprep.mubr.bf16.mxu0 %v3755
    %8971 = vmatmul.mubr.bf16.gmra.mrb[0].mxu0 %v3360
    %v8972 = vpop.f32.mrb[0].mxu0
    %v8973 = vadd.f32 %v8876, %v8972
    %v8974 = vpop.f32.mrb[0].mxu0
    %v8975 = vpop.f32.mrb[0].mxu0
    %v8976 = vadd.f32 %v8879, %v8975
    %v8977 = vpop.f32.mrb[0].mxu0
    %8978 = vmatprep.mubr.bf16.mxu0 %v3756
    %8979 = vmatmul.mubr.bf16.gmra.mrb[0].mxu0 %v3361
    %v8980 = vpop.f32.mrb[0].mxu0
    %v8981 = vadd.f32 %v8884, %v8980
    %v8982 = vpop.f32.mrb[0].mxu0
    %v8983 = vpop.f32.mrb[0].mxu0
    %v8984 = vadd.f32 %v8887, %v8983
    %v8985 = vpop.f32.mrb[0].mxu0
    %8986 = vmatprep.mubr.bf16.mxu0 %v3757
    %8987 = vmatmul.mubr.bf16.gmra.mrb[0].mxu0 %v3362
    %v8988 = vpop.f32.mrb[0].mxu0
    %v8989 = vadd.f32 %v8892, %v8988
    %v8990 = vpop.f32.mrb[0].mxu0
    %v8991 = vpop.f32.mrb[0].mxu0
    %v8992 = vadd.f32 %v8895, %v8991
    %v8993 = vpop.f32.mrb[0].mxu0
    %8994 = vmatprep.mubr.bf16.mxu0 %v3758
    %8995 = vmatmul.mubr.bf16.gmra.mrb[0].mxu0 %v3363
    %v8996 = vpop.f32.mrb[0].mxu0
    %v8997 = vadd.f32 %v8900, %v8996
    %v8998 = vpop.f32.mrb[0].mxu0
    %v8999 = vpop.f32.mrb[0].mxu0
    %v9000 = vadd.f32 %v8903, %v8999
    %v9001 = vpop.f32.mrb[0].mxu0
    %9002 = vmatprep.mubr.bf16.mxu0 %v3759
    %9003 = vmatmul.mubr.bf16.gmra.mrb[0].mxu0 %v3364
    %v9004 = vpop.f32.mrb[0].mxu0
    %v9005 = vadd.f32 %v8908, %v9004
    %v9006 = vpop.f32.mrb[0].mxu0
    %v9007 = vpop.f32.mrb[0].mxu0
    %v9008 = vadd.f32 %v8911, %v9007
    %v9009 = vpop.f32.mrb[0].mxu0
    %9010 = vmatprep.mubr.bf16.mxu0 %v3760
    %9011 = vmatmul.mubr.bf16.gmra.mrb[0].mxu0 %v3365
    %v9012 = vpop.f32.mrb[0].mxu0
    %v9013 = vadd.f32 %v8916, %v9012
    %v9014 = vpop.f32.mrb[0].mxu0
    %v9015 = vpop.f32.mrb[0].mxu0
    %v9016 = vadd.f32 %v8919, %v9015
    %v9017 = vpop.f32.mrb[0].mxu0
    %9018 = vmatprep.mubr.bf16.mxu0 %v3761
    %9019 = vmatmul.mubr.bf16.gmra.mrb[0].mxu0 %v3366
    %v9020 = vpop.f32.mrb[0].mxu0
    %v9021 = vadd.f32 %v8924, %v9020
    %v9022 = vpop.f32.mrb[0].mxu0
    %v9023 = vpop.f32.mrb[0].mxu0
    %v9024 = vadd.f32 %v8927, %v9023
    %v9025 = vpop.f32.mrb[0].mxu0
    %9026 = vdwg.mxu0
    %9027 = vmatprep.subr.bf16.mxu0 0
    %9028 = vmatpush1.bf16.msra.mxu0 %v8528
    %9029 = vmatprep.subr.bf16.mxu0 0
    %9030 = vmatpush1.bf16.msra.mxu0 %v8529
    %9031 = vmatprep.subr.bf16.mxu0 0
    %9032 = vmatpush1.bf16.msra.mxu0 %v8530
    %9033 = vmatprep.subr.bf16.mxu0 0
    %9034 = vmatpush1.bf16.msra.mxu0 %v8531
    %9035 = vmatprep.subr.bf16.mxu0 0
    %9036 = vmatpush1.bf16.msra.mxu0 %v8532
    %9037 = vmatprep.subr.bf16.mxu0 0
    %9038 = vmatpush1.bf16.msra.mxu0 %v8533
    %9039 = vmatprep.subr.bf16.mxu0 0
    %9040 = vmatpush1.bf16.msra.mxu0 %v8534
    %9041 = vmatprep.subr.bf16.mxu0 0
    %9042 = vmatpush1.bf16.msra.mxu0 %v8535
    %9043 = vmatprep.subr.bf16.mxu0 0
    %9044 = vmatpush1.bf16.msra.mxu0 %v8536
    %9045 = vmatprep.subr.bf16.mxu0 0
    %9046 = vmatpush1.bf16.msra.mxu0 %v8537
    %9047 = vmatprep.subr.bf16.mxu0 0
    %9048 = vmatpush1.bf16.msra.mxu0 %v8538
    %9049 = vmatprep.subr.bf16.mxu0 0
    %9050 = vmatpush1.bf16.msra.mxu0 %v8539
    %9051 = vmatprep.subr.bf16.mxu0 0
    %9052 = vmatpush1.bf16.msra.mxu0 %v8540
    %9053 = vmatprep.subr.bf16.mxu0 0
    %9054 = vmatpush1.bf16.msra.mxu0 %v8541
    %9055 = vmatprep.subr.bf16.mxu0 0
    %9056 = vmatpush1.bf16.msra.mxu0 %v8542
    %9057 = vmatprep.subr.bf16.mxu0 0
    %9058 = vmatpush1.bf16.msra.mxu0 %v8543
    %9059 = vmatprep.mubr.bf16.mxu0 %v4544
    %9060 = vmatmul.mubr.bf16.gmra.mrb[0].mxu0 %v4149
    %v9061 = vpop.f32.mrb[0].mxu0
    %v9062 = vadd.f32 %v8965, %v9061
    %v9063 = vpop.f32.mrb[0].mxu0
    %v9064 = vpop.f32.mrb[0].mxu0
    %v9065 = vadd.f32 %v8968, %v9064
    %v9066 = vpop.f32.mrb[0].mxu0
    %9067 = vmatprep.mubr.bf16.mxu0 %v4545
    %9068 = vmatmul.mubr.bf16.gmra.mrb[0].mxu0 %v4150
    %v9069 = vpop.f32.mrb[0].mxu0
    %v9070 = vadd.f32 %v8973, %v9069
    %v9071 = vpop.f32.mrb[0].mxu0
    %v9072 = vpop.f32.mrb[0].mxu0
    %v9073 = vadd.f32 %v8976, %v9072
    %v9074 = vpop.f32.mrb[0].mxu0
    %9075 = vmatprep.mubr.bf16.mxu0 %v4546
    %9076 = vmatmul.mubr.bf16.gmra.mrb[0].mxu0 %v4151
    %v9077 = vpop.f32.mrb[0].mxu0
    %v9078 = vadd.f32 %v8981, %v9077
    %v9079 = vpop.f32.mrb[0].mxu0
    %v9080 = vpop.f32.mrb[0].mxu0
    %v9081 = vadd.f32 %v8984, %v9080
    %v9082 = vpop.f32.mrb[0].mxu0
    %9083 = vmatprep.mubr.bf16.mxu0 %v4547
    %9084 = vmatmul.mubr.bf16.gmra.mrb[0].mxu0 %v4152
    %v9085 = vpop.f32.mrb[0].mxu0
    %v9086 = vadd.f32 %v8989, %v9085
    %v9087 = vpop.f32.mrb[0].mxu0
    %v9088 = vpop.f32.mrb[0].mxu0
    %v9089 = vadd.f32 %v8992, %v9088
    %v9090 = vpop.f32.mrb[0].mxu0
    %9091 = vmatprep.mubr.bf16.mxu0 %v4548
    %9092 = vmatmul.mubr.bf16.gmra.mrb[0].mxu0 %v4153
    %v9093 = vpop.f32.mrb[0].mxu0
    %v9094 = vadd.f32 %v8997, %v9093
    %v9095 = vpop.f32.mrb[0].mxu0
    %v9096 = vpop.f32.mrb[0].mxu0
    %v9097 = vadd.f32 %v9000, %v9096
    %v9098 = vpop.f32.mrb[0].mxu0
    %9099 = vmatprep.mubr.bf16.mxu0 %v4549
    %9100 = vmatmul.mubr.bf16.gmra.mrb[0].mxu0 %v4154
    %v9101 = vpop.f32.mrb[0].mxu0
    %v9102 = vadd.f32 %v9005, %v9101
    %v9103 = vpop.f32.mrb[0].mxu0
    %v9104 = vpop.f32.mrb[0].mxu0
    %v9105 = vadd.f32 %v9008, %v9104
    %v9106 = vpop.f32.mrb[0].mxu0
    %9107 = vmatprep.mubr.bf16.mxu0 %v4550
    %9108 = vmatmul.mubr.bf16.gmra.mrb[0].mxu0 %v4155
    %v9109 = vpop.f32.mrb[0].mxu0
    %v9110 = vadd.f32 %v9013, %v9109
    %v9111 = vpop.f32.mrb[0].mxu0
    %v9112 = vpop.f32.mrb[0].mxu0
    %v9113 = vadd.f32 %v9016, %v9112
    %v9114 = vpop.f32.mrb[0].mxu0
    %9115 = vmatprep.mubr.bf16.mxu0 %v4551
    %9116 = vmatmul.mubr.bf16.gmra.mrb[0].mxu0 %v4156
    %v9117 = vpop.f32.mrb[0].mxu0
    %v9118 = vadd.f32 %v9021, %v9117
    %v9119 = vpop.f32.mrb[0].mxu0
    %v9120 = vpop.f32.mrb[0].mxu0
    %v9121 = vadd.f32 %v9024, %v9120
    %v9122 = vpop.f32.mrb[0].mxu0
    %9123 = vdwg.mxu0
    %9124 = vmatprep.subr.bf16.mxu0 0
    %9125 = vmatpush1.bf16.msra.mxu0 %v8544
    %9126 = vmatprep.subr.bf16.mxu0 0
    %9127 = vmatpush1.bf16.msra.mxu0 %v8545
    %9128 = vmatprep.subr.bf16.mxu0 0
    %9129 = vmatpush1.bf16.msra.mxu0 %v8546
    %9130 = vmatprep.subr.bf16.mxu0 0
    %9131 = vmatpush1.bf16.msra.mxu0 %v8547
    %9132 = vmatprep.subr.bf16.mxu0 0
    %9133 = vmatpush1.bf16.msra.mxu0 %v8548
    %9134 = vmatprep.subr.bf16.mxu0 0
    %9135 = vmatpush1.bf16.msra.mxu0 %v8549
    %9136 = vmatprep.subr.bf16.mxu0 0
    %9137 = vmatpush1.bf16.msra.mxu0 %v8550
    %9138 = vmatprep.subr.bf16.mxu0 0
    %9139 = vmatpush1.bf16.msra.mxu0 %v8551
    %9140 = vmatprep.subr.bf16.mxu0 0
    %9141 = vmatpush1.bf16.msra.mxu0 %v8552
    %9142 = vmatprep.subr.bf16.mxu0 0
    %9143 = vmatpush1.bf16.msra.mxu0 %v8553
    %9144 = vmatprep.subr.bf16.mxu0 0
    %9145 = vmatpush1.bf16.msra.mxu0 %v8554
    %9146 = vmatprep.subr.bf16.mxu0 0
    %9147 = vmatpush1.bf16.msra.mxu0 %v8555
    %9148 = vmatprep.subr.bf16.mxu0 0
    %9149 = vmatpush1.bf16.msra.mxu0 %v8556
    %9150 = vmatprep.subr.bf16.mxu0 0
    %9151 = vmatpush1.bf16.msra.mxu0 %v8557
    %9152 = vmatprep.subr.bf16.mxu0 0
    %9153 = vmatpush1.bf16.msra.mxu0 %v8558
    %9154 = vmatprep.subr.bf16.mxu0 0
    %9155 = vmatpush1.bf16.msra.mxu0 %v8559
    %9156 = vmatprep.mubr.bf16.mxu0 %v5334
    %9157 = vmatmul.mubr.bf16.gmra.mrb[0].mxu0 %v4939
    %v9158 = vpop.f32.mrb[0].mxu0
    %v9159 = vadd.f32 %v9062, %v9158
    %v9160 = vpop.f32.mrb[0].mxu0
    %v9161 = vpop.f32.mrb[0].mxu0
    %v9162 = vadd.f32 %v9065, %v9161
    %v9163 = vpop.f32.mrb[0].mxu0
    %9164 = vmatprep.mubr.bf16.mxu0 %v5335
    %9165 = vmatmul.mubr.bf16.gmra.mrb[0].mxu0 %v4940
    %v9166 = vpop.f32.mrb[0].mxu0
    %v9167 = vadd.f32 %v9070, %v9166
    %v9168 = vpop.f32.mrb[0].mxu0
    %v9169 = vpop.f32.mrb[0].mxu0
    %v9170 = vadd.f32 %v9073, %v9169
    %v9171 = vpop.f32.mrb[0].mxu0
    %9172 = vmatprep.mubr.bf16.mxu0 %v5336
    %9173 = vmatmul.mubr.bf16.gmra.mrb[0].mxu0 %v4941
    %v9174 = vpop.f32.mrb[0].mxu0
    %v9175 = vadd.f32 %v9078, %v9174
    %v9176 = vpop.f32.mrb[0].mxu0
    %v9177 = vpop.f32.mrb[0].mxu0
    %v9178 = vadd.f32 %v9081, %v9177
    %v9179 = vpop.f32.mrb[0].mxu0
    %9180 = vmatprep.mubr.bf16.mxu0 %v5337
    %9181 = vmatmul.mubr.bf16.gmra.mrb[0].mxu0 %v4942
    %v9182 = vpop.f32.mrb[0].mxu0
    %v9183 = vadd.f32 %v9086, %v9182
    %v9184 = vpop.f32.mrb[0].mxu0
    %v9185 = vpop.f32.mrb[0].mxu0
    %v9186 = vadd.f32 %v9089, %v9185
    %v9187 = vpop.f32.mrb[0].mxu0
    %9188 = vmatprep.mubr.bf16.mxu0 %v5338
    %9189 = vmatmul.mubr.bf16.gmra.mrb[0].mxu0 %v4943
    %v9190 = vpop.f32.mrb[0].mxu0
    %v9191 = vadd.f32 %v9094, %v9190
    %v9192 = vpop.f32.mrb[0].mxu0
    %v9193 = vpop.f32.mrb[0].mxu0
    %v9194 = vadd.f32 %v9097, %v9193
    %v9195 = vpop.f32.mrb[0].mxu0
    %9196 = vmatprep.mubr.bf16.mxu0 %v5339
    %9197 = vmatmul.mubr.bf16.gmra.mrb[0].mxu0 %v4944
    %v9198 = vpop.f32.mrb[0].mxu0
    %v9199 = vadd.f32 %v9102, %v9198
    %v9200 = vpop.f32.mrb[0].mxu0
    %v9201 = vpop.f32.mrb[0].mxu0
    %v9202 = vadd.f32 %v9105, %v9201
    %v9203 = vpop.f32.mrb[0].mxu0
    %9204 = vmatprep.mubr.bf16.mxu0 %v5340
    %9205 = vmatmul.mubr.bf16.gmra.mrb[0].mxu0 %v4945
    %v9206 = vpop.f32.mrb[0].mxu0
    %v9207 = vadd.f32 %v9110, %v9206
    %v9208 = vpop.f32.mrb[0].mxu0
    %v9209 = vpop.f32.mrb[0].mxu0
    %v9210 = vadd.f32 %v9113, %v9209
    %v9211 = vpop.f32.mrb[0].mxu0
    %9212 = vmatprep.mubr.bf16.mxu0 %v5341
    %9213 = vmatmul.mubr.bf16.gmra.mrb[0].mxu0 %v4946
    %v9214 = vpop.f32.mrb[0].mxu0
    %v9215 = vadd.f32 %v9118, %v9214
    %v9216 = vpop.f32.mrb[0].mxu0
    %v9217 = vpop.f32.mrb[0].mxu0
    %v9218 = vadd.f32 %v9121, %v9217
    %v9219 = vpop.f32.mrb[0].mxu0
    %9220 = vdwg.mxu0
    %9221 = vmatprep.subr.bf16.mxu0 0
    %9222 = vmatpush1.bf16.msra.mxu0 %v8560
    %9223 = vmatprep.subr.bf16.mxu0 0
    %9224 = vmatpush1.bf16.msra.mxu0 %v8561
    %9225 = vmatprep.subr.bf16.mxu0 0
    %9226 = vmatpush1.bf16.msra.mxu0 %v8562
    %9227 = vmatprep.subr.bf16.mxu0 0
    %9228 = vmatpush1.bf16.msra.mxu0 %v8563
    %9229 = vmatprep.subr.bf16.mxu0 0
    %9230 = vmatpush1.bf16.msra.mxu0 %v8564
    %9231 = vmatprep.subr.bf16.mxu0 0
    %9232 = vmatpush1.bf16.msra.mxu0 %v8565
    %9233 = vmatprep.subr.bf16.mxu0 0
    %9234 = vmatpush1.bf16.msra.mxu0 %v8566
    %9235 = vmatprep.subr.bf16.mxu0 0
    %9236 = vmatpush1.bf16.msra.mxu0 %v8567
    %9237 = vmatprep.subr.bf16.mxu0 0
    %9238 = vmatpush1.bf16.msra.mxu0 %v8568
    %9239 = vmatprep.subr.bf16.mxu0 0
    %9240 = vmatpush1.bf16.msra.mxu0 %v8569
    %9241 = vmatprep.subr.bf16.mxu0 0
    %9242 = vmatpush1.bf16.msra.mxu0 %v8570
    %9243 = vmatprep.subr.bf16.mxu0 0
    %9244 = vmatpush1.bf16.msra.mxu0 %v8571
    %9245 = vmatprep.subr.bf16.mxu0 0
    %9246 = vmatpush1.bf16.msra.mxu0 %v8572
    %9247 = vmatprep.subr.bf16.mxu0 0
    %9248 = vmatpush1.bf16.msra.mxu0 %v8573
    %9249 = vmatprep.subr.bf16.mxu0 0
    %9250 = vmatpush1.bf16.msra.mxu0 %v8574
    %9251 = vmatprep.subr.bf16.mxu0 0
    %9252 = vmatpush1.bf16.msra.mxu0 %v8575
    %9253 = vmatprep.mubr.bf16.mxu0 %v6124
    %9254 = vmatmul.mubr.bf16.gmra.mrb[0].mxu0 %v5729
    %v9255 = vpop.f32.mrb[0].mxu0
    %v9256 = vadd.f32 %v9159, %v9255
    %v9257 = vpop.f32.mrb[0].mxu0
    %v9258 = vpop.f32.mrb[0].mxu0
    %v9259 = vadd.f32 %v9162, %v9258
    %v9260 = vpop.f32.mrb[0].mxu0
    %9261 = vmatprep.mubr.bf16.mxu0 %v6125
    %9262 = vmatmul.mubr.bf16.gmra.mrb[0].mxu0 %v5730
    %v9263 = vpop.f32.mrb[0].mxu0
    %v9264 = vadd.f32 %v9167, %v9263
    %v9265 = vpop.f32.mrb[0].mxu0
    %v9266 = vpop.f32.mrb[0].mxu0
    %v9267 = vadd.f32 %v9170, %v9266
    %v9268 = vpop.f32.mrb[0].mxu0
    %9269 = vmatprep.mubr.bf16.mxu0 %v6126
    %9270 = vmatmul.mubr.bf16.gmra.mrb[0].mxu0 %v5731
    %v9271 = vpop.f32.mrb[0].mxu0
    %v9272 = vadd.f32 %v9175, %v9271
    %v9273 = vpop.f32.mrb[0].mxu0
    %v9274 = vpop.f32.mrb[0].mxu0
    %v9275 = vadd.f32 %v9178, %v9274
    %v9276 = vpop.f32.mrb[0].mxu0
    %9277 = vmatprep.mubr.bf16.mxu0 %v6127
    %9278 = vmatmul.mubr.bf16.gmra.mrb[0].mxu0 %v5732
    %v9279 = vpop.f32.mrb[0].mxu0
    %v9280 = vadd.f32 %v9183, %v9279
    %v9281 = vpop.f32.mrb[0].mxu0
    %v9282 = vpop.f32.mrb[0].mxu0
    %v9283 = vadd.f32 %v9186, %v9282
    %v9284 = vpop.f32.mrb[0].mxu0
    %9285 = vmatprep.mubr.bf16.mxu0 %v6128
    %9286 = vmatmul.mubr.bf16.gmra.mrb[0].mxu0 %v5733
    %v9287 = vpop.f32.mrb[0].mxu0
    %v9288 = vadd.f32 %v9191, %v9287
    %v9289 = vpop.f32.mrb[0].mxu0
    %v9290 = vpop.f32.mrb[0].mxu0
    %v9291 = vadd.f32 %v9194, %v9290
    %v9292 = vpop.f32.mrb[0].mxu0
    %9293 = vmatprep.mubr.bf16.mxu0 %v6129
    %9294 = vmatmul.mubr.bf16.gmra.mrb[0].mxu0 %v5734
    %v9295 = vpop.f32.mrb[0].mxu0
    %v9296 = vadd.f32 %v9199, %v9295
    %v9297 = vpop.f32.mrb[0].mxu0
    %v9298 = vpop.f32.mrb[0].mxu0
    %v9299 = vadd.f32 %v9202, %v9298
    %v9300 = vpop.f32.mrb[0].mxu0
    %9301 = vmatprep.mubr.bf16.mxu0 %v6130
    %9302 = vmatmul.mubr.bf16.gmra.mrb[0].mxu0 %v5735
    %v9303 = vpop.f32.mrb[0].mxu0
    %v9304 = vadd.f32 %v9207, %v9303
    %v9305 = vpop.f32.mrb[0].mxu0
    %v9306 = vpop.f32.mrb[0].mxu0
    %v9307 = vadd.f32 %v9210, %v9306
    %v9308 = vpop.f32.mrb[0].mxu0
    %9309 = vmatprep.mubr.bf16.mxu0 %v6131
    %9310 = vmatmul.mubr.bf16.gmra.mrb[0].mxu0 %v5736
    %v9311 = vpop.f32.mrb[0].mxu0
    %v9312 = vadd.f32 %v9215, %v9311
    %v9313 = vpop.f32.mrb[0].mxu0
    %v9314 = vpop.f32.mrb[0].mxu0
    %v9315 = vadd.f32 %v9218, %v9314
    %v9316 = vpop.f32.mrb[0].mxu0
    %9317 = vdwg.mxu0
    %9318 = vmatprep.subr.bf16.mxu0 0
    %9319 = vmatpush1.bf16.msra.mxu0 %v8576
    %9320 = vmatprep.subr.bf16.mxu0 0
    %9321 = vmatpush1.bf16.msra.mxu0 %v8577
    %9322 = vmatprep.subr.bf16.mxu0 0
    %9323 = vmatpush1.bf16.msra.mxu0 %v8578
    %9324 = vmatprep.subr.bf16.mxu0 0
    %9325 = vmatpush1.bf16.msra.mxu0 %v8579
    %9326 = vmatprep.subr.bf16.mxu0 0
    %9327 = vmatpush1.bf16.msra.mxu0 %v8580
    %9328 = vmatprep.subr.bf16.mxu0 0
    %9329 = vmatpush1.bf16.msra.mxu0 %v8581
    %9330 = vmatprep.subr.bf16.mxu0 0
    %9331 = vmatpush1.bf16.msra.mxu0 %v8582
    %9332 = vmatprep.subr.bf16.mxu0 0
    %9333 = vmatpush1.bf16.msra.mxu0 %v8583
    %9334 = vmatprep.subr.bf16.mxu0 0
    %9335 = vmatpush1.bf16.msra.mxu0 %v8584
    %9336 = vmatprep.subr.bf16.mxu0 0
    %9337 = vmatpush1.bf16.msra.mxu0 %v8585
    %9338 = vmatprep.subr.bf16.mxu0 0
    %9339 = vmatpush1.bf16.msra.mxu0 %v8586
    %9340 = vmatprep.subr.bf16.mxu0 0
    %9341 = vmatpush1.bf16.msra.mxu0 %v8587
    %9342 = vmatprep.subr.bf16.mxu0 0
    %9343 = vmatpush1.bf16.msra.mxu0 %v8588
    %9344 = vmatprep.subr.bf16.mxu0 0
    %9345 = vmatpush1.bf16.msra.mxu0 %v8589
    %9346 = vmatprep.subr.bf16.mxu0 0
    %9347 = vmatpush1.bf16.msra.mxu0 %v8590
    %9348 = vmatprep.subr.bf16.mxu0 0
    %9349 = vmatpush1.bf16.msra.mxu0 %v8591
    %9350 = vmatprep.mubr.bf16.mxu0 %v6914
    %9351 = vmatmul.mubr.bf16.gmra.mrb[0].mxu0 %v6519
    %v9352 = vpop.f32.mrb[0].mxu0
    %v9353 = vadd.f32 %v9256, %v9352
    %v9354 = vpop.f32.mrb[0].mxu0
    %v9355 = vpop.f32.mrb[0].mxu0
    %v9356 = vadd.f32 %v9259, %v9355
    %v9357 = vpop.f32.mrb[0].mxu0
    %9358 = vmatprep.mubr.bf16.mxu0 %v6915
    %9359 = vmatmul.mubr.bf16.gmra.mrb[0].mxu0 %v6520
    %v9360 = vpop.f32.mrb[0].mxu0
    %v9361 = vadd.f32 %v9264, %v9360
    %v9362 = vpop.f32.mrb[0].mxu0
    %v9363 = vpop.f32.mrb[0].mxu0
    %v9364 = vadd.f32 %v9267, %v9363
    %v9365 = vpop.f32.mrb[0].mxu0
    %9366 = vmatprep.mubr.bf16.mxu0 %v6916
    %9367 = vmatmul.mubr.bf16.gmra.mrb[0].mxu0 %v6521
    %v9368 = vpop.f32.mrb[0].mxu0
    %v9369 = vadd.f32 %v9272, %v9368
    %v9370 = vpop.f32.mrb[0].mxu0
    %v9371 = vpop.f32.mrb[0].mxu0
    %v9372 = vadd.f32 %v9275, %v9371
    %v9373 = vpop.f32.mrb[0].mxu0
    %9374 = vmatprep.mubr.bf16.mxu0 %v6917
    %9375 = vmatmul.mubr.bf16.gmra.mrb[0].mxu0 %v6522
    %v9376 = vpop.f32.mrb[0].mxu0
    %v9377 = vadd.f32 %v9280, %v9376
    %v9378 = vpop.f32.mrb[0].mxu0
    %v9379 = vpop.f32.mrb[0].mxu0
    %v9380 = vadd.f32 %v9283, %v9379
    %v9381 = vpop.f32.mrb[0].mxu0
    %9382 = vmatprep.mubr.bf16.mxu0 %v6918
    %9383 = vmatmul.mubr.bf16.gmra.mrb[0].mxu0 %v6523
    %v9384 = vpop.f32.mrb[0].mxu0
    %v9385 = vadd.f32 %v9288, %v9384
    %v9386 = vpop.f32.mrb[0].mxu0
    %v9387 = vpop.f32.mrb[0].mxu0
    %v9388 = vadd.f32 %v9291, %v9387
    %v9389 = vpop.f32.mrb[0].mxu0
    %9390 = vmatprep.mubr.bf16.mxu0 %v6919
    %9391 = vmatmul.mubr.bf16.gmra.mrb[0].mxu0 %v6524
    %v9392 = vpop.f32.mrb[0].mxu0
    %v9393 = vadd.f32 %v9296, %v9392
    %v9394 = vpop.f32.mrb[0].mxu0
    %v9395 = vpop.f32.mrb[0].mxu0
    %v9396 = vadd.f32 %v9299, %v9395
    %v9397 = vpop.f32.mrb[0].mxu0
    %9398 = vmatprep.mubr.bf16.mxu0 %v6920
    %9399 = vmatmul.mubr.bf16.gmra.mrb[0].mxu0 %v6525
    %v9400 = vpop.f32.mrb[0].mxu0
    %v9401 = vadd.f32 %v9304, %v9400
    %v9402 = vpop.f32.mrb[0].mxu0
    %v9403 = vpop.f32.mrb[0].mxu0
    %v9404 = vadd.f32 %v9307, %v9403
    %v9405 = vpop.f32.mrb[0].mxu0
    %9406 = vmatprep.mubr.bf16.mxu0 %v6921
    %9407 = vmatmul.mubr.bf16.gmra.mrb[0].mxu0 %v6526
    %v9408 = vpop.f32.mrb[0].mxu0
    %v9409 = vadd.f32 %v9312, %v9408
    %v9410 = vpop.f32.mrb[0].mxu0
    %v9411 = vpop.f32.mrb[0].mxu0
    %v9412 = vadd.f32 %v9315, %v9411
    %v9413 = vpop.f32.mrb[0].mxu0
    %9414 = vdwg.mxu0
    %9415 = vmatprep.subr.bf16.mxu0 0
    %9416 = vmatpush1.bf16.msra.mxu0 %v8592
    %9417 = vmatprep.subr.bf16.mxu0 0
    %9418 = vmatpush1.bf16.msra.mxu0 %v8593
    %9419 = vmatprep.subr.bf16.mxu0 0
    %9420 = vmatpush1.bf16.msra.mxu0 %v8594
    %9421 = vmatprep.subr.bf16.mxu0 0
    %9422 = vmatpush1.bf16.msra.mxu0 %v8595
    %9423 = vmatprep.subr.bf16.mxu0 0
    %9424 = vmatpush1.bf16.msra.mxu0 %v8596
    %9425 = vmatprep.subr.bf16.mxu0 0
    %9426 = vmatpush1.bf16.msra.mxu0 %v8597
    %9427 = vmatprep.subr.bf16.mxu0 0
    %9428 = vmatpush1.bf16.msra.mxu0 %v8598
    %9429 = vmatprep.subr.bf16.mxu0 0
    %9430 = vmatpush1.bf16.msra.mxu0 %v8599
    %9431 = vmatprep.subr.bf16.mxu0 0
    %9432 = vmatpush1.bf16.msra.mxu0 %v8600
    %9433 = vmatprep.subr.bf16.mxu0 0
    %9434 = vmatpush1.bf16.msra.mxu0 %v8601
    %9435 = vmatprep.subr.bf16.mxu0 0
    %9436 = vmatpush1.bf16.msra.mxu0 %v8602
    %9437 = vmatprep.subr.bf16.mxu0 0
    %9438 = vmatpush1.bf16.msra.mxu0 %v8603
    %9439 = vmatprep.subr.bf16.mxu0 0
    %9440 = vmatpush1.bf16.msra.mxu0 %v8604
    %9441 = vmatprep.subr.bf16.mxu0 0
    %9442 = vmatpush1.bf16.msra.mxu0 %v8605
    %9443 = vmatprep.subr.bf16.mxu0 0
    %9444 = vmatpush1.bf16.msra.mxu0 %v8606
    %9445 = vmatprep.subr.bf16.mxu0 0
    %9446 = vmatpush1.bf16.msra.mxu0 %v8607
    %9447 = vmatprep.mubr.bf16.mxu0 %v7704
    %9448 = vmatmul.mubr.bf16.gmra.mrb[0].mxu0 %v7309
    %v9449 = vpop.f32.mrb[0].mxu0
    %v9450 = vadd.f32 %v9353, %v9449
    %v9451 = vpop.f32.mrb[0].mxu0
    %v9452 = vpop.f32.mrb[0].mxu0
    %v9453 = vadd.f32 %v9356, %v9452
    %v9454 = vpop.f32.mrb[0].mxu0
    %9455 = vmatprep.mubr.bf16.mxu0 %v7705
    %9456 = vmatmul.mubr.bf16.gmra.mrb[0].mxu0 %v7310
    %v9457 = vpop.f32.mrb[0].mxu0
    %v9458 = vadd.f32 %v9361, %v9457
    %v9459 = vpop.f32.mrb[0].mxu0
    %v9460 = vpop.f32.mrb[0].mxu0
    %v9461 = vadd.f32 %v9364, %v9460
    %v9462 = vpop.f32.mrb[0].mxu0
    %9463 = vmatprep.mubr.bf16.mxu0 %v7706
    %9464 = vmatmul.mubr.bf16.gmra.mrb[0].mxu0 %v7311
    %v9465 = vpop.f32.mrb[0].mxu0
    %v9466 = vadd.f32 %v9369, %v9465
    %v9467 = vpop.f32.mrb[0].mxu0
    %v9468 = vpop.f32.mrb[0].mxu0
    %v9469 = vadd.f32 %v9372, %v9468
    %v9470 = vpop.f32.mrb[0].mxu0
    %9471 = vmatprep.mubr.bf16.mxu0 %v7707
    %9472 = vmatmul.mubr.bf16.gmra.mrb[0].mxu0 %v7312
    %v9473 = vpop.f32.mrb[0].mxu0
    %v9474 = vadd.f32 %v9377, %v9473
    %v9475 = vpop.f32.mrb[0].mxu0
    %v9476 = vpop.f32.mrb[0].mxu0
    %v9477 = vadd.f32 %v9380, %v9476
    %v9478 = vpop.f32.mrb[0].mxu0
    %9479 = vmatprep.mubr.bf16.mxu0 %v7708
    %9480 = vmatmul.mubr.bf16.gmra.mrb[0].mxu0 %v7313
    %v9481 = vpop.f32.mrb[0].mxu0
    %v9482 = vadd.f32 %v9385, %v9481
    %v9483 = vpop.f32.mrb[0].mxu0
    %v9484 = vpop.f32.mrb[0].mxu0
    %v9485 = vadd.f32 %v9388, %v9484
    %v9486 = vpop.f32.mrb[0].mxu0
    %9487 = vmatprep.mubr.bf16.mxu0 %v7709
    %9488 = vmatmul.mubr.bf16.gmra.mrb[0].mxu0 %v7314
    %v9489 = vpop.f32.mrb[0].mxu0
    %v9490 = vadd.f32 %v9393, %v9489
    %v9491 = vpop.f32.mrb[0].mxu0
    %v9492 = vpop.f32.mrb[0].mxu0
    %v9493 = vadd.f32 %v9396, %v9492
    %v9494 = vpop.f32.mrb[0].mxu0
    %9495 = vmatprep.mubr.bf16.mxu0 %v7710
    %9496 = vmatmul.mubr.bf16.gmra.mrb[0].mxu0 %v7315
    %v9497 = vpop.f32.mrb[0].mxu0
    %v9498 = vadd.f32 %v9401, %v9497
    %v9499 = vpop.f32.mrb[0].mxu0
    %v9500 = vpop.f32.mrb[0].mxu0
    %v9501 = vadd.f32 %v9404, %v9500
    %v9502 = vpop.f32.mrb[0].mxu0
    %9503 = vmatprep.mubr.bf16.mxu0 %v7711
    %9504 = vmatmul.mubr.bf16.gmra.mrb[0].mxu0 %v7316
    %v9505 = vpop.f32.mrb[0].mxu0
    %v9506 = vadd.f32 %v9409, %v9505
    %v9507 = vpop.f32.mrb[0].mxu0
    %v9508 = vpop.f32.mrb[0].mxu0
    %v9509 = vadd.f32 %v9412, %v9508
    %v9510 = vpop.f32.mrb[0].mxu0
    %9511 = vdwg.mxu0
    %v9512 = vld [vmem:[#allocation11] sm:$0x1]
    %v9513 = vld [vmem:[#allocation13] sm:$0x1]
    %v9514 = vmul.f32 %v9450, %v9450
    %v9515 = vmul.f32 %v9453, %v9453
    %v9516 = vmul.f32 %v9458, %v9458
    %v9517 = vmul.f32 %v9461, %v9461
    %v9518 = vmul.f32 %v9466, %v9466
    %v9519 = vmul.f32 %v9469, %v9469
    %v9520 = vmul.f32 %v9474, %v9474
    %v9521 = vmul.f32 %v9477, %v9477
    %v9522 = vmul.f32 %v9482, %v9482
    %v9523 = vmul.f32 %v9485, %v9485
    %v9524 = vmul.f32 %v9490, %v9490
    %v9525 = vmul.f32 %v9493, %v9493
    %v9526 = vmul.f32 %v9498, %v9498
    %v9527 = vmul.f32 %v9501, %v9501
    %v9528 = vmul.f32 %v9506, %v9506
    %v9529 = vmul.f32 %v9509, %v9509
    %v9530 = vadd.f32 %v9450, %v9453
    %v9531 = vadd.f32 %v9530, %v9458
    %v9532 = vadd.f32 %v9531, %v9461
    %v9533 = vadd.f32 %v9532, %v9466
    %v9534 = vadd.f32 %v9533, %v9469
    %v9535 = vadd.f32 %v9534, %v9474
    %v9536 = vadd.f32 %v9535, %v9477
    %v9537 = vadd.f32 %v9536, %v9482
    %v9538 = vadd.f32 %v9537, %v9485
    %v9539 = vadd.f32 %v9538, %v9490
    %v9540 = vadd.f32 %v9539, %v9493
    %v9541 = vadd.f32 %v9540, %v9498
    %v9542 = vadd.f32 %v9541, %v9501
    %v9543 = vadd.f32 %v9542, %v9506
    %v9544 = vadd.f32 %v9543, %v9509
    %v9545 = vrot.slane %v9544, 4
    %v9546 = vadd.f32 %v9544, %v9545
    %v9547 = vrot.slane %v9546, 2
    %v9548 = vadd.f32 %v9546, %v9547
    %v9549 = vrot.slane %v9548, 1
    %v9550 = vadd.f32 %v9548, %v9549
    %v9551 = vadd.f32 %v9514, %v9515
    %v9552 = vadd.f32 %v9551, %v9516
    %v9553 = vadd.f32 %v9552, %v9517
    %v9554 = vadd.f32 %v9553, %v9518
    %v9555 = vadd.f32 %v9554, %v9519
    %v9556 = vadd.f32 %v9555, %v9520
    %v9557 = vadd.f32 %v9556, %v9521
    %v9558 = vadd.f32 %v9557, %v9522
    %v9559 = vadd.f32 %v9558, %v9523
    %v9560 = vadd.f32 %v9559, %v9524
    %v9561 = vadd.f32 %v9560, %v9525
    %v9562 = vadd.f32 %v9561, %v9526
    %v9563 = vadd.f32 %v9562, %v9527
    %v9564 = vadd.f32 %v9563, %v9528
    %v9565 = vadd.f32 %v9564, %v9529
    %v9566 = vrot.slane %v9565, 4
    %v9567 = vadd.f32 %v9565, %v9566
    %v9568 = vrot.slane %v9567, 2
    %v9569 = vadd.f32 %v9567, %v9568
    %v9570 = vrot.slane %v9569, 1
    %v9571 = vadd.f32 %v9569, %v9570
    %v9572 = vmul.f32 %v9550, 0.0078125
    %v9573 = vmul.f32 %v9571, 0.0078125
    %v9574 = vmul.f32 %v9572, %v9572
    %v9575 = vsub.f32 %v9573, %v9574
    %v9576 = vmax.f32 %v9575, 0.0
    %v9577 = vadd.f32 %v9576, 1e-05
    %v9578 = vrsqrt.pop %v9577
    %v9579 = vmul.f32 %v9512, %v9578
    %v9580 = vmul.f32 %v9572, %v9579
    %v9581 = vsub.f32 %v9513, %v9580
    %v9583 = vlaneseq
    %v9584 = vshrl.u32 %v9583, 7
    %v9585 = vsub.s32 0, %v9584
    %v9586 = vrot.slane %v9579, %v9585
    %v9588 = vmul.f32 %v9450, %v9586
    %v9589 = vmul.f32 %v9453, %v9586
    %v9590 = vmul.f32 %v9458, %v9586
    %v9591 = vmul.f32 %v9461, %v9586
    %v9592 = vmul.f32 %v9466, %v9586
    %v9593 = vmul.f32 %v9469, %v9586
    %v9594 = vmul.f32 %v9474, %v9586
    %v9595 = vmul.f32 %v9477, %v9586
    %v9596 = vmul.f32 %v9482, %v9586
    %v9597 = vmul.f32 %v9485, %v9586
    %v9598 = vmul.f32 %v9490, %v9586
    %v9599 = vmul.f32 %v9493, %v9586
    %v9600 = vmul.f32 %v9498, %v9586
    %v9601 = vmul.f32 %v9501, %v9586
    %v9602 = vmul.f32 %v9506, %v9586
    %v9603 = vmul.f32 %v9509, %v9586
    %v9605 = vlaneseq
    %v9606 = vshrl.u32 %v9605, 7
    %v9607 = vsub.s32 0, %v9606
    %v9608 = vrot.slane %v9581, %v9607
    %v9610 = vadd.f32 %v9588, %v9608
    %v9611 = vadd.f32 %v9589, %v9608
    %v9612 = vadd.f32 %v9590, %v9608
    %v9613 = vadd.f32 %v9591, %v9608
    %v9614 = vadd.f32 %v9592, %v9608
    %v9615 = vadd.f32 %v9593, %v9608
    %v9616 = vadd.f32 %v9594, %v9608
    %v9617 = vadd.f32 %v9595, %v9608
    %v9618 = vadd.f32 %v9596, %v9608
    %v9619 = vadd.f32 %v9597, %v9608
    %v9620 = vadd.f32 %v9598, %v9608
    %v9621 = vadd.f32 %v9599, %v9608
    %v9622 = vadd.f32 %v9600, %v9608
    %v9623 = vadd.f32 %v9601, %v9608
    %v9624 = vadd.f32 %v9602, %v9608
    %v9625 = vadd.f32 %v9603, %v9608
    %vm9626 = vcmp.ge.f32.partialorder %v9610, 0.0
    %vm9627 = vcmp.ge.f32.partialorder %v9611, 0.0
    %vm9628 = vcmp.ge.f32.partialorder %v9612, 0.0
    %vm9629 = vcmp.ge.f32.partialorder %v9613, 0.0
    %vm9630 = vcmp.ge.f32.partialorder %v9614, 0.0
    %vm9631 = vcmp.ge.f32.partialorder %v9615, 0.0
    %vm9632 = vcmp.ge.f32.partialorder %v9616, 0.0
    %vm9633 = vcmp.ge.f32.partialorder %v9617, 0.0
    %vm9634 = vcmp.ge.f32.partialorder %v9618, 0.0
    %vm9635 = vcmp.ge.f32.partialorder %v9619, 0.0
    %vm9636 = vcmp.ge.f32.partialorder %v9620, 0.0
    %vm9637 = vcmp.ge.f32.partialorder %v9621, 0.0
    %vm9638 = vcmp.ge.f32.partialorder %v9622, 0.0
    %vm9639 = vcmp.ge.f32.partialorder %v9623, 0.0
    %vm9640 = vcmp.ge.f32.partialorder %v9624, 0.0
    %vm9641 = vcmp.ge.f32.partialorder %v9625, 0.0
    %v9642 = vmul.f32 %v9610, 0.2
    %v9643 = vmul.f32 %v9611, 0.2
    %v9644 = vmul.f32 %v9612, 0.2
    %v9645 = vmul.f32 %v9613, 0.2
    %v9646 = vmul.f32 %v9614, 0.2
    %v9647 = vmul.f32 %v9615, 0.2
    %v9648 = vmul.f32 %v9616, 0.2
    %v9649 = vmul.f32 %v9617, 0.2
    %v9650 = vmul.f32 %v9618, 0.2
    %v9651 = vmul.f32 %v9619, 0.2
    %v9652 = vmul.f32 %v9620, 0.2
    %v9653 = vmul.f32 %v9621, 0.2
    %v9654 = vmul.f32 %v9622, 0.2
    %v9655 = vmul.f32 %v9623, 0.2
    %v9656 = vmul.f32 %v9624, 0.2
    %v9657 = vmul.f32 %v9625, 0.2
    %v9658 = vsel %vm9626, %v9610, %v9642
    %v9659 = vsel %vm9627, %v9611, %v9643
    %v9660 = vsel %vm9628, %v9612, %v9644
    %v9661 = vsel %vm9629, %v9613, %v9645
    %v9662 = vsel %vm9630, %v9614, %v9646
    %v9663 = vsel %vm9631, %v9615, %v9647
    %v9664 = vsel %vm9632, %v9616, %v9648
    %v9665 = vsel %vm9633, %v9617, %v9649
    %v9666 = vsel %vm9634, %v9618, %v9650
    %v9667 = vsel %vm9635, %v9619, %v9651
    %v9668 = vsel %vm9636, %v9620, %v9652
    %v9669 = vsel %vm9637, %v9621, %v9653
    %v9670 = vsel %vm9638, %v9622, %v9654
    %v9671 = vsel %vm9639, %v9623, %v9655
    %v9672 = vsel %vm9640, %v9624, %v9656
    %v9673 = vsel %vm9641, %v9625, %v9657
    %v9674 = vpack.c.bf16 %v9659, %v9658
    %v9675 = vpack.c.bf16 %v9661, %v9660
    %v9676 = vpack.c.bf16 %v9663, %v9662
    %v9677 = vpack.c.bf16 %v9665, %v9664
    %v9678 = vpack.c.bf16 %v9667, %v9666
    %v9679 = vpack.c.bf16 %v9669, %v9668
    %v9680 = vpack.c.bf16 %v9671, %v9670
    %v9681 = vpack.c.bf16 %v9673, %v9672
    %v9682 = vld [vmem:[#allocation14] sm:$0xf]
    %v9683 = vld [vmem:[#allocation14 + $0x4] sm:$0xf]
    %v9684 = vld [vmem:[#allocation14 + $0x8] sm:$0xf]
    %v9685 = vld [vmem:[#allocation14 + $0xc] sm:$0xf]
    %v9690 = vunpack.c.l.b16 %v9682
    %v9691 = vunpack.c.l.b16 %v9683
    %v9692 = vunpack.c.l.b16 %v9684
    %v9693 = vunpack.c.l.b16 %v9685
    %v9694 = vpack.c.b16 %v9691, %v9690
    %v9695 = vpack.c.b16 %v9693, %v9692
    %9698 = vmatprep.subr.bf16.mxu0 0
    %9699 = vmatpush1.bf16.msra.mxu0 %v9674
    %9700 = vmatprep.subr.bf16.mxu0 0
    %9701 = vmatpush1.bf16.msra.mxu0 %v9675
    %9702 = vmatprep.subr.bf16.mxu0 0
    %9703 = vmatpush1.bf16.msra.mxu0 %v9676
    %9704 = vmatprep.subr.bf16.mxu0 0
    %9705 = vmatpush1.bf16.msra.mxu0 %v9677
    %9706 = vmatprep.subr.bf16.mxu0 0
    %9707 = vmatpush1.bf16.msra.mxu0 %v9678
    %9708 = vmatprep.subr.bf16.mxu0 0
    %9709 = vmatpush1.bf16.msra.mxu0 %v9679
    %9710 = vmatprep.subr.bf16.mxu0 0
    %9711 = vmatpush1.bf16.msra.mxu0 %v9680
    %9712 = vmatprep.subr.bf16.mxu0 0
    %9713 = vmatpush1.bf16.msra.mxu0 %v9681
    %9714 = vmatprep.subr.bf16.mxu0 0
    %9715 = vmatpush1.bf16.msra.mxu0 0
    %9716 = vmatprep.subr.bf16.mxu0 0
    %9717 = vmatpush1.bf16.msra.mxu0 0
    %9718 = vmatprep.subr.bf16.mxu0 0
    %9719 = vmatpush1.bf16.msra.mxu0 0
    %9720 = vmatprep.subr.bf16.mxu0 0
    %9721 = vmatpush1.bf16.msra.mxu0 0
    %9722 = vmatprep.subr.bf16.mxu0 0
    %9723 = vmatpush1.bf16.msra.mxu0 0
    %9724 = vmatprep.subr.bf16.mxu0 0
    %9725 = vmatpush1.bf16.msra.mxu0 0
    %9726 = vmatprep.subr.bf16.mxu0 0
    %9727 = vmatpush1.bf16.msra.mxu0 0
    %9728 = vmatprep.subr.bf16.mxu0 0
    %9729 = vmatpush1.bf16.msra.mxu0 0
    %9730 = vmatprep.mubr.bf16.mxu0 0
    %9731 = vmatmul.mubr.bf16.gmra.mrb[0].mxu0 %v9694
    %v9732 = vpop.f32.mrb[0].mxu0
    %v9733 = vadd.f32 0.0, %v9732
    %v9734 = vpop.f32.mrb[0].mxu0
    %v9735 = vpop.f32.mrb[0].mxu0
    %v9736 = vadd.f32 0.0, %v9735
    %v9737 = vpop.f32.mrb[0].mxu0
    %9738 = vmatprep.mubr.bf16.mxu0 0
    %9739 = vmatmul.mubr.bf16.gmra.mrb[0].mxu0 %v9695
    %v9740 = vpop.f32.mrb[0].mxu0
    %v9741 = vadd.f32 0.0, %v9740
    %v9742 = vpop.f32.mrb[0].mxu0
    %v9743 = vpop.f32.mrb[0].mxu0
    %v9744 = vadd.f32 0.0, %v9743
    %v9745 = vpop.f32.mrb[0].mxu0
    %9746 = vdwg.mxu0
    %v9747 = vpack.c.bf16 %v9736, %v9733
    %v9748 = vpack.c.bf16 %v9744, %v9741
    %s9749 = scalar_lea.vmem [#allocation14], 16
    %v9750 = vld [vmem:[%s9749] sm:$0xf]
    %v9751 = vld [vmem:[%s9749 + $0x4] sm:$0xf]
    %v9752 = vld [vmem:[%s9749 + $0x8] sm:$0xf]
    %v9753 = vld [vmem:[%s9749 + $0xc] sm:$0xf]
    %v9758 = vunpack.c.l.b16 %v9750
    %v9759 = vunpack.c.l.b16 %v9751
    %v9760 = vunpack.c.l.b16 %v9752
    %v9761 = vunpack.c.l.b16 %v9753
    %v9762 = vpack.c.b16 %v9759, %v9758
    %v9763 = vpack.c.b16 %v9761, %v9760
    %9766 = vmatprep.subr.bf16.mxu0 0
    %9767 = vmatpush1.bf16.msra.mxu0 %v9674
    %9768 = vmatprep.subr.bf16.mxu0 0
    %9769 = vmatpush1.bf16.msra.mxu0 %v9675
    %9770 = vmatprep.subr.bf16.mxu0 0
    %9771 = vmatpush1.bf16.msra.mxu0 %v9676
    %9772 = vmatprep.subr.bf16.mxu0 0
    %9773 = vmatpush1.bf16.msra.mxu0 %v9677
    %9774 = vmatprep.subr.bf16.mxu0 0
    %9775 = vmatpush1.bf16.msra.mxu0 %v9678
    %9776 = vmatprep.subr.bf16.mxu0 0
    %9777 = vmatpush1.bf16.msra.mxu0 %v9679
    %9778 = vmatprep.subr.bf16.mxu0 0
    %9779 = vmatpush1.bf16.msra.mxu0 %v9680
    %9780 = vmatprep.subr.bf16.mxu0 0
    %9781 = vmatpush1.bf16.msra.mxu0 %v9681
    %9782 = vmatprep.subr.bf16.mxu0 0
    %9783 = vmatpush1.bf16.msra.mxu0 0
    %9784 = vmatprep.subr.bf16.mxu0 0
    %9785 = vmatpush1.bf16.msra.mxu0 0
    %9786 = vmatprep.subr.bf16.mxu0 0
    %9787 = vmatpush1.bf16.msra.mxu0 0
    %9788 = vmatprep.subr.bf16.mxu0 0
    %9789 = vmatpush1.bf16.msra.mxu0 0
    %9790 = vmatprep.subr.bf16.mxu0 0
    %9791 = vmatpush1.bf16.msra.mxu0 0
    %9792 = vmatprep.subr.bf16.mxu0 0
    %9793 = vmatpush1.bf16.msra.mxu0 0
    %9794 = vmatprep.subr.bf16.mxu0 0
    %9795 = vmatpush1.bf16.msra.mxu0 0
    %9796 = vmatprep.subr.bf16.mxu0 0
    %9797 = vmatpush1.bf16.msra.mxu0 0
    %9798 = vmatprep.mubr.bf16.mxu0 0
    %9799 = vmatmul.mubr.bf16.gmra.mrb[0].mxu0 %v9762
    %v9800 = vpop.f32.mrb[0].mxu0
    %v9801 = vadd.f32 0.0, %v9800
    %v9802 = vpop.f32.mrb[0].mxu0
    %v9803 = vpop.f32.mrb[0].mxu0
    %v9804 = vadd.f32 0.0, %v9803
    %v9805 = vpop.f32.mrb[0].mxu0
    %9806 = vmatprep.mubr.bf16.mxu0 0
    %9807 = vmatmul.mubr.bf16.gmra.mrb[0].mxu0 %v9763
    %v9808 = vpop.f32.mrb[0].mxu0
    %v9809 = vadd.f32 0.0, %v9808
    %v9810 = vpop.f32.mrb[0].mxu0
    %v9811 = vpop.f32.mrb[0].mxu0
    %v9812 = vadd.f32 0.0, %v9811
    %v9813 = vpop.f32.mrb[0].mxu0
    %9814 = vdwg.mxu0
    %v9815 = vpack.c.bf16 %v9804, %v9801
    %v9816 = vpack.c.bf16 %v9812, %v9809
    %s9817 = scalar_lea.vmem [#allocation14], 32
    %v9818 = vld [vmem:[%s9817] sm:$0xf]
    %v9819 = vld [vmem:[%s9817 + $0x4] sm:$0xf]
    %v9820 = vld [vmem:[%s9817 + $0x8] sm:$0xf]
    %v9821 = vld [vmem:[%s9817 + $0xc] sm:$0xf]
    %v9826 = vunpack.c.l.b16 %v9818
    %v9827 = vunpack.c.l.b16 %v9819
    %v9828 = vunpack.c.l.b16 %v9820
    %v9829 = vunpack.c.l.b16 %v9821
    %v9830 = vpack.c.b16 %v9827, %v9826
    %v9831 = vpack.c.b16 %v9829, %v9828
    %9834 = vmatprep.subr.bf16.mxu0 0
    %9835 = vmatpush1.bf16.msra.mxu0 %v9674
    %9836 = vmatprep.subr.bf16.mxu0 0
    %9837 = vmatpush1.bf16.msra.mxu0 %v9675
    %9838 = vmatprep.subr.bf16.mxu0 0
    %9839 = vmatpush1.bf16.msra.mxu0 %v9676
    %9840 = vmatprep.subr.bf16.mxu0 0
    %9841 = vmatpush1.bf16.msra.mxu0 %v9677
    %9842 = vmatprep.subr.bf16.mxu0 0
    %9843 = vmatpush1.bf16.msra.mxu0 %v9678
    %9844 = vmatprep.subr.bf16.mxu0 0
    %9845 = vmatpush1.bf16.msra.mxu0 %v9679
    %9846 = vmatprep.subr.bf16.mxu0 0
    %9847 = vmatpush1.bf16.msra.mxu0 %v9680
    %9848 = vmatprep.subr.bf16.mxu0 0
    %9849 = vmatpush1.bf16.msra.mxu0 %v9681
    %9850 = vmatprep.subr.bf16.mxu0 0
    %9851 = vmatpush1.bf16.msra.mxu0 0
    %9852 = vmatprep.subr.bf16.mxu0 0
    %9853 = vmatpush1.bf16.msra.mxu0 0
    %9854 = vmatprep.subr.bf16.mxu0 0
    %9855 = vmatpush1.bf16.msra.mxu0 0
    %9856 = vmatprep.subr.bf16.mxu0 0
    %9857 = vmatpush1.bf16.msra.mxu0 0
    %9858 = vmatprep.subr.bf16.mxu0 0
    %9859 = vmatpush1.bf16.msra.mxu0 0
    %9860 = vmatprep.subr.bf16.mxu0 0
    %9861 = vmatpush1.bf16.msra.mxu0 0
    %9862 = vmatprep.subr.bf16.mxu0 0
    %9863 = vmatpush1.bf16.msra.mxu0 0
    %9864 = vmatprep.subr.bf16.mxu0 0
    %9865 = vmatpush1.bf16.msra.mxu0 0
    %9866 = vmatprep.mubr.bf16.mxu0 0
    %9867 = vmatmul.mubr.bf16.gmra.mrb[0].mxu0 %v9830
    %v9868 = vpop.f32.mrb[0].mxu0
    %v9869 = vadd.f32 0.0, %v9868
    %v9870 = vpop.f32.mrb[0].mxu0
    %v9871 = vpop.f32.mrb[0].mxu0
    %v9872 = vadd.f32 0.0, %v9871
    %v9873 = vpop.f32.mrb[0].mxu0
    %9874 = vmatprep.mubr.bf16.mxu0 0
    %9875 = vmatmul.mubr.bf16.gmra.mrb[0].mxu0 %v9831
    %v9876 = vpop.f32.mrb[0].mxu0
    %v9877 = vadd.f32 0.0, %v9876
    %v9878 = vpop.f32.mrb[0].mxu0
    %v9879 = vpop.f32.mrb[0].mxu0
    %v9880 = vadd.f32 0.0, %v9879
    %v9881 = vpop.f32.mrb[0].mxu0
    %9882 = vdwg.mxu0
    %v9883 = vpack.c.bf16 %v9872, %v9869
    %v9884 = vpack.c.bf16 %v9880, %v9877
    %s9885 = scalar_lea.vmem [#allocation14], 48
    %v9886 = vld [vmem:[%s9885] sm:$0xf]
    %v9887 = vld [vmem:[%s9885 + $0x4] sm:$0xf]
    %v9888 = vld [vmem:[%s9885 + $0x8] sm:$0xf]
    %v9889 = vld [vmem:[%s9885 + $0xc] sm:$0xf]
    %v9894 = vunpack.c.l.b16 %v9886
    %v9895 = vunpack.c.l.b16 %v9887
    %v9896 = vunpack.c.l.b16 %v9888
    %v9897 = vunpack.c.l.b16 %v9889
    %v9898 = vpack.c.b16 %v9895, %v9894
    %v9899 = vpack.c.b16 %v9897, %v9896
    %9902 = vmatprep.subr.bf16.mxu0 0
    %9903 = vmatpush1.bf16.msra.mxu0 %v9674
    %9904 = vmatprep.subr.bf16.mxu0 0
    %9905 = vmatpush1.bf16.msra.mxu0 %v9675
    %9906 = vmatprep.subr.bf16.mxu0 0
    %9907 = vmatpush1.bf16.msra.mxu0 %v9676
    %9908 = vmatprep.subr.bf16.mxu0 0
    %9909 = vmatpush1.bf16.msra.mxu0 %v9677
    %9910 = vmatprep.subr.bf16.mxu0 0
    %9911 = vmatpush1.bf16.msra.mxu0 %v9678
    %9912 = vmatprep.subr.bf16.mxu0 0
    %9913 = vmatpush1.bf16.msra.mxu0 %v9679
    %9914 = vmatprep.subr.bf16.mxu0 0
    %9915 = vmatpush1.bf16.msra.mxu0 %v9680
    %9916 = vmatprep.subr.bf16.mxu0 0
    %9917 = vmatpush1.bf16.msra.mxu0 %v9681
    %9918 = vmatprep.subr.bf16.mxu0 0
    %9919 = vmatpush1.bf16.msra.mxu0 0
    %9920 = vmatprep.subr.bf16.mxu0 0
    %9921 = vmatpush1.bf16.msra.mxu0 0
    %9922 = vmatprep.subr.bf16.mxu0 0
    %9923 = vmatpush1.bf16.msra.mxu0 0
    %9924 = vmatprep.subr.bf16.mxu0 0
    %9925 = vmatpush1.bf16.msra.mxu0 0
    %9926 = vmatprep.subr.bf16.mxu0 0
    %9927 = vmatpush1.bf16.msra.mxu0 0
    %9928 = vmatprep.subr.bf16.mxu0 0
    %9929 = vmatpush1.bf16.msra.mxu0 0
    %9930 = vmatprep.subr.bf16.mxu0 0
    %9931 = vmatpush1.bf16.msra.mxu0 0
    %9932 = vmatprep.subr.bf16.mxu0 0
    %9933 = vmatpush1.bf16.msra.mxu0 0
    %9934 = vmatprep.mubr.bf16.mxu0 0
    %9935 = vmatmul.mubr.bf16.gmra.mrb[0].mxu0 %v9898
    %v9936 = vpop.f32.mrb[0].mxu0
    %v9937 = vadd.f32 0.0, %v9936
    %v9938 = vpop.f32.mrb[0].mxu0
    %v9939 = vpop.f32.mrb[0].mxu0
    %v9940 = vadd.f32 0.0, %v9939
    %v9941 = vpop.f32.mrb[0].mxu0
    %9942 = vmatprep.mubr.bf16.mxu0 0
    %9943 = vmatmul.mubr.bf16.gmra.mrb[0].mxu0 %v9899
    %v9944 = vpop.f32.mrb[0].mxu0
    %v9945 = vadd.f32 0.0, %v9944
    %v9946 = vpop.f32.mrb[0].mxu0
    %v9947 = vpop.f32.mrb[0].mxu0
    %v9948 = vadd.f32 0.0, %v9947
    %v9949 = vpop.f32.mrb[0].mxu0
    %9950 = vdwg.mxu0
    %v9951 = vpack.c.bf16 %v9940, %v9937
    %v9952 = vpack.c.bf16 %v9948, %v9945
    %s9953 = scalar_lea.vmem [#allocation14], 64
    %v9954 = vld [vmem:[%s9953] sm:$0xf]
    %v9955 = vld [vmem:[%s9953 + $0x4] sm:$0xf]
    %v9956 = vld [vmem:[%s9953 + $0x8] sm:$0xf]
    %v9957 = vld [vmem:[%s9953 + $0xc] sm:$0xf]
    %v9962 = vunpack.c.l.b16 %v9954
    %v9963 = vunpack.c.l.b16 %v9955
    %v9964 = vunpack.c.l.b16 %v9956
    %v9965 = vunpack.c.l.b16 %v9957
    %v9966 = vpack.c.b16 %v9963, %v9962
    %v9967 = vpack.c.b16 %v9965, %v9964
    %9970 = vmatprep.subr.bf16.mxu0 0
    %9971 = vmatpush1.bf16.msra.mxu0 %v9674
    %9972 = vmatprep.subr.bf16.mxu0 0
    %9973 = vmatpush1.bf16.msra.mxu0 %v9675
    %9974 = vmatprep.subr.bf16.mxu0 0
    %9975 = vmatpush1.bf16.msra.mxu0 %v9676
    %9976 = vmatprep.subr.bf16.mxu0 0
    %9977 = vmatpush1.bf16.msra.mxu0 %v9677
    %9978 = vmatprep.subr.bf16.mxu0 0
    %9979 = vmatpush1.bf16.msra.mxu0 %v9678
    %9980 = vmatprep.subr.bf16.mxu0 0
    %9981 = vmatpush1.bf16.msra.mxu0 %v9679
    %9982 = vmatprep.subr.bf16.mxu0 0
    %9983 = vmatpush1.bf16.msra.mxu0 %v9680
    %9984 = vmatprep.subr.bf16.mxu0 0
    %9985 = vmatpush1.bf16.msra.mxu0 %v9681
    %9986 = vmatprep.subr.bf16.mxu0 0
    %9987 = vmatpush1.bf16.msra.mxu0 0
    %9988 = vmatprep.subr.bf16.mxu0 0
    %9989 = vmatpush1.bf16.msra.mxu0 0
    %9990 = vmatprep.subr.bf16.mxu0 0
    %9991 = vmatpush1.bf16.msra.mxu0 0
    %9992 = vmatprep.subr.bf16.mxu0 0
    %9993 = vmatpush1.bf16.msra.mxu0 0
    %9994 = vmatprep.subr.bf16.mxu0 0
    %9995 = vmatpush1.bf16.msra.mxu0 0
    %9996 = vmatprep.subr.bf16.mxu0 0
    %9997 = vmatpush1.bf16.msra.mxu0 0
    %9998 = vmatprep.subr.bf16.mxu0 0
    %9999 = vmatpush1.bf16.msra.mxu0 0
    %10000 = vmatprep.subr.bf16.mxu0 0
    %10001 = vmatpush1.bf16.msra.mxu0 0
    %10002 = vmatprep.mubr.bf16.mxu0 0
    %10003 = vmatmul.mubr.bf16.gmra.mrb[0].mxu0 %v9966
    %v10004 = vpop.f32.mrb[0].mxu0
    %v10005 = vadd.f32 0.0, %v10004
    %v10006 = vpop.f32.mrb[0].mxu0
    %v10007 = vpop.f32.mrb[0].mxu0
    %v10008 = vadd.f32 0.0, %v10007
    %v10009 = vpop.f32.mrb[0].mxu0
    %10010 = vmatprep.mubr.bf16.mxu0 0
    %10011 = vmatmul.mubr.bf16.gmra.mrb[0].mxu0 %v9967
    %v10012 = vpop.f32.mrb[0].mxu0
    %v10013 = vadd.f32 0.0, %v10012
    %v10014 = vpop.f32.mrb[0].mxu0
    %v10015 = vpop.f32.mrb[0].mxu0
    %v10016 = vadd.f32 0.0, %v10015
    %v10017 = vpop.f32.mrb[0].mxu0
    %10018 = vdwg.mxu0
    %v10019 = vpack.c.bf16 %v10008, %v10005
    %v10020 = vpack.c.bf16 %v10016, %v10013
    %s10021 = scalar_lea.vmem [#allocation14], 80
    %v10022 = vld [vmem:[%s10021] sm:$0xf]
    %v10023 = vld [vmem:[%s10021 + $0x4] sm:$0xf]
    %v10024 = vld [vmem:[%s10021 + $0x8] sm:$0xf]
    %v10025 = vld [vmem:[%s10021 + $0xc] sm:$0xf]
    %v10030 = vunpack.c.l.b16 %v10022
    %v10031 = vunpack.c.l.b16 %v10023
    %v10032 = vunpack.c.l.b16 %v10024
    %v10033 = vunpack.c.l.b16 %v10025
    %v10034 = vpack.c.b16 %v10031, %v10030
    %v10035 = vpack.c.b16 %v10033, %v10032
    %10038 = vmatprep.subr.bf16.mxu0 0
    %10039 = vmatpush1.bf16.msra.mxu0 %v9674
    %10040 = vmatprep.subr.bf16.mxu0 0
    %10041 = vmatpush1.bf16.msra.mxu0 %v9675
    %10042 = vmatprep.subr.bf16.mxu0 0
    %10043 = vmatpush1.bf16.msra.mxu0 %v9676
    %10044 = vmatprep.subr.bf16.mxu0 0
    %10045 = vmatpush1.bf16.msra.mxu0 %v9677
    %10046 = vmatprep.subr.bf16.mxu0 0
    %10047 = vmatpush1.bf16.msra.mxu0 %v9678
    %10048 = vmatprep.subr.bf16.mxu0 0
    %10049 = vmatpush1.bf16.msra.mxu0 %v9679
    %10050 = vmatprep.subr.bf16.mxu0 0
    %10051 = vmatpush1.bf16.msra.mxu0 %v9680
    %10052 = vmatprep.subr.bf16.mxu0 0
    %10053 = vmatpush1.bf16.msra.mxu0 %v9681
    %10054 = vmatprep.subr.bf16.mxu0 0
    %10055 = vmatpush1.bf16.msra.mxu0 0
    %10056 = vmatprep.subr.bf16.mxu0 0
    %10057 = vmatpush1.bf16.msra.mxu0 0
    %10058 = vmatprep.subr.bf16.mxu0 0
    %10059 = vmatpush1.bf16.msra.mxu0 0
    %10060 = vmatprep.subr.bf16.mxu0 0
    %10061 = vmatpush1.bf16.msra.mxu0 0
    %10062 = vmatprep.subr.bf16.mxu0 0
    %10063 = vmatpush1.bf16.msra.mxu0 0
    %10064 = vmatprep.subr.bf16.mxu0 0
    %10065 = vmatpush1.bf16.msra.mxu0 0
    %10066 = vmatprep.subr.bf16.mxu0 0
    %10067 = vmatpush1.bf16.msra.mxu0 0
    %10068 = vmatprep.subr.bf16.mxu0 0
    %10069 = vmatpush1.bf16.msra.mxu0 0
    %10070 = vmatprep.mubr.bf16.mxu0 0
    %10071 = vmatmul.mubr.bf16.gmra.mrb[0].mxu0 %v10034
    %v10072 = vpop.f32.mrb[0].mxu0
    %v10073 = vadd.f32 0.0, %v10072
    %v10074 = vpop.f32.mrb[0].mxu0
    %v10075 = vpop.f32.mrb[0].mxu0
    %v10076 = vadd.f32 0.0, %v10075
    %v10077 = vpop.f32.mrb[0].mxu0
    %10078 = vmatprep.mubr.bf16.mxu0 0
    %10079 = vmatmul.mubr.bf16.gmra.mrb[0].mxu0 %v10035
    %v10080 = vpop.f32.mrb[0].mxu0
    %v10081 = vadd.f32 0.0, %v10080
    %v10082 = vpop.f32.mrb[0].mxu0
    %v10083 = vpop.f32.mrb[0].mxu0
    %v10084 = vadd.f32 0.0, %v10083
    %v10085 = vpop.f32.mrb[0].mxu0
    %10086 = vdwg.mxu0
    %v10087 = vpack.c.bf16 %v10076, %v10073
    %v10088 = vpack.c.bf16 %v10084, %v10081
    %s10089 = scalar_lea.vmem [#allocation14], 96
    %v10090 = vld [vmem:[%s10089] sm:$0xf]
    %v10091 = vld [vmem:[%s10089 + $0x4] sm:$0xf]
    %v10092 = vld [vmem:[%s10089 + $0x8] sm:$0xf]
    %v10093 = vld [vmem:[%s10089 + $0xc] sm:$0xf]
    %v10098 = vunpack.c.l.b16 %v10090
    %v10099 = vunpack.c.l.b16 %v10091
    %v10100 = vunpack.c.l.b16 %v10092
    %v10101 = vunpack.c.l.b16 %v10093
    %v10102 = vpack.c.b16 %v10099, %v10098
    %v10103 = vpack.c.b16 %v10101, %v10100
    %10106 = vmatprep.subr.bf16.mxu0 0
    %10107 = vmatpush1.bf16.msra.mxu0 %v9674
    %10108 = vmatprep.subr.bf16.mxu0 0
    %10109 = vmatpush1.bf16.msra.mxu0 %v9675
    %10110 = vmatprep.subr.bf16.mxu0 0
    %10111 = vmatpush1.bf16.msra.mxu0 %v9676
    %10112 = vmatprep.subr.bf16.mxu0 0
    %10113 = vmatpush1.bf16.msra.mxu0 %v9677
    %10114 = vmatprep.subr.bf16.mxu0 0
    %10115 = vmatpush1.bf16.msra.mxu0 %v9678
    %10116 = vmatprep.subr.bf16.mxu0 0
    %10117 = vmatpush1.bf16.msra.mxu0 %v9679
    %10118 = vmatprep.subr.bf16.mxu0 0
    %10119 = vmatpush1.bf16.msra.mxu0 %v9680
    %10120 = vmatprep.subr.bf16.mxu0 0
    %10121 = vmatpush1.bf16.msra.mxu0 %v9681
    %10122 = vmatprep.subr.bf16.mxu0 0
    %10123 = vmatpush1.bf16.msra.mxu0 0
    %10124 = vmatprep.subr.bf16.mxu0 0
    %10125 = vmatpush1.bf16.msra.mxu0 0
    %10126 = vmatprep.subr.bf16.mxu0 0
    %10127 = vmatpush1.bf16.msra.mxu0 0
    %10128 = vmatprep.subr.bf16.mxu0 0
    %10129 = vmatpush1.bf16.msra.mxu0 0
    %10130 = vmatprep.subr.bf16.mxu0 0
    %10131 = vmatpush1.bf16.msra.mxu0 0
    %10132 = vmatprep.subr.bf16.mxu0 0
    %10133 = vmatpush1.bf16.msra.mxu0 0
    %10134 = vmatprep.subr.bf16.mxu0 0
    %10135 = vmatpush1.bf16.msra.mxu0 0
    %10136 = vmatprep.subr.bf16.mxu0 0
    %10137 = vmatpush1.bf16.msra.mxu0 0
    %10138 = vmatprep.mubr.bf16.mxu0 0
    %10139 = vmatmul.mubr.bf16.gmra.mrb[0].mxu0 %v10102
    %v10140 = vpop.f32.mrb[0].mxu0
    %v10141 = vadd.f32 0.0, %v10140
    %v10142 = vpop.f32.mrb[0].mxu0
    %v10143 = vpop.f32.mrb[0].mxu0
    %v10144 = vadd.f32 0.0, %v10143
    %v10145 = vpop.f32.mrb[0].mxu0
    %10146 = vmatprep.mubr.bf16.mxu0 0
    %10147 = vmatmul.mubr.bf16.gmra.mrb[0].mxu0 %v10103
    %v10148 = vpop.f32.mrb[0].mxu0
    %v10149 = vadd.f32 0.0, %v10148
    %v10150 = vpop.f32.mrb[0].mxu0
    %v10151 = vpop.f32.mrb[0].mxu0
    %v10152 = vadd.f32 0.0, %v10151
    %v10153 = vpop.f32.mrb[0].mxu0
    %10154 = vdwg.mxu0
    %v10155 = vpack.c.bf16 %v10144, %v10141
    %v10156 = vpack.c.bf16 %v10152, %v10149
    %s10157 = scalar_lea.vmem [#allocation14], 112
    %v10158 = vld [vmem:[%s10157] sm:$0xf]
    %v10159 = vld [vmem:[%s10157 + $0x4] sm:$0xf]
    %v10160 = vld [vmem:[%s10157 + $0x8] sm:$0xf]
    %v10161 = vld [vmem:[%s10157 + $0xc] sm:$0xf]
    %v10166 = vunpack.c.l.b16 %v10158
    %v10167 = vunpack.c.l.b16 %v10159
    %v10168 = vunpack.c.l.b16 %v10160
    %v10169 = vunpack.c.l.b16 %v10161
    %v10170 = vpack.c.b16 %v10167, %v10166
    %v10171 = vpack.c.b16 %v10169, %v10168
    %10174 = vmatprep.subr.bf16.mxu0 0
    %10175 = vmatpush1.bf16.msra.mxu0 %v9674
    %10176 = vmatprep.subr.bf16.mxu0 0
    %10177 = vmatpush1.bf16.msra.mxu0 %v9675
    %10178 = vmatprep.subr.bf16.mxu0 0
    %10179 = vmatpush1.bf16.msra.mxu0 %v9676
    %10180 = vmatprep.subr.bf16.mxu0 0
    %10181 = vmatpush1.bf16.msra.mxu0 %v9677
    %10182 = vmatprep.subr.bf16.mxu0 0
    %10183 = vmatpush1.bf16.msra.mxu0 %v9678
    %10184 = vmatprep.subr.bf16.mxu0 0
    %10185 = vmatpush1.bf16.msra.mxu0 %v9679
    %10186 = vmatprep.subr.bf16.mxu0 0
    %10187 = vmatpush1.bf16.msra.mxu0 %v9680
    %10188 = vmatprep.subr.bf16.mxu0 0
    %10189 = vmatpush1.bf16.msra.mxu0 %v9681
    %10190 = vmatprep.subr.bf16.mxu0 0
    %10191 = vmatpush1.bf16.msra.mxu0 0
    %10192 = vmatprep.subr.bf16.mxu0 0
    %10193 = vmatpush1.bf16.msra.mxu0 0
    %10194 = vmatprep.subr.bf16.mxu0 0
    %10195 = vmatpush1.bf16.msra.mxu0 0
    %10196 = vmatprep.subr.bf16.mxu0 0
    %10197 = vmatpush1.bf16.msra.mxu0 0
    %10198 = vmatprep.subr.bf16.mxu0 0
    %10199 = vmatpush1.bf16.msra.mxu0 0
    %10200 = vmatprep.subr.bf16.mxu0 0
    %10201 = vmatpush1.bf16.msra.mxu0 0
    %10202 = vmatprep.subr.bf16.mxu0 0
    %10203 = vmatpush1.bf16.msra.mxu0 0
    %10204 = vmatprep.subr.bf16.mxu0 0
    %10205 = vmatpush1.bf16.msra.mxu0 0
    %10206 = vmatprep.mubr.bf16.mxu0 0
    %10207 = vmatmul.mubr.bf16.gmra.mrb[0].mxu0 %v10170
    %v10208 = vpop.f32.mrb[0].mxu0
    %v10209 = vadd.f32 0.0, %v10208
    %v10210 = vpop.f32.mrb[0].mxu0
    %v10211 = vpop.f32.mrb[0].mxu0
    %v10212 = vadd.f32 0.0, %v10211
    %v10213 = vpop.f32.mrb[0].mxu0
    %10214 = vmatprep.mubr.bf16.mxu0 0
    %10215 = vmatmul.mubr.bf16.gmra.mrb[0].mxu0 %v10171
    %v10216 = vpop.f32.mrb[0].mxu0
    %v10217 = vadd.f32 0.0, %v10216
    %v10218 = vpop.f32.mrb[0].mxu0
    %v10219 = vpop.f32.mrb[0].mxu0
    %v10220 = vadd.f32 0.0, %v10219
    %v10221 = vpop.f32.mrb[0].mxu0
    %10222 = vdwg.mxu0
    %v10223 = vpack.c.bf16 %v10212, %v10209
    %v10224 = vpack.c.bf16 %v10220, %v10217
    %s10225 = scalar_lea.vmem [#allocation14], 128
    %v10226 = vld [vmem:[%s10225] sm:$0xf]
    %v10227 = vld [vmem:[%s10225 + $0x4] sm:$0xf]
    %v10228 = vld [vmem:[%s10225 + $0x8] sm:$0xf]
    %v10229 = vld [vmem:[%s10225 + $0xc] sm:$0xf]
    %v10234 = vunpack.c.l.b16 %v10226
    %v10235 = vunpack.c.l.b16 %v10227
    %v10236 = vunpack.c.l.b16 %v10228
    %v10237 = vunpack.c.l.b16 %v10229
    %v10238 = vpack.c.b16 %v10235, %v10234
    %v10239 = vpack.c.b16 %v10237, %v10236
    %10242 = vmatprep.subr.bf16.mxu0 0
    %10243 = vmatpush1.bf16.msra.mxu0 %v9674
    %10244 = vmatprep.subr.bf16.mxu0 0
    %10245 = vmatpush1.bf16.msra.mxu0 %v9675
    %10246 = vmatprep.subr.bf16.mxu0 0
    %10247 = vmatpush1.bf16.msra.mxu0 %v9676
    %10248 = vmatprep.subr.bf16.mxu0 0
    %10249 = vmatpush1.bf16.msra.mxu0 %v9677
    %10250 = vmatprep.subr.bf16.mxu0 0
    %10251 = vmatpush1.bf16.msra.mxu0 %v9678
    %10252 = vmatprep.subr.bf16.mxu0 0
    %10253 = vmatpush1.bf16.msra.mxu0 %v9679
    %10254 = vmatprep.subr.bf16.mxu0 0
    %10255 = vmatpush1.bf16.msra.mxu0 %v9680
    %10256 = vmatprep.subr.bf16.mxu0 0
    %10257 = vmatpush1.bf16.msra.mxu0 %v9681
    %10258 = vmatprep.subr.bf16.mxu0 0
    %10259 = vmatpush1.bf16.msra.mxu0 0
    %10260 = vmatprep.subr.bf16.mxu0 0
    %10261 = vmatpush1.bf16.msra.mxu0 0
    %10262 = vmatprep.subr.bf16.mxu0 0
    %10263 = vmatpush1.bf16.msra.mxu0 0
    %10264 = vmatprep.subr.bf16.mxu0 0
    %10265 = vmatpush1.bf16.msra.mxu0 0
    %10266 = vmatprep.subr.bf16.mxu0 0
    %10267 = vmatpush1.bf16.msra.mxu0 0
    %10268 = vmatprep.subr.bf16.mxu0 0
    %10269 = vmatpush1.bf16.msra.mxu0 0
    %10270 = vmatprep.subr.bf16.mxu0 0
    %10271 = vmatpush1.bf16.msra.mxu0 0
    %10272 = vmatprep.subr.bf16.mxu0 0
    %10273 = vmatpush1.bf16.msra.mxu0 0
    %10274 = vmatprep.mubr.bf16.mxu0 0
    %10275 = vmatmul.mubr.bf16.gmra.mrb[0].mxu0 %v10238
    %v10276 = vpop.f32.mrb[0].mxu0
    %v10277 = vadd.f32 0.0, %v10276
    %v10278 = vpop.f32.mrb[0].mxu0
    %v10279 = vpop.f32.mrb[0].mxu0
    %v10280 = vadd.f32 0.0, %v10279
    %v10281 = vpop.f32.mrb[0].mxu0
    %10282 = vmatprep.mubr.bf16.mxu0 0
    %10283 = vmatmul.mubr.bf16.gmra.mrb[0].mxu0 %v10239
    %v10284 = vpop.f32.mrb[0].mxu0
    %v10285 = vadd.f32 0.0, %v10284
    %v10286 = vpop.f32.mrb[0].mxu0
    %v10287 = vpop.f32.mrb[0].mxu0
    %v10288 = vadd.f32 0.0, %v10287
    %v10289 = vpop.f32.mrb[0].mxu0
    %10290 = vdwg.mxu0
    %v10291 = vpack.c.bf16 %v10280, %v10277
    %v10292 = vpack.c.bf16 %v10288, %v10285
    %s10293 = scalar_lea.vmem [#allocation14], 144
    %v10294 = vld [vmem:[%s10293] sm:$0xf]
    %v10295 = vld [vmem:[%s10293 + $0x4] sm:$0xf]
    %v10296 = vld [vmem:[%s10293 + $0x8] sm:$0xf]
    %v10297 = vld [vmem:[%s10293 + $0xc] sm:$0xf]
    %v10302 = vunpack.c.l.b16 %v10294
    %v10303 = vunpack.c.l.b16 %v10295
    %v10304 = vunpack.c.l.b16 %v10296
    %v10305 = vunpack.c.l.b16 %v10297
    %v10306 = vpack.c.b16 %v10303, %v10302
    %v10307 = vpack.c.b16 %v10305, %v10304
    %10310 = vmatprep.subr.bf16.mxu0 0
    %10311 = vmatpush1.bf16.msra.mxu0 %v9674
    %10312 = vmatprep.subr.bf16.mxu0 0
    %10313 = vmatpush1.bf16.msra.mxu0 %v9675
    %10314 = vmatprep.subr.bf16.mxu0 0
    %10315 = vmatpush1.bf16.msra.mxu0 %v9676
    %10316 = vmatprep.subr.bf16.mxu0 0
    %10317 = vmatpush1.bf16.msra.mxu0 %v9677
    %10318 = vmatprep.subr.bf16.mxu0 0
    %10319 = vmatpush1.bf16.msra.mxu0 %v9678
    %10320 = vmatprep.subr.bf16.mxu0 0
    %10321 = vmatpush1.bf16.msra.mxu0 %v9679
    %10322 = vmatprep.subr.bf16.mxu0 0
    %10323 = vmatpush1.bf16.msra.mxu0 %v9680
    %10324 = vmatprep.subr.bf16.mxu0 0
    %10325 = vmatpush1.bf16.msra.mxu0 %v9681
    %10326 = vmatprep.subr.bf16.mxu0 0
    %10327 = vmatpush1.bf16.msra.mxu0 0
    %10328 = vmatprep.subr.bf16.mxu0 0
    %10329 = vmatpush1.bf16.msra.mxu0 0
    %10330 = vmatprep.subr.bf16.mxu0 0
    %10331 = vmatpush1.bf16.msra.mxu0 0
    %10332 = vmatprep.subr.bf16.mxu0 0
    %10333 = vmatpush1.bf16.msra.mxu0 0
    %10334 = vmatprep.subr.bf16.mxu0 0
    %10335 = vmatpush1.bf16.msra.mxu0 0
    %10336 = vmatprep.subr.bf16.mxu0 0
    %10337 = vmatpush1.bf16.msra.mxu0 0
    %10338 = vmatprep.subr.bf16.mxu0 0
    %10339 = vmatpush1.bf16.msra.mxu0 0
    %10340 = vmatprep.subr.bf16.mxu0 0
    %10341 = vmatpush1.bf16.msra.mxu0 0
    %10342 = vmatprep.mubr.bf16.mxu0 0
    %10343 = vmatmul.mubr.bf16.gmra.mrb[0].mxu0 %v10306
    %v10344 = vpop.f32.mrb[0].mxu0
    %v10345 = vadd.f32 0.0, %v10344
    %v10346 = vpop.f32.mrb[0].mxu0
    %v10347 = vpop.f32.mrb[0].mxu0
    %v10348 = vadd.f32 0.0, %v10347
    %v10349 = vpop.f32.mrb[0].mxu0
    %10350 = vmatprep.mubr.bf16.mxu0 0
    %10351 = vmatmul.mubr.bf16.gmra.mrb[0].mxu0 %v10307
    %v10352 = vpop.f32.mrb[0].mxu0
    %v10353 = vadd.f32 0.0, %v10352
    %v10354 = vpop.f32.mrb[0].mxu0
    %v10355 = vpop.f32.mrb[0].mxu0
    %v10356 = vadd.f32 0.0, %v10355
    %v10357 = vpop.f32.mrb[0].mxu0
    %10358 = vdwg.mxu0
    %v10359 = vpack.c.bf16 %v10348, %v10345
    %v10360 = vpack.c.bf16 %v10356, %v10353
    %s10361 = scalar_lea.vmem [#allocation14], 160
    %v10362 = vld [vmem:[%s10361] sm:$0xf]
    %v10363 = vld [vmem:[%s10361 + $0x4] sm:$0xf]
    %v10364 = vld [vmem:[%s10361 + $0x8] sm:$0xf]
    %v10365 = vld [vmem:[%s10361 + $0xc] sm:$0xf]
    %v10370 = vunpack.c.l.b16 %v10362
    %v10371 = vunpack.c.l.b16 %v10363
    %v10372 = vunpack.c.l.b16 %v10364
    %v10373 = vunpack.c.l.b16 %v10365
    %v10374 = vpack.c.b16 %v10371, %v10370
    %v10375 = vpack.c.b16 %v10373, %v10372
    %10378 = vmatprep.subr.bf16.mxu0 0
    %10379 = vmatpush1.bf16.msra.mxu0 %v9674
    %10380 = vmatprep.subr.bf16.mxu0 0
    %10381 = vmatpush1.bf16.msra.mxu0 %v9675
    %10382 = vmatprep.subr.bf16.mxu0 0
    %10383 = vmatpush1.bf16.msra.mxu0 %v9676
    %10384 = vmatprep.subr.bf16.mxu0 0
    %10385 = vmatpush1.bf16.msra.mxu0 %v9677
    %10386 = vmatprep.subr.bf16.mxu0 0
    %10387 = vmatpush1.bf16.msra.mxu0 %v9678
    %10388 = vmatprep.subr.bf16.mxu0 0
    %10389 = vmatpush1.bf16.msra.mxu0 %v9679
    %10390 = vmatprep.subr.bf16.mxu0 0
    %10391 = vmatpush1.bf16.msra.mxu0 %v9680
    %10392 = vmatprep.subr.bf16.mxu0 0
    %10393 = vmatpush1.bf16.msra.mxu0 %v9681
    %10394 = vmatprep.subr.bf16.mxu0 0
    %10395 = vmatpush1.bf16.msra.mxu0 0
    %10396 = vmatprep.subr.bf16.mxu0 0
    %10397 = vmatpush1.bf16.msra.mxu0 0
    %10398 = vmatprep.subr.bf16.mxu0 0
    %10399 = vmatpush1.bf16.msra.mxu0 0
    %10400 = vmatprep.subr.bf16.mxu0 0
    %10401 = vmatpush1.bf16.msra.mxu0 0
    %10402 = vmatprep.subr.bf16.mxu0 0
    %10403 = vmatpush1.bf16.msra.mxu0 0
    %10404 = vmatprep.subr.bf16.mxu0 0
    %10405 = vmatpush1.bf16.msra.mxu0 0
    %10406 = vmatprep.subr.bf16.mxu0 0
    %10407 = vmatpush1.bf16.msra.mxu0 0
    %10408 = vmatprep.subr.bf16.mxu0 0
    %10409 = vmatpush1.bf16.msra.mxu0 0
    %10410 = vmatprep.mubr.bf16.mxu0 0
    %10411 = vmatmul.mubr.bf16.gmra.mrb[0].mxu0 %v10374
    %v10412 = vpop.f32.mrb[0].mxu0
    %v10413 = vadd.f32 0.0, %v10412
    %v10414 = vpop.f32.mrb[0].mxu0
    %v10415 = vpop.f32.mrb[0].mxu0
    %v10416 = vadd.f32 0.0, %v10415
    %v10417 = vpop.f32.mrb[0].mxu0
    %10418 = vmatprep.mubr.bf16.mxu0 0
    %10419 = vmatmul.mubr.bf16.gmra.mrb[0].mxu0 %v10375
    %v10420 = vpop.f32.mrb[0].mxu0
    %v10421 = vadd.f32 0.0, %v10420
    %v10422 = vpop.f32.mrb[0].mxu0
    %v10423 = vpop.f32.mrb[0].mxu0
    %v10424 = vadd.f32 0.0, %v10423
    %v10425 = vpop.f32.mrb[0].mxu0
    %10426 = vdwg.mxu0
    %v10427 = vpack.c.bf16 %v10416, %v10413
    %v10428 = vpack.c.bf16 %v10424, %v10421
    %s10429 = scalar_lea.vmem [#allocation14], 176
    %v10430 = vld [vmem:[%s10429] sm:$0xf]
    %v10431 = vld [vmem:[%s10429 + $0x4] sm:$0xf]
    %v10432 = vld [vmem:[%s10429 + $0x8] sm:$0xf]
    %v10433 = vld [vmem:[%s10429 + $0xc] sm:$0xf]
    %v10438 = vunpack.c.l.b16 %v10430
    %v10439 = vunpack.c.l.b16 %v10431
    %v10440 = vunpack.c.l.b16 %v10432
    %v10441 = vunpack.c.l.b16 %v10433
    %v10442 = vpack.c.b16 %v10439, %v10438
    %v10443 = vpack.c.b16 %v10441, %v10440
    %10446 = vmatprep.subr.bf16.mxu0 0
    %10447 = vmatpush1.bf16.msra.mxu0 %v9674
    %10448 = vmatprep.subr.bf16.mxu0 0
    %10449 = vmatpush1.bf16.msra.mxu0 %v9675
    %10450 = vmatprep.subr.bf16.mxu0 0
    %10451 = vmatpush1.bf16.msra.mxu0 %v9676
    %10452 = vmatprep.subr.bf16.mxu0 0
    %10453 = vmatpush1.bf16.msra.mxu0 %v9677
    %10454 = vmatprep.subr.bf16.mxu0 0
    %10455 = vmatpush1.bf16.msra.mxu0 %v9678
    %10456 = vmatprep.subr.bf16.mxu0 0
    %10457 = vmatpush1.bf16.msra.mxu0 %v9679
    %10458 = vmatprep.subr.bf16.mxu0 0
    %10459 = vmatpush1.bf16.msra.mxu0 %v9680
    %10460 = vmatprep.subr.bf16.mxu0 0
    %10461 = vmatpush1.bf16.msra.mxu0 %v9681
    %10462 = vmatprep.subr.bf16.mxu0 0
    %10463 = vmatpush1.bf16.msra.mxu0 0
    %10464 = vmatprep.subr.bf16.mxu0 0
    %10465 = vmatpush1.bf16.msra.mxu0 0
    %10466 = vmatprep.subr.bf16.mxu0 0
    %10467 = vmatpush1.bf16.msra.mxu0 0
    %10468 = vmatprep.subr.bf16.mxu0 0
    %10469 = vmatpush1.bf16.msra.mxu0 0
    %10470 = vmatprep.subr.bf16.mxu0 0
    %10471 = vmatpush1.bf16.msra.mxu0 0
    %10472 = vmatprep.subr.bf16.mxu0 0
    %10473 = vmatpush1.bf16.msra.mxu0 0
    %10474 = vmatprep.subr.bf16.mxu0 0
    %10475 = vmatpush1.bf16.msra.mxu0 0
    %10476 = vmatprep.subr.bf16.mxu0 0
    %10477 = vmatpush1.bf16.msra.mxu0 0
    %10478 = vmatprep.mubr.bf16.mxu0 0
    %10479 = vmatmul.mubr.bf16.gmra.mrb[0].mxu0 %v10442
    %v10480 = vpop.f32.mrb[0].mxu0
    %v10481 = vadd.f32 0.0, %v10480
    %v10482 = vpop.f32.mrb[0].mxu0
    %v10483 = vpop.f32.mrb[0].mxu0
    %v10484 = vadd.f32 0.0, %v10483
    %v10485 = vpop.f32.mrb[0].mxu0
    %10486 = vmatprep.mubr.bf16.mxu0 0
    %10487 = vmatmul.mubr.bf16.gmra.mrb[0].mxu0 %v10443
    %v10488 = vpop.f32.mrb[0].mxu0
    %v10489 = vadd.f32 0.0, %v10488
    %v10490 = vpop.f32.mrb[0].mxu0
    %v10491 = vpop.f32.mrb[0].mxu0
    %v10492 = vadd.f32 0.0, %v10491
    %v10493 = vpop.f32.mrb[0].mxu0
    %10494 = vdwg.mxu0
    %v10495 = vpack.c.bf16 %v10484, %v10481
    %v10496 = vpack.c.bf16 %v10492, %v10489
    %s10497 = scalar_lea.vmem [#allocation14], 192
    %v10498 = vld [vmem:[%s10497] sm:$0xf]
    %v10499 = vld [vmem:[%s10497 + $0x4] sm:$0xf]
    %v10500 = vld [vmem:[%s10497 + $0x8] sm:$0xf]
    %v10501 = vld [vmem:[%s10497 + $0xc] sm:$0xf]
    %v10506 = vunpack.c.l.b16 %v10498
    %v10507 = vunpack.c.l.b16 %v10499
    %v10508 = vunpack.c.l.b16 %v10500
    %v10509 = vunpack.c.l.b16 %v10501
    %v10510 = vpack.c.b16 %v10507, %v10506
    %v10511 = vpack.c.b16 %v10509, %v10508
    %10514 = vmatprep.subr.bf16.mxu0 0
    %10515 = vmatpush1.bf16.msra.mxu0 %v9674
    %10516 = vmatprep.subr.bf16.mxu0 0
    %10517 = vmatpush1.bf16.msra.mxu0 %v9675
    %10518 = vmatprep.subr.bf16.mxu0 0
    %10519 = vmatpush1.bf16.msra.mxu0 %v9676
    %10520 = vmatprep.subr.bf16.mxu0 0
    %10521 = vmatpush1.bf16.msra.mxu0 %v9677
    %10522 = vmatprep.subr.bf16.mxu0 0
    %10523 = vmatpush1.bf16.msra.mxu0 %v9678
    %10524 = vmatprep.subr.bf16.mxu0 0
    %10525 = vmatpush1.bf16.msra.mxu0 %v9679
    %10526 = vmatprep.subr.bf16.mxu0 0
    %10527 = vmatpush1.bf16.msra.mxu0 %v9680
    %10528 = vmatprep.subr.bf16.mxu0 0
    %10529 = vmatpush1.bf16.msra.mxu0 %v9681
    %10530 = vmatprep.subr.bf16.mxu0 0
    %10531 = vmatpush1.bf16.msra.mxu0 0
    %10532 = vmatprep.subr.bf16.mxu0 0
    %10533 = vmatpush1.bf16.msra.mxu0 0
    %10534 = vmatprep.subr.bf16.mxu0 0
    %10535 = vmatpush1.bf16.msra.mxu0 0
    %10536 = vmatprep.subr.bf16.mxu0 0
    %10537 = vmatpush1.bf16.msra.mxu0 0
    %10538 = vmatprep.subr.bf16.mxu0 0
    %10539 = vmatpush1.bf16.msra.mxu0 0
    %10540 = vmatprep.subr.bf16.mxu0 0
    %10541 = vmatpush1.bf16.msra.mxu0 0
    %10542 = vmatprep.subr.bf16.mxu0 0
    %10543 = vmatpush1.bf16.msra.mxu0 0
    %10544 = vmatprep.subr.bf16.mxu0 0
    %10545 = vmatpush1.bf16.msra.mxu0 0
    %10546 = vmatprep.mubr.bf16.mxu0 0
    %10547 = vmatmul.mubr.bf16.gmra.mrb[0].mxu0 %v10510
    %v10548 = vpop.f32.mrb[0].mxu0
    %v10549 = vadd.f32 0.0, %v10548
    %v10550 = vpop.f32.mrb[0].mxu0
    %v10551 = vpop.f32.mrb[0].mxu0
    %v10552 = vadd.f32 0.0, %v10551
    %v10553 = vpop.f32.mrb[0].mxu0
    %10554 = vmatprep.mubr.bf16.mxu0 0
    %10555 = vmatmul.mubr.bf16.gmra.mrb[0].mxu0 %v10511
    %v10556 = vpop.f32.mrb[0].mxu0
    %v10557 = vadd.f32 0.0, %v10556
    %v10558 = vpop.f32.mrb[0].mxu0
    %v10559 = vpop.f32.mrb[0].mxu0
    %v10560 = vadd.f32 0.0, %v10559
    %v10561 = vpop.f32.mrb[0].mxu0
    %10562 = vdwg.mxu0
    %v10563 = vpack.c.bf16 %v10552, %v10549
    %v10564 = vpack.c.bf16 %v10560, %v10557
    %s10565 = scalar_lea.vmem [#allocation14], 208
    %v10566 = vld [vmem:[%s10565] sm:$0xf]
    %v10567 = vld [vmem:[%s10565 + $0x4] sm:$0xf]
    %v10568 = vld [vmem:[%s10565 + $0x8] sm:$0xf]
    %v10569 = vld [vmem:[%s10565 + $0xc] sm:$0xf]
    %v10574 = vunpack.c.l.b16 %v10566
    %v10575 = vunpack.c.l.b16 %v10567
    %v10576 = vunpack.c.l.b16 %v10568
    %v10577 = vunpack.c.l.b16 %v10569
    %v10578 = vpack.c.b16 %v10575, %v10574
    %v10579 = vpack.c.b16 %v10577, %v10576
    %10582 = vmatprep.subr.bf16.mxu0 0
    %10583 = vmatpush1.bf16.msra.mxu0 %v9674
    %10584 = vmatprep.subr.bf16.mxu0 0
    %10585 = vmatpush1.bf16.msra.mxu0 %v9675
    %10586 = vmatprep.subr.bf16.mxu0 0
    %10587 = vmatpush1.bf16.msra.mxu0 %v9676
    %10588 = vmatprep.subr.bf16.mxu0 0
    %10589 = vmatpush1.bf16.msra.mxu0 %v9677
    %10590 = vmatprep.subr.bf16.mxu0 0
    %10591 = vmatpush1.bf16.msra.mxu0 %v9678
    %10592 = vmatprep.subr.bf16.mxu0 0
    %10593 = vmatpush1.bf16.msra.mxu0 %v9679
    %10594 = vmatprep.subr.bf16.mxu0 0
    %10595 = vmatpush1.bf16.msra.mxu0 %v9680
    %10596 = vmatprep.subr.bf16.mxu0 0
    %10597 = vmatpush1.bf16.msra.mxu0 %v9681
    %10598 = vmatprep.subr.bf16.mxu0 0
    %10599 = vmatpush1.bf16.msra.mxu0 0
    %10600 = vmatprep.subr.bf16.mxu0 0
    %10601 = vmatpush1.bf16.msra.mxu0 0
    %10602 = vmatprep.subr.bf16.mxu0 0
    %10603 = vmatpush1.bf16.msra.mxu0 0
    %10604 = vmatprep.subr.bf16.mxu0 0
    %10605 = vmatpush1.bf16.msra.mxu0 0
    %10606 = vmatprep.subr.bf16.mxu0 0
    %10607 = vmatpush1.bf16.msra.mxu0 0
    %10608 = vmatprep.subr.bf16.mxu0 0
    %10609 = vmatpush1.bf16.msra.mxu0 0
    %10610 = vmatprep.subr.bf16.mxu0 0
    %10611 = vmatpush1.bf16.msra.mxu0 0
    %10612 = vmatprep.subr.bf16.mxu0 0
    %10613 = vmatpush1.bf16.msra.mxu0 0
    %10614 = vmatprep.mubr.bf16.mxu0 0
    %10615 = vmatmul.mubr.bf16.gmra.mrb[0].mxu0 %v10578
    %v10616 = vpop.f32.mrb[0].mxu0
    %v10617 = vadd.f32 0.0, %v10616
    %v10618 = vpop.f32.mrb[0].mxu0
    %v10619 = vpop.f32.mrb[0].mxu0
    %v10620 = vadd.f32 0.0, %v10619
    %v10621 = vpop.f32.mrb[0].mxu0
    %10622 = vmatprep.mubr.bf16.mxu0 0
    %10623 = vmatmul.mubr.bf16.gmra.mrb[0].mxu0 %v10579
    %v10624 = vpop.f32.mrb[0].mxu0
    %v10625 = vadd.f32 0.0, %v10624
    %v10626 = vpop.f32.mrb[0].mxu0
    %v10627 = vpop.f32.mrb[0].mxu0
    %v10628 = vadd.f32 0.0, %v10627
    %v10629 = vpop.f32.mrb[0].mxu0
    %10630 = vdwg.mxu0
    %v10631 = vpack.c.bf16 %v10620, %v10617
    %v10632 = vpack.c.bf16 %v10628, %v10625
    %s10633 = scalar_lea.vmem [#allocation14], 224
    %v10634 = vld [vmem:[%s10633] sm:$0xf]
    %v10635 = vld [vmem:[%s10633 + $0x4] sm:$0xf]
    %v10636 = vld [vmem:[%s10633 + $0x8] sm:$0xf]
    %v10637 = vld [vmem:[%s10633 + $0xc] sm:$0xf]
    %v10642 = vunpack.c.l.b16 %v10634
    %v10643 = vunpack.c.l.b16 %v10635
    %v10644 = vunpack.c.l.b16 %v10636
    %v10645 = vunpack.c.l.b16 %v10637
    %v10646 = vpack.c.b16 %v10643, %v10642
    %v10647 = vpack.c.b16 %v10645, %v10644
    %10650 = vmatprep.subr.bf16.mxu0 0
    %10651 = vmatpush1.bf16.msra.mxu0 %v9674
    %10652 = vmatprep.subr.bf16.mxu0 0
    %10653 = vmatpush1.bf16.msra.mxu0 %v9675
    %10654 = vmatprep.subr.bf16.mxu0 0
    %10655 = vmatpush1.bf16.msra.mxu0 %v9676
    %10656 = vmatprep.subr.bf16.mxu0 0
    %10657 = vmatpush1.bf16.msra.mxu0 %v9677
    %10658 = vmatprep.subr.bf16.mxu0 0
    %10659 = vmatpush1.bf16.msra.mxu0 %v9678
    %10660 = vmatprep.subr.bf16.mxu0 0
    %10661 = vmatpush1.bf16.msra.mxu0 %v9679
    %10662 = vmatprep.subr.bf16.mxu0 0
    %10663 = vmatpush1.bf16.msra.mxu0 %v9680
    %10664 = vmatprep.subr.bf16.mxu0 0
    %10665 = vmatpush1.bf16.msra.mxu0 %v9681
    %10666 = vmatprep.subr.bf16.mxu0 0
    %10667 = vmatpush1.bf16.msra.mxu0 0
    %10668 = vmatprep.subr.bf16.mxu0 0
    %10669 = vmatpush1.bf16.msra.mxu0 0
    %10670 = vmatprep.subr.bf16.mxu0 0
    %10671 = vmatpush1.bf16.msra.mxu0 0
    %10672 = vmatprep.subr.bf16.mxu0 0
    %10673 = vmatpush1.bf16.msra.mxu0 0
    %10674 = vmatprep.subr.bf16.mxu0 0
    %10675 = vmatpush1.bf16.msra.mxu0 0
    %10676 = vmatprep.subr.bf16.mxu0 0
    %10677 = vmatpush1.bf16.msra.mxu0 0
    %10678 = vmatprep.subr.bf16.mxu0 0
    %10679 = vmatpush1.bf16.msra.mxu0 0
    %10680 = vmatprep.subr.bf16.mxu0 0
    %10681 = vmatpush1.bf16.msra.mxu0 0
    %10682 = vmatprep.mubr.bf16.mxu0 0
    %10683 = vmatmul.mubr.bf16.gmra.mrb[0].mxu0 %v10646
    %v10684 = vpop.f32.mrb[0].mxu0
    %v10685 = vadd.f32 0.0, %v10684
    %v10686 = vpop.f32.mrb[0].mxu0
    %v10687 = vpop.f32.mrb[0].mxu0
    %v10688 = vadd.f32 0.0, %v10687
    %v10689 = vpop.f32.mrb[0].mxu0
    %10690 = vmatprep.mubr.bf16.mxu0 0
    %10691 = vmatmul.mubr.bf16.gmra.mrb[0].mxu0 %v10647
    %v10692 = vpop.f32.mrb[0].mxu0
    %v10693 = vadd.f32 0.0, %v10692
    %v10694 = vpop.f32.mrb[0].mxu0
    %v10695 = vpop.f32.mrb[0].mxu0
    %v10696 = vadd.f32 0.0, %v10695
    %v10697 = vpop.f32.mrb[0].mxu0
    %10698 = vdwg.mxu0
    %v10699 = vpack.c.bf16 %v10688, %v10685
    %v10700 = vpack.c.bf16 %v10696, %v10693
    %s10701 = scalar_lea.vmem [#allocation14], 240
    %v10702 = vld [vmem:[%s10701] sm:$0xf]
    %v10703 = vld [vmem:[%s10701 + $0x4] sm:$0xf]
    %v10704 = vld [vmem:[%s10701 + $0x8] sm:$0xf]
    %v10705 = vld [vmem:[%s10701 + $0xc] sm:$0xf]
    %v10710 = vunpack.c.l.b16 %v10702
    %v10711 = vunpack.c.l.b16 %v10703
    %v10712 = vunpack.c.l.b16 %v10704
    %v10713 = vunpack.c.l.b16 %v10705
    %v10714 = vpack.c.b16 %v10711, %v10710
    %v10715 = vpack.c.b16 %v10713, %v10712
    %10718 = vmatprep.subr.bf16.mxu0 0
    %10719 = vmatpush1.bf16.msra.mxu0 %v9674
    %10720 = vmatprep.subr.bf16.mxu0 0
    %10721 = vmatpush1.bf16.msra.mxu0 %v9675
    %10722 = vmatprep.subr.bf16.mxu0 0
    %10723 = vmatpush1.bf16.msra.mxu0 %v9676
    %10724 = vmatprep.subr.bf16.mxu0 0
    %10725 = vmatpush1.bf16.msra.mxu0 %v9677
    %10726 = vmatprep.subr.bf16.mxu0 0
    %10727 = vmatpush1.bf16.msra.mxu0 %v9678
    %10728 = vmatprep.subr.bf16.mxu0 0
    %10729 = vmatpush1.bf16.msra.mxu0 %v9679
    %10730 = vmatprep.subr.bf16.mxu0 0
    %10731 = vmatpush1.bf16.msra.mxu0 %v9680
    %10732 = vmatprep.subr.bf16.mxu0 0
    %10733 = vmatpush1.bf16.msra.mxu0 %v9681
    %10734 = vmatprep.subr.bf16.mxu0 0
    %10735 = vmatpush1.bf16.msra.mxu0 0
    %10736 = vmatprep.subr.bf16.mxu0 0
    %10737 = vmatpush1.bf16.msra.mxu0 0
    %10738 = vmatprep.subr.bf16.mxu0 0
    %10739 = vmatpush1.bf16.msra.mxu0 0
    %10740 = vmatprep.subr.bf16.mxu0 0
    %10741 = vmatpush1.bf16.msra.mxu0 0
    %10742 = vmatprep.subr.bf16.mxu0 0
    %10743 = vmatpush1.bf16.msra.mxu0 0
    %10744 = vmatprep.subr.bf16.mxu0 0
    %10745 = vmatpush1.bf16.msra.mxu0 0
    %10746 = vmatprep.subr.bf16.mxu0 0
    %10747 = vmatpush1.bf16.msra.mxu0 0
    %10748 = vmatprep.subr.bf16.mxu0 0
    %10749 = vmatpush1.bf16.msra.mxu0 0
    %10750 = vmatprep.mubr.bf16.mxu0 0
    %10751 = vmatmul.mubr.bf16.gmra.mrb[0].mxu0 %v10714
    %v10752 = vpop.f32.mrb[0].mxu0
    %v10753 = vadd.f32 0.0, %v10752
    %v10754 = vpop.f32.mrb[0].mxu0
    %v10755 = vpop.f32.mrb[0].mxu0
    %v10756 = vadd.f32 0.0, %v10755
    %v10757 = vpop.f32.mrb[0].mxu0
    %10758 = vmatprep.mubr.bf16.mxu0 0
    %10759 = vmatmul.mubr.bf16.gmra.mrb[0].mxu0 %v10715
    %v10760 = vpop.f32.mrb[0].mxu0
    %v10761 = vadd.f32 0.0, %v10760
    %v10762 = vpop.f32.mrb[0].mxu0
    %v10763 = vpop.f32.mrb[0].mxu0
    %v10764 = vadd.f32 0.0, %v10763
    %v10765 = vpop.f32.mrb[0].mxu0
    %10766 = vdwg.mxu0
    %v10767 = vpack.c.bf16 %v10756, %v10753
    %v10768 = vpack.c.bf16 %v10764, %v10761
    %v10769 = vld [vmem:[#allocation16] sm:$0xff]
    %v10770 = vld [vmem:[#allocation16 + $0x8] sm:$0xff]
    %v10771 = vld [vmem:[#allocation16 + $0x10] sm:$0xff]
    %v10772 = vld [vmem:[#allocation16 + $0x18] sm:$0xff]
    %v10773 = vld [vmem:[#allocation16 + $0x20] sm:$0xff]
    %v10774 = vld [vmem:[#allocation16 + $0x28] sm:$0xff]
    %v10775 = vld [vmem:[#allocation16 + $0x30] sm:$0xff]
    %v10776 = vld [vmem:[#allocation16 + $0x38] sm:$0xff]
    %v10777 = vld [vmem:[#allocation16 + $0x40] sm:$0xff]
    %v10778 = vld [vmem:[#allocation16 + $0x48] sm:$0xff]
    %v10779 = vld [vmem:[#allocation16 + $0x50] sm:$0xff]
    %v10780 = vld [vmem:[#allocation16 + $0x58] sm:$0xff]
    %v10781 = vld [vmem:[#allocation16 + $0x60] sm:$0xff]
    %v10782 = vld [vmem:[#allocation16 + $0x68] sm:$0xff]
    %v10783 = vld [vmem:[#allocation16 + $0x70] sm:$0xff]
    %v10784 = vld [vmem:[#allocation16 + $0x78] sm:$0xff]
    %v10785 = vld [vmem:[#allocation16 + $0x80] sm:$0xff]
    %v10786 = vld [vmem:[#allocation16 + $0x88] sm:$0xff]
    %v10787 = vld [vmem:[#allocation16 + $0x90] sm:$0xff]
    %v10788 = vld [vmem:[#allocation16 + $0x98] sm:$0xff]
    %v10789 = vld [vmem:[#allocation16 + $0xa0] sm:$0xff]
    %v10790 = vld [vmem:[#allocation16 + $0xa8] sm:$0xff]
    %v10791 = vld [vmem:[#allocation16 + $0xb0] sm:$0xff]
    %v10792 = vld [vmem:[#allocation16 + $0xb8] sm:$0xff]
    %v10793 = vld [vmem:[#allocation16 + $0xc0] sm:$0xff]
    %v10794 = vld [vmem:[#allocation16 + $0xc8] sm:$0xff]
    %v10795 = vld [vmem:[#allocation16 + $0xd0] sm:$0xff]
    %v10796 = vld [vmem:[#allocation16 + $0xd8] sm:$0xff]
    %v10797 = vld [vmem:[#allocation16 + $0xe0] sm:$0xff]
    %v10798 = vld [vmem:[#allocation16 + $0xe8] sm:$0xff]
    %v10799 = vld [vmem:[#allocation16 + $0xf0] sm:$0xff]
    %v10800 = vld [vmem:[#allocation16 + $0xf8] sm:$0xff]
    %v10801 = vld [vmem:[#allocation16 + $0x100] sm:$0xff]
    %v10802 = vld [vmem:[#allocation16 + $0x108] sm:$0xff]
    %v10803 = vld [vmem:[#allocation16 + $0x110] sm:$0xff]
    %v10804 = vld [vmem:[#allocation16 + $0x118] sm:$0xff]
    %v10805 = vld [vmem:[#allocation16 + $0x120] sm:$0xff]
    %v10806 = vld [vmem:[#allocation16 + $0x128] sm:$0xff]
    %v10807 = vld [vmem:[#allocation16 + $0x130] sm:$0xff]
    %v10808 = vld [vmem:[#allocation16 + $0x138] sm:$0xff]
    %v10809 = vld [vmem:[#allocation16 + $0x140] sm:$0xff]
    %v10810 = vld [vmem:[#allocation16 + $0x148] sm:$0xff]
    %v10811 = vld [vmem:[#allocation16 + $0x150] sm:$0xff]
    %v10812 = vld [vmem:[#allocation16 + $0x158] sm:$0xff]
    %v10813 = vld [vmem:[#allocation16 + $0x160] sm:$0xff]
    %v10814 = vld [vmem:[#allocation16 + $0x168] sm:$0xff]
    %v10815 = vld [vmem:[#allocation16 + $0x170] sm:$0xff]
    %v10816 = vld [vmem:[#allocation16 + $0x178] sm:$0xff]
    %v10817 = vld [vmem:[#allocation16 + $0x180] sm:$0xff]
    %v10818 = vld [vmem:[#allocation16 + $0x188] sm:$0xff]
    %v10819 = vld [vmem:[#allocation16 + $0x190] sm:$0xff]
    %v10820 = vld [vmem:[#allocation16 + $0x198] sm:$0xff]
    %v10821 = vld [vmem:[#allocation16 + $0x1a0] sm:$0xff]
    %v10822 = vld [vmem:[#allocation16 + $0x1a8] sm:$0xff]
    %v10823 = vld [vmem:[#allocation16 + $0x1b0] sm:$0xff]
    %v10824 = vld [vmem:[#allocation16 + $0x1b8] sm:$0xff]
    %v10825 = vld [vmem:[#allocation16 + $0x1c0] sm:$0xff]
    %v10826 = vld [vmem:[#allocation16 + $0x1c8] sm:$0xff]
    %v10827 = vld [vmem:[#allocation16 + $0x1d0] sm:$0xff]
    %v10828 = vld [vmem:[#allocation16 + $0x1d8] sm:$0xff]
    %v10829 = vld [vmem:[#allocation16 + $0x1e0] sm:$0xff]
    %v10830 = vld [vmem:[#allocation16 + $0x1e8] sm:$0xff]
    %v10831 = vld [vmem:[#allocation16 + $0x1f0] sm:$0xff]
    %v10832 = vld [vmem:[#allocation16 + $0x1f8] sm:$0xff]
    %v10833 = vld [vmem:[#allocation16 + $0x200] sm:$0xff]
    %v10834 = vld [vmem:[#allocation16 + $0x208] sm:$0xff]
    %v10835 = vld [vmem:[#allocation16 + $0x210] sm:$0xff]
    %v10836 = vld [vmem:[#allocation16 + $0x218] sm:$0xff]
    %v10837 = vld [vmem:[#allocation16 + $0x220] sm:$0xff]
    %v10838 = vld [vmem:[#allocation16 + $0x228] sm:$0xff]
    %v10839 = vld [vmem:[#allocation16 + $0x230] sm:$0xff]
    %v10840 = vld [vmem:[#allocation16 + $0x238] sm:$0xff]
    %v10841 = vld [vmem:[#allocation16 + $0x240] sm:$0xff]
    %v10842 = vld [vmem:[#allocation16 + $0x248] sm:$0xff]
    %v10843 = vld [vmem:[#allocation16 + $0x250] sm:$0xff]
    %v10844 = vld [vmem:[#allocation16 + $0x258] sm:$0xff]
    %v10845 = vld [vmem:[#allocation16 + $0x260] sm:$0xff]
    %v10846 = vld [vmem:[#allocation16 + $0x268] sm:$0xff]
    %v10847 = vld [vmem:[#allocation16 + $0x270] sm:$0xff]
    %v10848 = vld [vmem:[#allocation16 + $0x278] sm:$0xff]
    %v10849 = vld [vmem:[#allocation16 + $0x280] sm:$0xff]
    %v10850 = vld [vmem:[#allocation16 + $0x288] sm:$0xff]
    %v10851 = vld [vmem:[#allocation16 + $0x290] sm:$0xff]
    %v10852 = vld [vmem:[#allocation16 + $0x298] sm:$0xff]
    %v10853 = vld [vmem:[#allocation16 + $0x2a0] sm:$0xff]
    %v10854 = vld [vmem:[#allocation16 + $0x2a8] sm:$0xff]
    %v10855 = vld [vmem:[#allocation16 + $0x2b0] sm:$0xff]
    %v10856 = vld [vmem:[#allocation16 + $0x2b8] sm:$0xff]
    %v10857 = vld [vmem:[#allocation16 + $0x2c0] sm:$0xff]
    %v10858 = vld [vmem:[#allocation16 + $0x2c8] sm:$0xff]
    %v10859 = vld [vmem:[#allocation16 + $0x2d0] sm:$0xff]
    %v10860 = vld [vmem:[#allocation16 + $0x2d8] sm:$0xff]
    %v10861 = vld [vmem:[#allocation16 + $0x2e0] sm:$0xff]
    %v10862 = vld [vmem:[#allocation16 + $0x2e8] sm:$0xff]
    %v10863 = vld [vmem:[#allocation16 + $0x2f0] sm:$0xff]
    %v10864 = vld [vmem:[#allocation16 + $0x2f8] sm:$0xff]
    %v10865 = vld [vmem:[#allocation16 + $0x300] sm:$0xff]
    %v10866 = vld [vmem:[#allocation16 + $0x308] sm:$0xff]
    %v10867 = vld [vmem:[#allocation16 + $0x310] sm:$0xff]
    %v10868 = vld [vmem:[#allocation16 + $0x318] sm:$0xff]
    %v10869 = vld [vmem:[#allocation16 + $0x320] sm:$0xff]
    %v10870 = vld [vmem:[#allocation16 + $0x328] sm:$0xff]
    %v10871 = vld [vmem:[#allocation16 + $0x330] sm:$0xff]
    %v10872 = vld [vmem:[#allocation16 + $0x338] sm:$0xff]
    %v10873 = vld [vmem:[#allocation16 + $0x340] sm:$0xff]
    %v10874 = vld [vmem:[#allocation16 + $0x348] sm:$0xff]
    %v10875 = vld [vmem:[#allocation16 + $0x350] sm:$0xff]
    %v10876 = vld [vmem:[#allocation16 + $0x358] sm:$0xff]
    %v10877 = vld [vmem:[#allocation16 + $0x360] sm:$0xff]
    %v10878 = vld [vmem:[#allocation16 + $0x368] sm:$0xff]
    %v10879 = vld [vmem:[#allocation16 + $0x370] sm:$0xff]
    %v10880 = vld [vmem:[#allocation16 + $0x378] sm:$0xff]
    %v10881 = vld [vmem:[#allocation16 + $0x380] sm:$0xff]
    %v10882 = vld [vmem:[#allocation16 + $0x388] sm:$0xff]
    %v10883 = vld [vmem:[#allocation16 + $0x390] sm:$0xff]
    %v10884 = vld [vmem:[#allocation16 + $0x398] sm:$0xff]
    %v10885 = vld [vmem:[#allocation16 + $0x3a0] sm:$0xff]
    %v10886 = vld [vmem:[#allocation16 + $0x3a8] sm:$0xff]
    %v10887 = vld [vmem:[#allocation16 + $0x3b0] sm:$0xff]
    %v10888 = vld [vmem:[#allocation16 + $0x3b8] sm:$0xff]
    %v10889 = vld [vmem:[#allocation16 + $0x3c0] sm:$0xff]
    %v10890 = vld [vmem:[#allocation16 + $0x3c8] sm:$0xff]
    %v10891 = vld [vmem:[#allocation16 + $0x3d0] sm:$0xff]
    %v10892 = vld [vmem:[#allocation16 + $0x3d8] sm:$0xff]
    %v10893 = vld [vmem:[#allocation16 + $0x3e0] sm:$0xff]
    %v10894 = vld [vmem:[#allocation16 + $0x3e8] sm:$0xff]
    %v10895 = vld [vmem:[#allocation16 + $0x3f0] sm:$0xff]
    %v10896 = vld [vmem:[#allocation16 + $0x3f8] sm:$0xff]
    %v10897 = vld [vmem:[#allocation16 + $0x400] sm:$0xff]
    %v10898 = vld [vmem:[#allocation16 + $0x408] sm:$0xff]
    %v10899 = vld [vmem:[#allocation16 + $0x410] sm:$0xff]
    %v10900 = vld [vmem:[#allocation16 + $0x418] sm:$0xff]
    %v10901 = vld [vmem:[#allocation16 + $0x420] sm:$0xff]
    %v10902 = vld [vmem:[#allocation16 + $0x428] sm:$0xff]
    %v10903 = vld [vmem:[#allocation16 + $0x430] sm:$0xff]
    %v10904 = vld [vmem:[#allocation16 + $0x438] sm:$0xff]
    %v10905 = vld [vmem:[#allocation16 + $0x440] sm:$0xff]
    %v10906 = vld [vmem:[#allocation16 + $0x448] sm:$0xff]
    %v10907 = vld [vmem:[#allocation16 + $0x450] sm:$0xff]
    %v10908 = vld [vmem:[#allocation16 + $0x458] sm:$0xff]
    %v10909 = vld [vmem:[#allocation16 + $0x460] sm:$0xff]
    %v10910 = vld [vmem:[#allocation16 + $0x468] sm:$0xff]
    %v10911 = vld [vmem:[#allocation16 + $0x470] sm:$0xff]
    %v10912 = vld [vmem:[#allocation16 + $0x478] sm:$0xff]
    %v10913 = vld [vmem:[#allocation16 + $0x480] sm:$0xff]
    %v10914 = vld [vmem:[#allocation16 + $0x488] sm:$0xff]
    %v10915 = vld [vmem:[#allocation16 + $0x490] sm:$0xff]
    %v10916 = vld [vmem:[#allocation16 + $0x498] sm:$0xff]
    %v10917 = vld [vmem:[#allocation16 + $0x4a0] sm:$0xff]
    %v10918 = vld [vmem:[#allocation16 + $0x4a8] sm:$0xff]
    %v10919 = vld [vmem:[#allocation16 + $0x4b0] sm:$0xff]
    %v10920 = vld [vmem:[#allocation16 + $0x4b8] sm:$0xff]
    %v10921 = vld [vmem:[#allocation16 + $0x4c0] sm:$0xff]
    %v10922 = vld [vmem:[#allocation16 + $0x4c8] sm:$0xff]
    %v10923 = vld [vmem:[#allocation16 + $0x4d0] sm:$0xff]
    %v10924 = vld [vmem:[#allocation16 + $0x4d8] sm:$0xff]
    %v10925 = vld [vmem:[#allocation16 + $0x4e0] sm:$0xff]
    %v10926 = vld [vmem:[#allocation16 + $0x4e8] sm:$0xff]
    %v10927 = vld [vmem:[#allocation16 + $0x4f0] sm:$0xff]
    %v10928 = vld [vmem:[#allocation16 + $0x4f8] sm:$0xff]
    %v10929 = vld [vmem:[#allocation16 + $0x500] sm:$0xff]
    %v10930 = vld [vmem:[#allocation16 + $0x508] sm:$0xff]
    %v10931 = vld [vmem:[#allocation16 + $0x510] sm:$0xff]
    %v10932 = vld [vmem:[#allocation16 + $0x518] sm:$0xff]
    %v10933 = vld [vmem:[#allocation16 + $0x520] sm:$0xff]
    %v10934 = vld [vmem:[#allocation16 + $0x528] sm:$0xff]
    %v10935 = vld [vmem:[#allocation16 + $0x530] sm:$0xff]
    %v10936 = vld [vmem:[#allocation16 + $0x538] sm:$0xff]
    %v10937 = vld [vmem:[#allocation16 + $0x540] sm:$0xff]
    %v10938 = vld [vmem:[#allocation16 + $0x548] sm:$0xff]
    %v10939 = vld [vmem:[#allocation16 + $0x550] sm:$0xff]
    %v10940 = vld [vmem:[#allocation16 + $0x558] sm:$0xff]
    %v10941 = vld [vmem:[#allocation16 + $0x560] sm:$0xff]
    %v10942 = vld [vmem:[#allocation16 + $0x568] sm:$0xff]
    %v10943 = vld [vmem:[#allocation16 + $0x570] sm:$0xff]
    %v10944 = vld [vmem:[#allocation16 + $0x578] sm:$0xff]
    %v10945 = vld [vmem:[#allocation16 + $0x580] sm:$0xff]
    %v10946 = vld [vmem:[#allocation16 + $0x588] sm:$0xff]
    %v10947 = vld [vmem:[#allocation16 + $0x590] sm:$0xff]
    %v10948 = vld [vmem:[#allocation16 + $0x598] sm:$0xff]
    %v10949 = vld [vmem:[#allocation16 + $0x5a0] sm:$0xff]
    %v10950 = vld [vmem:[#allocation16 + $0x5a8] sm:$0xff]
    %v10951 = vld [vmem:[#allocation16 + $0x5b0] sm:$0xff]
    %v10952 = vld [vmem:[#allocation16 + $0x5b8] sm:$0xff]
    %v10953 = vld [vmem:[#allocation16 + $0x5c0] sm:$0xff]
    %v10954 = vld [vmem:[#allocation16 + $0x5c8] sm:$0xff]
    %v10955 = vld [vmem:[#allocation16 + $0x5d0] sm:$0xff]
    %v10956 = vld [vmem:[#allocation16 + $0x5d8] sm:$0xff]
    %v10957 = vld [vmem:[#allocation16 + $0x5e0] sm:$0xff]
    %v10958 = vld [vmem:[#allocation16 + $0x5e8] sm:$0xff]
    %v10959 = vld [vmem:[#allocation16 + $0x5f0] sm:$0xff]
    %v10960 = vld [vmem:[#allocation16 + $0x5f8] sm:$0xff]
    %v10961 = vld [vmem:[#allocation16 + $0x600] sm:$0xff]
    %v10962 = vld [vmem:[#allocation16 + $0x608] sm:$0xff]
    %v10963 = vld [vmem:[#allocation16 + $0x610] sm:$0xff]
    %v10964 = vld [vmem:[#allocation16 + $0x618] sm:$0xff]
    %v10965 = vld [vmem:[#allocation16 + $0x620] sm:$0xff]
    %v10966 = vld [vmem:[#allocation16 + $0x628] sm:$0xff]
    %v10967 = vld [vmem:[#allocation16 + $0x630] sm:$0xff]
    %v10968 = vld [vmem:[#allocation16 + $0x638] sm:$0xff]
    %v10969 = vld [vmem:[#allocation16 + $0x640] sm:$0xff]
    %v10970 = vld [vmem:[#allocation16 + $0x648] sm:$0xff]
    %v10971 = vld [vmem:[#allocation16 + $0x650] sm:$0xff]
    %v10972 = vld [vmem:[#allocation16 + $0x658] sm:$0xff]
    %v10973 = vld [vmem:[#allocation16 + $0x660] sm:$0xff]
    %v10974 = vld [vmem:[#allocation16 + $0x668] sm:$0xff]
    %v10975 = vld [vmem:[#allocation16 + $0x670] sm:$0xff]
    %v10976 = vld [vmem:[#allocation16 + $0x678] sm:$0xff]
    %v10977 = vld [vmem:[#allocation16 + $0x680] sm:$0xff]
    %v10978 = vld [vmem:[#allocation16 + $0x688] sm:$0xff]
    %v10979 = vld [vmem:[#allocation16 + $0x690] sm:$0xff]
    %v10980 = vld [vmem:[#allocation16 + $0x698] sm:$0xff]
    %v10981 = vld [vmem:[#allocation16 + $0x6a0] sm:$0xff]
    %v10982 = vld [vmem:[#allocation16 + $0x6a8] sm:$0xff]
    %v10983 = vld [vmem:[#allocation16 + $0x6b0] sm:$0xff]
    %v10984 = vld [vmem:[#allocation16 + $0x6b8] sm:$0xff]
    %v10985 = vld [vmem:[#allocation16 + $0x6c0] sm:$0xff]
    %v10986 = vld [vmem:[#allocation16 + $0x6c8] sm:$0xff]
    %v10987 = vld [vmem:[#allocation16 + $0x6d0] sm:$0xff]
    %v10988 = vld [vmem:[#allocation16 + $0x6d8] sm:$0xff]
    %v10989 = vld [vmem:[#allocation16 + $0x6e0] sm:$0xff]
    %v10990 = vld [vmem:[#allocation16 + $0x6e8] sm:$0xff]
    %v10991 = vld [vmem:[#allocation16 + $0x6f0] sm:$0xff]
    %v10992 = vld [vmem:[#allocation16 + $0x6f8] sm:$0xff]
    %v10993 = vld [vmem:[#allocation16 + $0x700] sm:$0xff]
    %v10994 = vld [vmem:[#allocation16 + $0x708] sm:$0xff]
    %v10995 = vld [vmem:[#allocation16 + $0x710] sm:$0xff]
    %v10996 = vld [vmem:[#allocation16 + $0x718] sm:$0xff]
    %v10997 = vld [vmem:[#allocation16 + $0x720] sm:$0xff]
    %v10998 = vld [vmem:[#allocation16 + $0x728] sm:$0xff]
    %v10999 = vld [vmem:[#allocation16 + $0x730] sm:$0xff]
    %v11000 = vld [vmem:[#allocation16 + $0x738] sm:$0xff]
    %v11001 = vld [vmem:[#allocation16 + $0x740] sm:$0xff]
    %v11002 = vld [vmem:[#allocation16 + $0x748] sm:$0xff]
    %v11003 = vld [vmem:[#allocation16 + $0x750] sm:$0xff]
    %v11004 = vld [vmem:[#allocation16 + $0x758] sm:$0xff]
    %v11005 = vld [vmem:[#allocation16 + $0x760] sm:$0xff]
    %v11006 = vld [vmem:[#allocation16 + $0x768] sm:$0xff]
    %v11007 = vld [vmem:[#allocation16 + $0x770] sm:$0xff]
    %v11008 = vld [vmem:[#allocation16 + $0x778] sm:$0xff]
    %v11009 = vld [vmem:[#allocation16 + $0x780] sm:$0xff]
    %v11010 = vld [vmem:[#allocation16 + $0x788] sm:$0xff]
    %v11011 = vld [vmem:[#allocation16 + $0x790] sm:$0xff]
    %v11012 = vld [vmem:[#allocation16 + $0x798] sm:$0xff]
    %v11013 = vld [vmem:[#allocation16 + $0x7a0] sm:$0xff]
    %v11014 = vld [vmem:[#allocation16 + $0x7a8] sm:$0xff]
    %v11015 = vld [vmem:[#allocation16 + $0x7b0] sm:$0xff]
    %v11016 = vld [vmem:[#allocation16 + $0x7b8] sm:$0xff]
    %v11017 = vld [vmem:[#allocation16 + $0x7c0] sm:$0xff]
    %v11018 = vld [vmem:[#allocation16 + $0x7c8] sm:$0xff]
    %v11019 = vld [vmem:[#allocation16 + $0x7d0] sm:$0xff]
    %v11020 = vld [vmem:[#allocation16 + $0x7d8] sm:$0xff]
    %v11021 = vld [vmem:[#allocation16 + $0x7e0] sm:$0xff]
    %v11022 = vld [vmem:[#allocation16 + $0x7e8] sm:$0xff]
    %v11023 = vld [vmem:[#allocation16 + $0x7f0] sm:$0xff]
    %v11024 = vld [vmem:[#allocation16 + $0x7f8] sm:$0xff]
    %v11281 = vunpack.c.l.b16 %v10769
    %v11282 = vunpack.c.h.b16 %v10769
    %v11283 = vunpack.c.l.b16 %v10770
    %v11284 = vunpack.c.h.b16 %v10770
    %v11285 = vunpack.c.l.b16 %v10771
    %v11286 = vunpack.c.h.b16 %v10771
    %v11287 = vunpack.c.l.b16 %v10772
    %v11288 = vunpack.c.h.b16 %v10772
    %v11289 = vunpack.c.l.b16 %v10773
    %v11290 = vunpack.c.h.b16 %v10773
    %v11291 = vunpack.c.l.b16 %v10774
    %v11292 = vunpack.c.h.b16 %v10774
    %v11293 = vunpack.c.l.b16 %v10775
    %v11294 = vunpack.c.h.b16 %v10775
    %v11295 = vunpack.c.l.b16 %v10776
    %v11296 = vunpack.c.h.b16 %v10776
    %v11297 = vunpack.c.l.b16 %v10777
    %v11298 = vunpack.c.h.b16 %v10777
    %v11299 = vunpack.c.l.b16 %v10778
    %v11300 = vunpack.c.h.b16 %v10778
    %v11301 = vunpack.c.l.b16 %v10779
    %v11302 = vunpack.c.h.b16 %v10779
    %v11303 = vunpack.c.l.b16 %v10780
    %v11304 = vunpack.c.h.b16 %v10780
    %v11305 = vunpack.c.l.b16 %v10781
    %v11306 = vunpack.c.h.b16 %v10781
    %v11307 = vunpack.c.l.b16 %v10782
    %v11308 = vunpack.c.h.b16 %v10782
    %v11309 = vunpack.c.l.b16 %v10783
    %v11310 = vunpack.c.h.b16 %v10783
    %v11311 = vunpack.c.l.b16 %v10784
    %v11312 = vunpack.c.h.b16 %v10784
    %v11313 = vunpack.c.l.b16 %v10785
    %v11314 = vunpack.c.h.b16 %v10785
    %v11315 = vunpack.c.l.b16 %v10786
    %v11316 = vunpack.c.h.b16 %v10786
    %v11317 = vunpack.c.l.b16 %v10787
    %v11318 = vunpack.c.h.b16 %v10787
    %v11319 = vunpack.c.l.b16 %v10788
    %v11320 = vunpack.c.h.b16 %v10788
    %v11321 = vunpack.c.l.b16 %v10789
    %v11322 = vunpack.c.h.b16 %v10789
    %v11323 = vunpack.c.l.b16 %v10790
    %v11324 = vunpack.c.h.b16 %v10790
    %v11325 = vunpack.c.l.b16 %v10791
    %v11326 = vunpack.c.h.b16 %v10791
    %v11327 = vunpack.c.l.b16 %v10792
    %v11328 = vunpack.c.h.b16 %v10792
    %v11329 = vunpack.c.l.b16 %v10793
    %v11330 = vunpack.c.h.b16 %v10793
    %v11331 = vunpack.c.l.b16 %v10794
    %v11332 = vunpack.c.h.b16 %v10794
    %v11333 = vunpack.c.l.b16 %v10795
    %v11334 = vunpack.c.h.b16 %v10795
    %v11335 = vunpack.c.l.b16 %v10796
    %v11336 = vunpack.c.h.b16 %v10796
    %v11337 = vunpack.c.l.b16 %v10797
    %v11338 = vunpack.c.h.b16 %v10797
    %v11339 = vunpack.c.l.b16 %v10798
    %v11340 = vunpack.c.h.b16 %v10798
    %v11341 = vunpack.c.l.b16 %v10799
    %v11342 = vunpack.c.h.b16 %v10799
    %v11343 = vunpack.c.l.b16 %v10800
    %v11344 = vunpack.c.h.b16 %v10800
    %v11345 = vunpack.c.l.b16 %v10801
    %v11346 = vunpack.c.h.b16 %v10801
    %v11347 = vunpack.c.l.b16 %v10802
    %v11348 = vunpack.c.h.b16 %v10802
    %v11349 = vunpack.c.l.b16 %v10803
    %v11350 = vunpack.c.h.b16 %v10803
    %v11351 = vunpack.c.l.b16 %v10804
    %v11352 = vunpack.c.h.b16 %v10804
    %v11353 = vunpack.c.l.b16 %v10805
    %v11354 = vunpack.c.h.b16 %v10805
    %v11355 = vunpack.c.l.b16 %v10806
    %v11356 = vunpack.c.h.b16 %v10806
    %v11357 = vunpack.c.l.b16 %v10807
    %v11358 = vunpack.c.h.b16 %v10807
    %v11359 = vunpack.c.l.b16 %v10808
    %v11360 = vunpack.c.h.b16 %v10808
    %v11361 = vunpack.c.l.b16 %v10809
    %v11362 = vunpack.c.h.b16 %v10809
    %v11363 = vunpack.c.l.b16 %v10810
    %v11364 = vunpack.c.h.b16 %v10810
    %v11365 = vunpack.c.l.b16 %v10811
    %v11366 = vunpack.c.h.b16 %v10811
    %v11367 = vunpack.c.l.b16 %v10812
    %v11368 = vunpack.c.h.b16 %v10812
    %v11369 = vunpack.c.l.b16 %v10813
    %v11370 = vunpack.c.h.b16 %v10813
    %v11371 = vunpack.c.l.b16 %v10814
    %v11372 = vunpack.c.h.b16 %v10814
    %v11373 = vunpack.c.l.b16 %v10815
    %v11374 = vunpack.c.h.b16 %v10815
    %v11375 = vunpack.c.l.b16 %v10816
    %v11376 = vunpack.c.h.b16 %v10816
    %v11377 = vunpack.c.l.b16 %v10817
    %v11378 = vunpack.c.h.b16 %v10817
    %v11379 = vunpack.c.l.b16 %v10818
    %v11380 = vunpack.c.h.b16 %v10818
    %v11381 = vunpack.c.l.b16 %v10819
    %v11382 = vunpack.c.h.b16 %v10819
    %v11383 = vunpack.c.l.b16 %v10820
    %v11384 = vunpack.c.h.b16 %v10820
    %v11385 = vunpack.c.l.b16 %v10821
    %v11386 = vunpack.c.h.b16 %v10821
    %v11387 = vunpack.c.l.b16 %v10822
    %v11388 = vunpack.c.h.b16 %v10822
    %v11389 = vunpack.c.l.b16 %v10823
    %v11390 = vunpack.c.h.b16 %v10823
    %v11391 = vunpack.c.l.b16 %v10824
    %v11392 = vunpack.c.h.b16 %v10824
    %v11393 = vunpack.c.l.b16 %v10825
    %v11394 = vunpack.c.h.b16 %v10825
    %v11395 = vunpack.c.l.b16 %v10826
    %v11396 = vunpack.c.h.b16 %v10826
    %v11397 = vunpack.c.l.b16 %v10827
    %v11398 = vunpack.c.h.b16 %v10827
    %v11399 = vunpack.c.l.b16 %v10828
    %v11400 = vunpack.c.h.b16 %v10828
    %v11401 = vunpack.c.l.b16 %v10829
    %v11402 = vunpack.c.h.b16 %v10829
    %v11403 = vunpack.c.l.b16 %v10830
    %v11404 = vunpack.c.h.b16 %v10830
    %v11405 = vunpack.c.l.b16 %v10831
    %v11406 = vunpack.c.h.b16 %v10831
    %v11407 = vunpack.c.l.b16 %v10832
    %v11408 = vunpack.c.h.b16 %v10832
    %v11409 = vunpack.c.l.b16 %v10833
    %v11410 = vunpack.c.h.b16 %v10833
    %v11411 = vunpack.c.l.b16 %v10834
    %v11412 = vunpack.c.h.b16 %v10834
    %v11413 = vunpack.c.l.b16 %v10835
    %v11414 = vunpack.c.h.b16 %v10835
    %v11415 = vunpack.c.l.b16 %v10836
    %v11416 = vunpack.c.h.b16 %v10836
    %v11417 = vunpack.c.l.b16 %v10837
    %v11418 = vunpack.c.h.b16 %v10837
    %v11419 = vunpack.c.l.b16 %v10838
    %v11420 = vunpack.c.h.b16 %v10838
    %v11421 = vunpack.c.l.b16 %v10839
    %v11422 = vunpack.c.h.b16 %v10839
    %v11423 = vunpack.c.l.b16 %v10840
    %v11424 = vunpack.c.h.b16 %v10840
    %v11425 = vunpack.c.l.b16 %v10841
    %v11426 = vunpack.c.h.b16 %v10841
    %v11427 = vunpack.c.l.b16 %v10842
    %v11428 = vunpack.c.h.b16 %v10842
    %v11429 = vunpack.c.l.b16 %v10843
    %v11430 = vunpack.c.h.b16 %v10843
    %v11431 = vunpack.c.l.b16 %v10844
    %v11432 = vunpack.c.h.b16 %v10844
    %v11433 = vunpack.c.l.b16 %v10845
    %v11434 = vunpack.c.h.b16 %v10845
    %v11435 = vunpack.c.l.b16 %v10846
    %v11436 = vunpack.c.h.b16 %v10846
    %v11437 = vunpack.c.l.b16 %v10847
    %v11438 = vunpack.c.h.b16 %v10847
    %v11439 = vunpack.c.l.b16 %v10848
    %v11440 = vunpack.c.h.b16 %v10848
    %v11441 = vunpack.c.l.b16 %v10849
    %v11442 = vunpack.c.h.b16 %v10849
    %v11443 = vunpack.c.l.b16 %v10850
    %v11444 = vunpack.c.h.b16 %v10850
    %v11445 = vunpack.c.l.b16 %v10851
    %v11446 = vunpack.c.h.b16 %v10851
    %v11447 = vunpack.c.l.b16 %v10852
    %v11448 = vunpack.c.h.b16 %v10852
    %v11449 = vunpack.c.l.b16 %v10853
    %v11450 = vunpack.c.h.b16 %v10853
    %v11451 = vunpack.c.l.b16 %v10854
    %v11452 = vunpack.c.h.b16 %v10854
    %v11453 = vunpack.c.l.b16 %v10855
    %v11454 = vunpack.c.h.b16 %v10855
    %v11455 = vunpack.c.l.b16 %v10856
    %v11456 = vunpack.c.h.b16 %v10856
    %v11457 = vunpack.c.l.b16 %v10857
    %v11458 = vunpack.c.h.b16 %v10857
    %v11459 = vunpack.c.l.b16 %v10858
    %v11460 = vunpack.c.h.b16 %v10858
    %v11461 = vunpack.c.l.b16 %v10859
    %v11462 = vunpack.c.h.b16 %v10859
    %v11463 = vunpack.c.l.b16 %v10860
    %v11464 = vunpack.c.h.b16 %v10860
    %v11465 = vunpack.c.l.b16 %v10861
    %v11466 = vunpack.c.h.b16 %v10861
    %v11467 = vunpack.c.l.b16 %v10862
    %v11468 = vunpack.c.h.b16 %v10862
    %v11469 = vunpack.c.l.b16 %v10863
    %v11470 = vunpack.c.h.b16 %v10863
    %v11471 = vunpack.c.l.b16 %v10864
    %v11472 = vunpack.c.h.b16 %v10864
    %v11473 = vunpack.c.l.b16 %v10865
    %v11474 = vunpack.c.h.b16 %v10865
    %v11475 = vunpack.c.l.b16 %v10866
    %v11476 = vunpack.c.h.b16 %v10866
    %v11477 = vunpack.c.l.b16 %v10867
    %v11478 = vunpack.c.h.b16 %v10867
    %v11479 = vunpack.c.l.b16 %v10868
    %v11480 = vunpack.c.h.b16 %v10868
    %v11481 = vunpack.c.l.b16 %v10869
    %v11482 = vunpack.c.h.b16 %v10869
    %v11483 = vunpack.c.l.b16 %v10870
    %v11484 = vunpack.c.h.b16 %v10870
    %v11485 = vunpack.c.l.b16 %v10871
    %v11486 = vunpack.c.h.b16 %v10871
    %v11487 = vunpack.c.l.b16 %v10872
    %v11488 = vunpack.c.h.b16 %v10872
    %v11489 = vunpack.c.l.b16 %v10873
    %v11490 = vunpack.c.h.b16 %v10873
    %v11491 = vunpack.c.l.b16 %v10874
    %v11492 = vunpack.c.h.b16 %v10874
    %v11493 = vunpack.c.l.b16 %v10875
    %v11494 = vunpack.c.h.b16 %v10875
    %v11495 = vunpack.c.l.b16 %v10876
    %v11496 = vunpack.c.h.b16 %v10876
    %v11497 = vunpack.c.l.b16 %v10877
    %v11498 = vunpack.c.h.b16 %v10877
    %v11499 = vunpack.c.l.b16 %v10878
    %v11500 = vunpack.c.h.b16 %v10878
    %v11501 = vunpack.c.l.b16 %v10879
    %v11502 = vunpack.c.h.b16 %v10879
    %v11503 = vunpack.c.l.b16 %v10880
    %v11504 = vunpack.c.h.b16 %v10880
    %v11505 = vunpack.c.l.b16 %v10881
    %v11506 = vunpack.c.h.b16 %v10881
    %v11507 = vunpack.c.l.b16 %v10882
    %v11508 = vunpack.c.h.b16 %v10882
    %v11509 = vunpack.c.l.b16 %v10883
    %v11510 = vunpack.c.h.b16 %v10883
    %v11511 = vunpack.c.l.b16 %v10884
    %v11512 = vunpack.c.h.b16 %v10884
    %v11513 = vunpack.c.l.b16 %v10885
    %v11514 = vunpack.c.h.b16 %v10885
    %v11515 = vunpack.c.l.b16 %v10886
    %v11516 = vunpack.c.h.b16 %v10886
    %v11517 = vunpack.c.l.b16 %v10887
    %v11518 = vunpack.c.h.b16 %v10887
    %v11519 = vunpack.c.l.b16 %v10888
    %v11520 = vunpack.c.h.b16 %v10888
    %v11521 = vunpack.c.l.b16 %v10889
    %v11522 = vunpack.c.h.b16 %v10889
    %v11523 = vunpack.c.l.b16 %v10890
    %v11524 = vunpack.c.h.b16 %v10890
    %v11525 = vunpack.c.l.b16 %v10891
    %v11526 = vunpack.c.h.b16 %v10891
    %v11527 = vunpack.c.l.b16 %v10892
    %v11528 = vunpack.c.h.b16 %v10892
    %v11529 = vunpack.c.l.b16 %v10893
    %v11530 = vunpack.c.h.b16 %v10893
    %v11531 = vunpack.c.l.b16 %v10894
    %v11532 = vunpack.c.h.b16 %v10894
    %v11533 = vunpack.c.l.b16 %v10895
    %v11534 = vunpack.c.h.b16 %v10895
    %v11535 = vunpack.c.l.b16 %v10896
    %v11536 = vunpack.c.h.b16 %v10896
    %v11537 = vunpack.c.l.b16 %v10897
    %v11538 = vunpack.c.h.b16 %v10897
    %v11539 = vunpack.c.l.b16 %v10898
    %v11540 = vunpack.c.h.b16 %v10898
    %v11541 = vunpack.c.l.b16 %v10899
    %v11542 = vunpack.c.h.b16 %v10899
    %v11543 = vunpack.c.l.b16 %v10900
    %v11544 = vunpack.c.h.b16 %v10900
    %v11545 = vunpack.c.l.b16 %v10901
    %v11546 = vunpack.c.h.b16 %v10901
    %v11547 = vunpack.c.l.b16 %v10902
    %v11548 = vunpack.c.h.b16 %v10902
    %v11549 = vunpack.c.l.b16 %v10903
    %v11550 = vunpack.c.h.b16 %v10903
    %v11551 = vunpack.c.l.b16 %v10904
    %v11552 = vunpack.c.h.b16 %v10904
    %v11553 = vunpack.c.l.b16 %v10905
    %v11554 = vunpack.c.h.b16 %v10905
    %v11555 = vunpack.c.l.b16 %v10906
    %v11556 = vunpack.c.h.b16 %v10906
    %v11557 = vunpack.c.l.b16 %v10907
    %v11558 = vunpack.c.h.b16 %v10907
    %v11559 = vunpack.c.l.b16 %v10908
    %v11560 = vunpack.c.h.b16 %v10908
    %v11561 = vunpack.c.l.b16 %v10909
    %v11562 = vunpack.c.h.b16 %v10909
    %v11563 = vunpack.c.l.b16 %v10910
    %v11564 = vunpack.c.h.b16 %v10910
    %v11565 = vunpack.c.l.b16 %v10911
    %v11566 = vunpack.c.h.b16 %v10911
    %v11567 = vunpack.c.l.b16 %v10912
    %v11568 = vunpack.c.h.b16 %v10912
    %v11569 = vunpack.c.l.b16 %v10913
    %v11570 = vunpack.c.h.b16 %v10913
    %v11571 = vunpack.c.l.b16 %v10914
    %v11572 = vunpack.c.h.b16 %v10914
    %v11573 = vunpack.c.l.b16 %v10915
    %v11574 = vunpack.c.h.b16 %v10915
    %v11575 = vunpack.c.l.b16 %v10916
    %v11576 = vunpack.c.h.b16 %v10916
    %v11577 = vunpack.c.l.b16 %v10917
    %v11578 = vunpack.c.h.b16 %v10917
    %v11579 = vunpack.c.l.b16 %v10918
    %v11580 = vunpack.c.h.b16 %v10918
    %v11581 = vunpack.c.l.b16 %v10919
    %v11582 = vunpack.c.h.b16 %v10919
    %v11583 = vunpack.c.l.b16 %v10920
    %v11584 = vunpack.c.h.b16 %v10920
    %v11585 = vunpack.c.l.b16 %v10921
    %v11586 = vunpack.c.h.b16 %v10921
    %v11587 = vunpack.c.l.b16 %v10922
    %v11588 = vunpack.c.h.b16 %v10922
    %v11589 = vunpack.c.l.b16 %v10923
    %v11590 = vunpack.c.h.b16 %v10923
    %v11591 = vunpack.c.l.b16 %v10924
    %v11592 = vunpack.c.h.b16 %v10924
    %v11593 = vunpack.c.l.b16 %v10925
    %v11594 = vunpack.c.h.b16 %v10925
    %v11595 = vunpack.c.l.b16 %v10926
    %v11596 = vunpack.c.h.b16 %v10926
    %v11597 = vunpack.c.l.b16 %v10927
    %v11598 = vunpack.c.h.b16 %v10927
    %v11599 = vunpack.c.l.b16 %v10928
    %v11600 = vunpack.c.h.b16 %v10928
    %v11601 = vunpack.c.l.b16 %v10929
    %v11602 = vunpack.c.h.b16 %v10929
    %v11603 = vunpack.c.l.b16 %v10930
    %v11604 = vunpack.c.h.b16 %v10930
    %v11605 = vunpack.c.l.b16 %v10931
    %v11606 = vunpack.c.h.b16 %v10931
    %v11607 = vunpack.c.l.b16 %v10932
    %v11608 = vunpack.c.h.b16 %v10932
    %v11609 = vunpack.c.l.b16 %v10933
    %v11610 = vunpack.c.h.b16 %v10933
    %v11611 = vunpack.c.l.b16 %v10934
    %v11612 = vunpack.c.h.b16 %v10934
    %v11613 = vunpack.c.l.b16 %v10935
    %v11614 = vunpack.c.h.b16 %v10935
    %v11615 = vunpack.c.l.b16 %v10936
    %v11616 = vunpack.c.h.b16 %v10936
    %v11617 = vunpack.c.l.b16 %v10937
    %v11618 = vunpack.c.h.b16 %v10937
    %v11619 = vunpack.c.l.b16 %v10938
    %v11620 = vunpack.c.h.b16 %v10938
    %v11621 = vunpack.c.l.b16 %v10939
    %v11622 = vunpack.c.h.b16 %v10939
    %v11623 = vunpack.c.l.b16 %v10940
    %v11624 = vunpack.c.h.b16 %v10940
    %v11625 = vunpack.c.l.b16 %v10941
    %v11626 = vunpack.c.h.b16 %v10941
    %v11627 = vunpack.c.l.b16 %v10942
    %v11628 = vunpack.c.h.b16 %v10942
    %v11629 = vunpack.c.l.b16 %v10943
    %v11630 = vunpack.c.h.b16 %v10943
    %v11631 = vunpack.c.l.b16 %v10944
    %v11632 = vunpack.c.h.b16 %v10944
    %v11633 = vunpack.c.l.b16 %v10945
    %v11634 = vunpack.c.h.b16 %v10945
    %v11635 = vunpack.c.l.b16 %v10946
    %v11636 = vunpack.c.h.b16 %v10946
    %v11637 = vunpack.c.l.b16 %v10947
    %v11638 = vunpack.c.h.b16 %v10947
    %v11639 = vunpack.c.l.b16 %v10948
    %v11640 = vunpack.c.h.b16 %v10948
    %v11641 = vunpack.c.l.b16 %v10949
    %v11642 = vunpack.c.h.b16 %v10949
    %v11643 = vunpack.c.l.b16 %v10950
    %v11644 = vunpack.c.h.b16 %v10950
    %v11645 = vunpack.c.l.b16 %v10951
    %v11646 = vunpack.c.h.b16 %v10951
    %v11647 = vunpack.c.l.b16 %v10952
    %v11648 = vunpack.c.h.b16 %v10952
    %v11649 = vunpack.c.l.b16 %v10953
    %v11650 = vunpack.c.h.b16 %v10953
    %v11651 = vunpack.c.l.b16 %v10954
    %v11652 = vunpack.c.h.b16 %v10954
    %v11653 = vunpack.c.l.b16 %v10955
    %v11654 = vunpack.c.h.b16 %v10955
    %v11655 = vunpack.c.l.b16 %v10956
    %v11656 = vunpack.c.h.b16 %v10956
    %v11657 = vunpack.c.l.b16 %v10957
    %v11658 = vunpack.c.h.b16 %v10957
    %v11659 = vunpack.c.l.b16 %v10958
    %v11660 = vunpack.c.h.b16 %v10958
    %v11661 = vunpack.c.l.b16 %v10959
    %v11662 = vunpack.c.h.b16 %v10959
    %v11663 = vunpack.c.l.b16 %v10960
    %v11664 = vunpack.c.h.b16 %v10960
    %v11665 = vunpack.c.l.b16 %v10961
    %v11666 = vunpack.c.h.b16 %v10961
    %v11667 = vunpack.c.l.b16 %v10962
    %v11668 = vunpack.c.h.b16 %v10962
    %v11669 = vunpack.c.l.b16 %v10963
    %v11670 = vunpack.c.h.b16 %v10963
    %v11671 = vunpack.c.l.b16 %v10964
    %v11672 = vunpack.c.h.b16 %v10964
    %v11673 = vunpack.c.l.b16 %v10965
    %v11674 = vunpack.c.h.b16 %v10965
    %v11675 = vunpack.c.l.b16 %v10966
    %v11676 = vunpack.c.h.b16 %v10966
    %v11677 = vunpack.c.l.b16 %v10967
    %v11678 = vunpack.c.h.b16 %v10967
    %v11679 = vunpack.c.l.b16 %v10968
    %v11680 = vunpack.c.h.b16 %v10968
    %v11681 = vunpack.c.l.b16 %v10969
    %v11682 = vunpack.c.h.b16 %v10969
    %v11683 = vunpack.c.l.b16 %v10970
    %v11684 = vunpack.c.h.b16 %v10970
    %v11685 = vunpack.c.l.b16 %v10971
    %v11686 = vunpack.c.h.b16 %v10971
    %v11687 = vunpack.c.l.b16 %v10972
    %v11688 = vunpack.c.h.b16 %v10972
    %v11689 = vunpack.c.l.b16 %v10973
    %v11690 = vunpack.c.h.b16 %v10973
    %v11691 = vunpack.c.l.b16 %v10974
    %v11692 = vunpack.c.h.b16 %v10974
    %v11693 = vunpack.c.l.b16 %v10975
    %v11694 = vunpack.c.h.b16 %v10975
    %v11695 = vunpack.c.l.b16 %v10976
    %v11696 = vunpack.c.h.b16 %v10976
    %v11697 = vunpack.c.l.b16 %v10977
    %v11698 = vunpack.c.h.b16 %v10977
    %v11699 = vunpack.c.l.b16 %v10978
    %v11700 = vunpack.c.h.b16 %v10978
    %v11701 = vunpack.c.l.b16 %v10979
    %v11702 = vunpack.c.h.b16 %v10979
    %v11703 = vunpack.c.l.b16 %v10980
    %v11704 = vunpack.c.h.b16 %v10980
    %v11705 = vunpack.c.l.b16 %v10981
    %v11706 = vunpack.c.h.b16 %v10981
    %v11707 = vunpack.c.l.b16 %v10982
    %v11708 = vunpack.c.h.b16 %v10982
    %v11709 = vunpack.c.l.b16 %v10983
    %v11710 = vunpack.c.h.b16 %v10983
    %v11711 = vunpack.c.l.b16 %v10984
    %v11712 = vunpack.c.h.b16 %v10984
    %v11713 = vunpack.c.l.b16 %v10985
    %v11714 = vunpack.c.h.b16 %v10985
    %v11715 = vunpack.c.l.b16 %v10986
    %v11716 = vunpack.c.h.b16 %v10986
    %v11717 = vunpack.c.l.b16 %v10987
    %v11718 = vunpack.c.h.b16 %v10987
    %v11719 = vunpack.c.l.b16 %v10988
    %v11720 = vunpack.c.h.b16 %v10988
    %v11721 = vunpack.c.l.b16 %v10989
    %v11722 = vunpack.c.h.b16 %v10989
    %v11723 = vunpack.c.l.b16 %v10990
    %v11724 = vunpack.c.h.b16 %v10990
    %v11725 = vunpack.c.l.b16 %v10991
    %v11726 = vunpack.c.h.b16 %v10991
    %v11727 = vunpack.c.l.b16 %v10992
    %v11728 = vunpack.c.h.b16 %v10992
    %v11729 = vunpack.c.l.b16 %v10993
    %v11730 = vunpack.c.h.b16 %v10993
    %v11731 = vunpack.c.l.b16 %v10994
    %v11732 = vunpack.c.h.b16 %v10994
    %v11733 = vunpack.c.l.b16 %v10995
    %v11734 = vunpack.c.h.b16 %v10995
    %v11735 = vunpack.c.l.b16 %v10996
    %v11736 = vunpack.c.h.b16 %v10996
    %v11737 = vunpack.c.l.b16 %v10997
    %v11738 = vunpack.c.h.b16 %v10997
    %v11739 = vunpack.c.l.b16 %v10998
    %v11740 = vunpack.c.h.b16 %v10998
    %v11741 = vunpack.c.l.b16 %v10999
    %v11742 = vunpack.c.h.b16 %v10999
    %v11743 = vunpack.c.l.b16 %v11000
    %v11744 = vunpack.c.h.b16 %v11000
    %v11745 = vunpack.c.l.b16 %v11001
    %v11746 = vunpack.c.h.b16 %v11001
    %v11747 = vunpack.c.l.b16 %v11002
    %v11748 = vunpack.c.h.b16 %v11002
    %v11749 = vunpack.c.l.b16 %v11003
    %v11750 = vunpack.c.h.b16 %v11003
    %v11751 = vunpack.c.l.b16 %v11004
    %v11752 = vunpack.c.h.b16 %v11004
    %v11753 = vunpack.c.l.b16 %v11005
    %v11754 = vunpack.c.h.b16 %v11005
    %v11755 = vunpack.c.l.b16 %v11006
    %v11756 = vunpack.c.h.b16 %v11006
    %v11757 = vunpack.c.l.b16 %v11007
    %v11758 = vunpack.c.h.b16 %v11007
    %v11759 = vunpack.c.l.b16 %v11008
    %v11760 = vunpack.c.h.b16 %v11008
    %v11761 = vunpack.c.l.b16 %v11009
    %v11762 = vunpack.c.h.b16 %v11009
    %v11763 = vunpack.c.l.b16 %v11010
    %v11764 = vunpack.c.h.b16 %v11010
    %v11765 = vunpack.c.l.b16 %v11011
    %v11766 = vunpack.c.h.b16 %v11011
    %v11767 = vunpack.c.l.b16 %v11012
    %v11768 = vunpack.c.h.b16 %v11012
    %v11769 = vunpack.c.l.b16 %v11013
    %v11770 = vunpack.c.h.b16 %v11013
    %v11771 = vunpack.c.l.b16 %v11014
    %v11772 = vunpack.c.h.b16 %v11014
    %v11773 = vunpack.c.l.b16 %v11015
    %v11774 = vunpack.c.h.b16 %v11015
    %v11775 = vunpack.c.l.b16 %v11016
    %v11776 = vunpack.c.h.b16 %v11016
    %v11777 = vunpack.c.l.b16 %v11017
    %v11778 = vunpack.c.h.b16 %v11017
    %v11779 = vunpack.c.l.b16 %v11018
    %v11780 = vunpack.c.h.b16 %v11018
    %v11781 = vunpack.c.l.b16 %v11019
    %v11782 = vunpack.c.h.b16 %v11019
    %v11783 = vunpack.c.l.b16 %v11020
    %v11784 = vunpack.c.h.b16 %v11020
    %v11785 = vunpack.c.l.b16 %v11021
    %v11786 = vunpack.c.h.b16 %v11021
    %v11787 = vunpack.c.l.b16 %v11022
    %v11788 = vunpack.c.h.b16 %v11022
    %v11789 = vunpack.c.l.b16 %v11023
    %v11790 = vunpack.c.h.b16 %v11023
    %v11791 = vunpack.c.l.b16 %v11024
    %v11792 = vunpack.c.h.b16 %v11024
    %v11793 = vpack.c.b16 %v11283, %v11281
    %v11794 = vpack.c.b16 %v11284, %v11282
    %v11795 = vpack.c.b16 %v11287, %v11285
    %v11796 = vpack.c.b16 %v11288, %v11286
    %v11797 = vpack.c.b16 %v11291, %v11289
    %v11798 = vpack.c.b16 %v11292, %v11290
    %v11799 = vpack.c.b16 %v11295, %v11293
    %v11800 = vpack.c.b16 %v11296, %v11294
    %v11801 = vpack.c.b16 %v11299, %v11297
    %v11802 = vpack.c.b16 %v11300, %v11298
    %v11803 = vpack.c.b16 %v11303, %v11301
    %v11804 = vpack.c.b16 %v11304, %v11302
    %v11805 = vpack.c.b16 %v11307, %v11305
    %v11806 = vpack.c.b16 %v11308, %v11306
    %v11807 = vpack.c.b16 %v11311, %v11309
    %v11808 = vpack.c.b16 %v11312, %v11310
    %v11809 = vpack.c.b16 %v11315, %v11313
    %v11810 = vpack.c.b16 %v11316, %v11314
    %v11811 = vpack.c.b16 %v11319, %v11317
    %v11812 = vpack.c.b16 %v11320, %v11318
    %v11813 = vpack.c.b16 %v11323, %v11321
    %v11814 = vpack.c.b16 %v11324, %v11322
    %v11815 = vpack.c.b16 %v11327, %v11325
    %v11816 = vpack.c.b16 %v11328, %v11326
    %v11817 = vpack.c.b16 %v11331, %v11329
    %v11818 = vpack.c.b16 %v11332, %v11330
    %v11819 = vpack.c.b16 %v11335, %v11333
    %v11820 = vpack.c.b16 %v11336, %v11334
    %v11821 = vpack.c.b16 %v11339, %v11337
    %v11822 = vpack.c.b16 %v11340, %v11338
    %v11823 = vpack.c.b16 %v11343, %v11341
    %v11824 = vpack.c.b16 %v11344, %v11342
    %v11825 = vpack.c.b16 %v11347, %v11345
    %v11826 = vpack.c.b16 %v11348, %v11346
    %v11827 = vpack.c.b16 %v11351, %v11349
    %v11828 = vpack.c.b16 %v11352, %v11350
    %v11829 = vpack.c.b16 %v11355, %v11353
    %v11830 = vpack.c.b16 %v11356, %v11354
    %v11831 = vpack.c.b16 %v11359, %v11357
    %v11832 = vpack.c.b16 %v11360, %v11358
    %v11833 = vpack.c.b16 %v11363, %v11361
    %v11834 = vpack.c.b16 %v11364, %v11362
    %v11835 = vpack.c.b16 %v11367, %v11365
    %v11836 = vpack.c.b16 %v11368, %v11366
    %v11837 = vpack.c.b16 %v11371, %v11369
    %v11838 = vpack.c.b16 %v11372, %v11370
    %v11839 = vpack.c.b16 %v11375, %v11373
    %v11840 = vpack.c.b16 %v11376, %v11374
    %v11841 = vpack.c.b16 %v11379, %v11377
    %v11842 = vpack.c.b16 %v11380, %v11378
    %v11843 = vpack.c.b16 %v11383, %v11381
    %v11844 = vpack.c.b16 %v11384, %v11382
    %v11845 = vpack.c.b16 %v11387, %v11385
    %v11846 = vpack.c.b16 %v11388, %v11386
    %v11847 = vpack.c.b16 %v11391, %v11389
    %v11848 = vpack.c.b16 %v11392, %v11390
    %v11849 = vpack.c.b16 %v11395, %v11393
    %v11850 = vpack.c.b16 %v11396, %v11394
    %v11851 = vpack.c.b16 %v11399, %v11397
    %v11852 = vpack.c.b16 %v11400, %v11398
    %v11853 = vpack.c.b16 %v11403, %v11401
    %v11854 = vpack.c.b16 %v11404, %v11402
    %v11855 = vpack.c.b16 %v11407, %v11405
    %v11856 = vpack.c.b16 %v11408, %v11406
    %v11857 = vpack.c.b16 %v11411, %v11409
    %v11858 = vpack.c.b16 %v11412, %v11410
    %v11859 = vpack.c.b16 %v11415, %v11413
    %v11860 = vpack.c.b16 %v11416, %v11414
    %v11861 = vpack.c.b16 %v11419, %v11417
    %v11862 = vpack.c.b16 %v11420, %v11418
    %v11863 = vpack.c.b16 %v11423, %v11421
    %v11864 = vpack.c.b16 %v11424, %v11422
    %v11865 = vpack.c.b16 %v11427, %v11425
    %v11866 = vpack.c.b16 %v11428, %v11426
    %v11867 = vpack.c.b16 %v11431, %v11429
    %v11868 = vpack.c.b16 %v11432, %v11430
    %v11869 = vpack.c.b16 %v11435, %v11433
    %v11870 = vpack.c.b16 %v11436, %v11434
    %v11871 = vpack.c.b16 %v11439, %v11437
    %v11872 = vpack.c.b16 %v11440, %v11438
    %v11873 = vpack.c.b16 %v11443, %v11441
    %v11874 = vpack.c.b16 %v11444, %v11442
    %v11875 = vpack.c.b16 %v11447, %v11445
    %v11876 = vpack.c.b16 %v11448, %v11446
    %v11877 = vpack.c.b16 %v11451, %v11449
    %v11878 = vpack.c.b16 %v11452, %v11450
    %v11879 = vpack.c.b16 %v11455, %v11453
    %v11880 = vpack.c.b16 %v11456, %v11454
    %v11881 = vpack.c.b16 %v11459, %v11457
    %v11882 = vpack.c.b16 %v11460, %v11458
    %v11883 = vpack.c.b16 %v11463, %v11461
    %v11884 = vpack.c.b16 %v11464, %v11462
    %v11885 = vpack.c.b16 %v11467, %v11465
    %v11886 = vpack.c.b16 %v11468, %v11466
    %v11887 = vpack.c.b16 %v11471, %v11469
    %v11888 = vpack.c.b16 %v11472, %v11470
    %v11889 = vpack.c.b16 %v11475, %v11473
    %v11890 = vpack.c.b16 %v11476, %v11474
    %v11891 = vpack.c.b16 %v11479, %v11477
    %v11892 = vpack.c.b16 %v11480, %v11478
    %v11893 = vpack.c.b16 %v11483, %v11481
    %v11894 = vpack.c.b16 %v11484, %v11482
    %v11895 = vpack.c.b16 %v11487, %v11485
    %v11896 = vpack.c.b16 %v11488, %v11486
    %v11897 = vpack.c.b16 %v11491, %v11489
    %v11898 = vpack.c.b16 %v11492, %v11490
    %v11899 = vpack.c.b16 %v11495, %v11493
    %v11900 = vpack.c.b16 %v11496, %v11494
    %v11901 = vpack.c.b16 %v11499, %v11497
    %v11902 = vpack.c.b16 %v11500, %v11498
    %v11903 = vpack.c.b16 %v11503, %v11501
    %v11904 = vpack.c.b16 %v11504, %v11502
    %v11905 = vpack.c.b16 %v11507, %v11505
    %v11906 = vpack.c.b16 %v11508, %v11506
    %v11907 = vpack.c.b16 %v11511, %v11509
    %v11908 = vpack.c.b16 %v11512, %v11510
    %v11909 = vpack.c.b16 %v11515, %v11513
    %v11910 = vpack.c.b16 %v11516, %v11514
    %v11911 = vpack.c.b16 %v11519, %v11517
    %v11912 = vpack.c.b16 %v11520, %v11518
    %v11913 = vpack.c.b16 %v11523, %v11521
    %v11914 = vpack.c.b16 %v11524, %v11522
    %v11915 = vpack.c.b16 %v11527, %v11525
    %v11916 = vpack.c.b16 %v11528, %v11526
    %v11917 = vpack.c.b16 %v11531, %v11529
    %v11918 = vpack.c.b16 %v11532, %v11530
    %v11919 = vpack.c.b16 %v11535, %v11533
    %v11920 = vpack.c.b16 %v11536, %v11534
    %v11921 = vpack.c.b16 %v11539, %v11537
    %v11922 = vpack.c.b16 %v11540, %v11538
    %v11923 = vpack.c.b16 %v11543, %v11541
    %v11924 = vpack.c.b16 %v11544, %v11542
    %v11925 = vpack.c.b16 %v11547, %v11545
    %v11926 = vpack.c.b16 %v11548, %v11546
    %v11927 = vpack.c.b16 %v11551, %v11549
    %v11928 = vpack.c.b16 %v11552, %v11550
    %v11929 = vpack.c.b16 %v11555, %v11553
    %v11930 = vpack.c.b16 %v11556, %v11554
    %v11931 = vpack.c.b16 %v11559, %v11557
    %v11932 = vpack.c.b16 %v11560, %v11558
    %v11933 = vpack.c.b16 %v11563, %v11561
    %v11934 = vpack.c.b16 %v11564, %v11562
    %v11935 = vpack.c.b16 %v11567, %v11565
    %v11936 = vpack.c.b16 %v11568, %v11566
    %v11937 = vpack.c.b16 %v11571, %v11569
    %v11938 = vpack.c.b16 %v11572, %v11570
    %v11939 = vpack.c.b16 %v11575, %v11573
    %v11940 = vpack.c.b16 %v11576, %v11574
    %v11941 = vpack.c.b16 %v11579, %v11577
    %v11942 = vpack.c.b16 %v11580, %v11578
    %v11943 = vpack.c.b16 %v11583, %v11581
    %v11944 = vpack.c.b16 %v11584, %v11582
    %v11945 = vpack.c.b16 %v11587, %v11585
    %v11946 = vpack.c.b16 %v11588, %v11586
    %v11947 = vpack.c.b16 %v11591, %v11589
    %v11948 = vpack.c.b16 %v11592, %v11590
    %v11949 = vpack.c.b16 %v11595, %v11593
    %v11950 = vpack.c.b16 %v11596, %v11594
    %v11951 = vpack.c.b16 %v11599, %v11597
    %v11952 = vpack.c.b16 %v11600, %v11598
    %v11953 = vpack.c.b16 %v11603, %v11601
    %v11954 = vpack.c.b16 %v11604, %v11602
    %v11955 = vpack.c.b16 %v11607, %v11605
    %v11956 = vpack.c.b16 %v11608, %v11606
    %v11957 = vpack.c.b16 %v11611, %v11609
    %v11958 = vpack.c.b16 %v11612, %v11610
    %v11959 = vpack.c.b16 %v11615, %v11613
    %v11960 = vpack.c.b16 %v11616, %v11614
    %v11961 = vpack.c.b16 %v11619, %v11617
    %v11962 = vpack.c.b16 %v11620, %v11618
    %v11963 = vpack.c.b16 %v11623, %v11621
    %v11964 = vpack.c.b16 %v11624, %v11622
    %v11965 = vpack.c.b16 %v11627, %v11625
    %v11966 = vpack.c.b16 %v11628, %v11626
    %v11967 = vpack.c.b16 %v11631, %v11629
    %v11968 = vpack.c.b16 %v11632, %v11630
    %v11969 = vpack.c.b16 %v11635, %v11633
    %v11970 = vpack.c.b16 %v11636, %v11634
    %v11971 = vpack.c.b16 %v11639, %v11637
    %v11972 = vpack.c.b16 %v11640, %v11638
    %v11973 = vpack.c.b16 %v11643, %v11641
    %v11974 = vpack.c.b16 %v11644, %v11642
    %v11975 = vpack.c.b16 %v11647, %v11645
    %v11976 = vpack.c.b16 %v11648, %v11646
    %v11977 = vpack.c.b16 %v11651, %v11649
    %v11978 = vpack.c.b16 %v11652, %v11650
    %v11979 = vpack.c.b16 %v11655, %v11653
    %v11980 = vpack.c.b16 %v11656, %v11654
    %v11981 = vpack.c.b16 %v11659, %v11657
    %v11982 = vpack.c.b16 %v11660, %v11658
    %v11983 = vpack.c.b16 %v11663, %v11661
    %v11984 = vpack.c.b16 %v11664, %v11662
    %v11985 = vpack.c.b16 %v11667, %v11665
    %v11986 = vpack.c.b16 %v11668, %v11666
    %v11987 = vpack.c.b16 %v11671, %v11669
    %v11988 = vpack.c.b16 %v11672, %v11670
    %v11989 = vpack.c.b16 %v11675, %v11673
    %v11990 = vpack.c.b16 %v11676, %v11674
    %v11991 = vpack.c.b16 %v11679, %v11677
    %v11992 = vpack.c.b16 %v11680, %v11678
    %v11993 = vpack.c.b16 %v11683, %v11681
    %v11994 = vpack.c.b16 %v11684, %v11682
    %v11995 = vpack.c.b16 %v11687, %v11685
    %v11996 = vpack.c.b16 %v11688, %v11686
    %v11997 = vpack.c.b16 %v11691, %v11689
    %v11998 = vpack.c.b16 %v11692, %v11690
    %v11999 = vpack.c.b16 %v11695, %v11693
    %v12000 = vpack.c.b16 %v11696, %v11694
    %v12001 = vpack.c.b16 %v11699, %v11697
    %v12002 = vpack.c.b16 %v11700, %v11698
    %v12003 = vpack.c.b16 %v11703, %v11701
    %v12004 = vpack.c.b16 %v11704, %v11702
    %v12005 = vpack.c.b16 %v11707, %v11705
    %v12006 = vpack.c.b16 %v11708, %v11706
    %v12007 = vpack.c.b16 %v11711, %v11709
    %v12008 = vpack.c.b16 %v11712, %v11710
    %v12009 = vpack.c.b16 %v11715, %v11713
    %v12010 = vpack.c.b16 %v11716, %v11714
    %v12011 = vpack.c.b16 %v11719, %v11717
    %v12012 = vpack.c.b16 %v11720, %v11718
    %v12013 = vpack.c.b16 %v11723, %v11721
    %v12014 = vpack.c.b16 %v11724, %v11722
    %v12015 = vpack.c.b16 %v11727, %v11725
    %v12016 = vpack.c.b16 %v11728, %v11726
    %v12017 = vpack.c.b16 %v11731, %v11729
    %v12018 = vpack.c.b16 %v11732, %v11730
    %v12019 = vpack.c.b16 %v11735, %v11733
    %v12020 = vpack.c.b16 %v11736, %v11734
    %v12021 = vpack.c.b16 %v11739, %v11737
    %v12022 = vpack.c.b16 %v11740, %v11738
    %v12023 = vpack.c.b16 %v11743, %v11741
    %v12024 = vpack.c.b16 %v11744, %v11742
    %v12025 = vpack.c.b16 %v11747, %v11745
    %v12026 = vpack.c.b16 %v11748, %v11746
    %v12027 = vpack.c.b16 %v11751, %v11749
    %v12028 = vpack.c.b16 %v11752, %v11750
    %v12029 = vpack.c.b16 %v11755, %v11753
    %v12030 = vpack.c.b16 %v11756, %v11754
    %v12031 = vpack.c.b16 %v11759, %v11757
    %v12032 = vpack.c.b16 %v11760, %v11758
    %v12033 = vpack.c.b16 %v11763, %v11761
    %v12034 = vpack.c.b16 %v11764, %v11762
    %v12035 = vpack.c.b16 %v11767, %v11765
    %v12036 = vpack.c.b16 %v11768, %v11766
    %v12037 = vpack.c.b16 %v11771, %v11769
    %v12038 = vpack.c.b16 %v11772, %v11770
    %v12039 = vpack.c.b16 %v11775, %v11773
    %v12040 = vpack.c.b16 %v11776, %v11774
    %v12041 = vpack.c.b16 %v11779, %v11777
    %v12042 = vpack.c.b16 %v11780, %v11778
    %v12043 = vpack.c.b16 %v11783, %v11781
    %v12044 = vpack.c.b16 %v11784, %v11782
    %v12045 = vpack.c.b16 %v11787, %v11785
    %v12046 = vpack.c.b16 %v11788, %v11786
    %v12047 = vpack.c.b16 %v11791, %v11789
    %v12048 = vpack.c.b16 %v11792, %v11790
    %12305 = vmatprep.subr.bf16.mxu0 %v11794
    %12306 = vmatpush1.bf16.msra.mxu0 %v11793
    %12307 = vmatprep.subr.bf16.mxu0 %v11796
    %12308 = vmatpush1.bf16.msra.mxu0 %v11795
    %12309 = vmatprep.subr.bf16.mxu0 %v11798
    %12310 = vmatpush1.bf16.msra.mxu0 %v11797
    %12311 = vmatprep.subr.bf16.mxu0 %v11800
    %12312 = vmatpush1.bf16.msra.mxu0 %v11799
    %12313 = vmatprep.subr.bf16.mxu0 %v11802
    %12314 = vmatpush1.bf16.msra.mxu0 %v11801
    %12315 = vmatprep.subr.bf16.mxu0 %v11804
    %12316 = vmatpush1.bf16.msra.mxu0 %v11803
    %12317 = vmatprep.subr.bf16.mxu0 %v11806
    %12318 = vmatpush1.bf16.msra.mxu0 %v11805
    %12319 = vmatprep.subr.bf16.mxu0 %v11808
    %12320 = vmatpush1.bf16.msra.mxu0 %v11807
    %12321 = vmatprep.subr.bf16.mxu0 %v11810
    %12322 = vmatpush1.bf16.msra.mxu0 %v11809
    %12323 = vmatprep.subr.bf16.mxu0 %v11812
    %12324 = vmatpush1.bf16.msra.mxu0 %v11811
    %12325 = vmatprep.subr.bf16.mxu0 %v11814
    %12326 = vmatpush1.bf16.msra.mxu0 %v11813
    %12327 = vmatprep.subr.bf16.mxu0 %v11816
    %12328 = vmatpush1.bf16.msra.mxu0 %v11815
    %12329 = vmatprep.subr.bf16.mxu0 %v11818
    %12330 = vmatpush1.bf16.msra.mxu0 %v11817
    %12331 = vmatprep.subr.bf16.mxu0 %v11820
    %12332 = vmatpush1.bf16.msra.mxu0 %v11819
    %12333 = vmatprep.subr.bf16.mxu0 %v11822
    %12334 = vmatpush1.bf16.msra.mxu0 %v11821
    %12335 = vmatprep.subr.bf16.mxu0 %v11824
    %12336 = vmatpush1.bf16.msra.mxu0 %v11823
    %12337 = vmatprep.mubr.bf16.mxu0 %v9815
    %12338 = vmatmul.mubr.bf16.gmra.mrb[0].mxu0 %v9747
    %v12339 = vpop.f32.mrb[0].mxu0
    %v12340 = vadd.f32 0.0, %v12339
    %v12341 = vpop.f32.mrb[0].mxu0
    %v12342 = vadd.f32 0.0, %v12341
    %v12343 = vpop.f32.mrb[0].mxu0
    %v12344 = vadd.f32 0.0, %v12343
    %v12345 = vpop.f32.mrb[0].mxu0
    %v12346 = vadd.f32 0.0, %v12345
    %12347 = vmatprep.mubr.bf16.mxu0 %v9816
    %12348 = vmatmul.mubr.bf16.gmra.mrb[0].mxu0 %v9748
    %v12349 = vpop.f32.mrb[0].mxu0
    %v12350 = vadd.f32 0.0, %v12349
    %v12351 = vpop.f32.mrb[0].mxu0
    %v12352 = vadd.f32 0.0, %v12351
    %v12353 = vpop.f32.mrb[0].mxu0
    %v12354 = vadd.f32 0.0, %v12353
    %v12355 = vpop.f32.mrb[0].mxu0
    %v12356 = vadd.f32 0.0, %v12355
    %12357 = vdwg.mxu0
    %12358 = vmatprep.subr.bf16.mxu0 %v11826
    %12359 = vmatpush1.bf16.msra.mxu0 %v11825
    %12360 = vmatprep.subr.bf16.mxu0 %v11828
    %12361 = vmatpush1.bf16.msra.mxu0 %v11827
    %12362 = vmatprep.subr.bf16.mxu0 %v11830
    %12363 = vmatpush1.bf16.msra.mxu0 %v11829
    %12364 = vmatprep.subr.bf16.mxu0 %v11832
    %12365 = vmatpush1.bf16.msra.mxu0 %v11831
    %12366 = vmatprep.subr.bf16.mxu0 %v11834
    %12367 = vmatpush1.bf16.msra.mxu0 %v11833
    %12368 = vmatprep.subr.bf16.mxu0 %v11836
    %12369 = vmatpush1.bf16.msra.mxu0 %v11835
    %12370 = vmatprep.subr.bf16.mxu0 %v11838
    %12371 = vmatpush1.bf16.msra.mxu0 %v11837
    %12372 = vmatprep.subr.bf16.mxu0 %v11840
    %12373 = vmatpush1.bf16.msra.mxu0 %v11839
    %12374 = vmatprep.subr.bf16.mxu0 %v11842
    %12375 = vmatpush1.bf16.msra.mxu0 %v11841
    %12376 = vmatprep.subr.bf16.mxu0 %v11844
    %12377 = vmatpush1.bf16.msra.mxu0 %v11843
    %12378 = vmatprep.subr.bf16.mxu0 %v11846
    %12379 = vmatpush1.bf16.msra.mxu0 %v11845
    %12380 = vmatprep.subr.bf16.mxu0 %v11848
    %12381 = vmatpush1.bf16.msra.mxu0 %v11847
    %12382 = vmatprep.subr.bf16.mxu0 %v11850
    %12383 = vmatpush1.bf16.msra.mxu0 %v11849
    %12384 = vmatprep.subr.bf16.mxu0 %v11852
    %12385 = vmatpush1.bf16.msra.mxu0 %v11851
    %12386 = vmatprep.subr.bf16.mxu0 %v11854
    %12387 = vmatpush1.bf16.msra.mxu0 %v11853
    %12388 = vmatprep.subr.bf16.mxu0 %v11856
    %12389 = vmatpush1.bf16.msra.mxu0 %v11855
    %12390 = vmatprep.mubr.bf16.mxu0 %v9951
    %12391 = vmatmul.mubr.bf16.gmra.mrb[0].mxu0 %v9883
    %v12392 = vpop.f32.mrb[0].mxu0
    %v12393 = vadd.f32 %v12340, %v12392
    %v12394 = vpop.f32.mrb[0].mxu0
    %v12395 = vadd.f32 %v12342, %v12394
    %v12396 = vpop.f32.mrb[0].mxu0
    %v12397 = vadd.f32 %v12344, %v12396
    %v12398 = vpop.f32.mrb[0].mxu0
    %v12399 = vadd.f32 %v12346, %v12398
    %12400 = vmatprep.mubr.bf16.mxu0 %v9952
    %12401 = vmatmul.mubr.bf16.gmra.mrb[0].mxu0 %v9884
    %v12402 = vpop.f32.mrb[0].mxu0
    %v12403 = vadd.f32 %v12350, %v12402
    %v12404 = vpop.f32.mrb[0].mxu0
    %v12405 = vadd.f32 %v12352, %v12404
    %v12406 = vpop.f32.mrb[0].mxu0
    %v12407 = vadd.f32 %v12354, %v12406
    %v12408 = vpop.f32.mrb[0].mxu0
    %v12409 = vadd.f32 %v12356, %v12408
    %12410 = vdwg.mxu0
    %12411 = vmatprep.subr.bf16.mxu0 %v11858
    %12412 = vmatpush1.bf16.msra.mxu0 %v11857
    %12413 = vmatprep.subr.bf16.mxu0 %v11860
    %12414 = vmatpush1.bf16.msra.mxu0 %v11859
    %12415 = vmatprep.subr.bf16.mxu0 %v11862
    %12416 = vmatpush1.bf16.msra.mxu0 %v11861
    %12417 = vmatprep.subr.bf16.mxu0 %v11864
    %12418 = vmatpush1.bf16.msra.mxu0 %v11863
    %12419 = vmatprep.subr.bf16.mxu0 %v11866
    %12420 = vmatpush1.bf16.msra.mxu0 %v11865
    %12421 = vmatprep.subr.bf16.mxu0 %v11868
    %12422 = vmatpush1.bf16.msra.mxu0 %v11867
    %12423 = vmatprep.subr.bf16.mxu0 %v11870
    %12424 = vmatpush1.bf16.msra.mxu0 %v11869
    %12425 = vmatprep.subr.bf16.mxu0 %v11872
    %12426 = vmatpush1.bf16.msra.mxu0 %v11871
    %12427 = vmatprep.subr.bf16.mxu0 %v11874
    %12428 = vmatpush1.bf16.msra.mxu0 %v11873
    %12429 = vmatprep.subr.bf16.mxu0 %v11876
    %12430 = vmatpush1.bf16.msra.mxu0 %v11875
    %12431 = vmatprep.subr.bf16.mxu0 %v11878
    %12432 = vmatpush1.bf16.msra.mxu0 %v11877
    %12433 = vmatprep.subr.bf16.mxu0 %v11880
    %12434 = vmatpush1.bf16.msra.mxu0 %v11879
    %12435 = vmatprep.subr.bf16.mxu0 %v11882
    %12436 = vmatpush1.bf16.msra.mxu0 %v11881
    %12437 = vmatprep.subr.bf16.mxu0 %v11884
    %12438 = vmatpush1.bf16.msra.mxu0 %v11883
    %12439 = vmatprep.subr.bf16.mxu0 %v11886
    %12440 = vmatpush1.bf16.msra.mxu0 %v11885
    %12441 = vmatprep.subr.bf16.mxu0 %v11888
    %12442 = vmatpush1.bf16.msra.mxu0 %v11887
    %12443 = vmatprep.mubr.bf16.mxu0 %v10087
    %12444 = vmatmul.mubr.bf16.gmra.mrb[0].mxu0 %v10019
    %v12445 = vpop.f32.mrb[0].mxu0
    %v12446 = vadd.f32 %v12393, %v12445
    %v12447 = vpop.f32.mrb[0].mxu0
    %v12448 = vadd.f32 %v12395, %v12447
    %v12449 = vpop.f32.mrb[0].mxu0
    %v12450 = vadd.f32 %v12397, %v12449
    %v12451 = vpop.f32.mrb[0].mxu0
    %v12452 = vadd.f32 %v12399, %v12451
    %12453 = vmatprep.mubr.bf16.mxu0 %v10088
    %12454 = vmatmul.mubr.bf16.gmra.mrb[0].mxu0 %v10020
    %v12455 = vpop.f32.mrb[0].mxu0
    %v12456 = vadd.f32 %v12403, %v12455
    %v12457 = vpop.f32.mrb[0].mxu0
    %v12458 = vadd.f32 %v12405, %v12457
    %v12459 = vpop.f32.mrb[0].mxu0
    %v12460 = vadd.f32 %v12407, %v12459
    %v12461 = vpop.f32.mrb[0].mxu0
    %v12462 = vadd.f32 %v12409, %v12461
    %12463 = vdwg.mxu0
    %12464 = vmatprep.subr.bf16.mxu0 %v11890
    %12465 = vmatpush1.bf16.msra.mxu0 %v11889
    %12466 = vmatprep.subr.bf16.mxu0 %v11892
    %12467 = vmatpush1.bf16.msra.mxu0 %v11891
    %12468 = vmatprep.subr.bf16.mxu0 %v11894
    %12469 = vmatpush1.bf16.msra.mxu0 %v11893
    %12470 = vmatprep.subr.bf16.mxu0 %v11896
    %12471 = vmatpush1.bf16.msra.mxu0 %v11895
    %12472 = vmatprep.subr.bf16.mxu0 %v11898
    %12473 = vmatpush1.bf16.msra.mxu0 %v11897
    %12474 = vmatprep.subr.bf16.mxu0 %v11900
    %12475 = vmatpush1.bf16.msra.mxu0 %v11899
    %12476 = vmatprep.subr.bf16.mxu0 %v11902
    %12477 = vmatpush1.bf16.msra.mxu0 %v11901
    %12478 = vmatprep.subr.bf16.mxu0 %v11904
    %12479 = vmatpush1.bf16.msra.mxu0 %v11903
    %12480 = vmatprep.subr.bf16.mxu0 %v11906
    %12481 = vmatpush1.bf16.msra.mxu0 %v11905
    %12482 = vmatprep.subr.bf16.mxu0 %v11908
    %12483 = vmatpush1.bf16.msra.mxu0 %v11907
    %12484 = vmatprep.subr.bf16.mxu0 %v11910
    %12485 = vmatpush1.bf16.msra.mxu0 %v11909
    %12486 = vmatprep.subr.bf16.mxu0 %v11912
    %12487 = vmatpush1.bf16.msra.mxu0 %v11911
    %12488 = vmatprep.subr.bf16.mxu0 %v11914
    %12489 = vmatpush1.bf16.msra.mxu0 %v11913
    %12490 = vmatprep.subr.bf16.mxu0 %v11916
    %12491 = vmatpush1.bf16.msra.mxu0 %v11915
    %12492 = vmatprep.subr.bf16.mxu0 %v11918
    %12493 = vmatpush1.bf16.msra.mxu0 %v11917
    %12494 = vmatprep.subr.bf16.mxu0 %v11920
    %12495 = vmatpush1.bf16.msra.mxu0 %v11919
    %12496 = vmatprep.mubr.bf16.mxu0 %v10223
    %12497 = vmatmul.mubr.bf16.gmra.mrb[0].mxu0 %v10155
    %v12498 = vpop.f32.mrb[0].mxu0
    %v12499 = vadd.f32 %v12446, %v12498
    %v12500 = vpop.f32.mrb[0].mxu0
    %v12501 = vadd.f32 %v12448, %v12500
    %v12502 = vpop.f32.mrb[0].mxu0
    %v12503 = vadd.f32 %v12450, %v12502
    %v12504 = vpop.f32.mrb[0].mxu0
    %v12505 = vadd.f32 %v12452, %v12504
    %12506 = vmatprep.mubr.bf16.mxu0 %v10224
    %12507 = vmatmul.mubr.bf16.gmra.mrb[0].mxu0 %v10156
    %v12508 = vpop.f32.mrb[0].mxu0
    %v12509 = vadd.f32 %v12456, %v12508
    %v12510 = vpop.f32.mrb[0].mxu0
    %v12511 = vadd.f32 %v12458, %v12510
    %v12512 = vpop.f32.mrb[0].mxu0
    %v12513 = vadd.f32 %v12460, %v12512
    %v12514 = vpop.f32.mrb[0].mxu0
    %v12515 = vadd.f32 %v12462, %v12514
    %12516 = vdwg.mxu0
    %12517 = vmatprep.subr.bf16.mxu0 %v11922
    %12518 = vmatpush1.bf16.msra.mxu0 %v11921
    %12519 = vmatprep.subr.bf16.mxu0 %v11924
    %12520 = vmatpush1.bf16.msra.mxu0 %v11923
    %12521 = vmatprep.subr.bf16.mxu0 %v11926
    %12522 = vmatpush1.bf16.msra.mxu0 %v11925
    %12523 = vmatprep.subr.bf16.mxu0 %v11928
    %12524 = vmatpush1.bf16.msra.mxu0 %v11927
    %12525 = vmatprep.subr.bf16.mxu0 %v11930
    %12526 = vmatpush1.bf16.msra.mxu0 %v11929
    %12527 = vmatprep.subr.bf16.mxu0 %v11932
    %12528 = vmatpush1.bf16.msra.mxu0 %v11931
    %12529 = vmatprep.subr.bf16.mxu0 %v11934
    %12530 = vmatpush1.bf16.msra.mxu0 %v11933
    %12531 = vmatprep.subr.bf16.mxu0 %v11936
    %12532 = vmatpush1.bf16.msra.mxu0 %v11935
    %12533 = vmatprep.subr.bf16.mxu0 %v11938
    %12534 = vmatpush1.bf16.msra.mxu0 %v11937
    %12535 = vmatprep.subr.bf16.mxu0 %v11940
    %12536 = vmatpush1.bf16.msra.mxu0 %v11939
    %12537 = vmatprep.subr.bf16.mxu0 %v11942
    %12538 = vmatpush1.bf16.msra.mxu0 %v11941
    %12539 = vmatprep.subr.bf16.mxu0 %v11944
    %12540 = vmatpush1.bf16.msra.mxu0 %v11943
    %12541 = vmatprep.subr.bf16.mxu0 %v11946
    %12542 = vmatpush1.bf16.msra.mxu0 %v11945
    %12543 = vmatprep.subr.bf16.mxu0 %v11948
    %12544 = vmatpush1.bf16.msra.mxu0 %v11947
    %12545 = vmatprep.subr.bf16.mxu0 %v11950
    %12546 = vmatpush1.bf16.msra.mxu0 %v11949
    %12547 = vmatprep.subr.bf16.mxu0 %v11952
    %12548 = vmatpush1.bf16.msra.mxu0 %v11951
    %12549 = vmatprep.mubr.bf16.mxu0 %v10359
    %12550 = vmatmul.mubr.bf16.gmra.mrb[0].mxu0 %v10291
    %v12551 = vpop.f32.mrb[0].mxu0
    %v12552 = vadd.f32 %v12499, %v12551
    %v12553 = vpop.f32.mrb[0].mxu0
    %v12554 = vadd.f32 %v12501, %v12553
    %v12555 = vpop.f32.mrb[0].mxu0
    %v12556 = vadd.f32 %v12503, %v12555
    %v12557 = vpop.f32.mrb[0].mxu0
    %v12558 = vadd.f32 %v12505, %v12557
    %12559 = vmatprep.mubr.bf16.mxu0 %v10360
    %12560 = vmatmul.mubr.bf16.gmra.mrb[0].mxu0 %v10292
    %v12561 = vpop.f32.mrb[0].mxu0
    %v12562 = vadd.f32 %v12509, %v12561
    %v12563 = vpop.f32.mrb[0].mxu0
    %v12564 = vadd.f32 %v12511, %v12563
    %v12565 = vpop.f32.mrb[0].mxu0
    %v12566 = vadd.f32 %v12513, %v12565
    %v12567 = vpop.f32.mrb[0].mxu0
    %v12568 = vadd.f32 %v12515, %v12567
    %12569 = vdwg.mxu0
    %12570 = vmatprep.subr.bf16.mxu0 %v11954
    %12571 = vmatpush1.bf16.msra.mxu0 %v11953
    %12572 = vmatprep.subr.bf16.mxu0 %v11956
    %12573 = vmatpush1.bf16.msra.mxu0 %v11955
    %12574 = vmatprep.subr.bf16.mxu0 %v11958
    %12575 = vmatpush1.bf16.msra.mxu0 %v11957
    %12576 = vmatprep.subr.bf16.mxu0 %v11960
    %12577 = vmatpush1.bf16.msra.mxu0 %v11959
    %12578 = vmatprep.subr.bf16.mxu0 %v11962
    %12579 = vmatpush1.bf16.msra.mxu0 %v11961
    %12580 = vmatprep.subr.bf16.mxu0 %v11964
    %12581 = vmatpush1.bf16.msra.mxu0 %v11963
    %12582 = vmatprep.subr.bf16.mxu0 %v11966
    %12583 = vmatpush1.bf16.msra.mxu0 %v11965
    %12584 = vmatprep.subr.bf16.mxu0 %v11968
    %12585 = vmatpush1.bf16.msra.mxu0 %v11967
    %12586 = vmatprep.subr.bf16.mxu0 %v11970
    %12587 = vmatpush1.bf16.msra.mxu0 %v11969
    %12588 = vmatprep.subr.bf16.mxu0 %v11972
    %12589 = vmatpush1.bf16.msra.mxu0 %v11971
    %12590 = vmatprep.subr.bf16.mxu0 %v11974
    %12591 = vmatpush1.bf16.msra.mxu0 %v11973
    %12592 = vmatprep.subr.bf16.mxu0 %v11976
    %12593 = vmatpush1.bf16.msra.mxu0 %v11975
    %12594 = vmatprep.subr.bf16.mxu0 %v11978
    %12595 = vmatpush1.bf16.msra.mxu0 %v11977
    %12596 = vmatprep.subr.bf16.mxu0 %v11980
    %12597 = vmatpush1.bf16.msra.mxu0 %v11979
    %12598 = vmatprep.subr.bf16.mxu0 %v11982
    %12599 = vmatpush1.bf16.msra.mxu0 %v11981
    %12600 = vmatprep.subr.bf16.mxu0 %v11984
    %12601 = vmatpush1.bf16.msra.mxu0 %v11983
    %12602 = vmatprep.mubr.bf16.mxu0 %v10495
    %12603 = vmatmul.mubr.bf16.gmra.mrb[0].mxu0 %v10427
    %v12604 = vpop.f32.mrb[0].mxu0
    %v12605 = vadd.f32 %v12552, %v12604
    %v12606 = vpop.f32.mrb[0].mxu0
    %v12607 = vadd.f32 %v12554, %v12606
    %v12608 = vpop.f32.mrb[0].mxu0
    %v12609 = vadd.f32 %v12556, %v12608
    %v12610 = vpop.f32.mrb[0].mxu0
    %v12611 = vadd.f32 %v12558, %v12610
    %12612 = vmatprep.mubr.bf16.mxu0 %v10496
    %12613 = vmatmul.mubr.bf16.gmra.mrb[0].mxu0 %v10428
    %v12614 = vpop.f32.mrb[0].mxu0
    %v12615 = vadd.f32 %v12562, %v12614
    %v12616 = vpop.f32.mrb[0].mxu0
    %v12617 = vadd.f32 %v12564, %v12616
    %v12618 = vpop.f32.mrb[0].mxu0
    %v12619 = vadd.f32 %v12566, %v12618
    %v12620 = vpop.f32.mrb[0].mxu0
    %v12621 = vadd.f32 %v12568, %v12620
    %12622 = vdwg.mxu0
    %12623 = vmatprep.subr.bf16.mxu0 %v11986
    %12624 = vmatpush1.bf16.msra.mxu0 %v11985
    %12625 = vmatprep.subr.bf16.mxu0 %v11988
    %12626 = vmatpush1.bf16.msra.mxu0 %v11987
    %12627 = vmatprep.subr.bf16.mxu0 %v11990
    %12628 = vmatpush1.bf16.msra.mxu0 %v11989
    %12629 = vmatprep.subr.bf16.mxu0 %v11992
    %12630 = vmatpush1.bf16.msra.mxu0 %v11991
    %12631 = vmatprep.subr.bf16.mxu0 %v11994
    %12632 = vmatpush1.bf16.msra.mxu0 %v11993
    %12633 = vmatprep.subr.bf16.mxu0 %v11996
    %12634 = vmatpush1.bf16.msra.mxu0 %v11995
    %12635 = vmatprep.subr.bf16.mxu0 %v11998
    %12636 = vmatpush1.bf16.msra.mxu0 %v11997
    %12637 = vmatprep.subr.bf16.mxu0 %v12000
    %12638 = vmatpush1.bf16.msra.mxu0 %v11999
    %12639 = vmatprep.subr.bf16.mxu0 %v12002
    %12640 = vmatpush1.bf16.msra.mxu0 %v12001
    %12641 = vmatprep.subr.bf16.mxu0 %v12004
    %12642 = vmatpush1.bf16.msra.mxu0 %v12003
    %12643 = vmatprep.subr.bf16.mxu0 %v12006
    %12644 = vmatpush1.bf16.msra.mxu0 %v12005
    %12645 = vmatprep.subr.bf16.mxu0 %v12008
    %12646 = vmatpush1.bf16.msra.mxu0 %v12007
    %12647 = vmatprep.subr.bf16.mxu0 %v12010
    %12648 = vmatpush1.bf16.msra.mxu0 %v12009
    %12649 = vmatprep.subr.bf16.mxu0 %v12012
    %12650 = vmatpush1.bf16.msra.mxu0 %v12011
    %12651 = vmatprep.subr.bf16.mxu0 %v12014
    %12652 = vmatpush1.bf16.msra.mxu0 %v12013
    %12653 = vmatprep.subr.bf16.mxu0 %v12016
    %12654 = vmatpush1.bf16.msra.mxu0 %v12015
    %12655 = vmatprep.mubr.bf16.mxu0 %v10631
    %12656 = vmatmul.mubr.bf16.gmra.mrb[0].mxu0 %v10563
    %v12657 = vpop.f32.mrb[0].mxu0
    %v12658 = vadd.f32 %v12605, %v12657
    %v12659 = vpop.f32.mrb[0].mxu0
    %v12660 = vadd.f32 %v12607, %v12659
    %v12661 = vpop.f32.mrb[0].mxu0
    %v12662 = vadd.f32 %v12609, %v12661
    %v12663 = vpop.f32.mrb[0].mxu0
    %v12664 = vadd.f32 %v12611, %v12663
    %12665 = vmatprep.mubr.bf16.mxu0 %v10632
    %12666 = vmatmul.mubr.bf16.gmra.mrb[0].mxu0 %v10564
    %v12667 = vpop.f32.mrb[0].mxu0
    %v12668 = vadd.f32 %v12615, %v12667
    %v12669 = vpop.f32.mrb[0].mxu0
    %v12670 = vadd.f32 %v12617, %v12669
    %v12671 = vpop.f32.mrb[0].mxu0
    %v12672 = vadd.f32 %v12619, %v12671
    %v12673 = vpop.f32.mrb[0].mxu0
    %v12674 = vadd.f32 %v12621, %v12673
    %12675 = vdwg.mxu0
    %12676 = vmatprep.subr.bf16.mxu0 %v12018
    %12677 = vmatpush1.bf16.msra.mxu0 %v12017
    %12678 = vmatprep.subr.bf16.mxu0 %v12020
    %12679 = vmatpush1.bf16.msra.mxu0 %v12019
    %12680 = vmatprep.subr.bf16.mxu0 %v12022
    %12681 = vmatpush1.bf16.msra.mxu0 %v12021
    %12682 = vmatprep.subr.bf16.mxu0 %v12024
    %12683 = vmatpush1.bf16.msra.mxu0 %v12023
    %12684 = vmatprep.subr.bf16.mxu0 %v12026
    %12685 = vmatpush1.bf16.msra.mxu0 %v12025
    %12686 = vmatprep.subr.bf16.mxu0 %v12028
    %12687 = vmatpush1.bf16.msra.mxu0 %v12027
    %12688 = vmatprep.subr.bf16.mxu0 %v12030
    %12689 = vmatpush1.bf16.msra.mxu0 %v12029
    %12690 = vmatprep.subr.bf16.mxu0 %v12032
    %12691 = vmatpush1.bf16.msra.mxu0 %v12031
    %12692 = vmatprep.subr.bf16.mxu0 %v12034
    %12693 = vmatpush1.bf16.msra.mxu0 %v12033
    %12694 = vmatprep.subr.bf16.mxu0 %v12036
    %12695 = vmatpush1.bf16.msra.mxu0 %v12035
    %12696 = vmatprep.subr.bf16.mxu0 %v12038
    %12697 = vmatpush1.bf16.msra.mxu0 %v12037
    %12698 = vmatprep.subr.bf16.mxu0 %v12040
    %12699 = vmatpush1.bf16.msra.mxu0 %v12039
    %12700 = vmatprep.subr.bf16.mxu0 %v12042
    %12701 = vmatpush1.bf16.msra.mxu0 %v12041
    %12702 = vmatprep.subr.bf16.mxu0 %v12044
    %12703 = vmatpush1.bf16.msra.mxu0 %v12043
    %12704 = vmatprep.subr.bf16.mxu0 %v12046
    %12705 = vmatpush1.bf16.msra.mxu0 %v12045
    %12706 = vmatprep.subr.bf16.mxu0 %v12048
    %12707 = vmatpush1.bf16.msra.mxu0 %v12047
    %12708 = vmatprep.mubr.bf16.mxu0 %v10767
    %12709 = vmatmul.mubr.bf16.gmra.mrb[0].mxu0 %v10699
    %v12710 = vpop.f32.mrb[0].mxu0
    %v12711 = vadd.f32 %v12658, %v12710
    %v12712 = vpop.f32.mrb[0].mxu0
    %v12713 = vadd.f32 %v12660, %v12712
    %v12714 = vpop.f32.mrb[0].mxu0
    %v12715 = vadd.f32 %v12662, %v12714
    %v12716 = vpop.f32.mrb[0].mxu0
    %v12717 = vadd.f32 %v12664, %v12716
    %12718 = vmatprep.mubr.bf16.mxu0 %v10768
    %12719 = vmatmul.mubr.bf16.gmra.mrb[0].mxu0 %v10700
    %v12720 = vpop.f32.mrb[0].mxu0
    %v12721 = vadd.f32 %v12668, %v12720
    %v12722 = vpop.f32.mrb[0].mxu0
    %v12723 = vadd.f32 %v12670, %v12722
    %v12724 = vpop.f32.mrb[0].mxu0
    %v12725 = vadd.f32 %v12672, %v12724
    %v12726 = vpop.f32.mrb[0].mxu0
    %v12727 = vadd.f32 %v12674, %v12726
    %12728 = vdwg.mxu0
    %v12729 = vld [vmem:[#allocation17] sm:$0x3]
    %v12730 = vld [vmem:[#allocation19] sm:$0x3]
    %v12731 = vmul.f32 %v12711, %v12711
    %v12732 = vmul.f32 %v12713, %v12713
    %v12733 = vmul.f32 %v12715, %v12715
    %v12734 = vmul.f32 %v12717, %v12717
    %v12735 = vmul.f32 %v12721, %v12721
    %v12736 = vmul.f32 %v12723, %v12723
    %v12737 = vmul.f32 %v12725, %v12725
    %v12738 = vmul.f32 %v12727, %v12727
    %v12739 = vadd.f32 %v12711, %v12715
    %v12740 = vadd.f32 %v12739, %v12721
    %v12741 = vadd.f32 %v12740, %v12725
    %v12742 = vrot.slane %v12741, 4
    %v12743 = vadd.f32 %v12741, %v12742
    %v12744 = vrot.slane %v12743, 2
    %v12745 = vadd.f32 %v12743, %v12744
    %v12746 = vrot.slane %v12745, 1
    %v12747 = vadd.f32 %v12745, %v12746
    %v12748 = vadd.f32 %v12713, %v12717
    %v12749 = vadd.f32 %v12748, %v12723
    %v12750 = vadd.f32 %v12749, %v12727
    %v12751 = vrot.slane %v12750, 4
    %v12752 = vadd.f32 %v12750, %v12751
    %v12753 = vrot.slane %v12752, 2
    %v12754 = vadd.f32 %v12752, %v12753
    %v12755 = vrot.slane %v12754, 1
    %v12756 = vadd.f32 %v12754, %v12755
    %v12757 = vadd.f32 %v12731, %v12733
    %v12758 = vadd.f32 %v12757, %v12735
    %v12759 = vadd.f32 %v12758, %v12737
    %v12760 = vrot.slane %v12759, 4
    %v12761 = vadd.f32 %v12759, %v12760
    %v12762 = vrot.slane %v12761, 2
    %v12763 = vadd.f32 %v12761, %v12762
    %v12764 = vrot.slane %v12763, 1
    %v12765 = vadd.f32 %v12763, %v12764
    %v12766 = vadd.f32 %v12732, %v12734
    %v12767 = vadd.f32 %v12766, %v12736
    %v12768 = vadd.f32 %v12767, %v12738
    %v12769 = vrot.slane %v12768, 4
    %v12770 = vadd.f32 %v12768, %v12769
    %v12771 = vrot.slane %v12770, 2
    %v12772 = vadd.f32 %v12770, %v12771
    %v12773 = vrot.slane %v12772, 1
    %v12774 = vadd.f32 %v12772, %v12773
    %v12775 = vmul.f32 %v12747, 0.03125
    %v12776 = vmul.f32 %v12756, 0.03125
    %v12777 = vmul.f32 %v12765, 0.03125
    %v12778 = vmul.f32 %v12774, 0.03125
    %v12779 = vmul.f32 %v12775, %v12775
    %v12780 = vmul.f32 %v12776, %v12776
    %v12781 = vsub.f32 %v12777, %v12779
    %v12782 = vsub.f32 %v12778, %v12780
    %v12783 = vmax.f32 %v12781, 0.0
    %v12784 = vmax.f32 %v12782, 0.0
    %v12785 = vadd.f32 %v12783, 1e-05
    %v12786 = vadd.f32 %v12784, 1e-05
    %v12787 = vrsqrt.pop %v12785
    %v12788 = vrsqrt.pop %v12786
    %v12791 = vcombine.low %v12787, %v12788
    %v12793 = vunpack.c.l.s4 1966171168
    %v12794 = vunpack.c.0.s8 %v12793
    %v12795 = vlaneseq
    %v12796 = vshrl.u32 %v12795, 7
    %v12797 = vsub.s32 %v12794, %v12796
    %v12798 = vrot.slane %v12791, %v12797
    %v12800 = vunpack.c.l.s4 1966171168
    %v12801 = vunpack.c.0.s8 %v12800
    %v12802 = vlaneseq
    %v12803 = vshrl.u32 %v12802, 7
    %v12804 = vsub.s32 %v12801, %v12803
    %v12805 = vrot.slane %v12798, %v12804
    %v12807 = vmul.f32 %v12729, %v12805
    %v12809 = vlaneseq
    %v12810 = vshrl.u32 %v12809, 7
    %v12811 = vsub.s32 0, %v12810
    %v12812 = vrot.slane %v12807, %v12811
    %v12813 = vlaneseq
    %v12814 = vshrl.u32 %v12813, 7
    %v12815 = vsub.s32 1, %v12814
    %v12816 = vrot.slane %v12807, %v12815
    %v12819 = vmul.f32 %v12775, %v12812
    %v12820 = vmul.f32 %v12776, %v12816
    %v12823 = vcombine.low %v12819, %v12820
    %v12825 = vunpack.c.l.s4 1966171168
    %v12826 = vunpack.c.0.s8 %v12825
    %v12827 = vlaneseq
    %v12828 = vshrl.u32 %v12827, 7
    %v12829 = vsub.s32 %v12826, %v12828
    %v12830 = vrot.slane %v12823, %v12829
    %v12832 = vunpack.c.l.s4 1966171168
    %v12833 = vunpack.c.0.s8 %v12832
    %v12834 = vlaneseq
    %v12835 = vshrl.u32 %v12834, 7
    %v12836 = vsub.s32 %v12833, %v12835
    %v12837 = vrot.slane %v12830, %v12836
    %v12839 = vsub.f32 %v12730, %v12837
    %v12840 = vmul.f32 %v12711, %v12812
    %v12841 = vmul.f32 %v12713, %v12816
    %v12842 = vmul.f32 %v12715, %v12812
    %v12843 = vmul.f32 %v12717, %v12816
    %v12844 = vmul.f32 %v12721, %v12812
    %v12845 = vmul.f32 %v12723, %v12816
    %v12846 = vmul.f32 %v12725, %v12812
    %v12847 = vmul.f32 %v12727, %v12816
    %v12849 = vlaneseq
    %v12850 = vshrl.u32 %v12849, 7
    %v12851 = vsub.s32 0, %v12850
    %v12852 = vrot.slane %v12839, %v12851
    %v12853 = vlaneseq
    %v12854 = vshrl.u32 %v12853, 7
    %v12855 = vsub.s32 1, %v12854
    %v12856 = vrot.slane %v12839, %v12855
    %v12859 = vadd.f32 %v12840, %v12852
    %v12860 = vadd.f32 %v12841, %v12856
    %v12861 = vadd.f32 %v12842, %v12852
    %v12862 = vadd.f32 %v12843, %v12856
    %v12863 = vadd.f32 %v12844, %v12852
    %v12864 = vadd.f32 %v12845, %v12856
    %v12865 = vadd.f32 %v12846, %v12852
    %v12866 = vadd.f32 %v12847, %v12856
    %vm12867 = vcmp.ge.f32.partialorder %v12859, 0.0
    %vm12868 = vcmp.ge.f32.partialorder %v12860, 0.0
    %vm12869 = vcmp.ge.f32.partialorder %v12861, 0.0
    %vm12870 = vcmp.ge.f32.partialorder %v12862, 0.0
    %vm12871 = vcmp.ge.f32.partialorder %v12863, 0.0
    %vm12872 = vcmp.ge.f32.partialorder %v12864, 0.0
    %vm12873 = vcmp.ge.f32.partialorder %v12865, 0.0
    %vm12874 = vcmp.ge.f32.partialorder %v12866, 0.0
    %v12875 = vmul.f32 %v12859, 0.2
    %v12876 = vmul.f32 %v12860, 0.2
    %v12877 = vmul.f32 %v12861, 0.2
    %v12878 = vmul.f32 %v12862, 0.2
    %v12879 = vmul.f32 %v12863, 0.2
    %v12880 = vmul.f32 %v12864, 0.2
    %v12881 = vmul.f32 %v12865, 0.2
    %v12882 = vmul.f32 %v12866, 0.2
    %v12883 = vsel %vm12867, %v12859, %v12875
    %v12884 = vsel %vm12868, %v12860, %v12876
    %v12885 = vsel %vm12869, %v12861, %v12877
    %v12886 = vsel %vm12870, %v12862, %v12878
    %v12887 = vsel %vm12871, %v12863, %v12879
    %v12888 = vsel %vm12872, %v12864, %v12880
    %v12889 = vsel %vm12873, %v12865, %v12881
    %v12890 = vsel %vm12874, %v12866, %v12882
    %v12891 = vld [vmem:[#allocation20] sm:$0xff]
    %v12892 = vld [vmem:[#allocation20 + $0x8] sm:$0xff]
    %v12893 = vld [vmem:[#allocation20 + $0x10] sm:$0xff]
    %v12894 = vld [vmem:[#allocation20 + $0x18] sm:$0xff]
    %v12895 = vmul.f32 %v12883, %v12891
    %v12896 = vmul.f32 %v12884, %v12892
    %v12897 = vmul.f32 %v12885, %v12893
    %v12898 = vmul.f32 %v12886, %v12894
    %v12899 = vadd.f32 %v12895, %v12896
    %12900 = vadd.xlane.f32.xlu0 %v12899
    %v12901 = vpop.xlane.xlu0 %12900
    %v12902 = vadd.f32 %v12897, %v12898
    %12903 = vadd.xlane.f32.xlu0 %v12902
    %v12904 = vpop.xlane.xlu0 %12903
    %v12905 = vadd.f32 %v12901, %v12904
    %v12906 = vrot.slane %v12905, 4
    %v12907 = vadd.f32 %v12905, %v12906
    %v12908 = vrot.slane %v12907, 2
    %v12909 = vadd.f32 %v12907, %v12908
    %v12910 = vrot.slane %v12909, 1
    %v12911 = vadd.f32 %v12909, %v12910
    %v12912 = vmul.f32 %v12887, %v12891
    %v12913 = vmul.f32 %v12888, %v12892
    %v12914 = vmul.f32 %v12889, %v12893
    %v12915 = vmul.f32 %v12890, %v12894
    %v12916 = vadd.f32 %v12912, %v12913
    %12917 = vadd.xlane.f32.xlu0 %v12916
    %v12918 = vpop.xlane.xlu0 %12917
    %v12919 = vadd.f32 %v12914, %v12915
    %12920 = vadd.xlane.f32.xlu0 %v12919
    %v12921 = vpop.xlane.xlu0 %12920
    %v12922 = vadd.f32 %v12918, %v12921
    %v12923 = vrot.slane %v12922, 4
    %v12924 = vadd.f32 %v12922, %v12923
    %v12925 = vrot.slane %v12924, 2
    %v12926 = vadd.f32 %v12924, %v12925
    %v12927 = vrot.slane %v12926, 1
    %v12928 = vadd.f32 %v12926, %v12927
    %vm12929 = vcmask 7168
    %v12930 = vsel %vm12929, %v12911, %v12928
    %v12931 = vsub.f32 0.0, %v12930
    %v12932 = vmul.f32 %v12931, 1.442695
    %v12933 = vpow.pop %v12932
    %v12934 = vadd.f32 %v12933, 1.0
    %v12935 = vrcp.pop %v12934
    %v12936 = vmul.f32 1.0, %v12935
    %vm12937 = vcmask 8192
    %12938 = vst.msk [vmem:[#allocation22] sm:$0x1] %vm12937, %v12936
    // Predicated region
    $region102: #{discriminator_forward.1} parent=1 // pred_check
      _
    $region103: #{discriminator_forward.1} parent=1 // pred_check_branch
      %12940 = sbr.rel (0) target = $region105
    $region104: #{discriminator_forward.1} parent=1 // pred_region
      %s12942 = ssub.s32 16, 16
      %12943 = vsyncadd [#allocation4], %s12942
      %s12945 = sshll.u32 [#allocation22], 4
      %s12946 = int_to_ptr.vmem [resolvable:$true] %s12945
      %12948 = dma.vmem_to_hbm [thread:$0]  %s12946, 16, %s13, [#allocation4]
    $region105: #{discriminator_forward.1} parent=1 // pred_fallthru
      _
    // Predicated region
    $region106: #{discriminator_forward.1} parent=1 // pred_check
      _
    $region107: #{discriminator_forward.1} parent=1 // pred_check_branch
      %12950 = sbr.rel (0) target = $region109
    $region108: #{discriminator_forward.1} parent=1 // pred_region
      %12951 = dma.done [#allocation4], 16
    $region109: #{discriminator_forward.1} parent=1 // pred_fallthru
      _
    %12952 = vsyncpa [#allocation3], 1
    %12953 = vsyncpa [#allocation6], 1
    %12954 = vsyncpa [#allocation9], 1
    %12955 = vsyncpa [#allocation12], 1
    %12956 = vsyncpa [#allocation15], 1
    %12957 = vsyncpa [#allocation18], 1
    %12958 = vsyncpa [#allocation21], 1
    %12959 = vsyncpa [#allocation4], 1

</llo_original>
